<compile_context>
chip_gen: v6e
topology: v6e:2x2x1
jax: 0.10.0
libtpu: 0.0.40
codegen_flags: <defaults>
</compile_context>

<pallas_src>
import numpy as np
import jax
import jax.numpy as jnp
from jax import lax
from jax.experimental import pallas as pl
from jax.experimental.pallas import tpu as pltpu


def _round_up(x, m):
    return (x + m - 1) // m * m


# ----------------------------- Pallas kernels ------------------------------- #

def _mm_bias_relu_kernel(x_ref, w_ref, b_ref, o_ref):
    # Whole K dim resident in VMEM: single-shot matmul, no accumulator scratch,
    # no init/finalize branches.
    acc = jnp.dot(x_ref[...], w_ref[...], preferred_element_type=jnp.float32)
    o_ref[...] = jnp.maximum(acc + b_ref[...], 0.0).astype(o_ref.dtype)


def _mm_bias_relu_acc_kernel(x_ref, w_ref, b_ref, o_ref, acc_ref):
    # K-reduction variant (used only for the big fc4 layer).
    @pl.when(pl.program_id(2) == 0)
    def _():
        acc_ref[...] = jnp.zeros_like(acc_ref)

    acc_ref[...] += jnp.dot(x_ref[...], w_ref[...],
                            preferred_element_type=jnp.float32)

    @pl.when(pl.program_id(2) == pl.num_programs(2) - 1)
    def _():
        o_ref[...] = jnp.maximum(acc_ref[...] + b_ref[...], 0.0).astype(o_ref.dtype)


def matmul_bias_relu_fullk(x, w_pad, b_pad, *, tm, out_dtype):
    """relu(x @ w + b) with the whole K dim as one VMEM block.

    x:      (M, K)  activations (bf16), K <= w_pad.shape[0].
    w_pad:  (Kp, Np) pre-padded / pre-cast (bf16) weight.
    b_pad:  (1, Np)  float32 bias.
    Returns the padded (Mp, Np) result; caller slices the valid rows/cols.
    """
    M, K = x.shape
    Kp, Np = w_pad.shape
    Mp = _round_up(M, tm)
    xp = jnp.pad(x, ((0, Mp - M), (0, Kp - K)))
    tn = min(Np, 512)
    grid = (Mp // tm, Np // tn)
    return pl.pallas_call(
        _mm_bias_relu_kernel,
        out_shape=jax.ShapeDtypeStruct((Mp, Np), out_dtype),
        grid_spec=pltpu.PrefetchScalarGridSpec(
            num_scalar_prefetch=0,
            grid=grid,
            in_specs=[
                pl.BlockSpec((tm, Kp), lambda i, j: (i, 0)),
                pl.BlockSpec((Kp, tn), lambda i, j: (0, j)),
                pl.BlockSpec((1, tn), lambda i, j: (0, j)),
            ],
            out_specs=pl.BlockSpec((tm, tn), lambda i, j: (i, j)),
        ),
        compiler_params=pltpu.CompilerParams(
            dimension_semantics=("parallel", "parallel")),
    )(xp, w_pad, b_pad)


def matmul_bias_relu_bigk(x, w_pad, b_pad, *, tm, tn, tk, out_dtype):
    """relu(x @ w + b) with a K-reduction grid axis (fc4)."""
    M, K = x.shape
    Kp, Np = w_pad.shape
    assert K == Kp and Kp % tk == 0 and Np % tn == 0
    Mp = _round_up(M, tm)
    xp = jnp.pad(x, ((0, Mp - M), (0, 0)))
    grid = (Mp // tm, Np // tn, Kp // tk)
    return pl.pallas_call(
        _mm_bias_relu_acc_kernel,
        out_shape=jax.ShapeDtypeStruct((Mp, Np), out_dtype),
        grid_spec=pltpu.PrefetchScalarGridSpec(
            num_scalar_prefetch=0,
            grid=grid,
            in_specs=[
                pl.BlockSpec((tm, tk), lambda i, j, k: (i, k)),
                pl.BlockSpec((tk, tn), lambda i, j, k: (k, j)),
                pl.BlockSpec((1, tn), lambda i, j, k: (0, j)),
            ],
            out_specs=pl.BlockSpec((tm, tn), lambda i, j, k: (i, j)),
            scratch_shapes=[pltpu.VMEM((tm, tn), jnp.float32)],
        ),
        compiler_params=pltpu.CompilerParams(
            dimension_semantics=("parallel", "parallel", "arbitrary")),
    )(xp, w_pad, b_pad)


# --------------------------- conv via im2col glue --------------------------- #

def conv2d_relu(x_nhwc, w_pad, b_pad, *, kh, kw, stride, oc, tm=512,
                out_dtype=jnp.bfloat16):
    """VALID conv + bias + ReLU.  Patch extraction is a single fused XLA op
    (glue); the matmul + bias + ReLU is the Pallas hot path."""
    N, H, W, C = x_nhwc.shape
    OH = (H - kh) // stride + 1
    OW = (W - kw) // stride + 1
    # (N, OH, OW, C*kh*kw); feature order is (c, kh, kw), which matches the
    # PyTorch OIHW weight flatten used in the pre-packed w_pad.
    patches = lax.conv_general_dilated_patches(
        x_nhwc, (kh, kw), (stride, stride), "VALID",
        dimension_numbers=("NHWC", "HWIO", "NHWC"))
    cols = patches.reshape(N * OH * OW, C * kh * kw)
    y = matmul_bias_relu_fullk(cols, w_pad, b_pad, tm=tm, out_dtype=out_dtype)
    return y[:N * OH * OW, :oc].reshape(N, OH, OW, oc)


# ----------------------------- NatureConvBody ------------------------------- #

def nature_conv_body(params, x_nchw):
    x = jnp.transpose(x_nchw, (0, 2, 3, 1)).astype(jnp.bfloat16)  # NCHW -> NHWC
    y = conv2d_relu(x, params["w1"], params["b1"], kh=7, kw=7, stride=3, oc=32)
    y = conv2d_relu(y, params["w2"], params["b2"], kh=3, kw=3, stride=2, oc=64)
    y = conv2d_relu(y, params["w3"], params["b3"], kh=3, kw=3, stride=1, oc=64)
    N = y.shape[0]
    # NHWC flatten; w4's columns were permuted at init so this matches torch's
    # y.view(N, -1) on the NCHW tensor exactly.
    y = y.reshape(N, -1)                                          # (N, 20736) bf16
    y = matmul_bias_relu_bigk(y, params["w4"], params["b4"],
                              tm=16, tn=256, tk=2304, out_dtype=jnp.float32)
    return y[:N]


# -------------------- one-time parameter packing (init) --------------------- #

def _prepare_conv(w_oihw, b, compute_dtype=jnp.bfloat16):
    oc, ic, kh, kw = w_oihw.shape
    k = ic * kh * kw
    wm = jnp.asarray(w_oihw).reshape(oc, k).T           # (K, OC), rows (c,kh,kw)
    kp, npad = _round_up(k, 128), _round_up(oc, 128)
    wm = jnp.pad(wm, ((0, kp - k), (0, npad - oc))).astype(compute_dtype)
    bp = jnp.pad(jnp.asarray(b, jnp.float32).reshape(1, -1),
                 ((0, 0), (0, npad - oc)))
    return wm, bp


def _prepare_fc_from_nchw(w, b, c, h, ww, compute_dtype=jnp.bfloat16):
    # torch Linear weight (OUT, C*H*W) expects an NCHW flatten; permute its
    # input columns to NHWC-flatten order and transpose once, offline.
    out_f, in_f = w.shape
    assert in_f == c * h * ww
    wp = jnp.asarray(w).reshape(out_f, c, h, ww).transpose(0, 2, 3, 1)
    wp = wp.reshape(out_f, in_f).T.astype(compute_dtype)          # (20736, 512)
    bp = jnp.asarray(b, jnp.float32).reshape(1, -1)               # (1, 512)
    return wp, bp


def prepare_params(raw):
    w1, b1 = _prepare_conv(raw["w1"], raw["b1"])
    w2, b2 = _prepare_conv(raw["w2"], raw["b2"])
    w3, b3 = _prepare_conv(raw["w3"], raw["b3"])
    w4, b4 = _prepare_fc_from_nchw(raw["w4"], raw["b4"], 64, 18, 18)
    return {"w1": w1, "b1": b1, "w2": w2, "b2": b2,
            "w3": w3, "b3": b3, "w4": w4, "b4": b4}


# ------------------------- deterministic init (glue) ------------------------ #

def orthogonal_init(key, shape, scale=1.0):
    """PyTorch-style orthogonal_ on weight flattened as (out, fan_in)."""
    out = shape[0]
    fan_in = int(np.prod(shape[1:]))
    n, m = max(out, fan_in), min(out, fan_in)
    a = np.asarray(jax.random.normal(key, (n, m), dtype=jnp.float32))
    q, r = np.linalg.qr(a)
    q = q * np.sign(np.diagonal(r))
    if out < fan_in:
        q = q.T
    return jnp.asarray(scale * q.reshape(shape), dtype=jnp.float32)


# --------------------------- pure-JAX f32 reference -------------------------- #

def reference_forward(raw, x_nchw):
    y = x_nchw
    for w, b, s in ((raw["w1"], raw["b1"], 3),
                    (raw["w2"], raw["b2"], 2),
                    (raw["w3"], raw["b3"], 1)):
        y = lax.conv_general_dilated(y, w, (s, s), "VALID",
                                     dimension_numbers=("NCHW", "OIHW", "NCHW"))
        y = jax.nn.relu(y + b.reshape(1, -1, 1, 1))
    y = y.reshape(y.shape[0], -1)
    return jax.nn.relu(y @ raw["w4"].T + raw["b4"])


if __name__ == "__main__":
    key = jax.random.PRNGKey(0)
    k_in, k1, k2, k3, k4 = jax.random.split(key, 5)

    raw = {
        "w1": orthogonal_init(k1, (32, 4, 7, 7)),
        "b1": jnp.zeros((32,), jnp.float32),
        "w2": orthogonal_init(k2, (64, 32, 3, 3)),
        "b2": jnp.zeros((64,), jnp.float32),
        "w3": orthogonal_init(k3, (64, 64, 3, 3)),
        "b3": jnp.zeros((64,), jnp.float32),
        "w4": orthogonal_init(k4, (512, 18 * 18 * 64)),
        "b4": jnp.zeros((512,), jnp.float32),
    }
    params = prepare_params(raw)   # offline: transpose / permute / pad / bf16 cast

    # Input spatial size 127x127 is implied by the module: conv stack 7/3, 3/2,
    # 3/1 maps 127 -> 41 -> 20 -> 18, matching fc4's 18*18*64 in_features.
    x = jax.random.normal(k_in, (2, 4, 127, 127), dtype=jnp.float32)

    fwd = jax.jit(nature_conv_body)
    out = jax.block_until_ready(fwd(params, x))
    assert out.shape == (2, 512) and out.dtype == jnp.float32
    assert bool(jnp.all(out >= 0.0))   # final ReLU

    # bf16-operand / f32-accumulate tolerance vs the f32 reference.
    ref = reference_forward(raw, x)
    err = float(jnp.max(jnp.abs(out - ref)))
    scale = float(jnp.max(jnp.abs(ref)))
    assert err <= 7.5e-2 * max(1.0, scale), (err, scale)

    print("KERNEL_OK")
</pallas_src>

<mosaic_0001>
module attributes {stable_mosaic.version = 11 : i64} {
  func.func @_mm_bias_relu_kernel(%arg0: i32, %arg1: i32, %arg2: memref<512x256xbf16, #tpu.memory_space<vmem>>, %arg3: memref<256x128xbf16, #tpu.memory_space<vmem>>, %arg4: memref<1x128xf32, #tpu.memory_space<vmem>>, %arg5: memref<512x128xbf16, #tpu.memory_space<vmem>>) attributes {dimension_semantics = [#tpu.dimension_semantics<parallel>, #tpu.dimension_semantics<parallel>], iteration_bounds = array<i64: 7, 1>, scalar_prefetch = 0 : i64, scratch_operands = 0 : i64, tpu.core_type = #tpu.core_type<tc>, window_params = [{transform_indices = @transform_0, window_bounds = array<i64: 512, 256>}, {transform_indices = @transform_1, window_bounds = array<i64: 256, 128>}, {transform_indices = @transform_2, window_bounds = array<i64: 1, 128>}, {transform_indices = @transform_3, window_bounds = array<i64: 512, 128>}]} {
    %c0 = arith.constant 0 : index
    %c0_0 = arith.constant 0 : index
    %0 = vector.load %arg2[%c0, %c0_0] : memref<512x256xbf16, #tpu.memory_space<vmem>>, vector<512x256xbf16>
    %c0_1 = arith.constant 0 : index
    %c0_2 = arith.constant 0 : index
    %1 = vector.load %arg3[%c0_1, %c0_2] : memref<256x128xbf16, #tpu.memory_space<vmem>>, vector<256x128xbf16>
    %cst = arith.constant dense<0.000000e+00> : vector<512x128xf32>
    %2 = tpu.matmul %0, %1, %cst {dimension_numbers = #tpu.dot_dimension_numbers<[1], [0], [0], [1], [0, 0, 1, 1], [], []>} : vector<512x256xbf16>, vector<256x128xbf16>, vector<512x128xf32> -> vector<512x128xf32>
    %c0_3 = arith.constant 0 : index
    %c0_4 = arith.constant 0 : index
    %3 = vector.load %arg4[%c0_3, %c0_4] : memref<1x128xf32, #tpu.memory_space<vmem>>, vector<1x128xf32>
    %4 = vector.broadcast %3 : vector<1x128xf32> to vector<512x128xf32>
    %5 = arith.addf %2, %4 : vector<512x128xf32>
    %cst_5 = arith.constant 0.000000e+00 : f32
    %6 = vector.broadcast %cst_5 : f32 to vector<512x128xf32>
    %7 = arith.maximumf %5, %6 : vector<512x128xf32>
    %8 = arith.truncf %7 : vector<512x128xf32> to vector<512x128xbf16>
    %c0_6 = arith.constant 0 : index
    %c0_7 = arith.constant 0 : index
    %9 = vector.load %arg5[%c0_6, %c0_7] : memref<512x128xbf16, #tpu.memory_space<vmem>>, vector<512x128xbf16>
    tpu.vector_store %arg5[%c0_6, %c0_7], %8 {strides = array<i32>} : memref<512x128xbf16, #tpu.memory_space<vmem>>, vector<512x128xbf16>,
    return
  }
  func.func @transform_0(%arg0: i32, %arg1: i32) -> (i32, i32) {
    %c0_i32 = arith.constant 0 : i32
    %c0_i32_0 = arith.constant 0 : i32
    return %arg0, %c0_i32 : i32, i32
  }
  func.func @transform_1(%arg0: i32, %arg1: i32) -> (i32, i32) {
    %c0_i32 = arith.constant 0 : i32
    %c0_i32_0 = arith.constant 0 : i32
    return %c0_i32, %arg1 : i32, i32
  }
  func.func @transform_2(%arg0: i32, %arg1: i32) -> (i32, i32) {
    %c0_i32 = arith.constant 0 : i32
    %c0_i32_0 = arith.constant 0 : i32
    return %c0_i32, %arg1 : i32, i32
  }
  func.func @transform_3(%arg0: i32, %arg1: i32) -> (i32, i32) {
    %c0_i32 = arith.constant 0 : i32
    return %arg0, %arg1 : i32, i32
  }
}

module attributes {stable_mosaic.version = 11 : i64} {
  func.func @_mm_bias_relu_kernel(%arg0: i32, %arg1: i32, %arg2: memref<512x384xbf16, #tpu.memory_space<vmem>>, %arg3: memref<384x128xbf16, #tpu.memory_space<vmem>>, %arg4: memref<1x128xf32, #tpu.memory_space<vmem>>, %arg5: memref<512x128xbf16, #tpu.memory_space<vmem>>) attributes {dimension_semantics = [#tpu.dimension_semantics<parallel>, #tpu.dimension_semantics<parallel>], iteration_bounds = array<i64: 2, 1>, scalar_prefetch = 0 : i64, scratch_operands = 0 : i64, tpu.core_type = #tpu.core_type<tc>, window_params = [{transform_indices = @transform_0, window_bounds = array<i64: 512, 384>}, {transform_indices = @transform_1, window_bounds = array<i64: 384, 128>}, {transform_indices = @transform_2, window_bounds = array<i64: 1, 128>}, {transform_indices = @transform_3, window_bounds = array<i64: 512, 128>}]} {
    %c0 = arith.constant 0 : index
    %c0_0 = arith.constant 0 : index
    %0 = vector.load %arg2[%c0, %c0_0] : memref<512x384xbf16, #tpu.memory_space<vmem>>, vector<512x384xbf16>
    %c0_1 = arith.constant 0 : index
    %c0_2 = arith.constant 0 : index
    %1 = vector.load %arg3[%c0_1, %c0_2] : memref<384x128xbf16, #tpu.memory_space<vmem>>, vector<384x128xbf16>
    %cst = arith.constant dense<0.000000e+00> : vector<512x128xf32>
    %2 = tpu.matmul %0, %1, %cst {dimension_numbers = #tpu.dot_dimension_numbers<[1], [0], [0], [1], [0, 0, 1, 1], [], []>} : vector<512x384xbf16>, vector<384x128xbf16>, vector<512x128xf32> -> vector<512x128xf32>
    %c0_3 = arith.constant 0 : index
    %c0_4 = arith.constant 0 : index
    %3 = vector.load %arg4[%c0_3, %c0_4] : memref<1x128xf32, #tpu.memory_space<vmem>>, vector<1x128xf32>
    %4 = vector.broadcast %3 : vector<1x128xf32> to vector<512x128xf32>
    %5 = arith.addf %2, %4 : vector<512x128xf32>
    %cst_5 = arith.constant 0.000000e+00 : f32
    %6 = vector.broadcast %cst_5 : f32 to vector<512x128xf32>
    %7 = arith.maximumf %5, %6 : vector<512x128xf32>
    %8 = arith.truncf %7 : vector<512x128xf32> to vector<512x128xbf16>
    %c0_6 = arith.constant 0 : index
    %c0_7 = arith.constant 0 : index
    %9 = vector.load %arg5[%c0_6, %c0_7] : memref<512x128xbf16, #tpu.memory_space<vmem>>, vector<512x128xbf16>
    tpu.vector_store %arg5[%c0_6, %c0_7], %8 {strides = array<i32>} : memref<512x128xbf16, #tpu.memory_space<vmem>>, vector<512x128xbf16>,
    return
  }
  func.func @transform_0(%arg0: i32, %arg1: i32) -> (i32, i32) {
    %c0_i32 = arith.constant 0 : i32
    %c0_i32_0 = arith.constant 0 : i32
    return %arg0, %c0_i32 : i32, i32
  }
  func.func @transform_1(%arg0: i32, %arg1: i32) -> (i32, i32) {
    %c0_i32 = arith.constant 0 : i32
    %c0_i32_0 = arith.constant 0 : i32
    return %c0_i32, %arg1 : i32, i32
  }
  func.func @transform_2(%arg0: i32, %arg1: i32) -> (i32, i32) {
    %c0_i32 = arith.constant 0 : i32
    %c0_i32_0 = arith.constant 0 : i32
    return %c0_i32, %arg1 : i32, i32
  }
  func.func @transform_3(%arg0: i32, %arg1: i32) -> (i32, i32) {
    %c0_i32 = arith.constant 0 : i32
    return %arg0, %arg1 : i32, i32
  }
}

module attributes {stable_mosaic.version = 11 : i64} {
  func.func @_mm_bias_relu_kernel(%arg0: i32, %arg1: i32, %arg2: memref<512x640xbf16, #tpu.memory_space<vmem>>, %arg3: memref<640x128xbf16, #tpu.memory_space<vmem>>, %arg4: memref<1x128xf32, #tpu.memory_space<vmem>>, %arg5: memref<512x128xbf16, #tpu.memory_space<vmem>>) attributes {dimension_semantics = [#tpu.dimension_semantics<parallel>, #tpu.dimension_semantics<parallel>], iteration_bounds = array<i64: 2, 1>, scalar_prefetch = 0 : i64, scratch_operands = 0 : i64, tpu.core_type = #tpu.core_type<tc>, window_params = [{transform_indices = @transform_0, window_bounds = array<i64: 512, 640>}, {transform_indices = @transform_1, window_bounds = array<i64: 640, 128>}, {transform_indices = @transform_2, window_bounds = array<i64: 1, 128>}, {transform_indices = @transform_3, window_bounds = array<i64: 512, 128>}]} {
    %c0 = arith.constant 0 : index
    %c0_0 = arith.constant 0 : index
    %0 = vector.load %arg2[%c0, %c0_0] : memref<512x640xbf16, #tpu.memory_space<vmem>>, vector<512x640xbf16>
    %c0_1 = arith.constant 0 : index
    %c0_2 = arith.constant 0 : index
    %1 = vector.load %arg3[%c0_1, %c0_2] : memref<640x128xbf16, #tpu.memory_space<vmem>>, vector<640x128xbf16>
    %cst = arith.constant dense<0.000000e+00> : vector<512x128xf32>
    %2 = tpu.matmul %0, %1, %cst {dimension_numbers = #tpu.dot_dimension_numbers<[1], [0], [0], [1], [0, 0, 1, 1], [], []>} : vector<512x640xbf16>, vector<640x128xbf16>, vector<512x128xf32> -> vector<512x128xf32>
    %c0_3 = arith.constant 0 : index
    %c0_4 = arith.constant 0 : index
    %3 = vector.load %arg4[%c0_3, %c0_4] : memref<1x128xf32, #tpu.memory_space<vmem>>, vector<1x128xf32>
    %4 = vector.broadcast %3 : vector<1x128xf32> to vector<512x128xf32>
    %5 = arith.addf %2, %4 : vector<512x128xf32>
    %cst_5 = arith.constant 0.000000e+00 : f32
    %6 = vector.broadcast %cst_5 : f32 to vector<512x128xf32>
    %7 = arith.maximumf %5, %6 : vector<512x128xf32>
    %8 = arith.truncf %7 : vector<512x128xf32> to vector<512x128xbf16>
    %c0_6 = arith.constant 0 : index
    %c0_7 = arith.constant 0 : index
    %9 = vector.load %arg5[%c0_6, %c0_7] : memref<512x128xbf16, #tpu.memory_space<vmem>>, vector<512x128xbf16>
    tpu.vector_store %arg5[%c0_6, %c0_7], %8 {strides = array<i32>} : memref<512x128xbf16, #tpu.memory_space<vmem>>, vector<512x128xbf16>,
    return
  }
  func.func @transform_0(%arg0: i32, %arg1: i32) -> (i32, i32) {
    %c0_i32 = arith.constant 0 : i32
    %c0_i32_0 = arith.constant 0 : i32
    return %arg0, %c0_i32 : i32, i32
  }
  func.func @transform_1(%arg0: i32, %arg1: i32) -> (i32, i32) {
    %c0_i32 = arith.constant 0 : i32
    %c0_i32_0 = arith.constant 0 : i32
    return %c0_i32, %arg1 : i32, i32
  }
  func.func @transform_2(%arg0: i32, %arg1: i32) -> (i32, i32) {
    %c0_i32 = arith.constant 0 : i32
    %c0_i32_0 = arith.constant 0 : i32
    return %c0_i32, %arg1 : i32, i32
  }
  func.func @transform_3(%arg0: i32, %arg1: i32) -> (i32, i32) {
    %c0_i32 = arith.constant 0 : i32
    return %arg0, %arg1 : i32, i32
  }
}

module attributes {stable_mosaic.version = 11 : i64} {
  func.func @_mm_bias_relu_acc_kernel(%arg0: i32, %arg1: i32, %arg2: i32, %arg3: memref<16x2304xbf16, #tpu.memory_space<vmem>>, %arg4: memref<2304x256xbf16, #tpu.memory_space<vmem>>, %arg5: memref<1x256xf32, #tpu.memory_space<vmem>>, %arg6: memref<16x256xf32, #tpu.memory_space<vmem>>, %arg7: memref<16x256xf32, #tpu.memory_space<vmem>>) attributes {dimension_semantics = [#tpu.dimension_semantics<parallel>, #tpu.dimension_semantics<parallel>, #tpu.dimension_semantics<arbitrary>], iteration_bounds = array<i64: 1, 2, 9>, scalar_prefetch = 0 : i64, scratch_operands = 1 : i64, tpu.core_type = #tpu.core_type<tc>, window_params = [{transform_indices = @transform_0, window_bounds = array<i64: 16, 2304>}, {transform_indices = @transform_1, window_bounds = array<i64: 2304, 256>}, {transform_indices = @transform_2, window_bounds = array<i64: 1, 256>}, {transform_indices = @transform_3, window_bounds = array<i64: 16, 256>}]} {
    %c0_i32 = arith.constant 0 : i32
    %0 = arith.cmpi eq, %arg2, %c0_i32 : i32
    %1 = arith.extui %0 : i1 to i32
    %c0_i32_0 = arith.constant 0 : i32
    %2 = arith.cmpi ne, %1, %c0_i32_0 : i32
    scf.if %2 {
      %cst_9 = arith.constant 0.000000e+00 : f32
      %12 = vector.broadcast %cst_9 : f32 to vector<16x256xf32>
      %c0_10 = arith.constant 0 : index
      %c0_11 = arith.constant 0 : index
      %13 = vector.load %arg7[%c0_10, %c0_11] : memref<16x256xf32, #tpu.memory_space<vmem>>, vector<16x256xf32>
      tpu.vector_store %arg7[%c0_10, %c0_11], %12 {strides = array<i32>} : memref<16x256xf32, #tpu.memory_space<vmem>>, vector<16x256xf32>,
    } else {
    }
    %c0 = arith.constant 0 : index
    %c0_1 = arith.constant 0 : index
    %3 = vector.load %arg7[%c0, %c0_1] : memref<16x256xf32, #tpu.memory_space<vmem>>, vector<16x256xf32>
    %c0_2 = arith.constant 0 : index
    %c0_3 = arith.constant 0 : index
    %4 = vector.load %arg3[%c0_2, %c0_3] : memref<16x2304xbf16, #tpu.memory_space<vmem>>, vector<16x2304xbf16>
    %c0_4 = arith.constant 0 : index
    %c0_5 = arith.constant 0 : index
    %5 = vector.load %arg4[%c0_4, %c0_5] : memref<2304x256xbf16, #tpu.memory_space<vmem>>, vector<2304x256xbf16>
    %cst = arith.constant dense<0.000000e+00> : vector<16x256xf32>
    %6 = tpu.matmul %4, %5, %cst {dimension_numbers = #tpu.dot_dimension_numbers<[1], [0], [0], [1], [0, 0, 1, 1], [], []>} : vector<16x2304xbf16>, vector<2304x256xbf16>, vector<16x256xf32> -> vector<16x256xf32>
    %7 = arith.addf %3, %6 : vector<16x256xf32>
    %c0_6 = arith.constant 0 : index
    %c0_7 = arith.constant 0 : index
    %8 = vector.load %arg7[%c0_6, %c0_7] : memref<16x256xf32, #tpu.memory_space<vmem>>, vector<16x256xf32>
    tpu.vector_store %arg7[%c0_6, %c0_7], %7 {strides = array<i32>} : memref<16x256xf32, #tpu.memory_space<vmem>>, vector<16x256xf32>,
    %c8_i32 = arith.constant 8 : i32
    %9 = arith.cmpi eq, %arg2, %c8_i32 : i32
    %10 = arith.extui %9 : i1 to i32
    %c0_i32_8 = arith.constant 0 : i32
    %11 = arith.cmpi ne, %10, %c0_i32_8 : i32
    scf.if %11 {
      %c0_9 = arith.constant 0 : index
      %c0_10 = arith.constant 0 : index
      %12 = vector.load %arg7[%c0_9, %c0_10] : memref<16x256xf32, #tpu.memory_space<vmem>>, vector<16x256xf32>
      %c0_11 = arith.constant 0 : index
      %c0_12 = arith.constant 0 : index
      %13 = vector.load %arg5[%c0_11, %c0_12] : memref<1x256xf32, #tpu.memory_space<vmem>>, vector<1x256xf32>
      %14 = vector.broadcast %13 : vector<1x256xf32> to vector<16x256xf32>
      %15 = arith.addf %12, %14 : vector<16x256xf32>
      %cst_13 = arith.constant 0.000000e+00 : f32
      %16 = vector.broadcast %cst_13 : f32 to vector<16x256xf32>
      %17 = arith.maximumf %15, %16 : vector<16x256xf32>
      %c0_14 = arith.constant 0 : index
      %c0_15 = arith.constant 0 : index
      %18 = vector.load %arg6[%c0_14, %c0_15] : memref<16x256xf32, #tpu.memory_space<vmem>>, vector<16x256xf32>
      tpu.vector_store %arg6[%c0_14, %c0_15], %17 {strides = array<i32>} : memref<16x256xf32, #tpu.memory_space<vmem>>, vector<16x256xf32>,
    } else {
    }
    return
  }
  func.func @transform_0(%arg0: i32, %arg1: i32, %arg2: i32) -> (i32, i32) {
    %c0_i32 = arith.constant 0 : i32
    return %arg0, %arg2 : i32, i32
  }
  func.func @transform_1(%arg0: i32, %arg1: i32, %arg2: i32) -> (i32, i32) {
    %c0_i32 = arith.constant 0 : i32
    return %arg2, %arg1 : i32, i32
  }
  func.func @transform_2(%arg0: i32, %arg1: i32, %arg2: i32) -> (i32, i32) {
    %c0_i32 = arith.constant 0 : i32
    %c0_i32_0 = arith.constant 0 : i32
    return %c0_i32, %arg1 : i32, i32
  }
  func.func @transform_3(%arg0: i32, %arg1: i32, %arg2: i32) -> (i32, i32) {
    %c0_i32 = arith.constant 0 : i32
    return %arg0, %arg1 : i32, i32
  }
}

</mosaic_0001>

<llo_original>
// kernel: nature_conv_body.4
$region0: #{nature_conv_body.4}
  #allocation0 [shape = 'u32[]', space=smem, size = 0x4, offset = 0x4, fixed_abs, tag = 'smem constant byte address 0x4 - core index']
  #allocation1 [shape = 'u32[144,128]{1,0:T(1,128)}', space=vmem, size = 0x12000, scoped, tag = 'internal scratch']
  %s0 = inlined_call_operand.vmem [shape: bf16[3584,256], index: 0, kind: input, shape index: {}]
  %s1 = inlined_call_operand.vmem [shape: bf16[256,128], index: 1, kind: input, shape index: {}]
  %s2 = inlined_call_operand.vmem [shape: f32[1,128], index: 2, kind: input, shape index: {}]
  %s3 = inlined_call_operand.vmem [shape: bf16[3584,128], index: 3, kind: output, shape index: {}]
  %s4 = sld [smem:[#allocation0]]
  $region45: #{nature_conv_body.4} parent=0
    _
  %s6 = ssub.s32 1, %s4
  %s7 = scalar_select 0, %s6, %s4
  loop: start=0, step=1, limit=9
  $region2: #{nature_conv_body.4} parent=0 // loop_pre_header
    _
  $region3: #{nature_conv_body.4} parent=0 // loop_header
    %s9 = sphi 0, %s13
    %p10 = scmp.ge.s32.totalorder %s9, 9
    %s16 = sphi 0, %s28
    %s17 = sphi 0, %s24
    %s18 = sphi 0, %s16
    %s19 = sphi 0, %s17
    %s20 = sphi 0, %s18
    %s21 = sphi 0, %s19
    %s31 = sphi 0, %s33
    %s34 = sphi 0, %s31
    %s35 = sphi 0, %s34
    %s51 = sphi 0, %s35
    %s57 = sphi 0, %s59
    %s60 = sphi 0, %s57
    %s61 = sphi 0, %s60
    %s77 = sphi 0, %s61
    %s83 = sphi 0, %s85
    %s86 = sphi 0, %s83
    %s87 = sphi 0, %s86
    %s103 = sphi 0, %s87
    %s111 = sphi 0, %s113
    %s114 = sphi 0, %s111
    %s115 = sphi 0, %s114
    %s131 = sphi 0, %s115
  $region4: #{nature_conv_body.4} parent=0 // loop_header_branch
    %12 = sbr.rel (%p10) target = $region8
  $region5: #{nature_conv_body.4} parent=0 // loop_body
    %s14 = ssub.s32 %s9, 1
    %s15 = ssub.s32 %s9, 2
    %s22 = sadd.s32 1, %s17
    %p23 = scmp.ge.s32.totalorder %s22, 1
    %s24 = scalar_select %p23, 0, %s22
    %s25 = sadd.s32 1, %s16
    %s26 = scalar_select %p23, %s25, %s16
    %p27 = scmp.ge.s32.totalorder %s26, 7
    %s28 = scalar_select %p27, 0, %s26
    %s29 = ssub.s32 %s16, %s28
    %p30 = scmp.eq.s32.totalorder %s29, 0
    %s32 = sadd.s32 %s31, 1
    %s33 = scalar_select %p30, %s31, %s32
    %p36 = pneg %p30
    %p37 = scmp.eq.s32.totalorder %s9, 6
    %p38 = por %p36, %p37
    %p39 = scmp.ne.s32.totalorder %s31, %s34
    %p40 = scmp.eq.s32.totalorder %s9, 0
    %p41 = por %p39, %p40
    %p42 = scmp.ne.s32.totalorder %s31, %s34
    %p43 = scmp.eq.s32.totalorder %s14, 6
    %p44 = por %p42, %p43
    %p45 = scmp.ne.s32.totalorder %s34, %s35
    %p46 = scmp.eq.s32.totalorder %s14, 0
    %p47 = por %p45, %p46
    %p48 = scmp.ne.s32.totalorder %s34, %s35
    %p49 = scmp.eq.s32.totalorder %s15, 6
    %p50 = por %p48, %p49
    %p52 = scmp.ne.s32.totalorder %s35, %s51
    %p53 = scmp.eq.s32.totalorder %s15, 0
    %p54 = por %p52, %p53
    %s55 = ssub.s32 %s17, %s24
    %p56 = scmp.eq.s32.totalorder %s55, 0
    %s58 = sadd.s32 %s57, 1
    %s59 = scalar_select %p56, %s57, %s58
    %p62 = pneg %p56
    %p63 = scmp.eq.s32.totalorder %s9, 6
    %p64 = por %p62, %p63
    %p65 = scmp.ne.s32.totalorder %s57, %s60
    %p66 = scmp.eq.s32.totalorder %s9, 0
    %p67 = por %p65, %p66
    %p68 = scmp.ne.s32.totalorder %s57, %s60
    %p69 = scmp.eq.s32.totalorder %s14, 6
    %p70 = por %p68, %p69
    %p71 = scmp.ne.s32.totalorder %s60, %s61
    %p72 = scmp.eq.s32.totalorder %s14, 0
    %p73 = por %p71, %p72
    %p74 = scmp.ne.s32.totalorder %s60, %s61
    %p75 = scmp.eq.s32.totalorder %s15, 6
    %p76 = por %p74, %p75
    %p78 = scmp.ne.s32.totalorder %s61, %s77
    %p79 = scmp.eq.s32.totalorder %s15, 0
    %p80 = por %p78, %p79
    %s81 = ssub.s32 %s17, %s24
    %p82 = scmp.eq.s32.totalorder %s81, 0
    %s84 = sadd.s32 %s83, 1
    %s85 = scalar_select %p82, %s83, %s84
    %p88 = pneg %p82
    %p89 = scmp.eq.s32.totalorder %s9, 6
    %p90 = por %p88, %p89
    %p91 = scmp.ne.s32.totalorder %s83, %s86
    %p92 = scmp.eq.s32.totalorder %s9, 0
    %p93 = por %p91, %p92
    %p94 = scmp.ne.s32.totalorder %s83, %s86
    %p95 = scmp.eq.s32.totalorder %s14, 6
    %p96 = por %p94, %p95
    %p97 = scmp.ne.s32.totalorder %s86, %s87
    %p98 = scmp.eq.s32.totalorder %s14, 0
    %p99 = por %p97, %p98
    %p100 = scmp.ne.s32.totalorder %s86, %s87
    %p101 = scmp.eq.s32.totalorder %s15, 6
    %p102 = por %p100, %p101
    %p104 = scmp.ne.s32.totalorder %s87, %s103
    %p105 = scmp.eq.s32.totalorder %s15, 0
    %p106 = por %p104, %p105
    %s107 = ssub.s32 %s16, %s28
    %s108 = ssub.s32 %s17, %s24
    %s109 = sor.u32 %s107, %s108
    %p110 = scmp.eq.s32.totalorder %s109, 0
    %s112 = sadd.s32 %s111, 1
    %s113 = scalar_select %p110, %s111, %s112
    %p116 = pneg %p110
    %p117 = scmp.eq.s32.totalorder %s9, 6
    %p118 = por %p116, %p117
    %p119 = scmp.ne.s32.totalorder %s111, %s114
    %p120 = scmp.eq.s32.totalorder %s9, 0
    %p121 = por %p119, %p120
    %p122 = scmp.ne.s32.totalorder %s111, %s114
    %p123 = scmp.eq.s32.totalorder %s14, 6
    %p124 = por %p122, %p123
    %p125 = scmp.ne.s32.totalorder %s114, %s115
    %p126 = scmp.eq.s32.totalorder %s14, 0
    %p127 = por %p125, %p126
    %p128 = scmp.ne.s32.totalorder %s114, %s115
    %p129 = scmp.eq.s32.totalorder %s15, 6
    %p130 = por %p128, %p129
    %p132 = scmp.ne.s32.totalorder %s115, %s131
    %p133 = scmp.eq.s32.totalorder %s15, 0
    %p134 = por %p132, %p133
    %p135 = scmp.le.s32.totalorder 1, %s9
    %p136 = scmp.lt.s32.totalorder %s9, 8
    %p137 = pnand %p135, %p136
    %p138 = pneg %p137
    // Predicated region
    $region9: #{nature_conv_body.4} parent=5 // pred_check
      _
    $region10: #{nature_conv_body.4} parent=5 // pred_check_branch
      %140 = sbr.rel (%p137) target = $region12
    $region11: #{nature_conv_body.4} parent=5 // pred_region
      %s141 = ssub.s32 %s9, 1
      // Predicated region
      $region13: #{nature_conv_body.4} parent=11 // pred_check
        %p142 = pneg %p73
      $region14: #{nature_conv_body.4} parent=11 // pred_check_branch
        %144 = sbr.rel (%p142) target = $region16
      $region15: #{nature_conv_body.4} parent=11 // pred_region
        %p145 = scmp.lt.s32.totalorder %s19, 0
        %s146 = scalar_select %p145, %s19, 0
        %s147 = smul.addr %s146, 4
        %s148 = scalar_lea.vmem %s1, %s147
      $region16: #{nature_conv_body.4} parent=11 // pred_fallthru
        _
      // Predicated region
      $region17: #{nature_conv_body.4} parent=11 // pred_check
        %p149 = pneg %p99
      $region18: #{nature_conv_body.4} parent=11 // pred_check_branch
        %151 = sbr.rel (%p149) target = $region20
      $region19: #{nature_conv_body.4} parent=11 // pred_region
        %p152 = scmp.lt.s32.totalorder %s19, 0
        %s153 = scalar_select %p152, %s19, 0
        %s154 = scalar_lea.vmem %s2, %s153
      $region20: #{nature_conv_body.4} parent=11 // pred_fallthru
        _
    $region12: #{nature_conv_body.4} parent=5 // pred_fallthru
      _
    %p155 = scmp.lt.s32.totalorder %s9, 7
    // Predicated region
    $region21: #{nature_conv_body.4} parent=5 // pred_check
      %p156 = pneg %p155
    $region22: #{nature_conv_body.4} parent=5 // pred_check_branch
      %158 = sbr.rel (%p156) target = $region24
    $region23: #{nature_conv_body.4} parent=5 // pred_region
      // Predicated region
      $region25: #{nature_conv_body.4} parent=23 // pred_check
        %p159 = pneg %p41
      $region26: #{nature_conv_body.4} parent=23 // pred_check_branch
        %161 = sbr.rel (%p159) target = $region28
      $region27: #{nature_conv_body.4} parent=23 // pred_region
        %s162 = smul.u32 64, %s16
        %p163 = scmp.lt.s32.totalorder %s162, 447
        %s164 = scalar_select %p163, %s162, 447
        %s165 = smul.addr %s164, 2
        %s166 = smul.addr %s165, 4
        %s167 = scalar_lea.vmem %s0, %s166
        %s168 = smul.u32 64, %s16
      $region28: #{nature_conv_body.4} parent=23 // pred_fallthru
        _
    $region24: #{nature_conv_body.4} parent=5 // pred_fallthru
      _
    %p169 = scmp.le.s32.totalorder 1, %s9
    %p170 = scmp.lt.s32.totalorder %s9, 8
    %p171 = pnand %p169, %p170
    %p172 = pneg %p171
    // Predicated region
    $region29: #{nature_conv_body.4} parent=5 // pred_check
      _
    $region30: #{nature_conv_body.4} parent=5 // pred_check_branch
      %174 = sbr.rel (%p171) target = $region32
    $region31: #{nature_conv_body.4} parent=5 // pred_region
      %s175 = ssub.s32 %s9, 1
      %s176 = smul.u32 64, %s18
      %p177 = scmp.lt.s32.totalorder %s176, 447
      %s178 = scalar_select %p177, %s176, 447
      %s179 = smul.addr %s178, 2
      %s180 = smul.addr %s179, 4
      %s181 = scalar_lea.vmem %s0, %s180
      %p182 = pneg %p47
      %p183 = pneg %p44
      %p184 = scmp.lt.s32.totalorder %s19, 0
      %s185 = scalar_select %p184, %s19, 0
      %s186 = smul.addr %s185, 4
      %s187 = scalar_lea.vmem %s1, %s186
      %p188 = pneg %p73
      %p189 = pneg %p70
      %p190 = scmp.lt.s32.totalorder %s19, 0
      %s191 = scalar_select %p190, %s19, 0
      %s192 = scalar_lea.vmem %s2, %s191
      %p193 = pneg %p99
      %p194 = pneg %p96
      %p195 = pneg %p127
      %p196 = pneg %p124
      %s197 = smul.u32 64, %s18
      %p198 = scmp.lt.s32.totalorder %s197, 447
      %s199 = scalar_select %p198, %s197, 447
      %p200 = scmp.lt.s32.totalorder %s19, 0
      %s201 = scalar_select %p200, %s19, 0
      %s202 = sadd.s32 %s201, %s199
      %s203 = smul.addr %s202, 4
      %s204 = scalar_lea.vmem %s3, %s203
      %s205 = smul.u32 64, %s18
      %p206 = scmp.lt.s32.totalorder %s205, 447
      %s207 = scalar_select %p206, %s205, 447
      %s208 = smul.addr %s207, 2
      %s209 = smul.addr %s208, 4
      %s210 = scalar_lea.vmem %s0, %s209
      %s211 = smul.u32 64, %s18
      %p212 = scmp.lt.s32.totalorder %s19, 0
      %s213 = scalar_select %p212, %s19, 0
      %s214 = smul.addr %s213, 4
      %s215 = scalar_lea.vmem %s1, %s214
      %p216 = scmp.lt.s32.totalorder %s19, 0
      %s217 = scalar_select %p216, %s19, 0
      %s218 = scalar_lea.vmem %s2, %s217
      %s219 = smul.u32 64, %s18
      %p220 = scmp.lt.s32.totalorder %s219, 447
      %s221 = scalar_select %p220, %s219, 447
      %p222 = scmp.lt.s32.totalorder %s19, 0
      %s223 = scalar_select %p222, %s19, 0
      %s224 = sadd.s32 %s223, %s221
      %s225 = smul.addr %s224, 4
      %s226 = scalar_lea.vmem %s3, %s225
      %s227 = smul.u32 64, %s18
      %v229 = vld [vmem:[%s210] sm:$0xff]
      %v230 = vld [vmem:[%s210 + $0x8] sm:$0xff]
      %v231 = vld [vmem:[%s210 + $0x10] sm:$0xff]
      %v232 = vld [vmem:[%s210 + $0x18] sm:$0xff]
      %v233 = vld [vmem:[%s210 + $0x20] sm:$0xff]
      %v234 = vld [vmem:[%s210 + $0x28] sm:$0xff]
      %v235 = vld [vmem:[%s210 + $0x30] sm:$0xff]
      %v236 = vld [vmem:[%s210 + $0x38] sm:$0xff]
      %v237 = vld [vmem:[%s210 + $0x40] sm:$0xff]
      %v238 = vld [vmem:[%s210 + $0x48] sm:$0xff]
      %v239 = vld [vmem:[%s210 + $0x50] sm:$0xff]
      %v240 = vld [vmem:[%s210 + $0x58] sm:$0xff]
      %v241 = vld [vmem:[%s210 + $0x60] sm:$0xff]
      %v242 = vld [vmem:[%s210 + $0x68] sm:$0xff]
      %v243 = vld [vmem:[%s210 + $0x70] sm:$0xff]
      %v244 = vld [vmem:[%s210 + $0x78] sm:$0xff]
      %v245 = vld [vmem:[%s210 + $0x80] sm:$0xff]
      %v246 = vld [vmem:[%s210 + $0x88] sm:$0xff]
      %v247 = vld [vmem:[%s210 + $0x90] sm:$0xff]
      %v248 = vld [vmem:[%s210 + $0x98] sm:$0xff]
      %v249 = vld [vmem:[%s210 + $0xa0] sm:$0xff]
      %v250 = vld [vmem:[%s210 + $0xa8] sm:$0xff]
      %v251 = vld [vmem:[%s210 + $0xb0] sm:$0xff]
      %v252 = vld [vmem:[%s210 + $0xb8] sm:$0xff]
      %v253 = vld [vmem:[%s210 + $0xc0] sm:$0xff]
      %v254 = vld [vmem:[%s210 + $0xc8] sm:$0xff]
      %v255 = vld [vmem:[%s210 + $0xd0] sm:$0xff]
      %v256 = vld [vmem:[%s210 + $0xd8] sm:$0xff]
      %v257 = vld [vmem:[%s210 + $0xe0] sm:$0xff]
      %v258 = vld [vmem:[%s210 + $0xe8] sm:$0xff]
      %v259 = vld [vmem:[%s210 + $0xf0] sm:$0xff]
      %v260 = vld [vmem:[%s210 + $0xf8] sm:$0xff]
      %v261 = vld [vmem:[%s210 + $0x100] sm:$0xff]
      %v262 = vld [vmem:[%s210 + $0x108] sm:$0xff]
      %v263 = vld [vmem:[%s210 + $0x110] sm:$0xff]
      %v264 = vld [vmem:[%s210 + $0x118] sm:$0xff]
      %v265 = vld [vmem:[%s210 + $0x120] sm:$0xff]
      %v266 = vld [vmem:[%s210 + $0x128] sm:$0xff]
      %v267 = vld [vmem:[%s210 + $0x130] sm:$0xff]
      %v268 = vld [vmem:[%s210 + $0x138] sm:$0xff]
      %v269 = vld [vmem:[%s210 + $0x140] sm:$0xff]
      %v270 = vld [vmem:[%s210 + $0x148] sm:$0xff]
      %v271 = vld [vmem:[%s210 + $0x150] sm:$0xff]
      %v272 = vld [vmem:[%s210 + $0x158] sm:$0xff]
      %v273 = vld [vmem:[%s210 + $0x160] sm:$0xff]
      %v274 = vld [vmem:[%s210 + $0x168] sm:$0xff]
      %v275 = vld [vmem:[%s210 + $0x170] sm:$0xff]
      %v276 = vld [vmem:[%s210 + $0x178] sm:$0xff]
      %v277 = vld [vmem:[%s210 + $0x180] sm:$0xff]
      %v278 = vld [vmem:[%s210 + $0x188] sm:$0xff]
      %v279 = vld [vmem:[%s210 + $0x190] sm:$0xff]
      %v280 = vld [vmem:[%s210 + $0x198] sm:$0xff]
      %v281 = vld [vmem:[%s210 + $0x1a0] sm:$0xff]
      %v282 = vld [vmem:[%s210 + $0x1a8] sm:$0xff]
      %v283 = vld [vmem:[%s210 + $0x1b0] sm:$0xff]
      %v284 = vld [vmem:[%s210 + $0x1b8] sm:$0xff]
      %v285 = vld [vmem:[%s210 + $0x1c0] sm:$0xff]
      %v286 = vld [vmem:[%s210 + $0x1c8] sm:$0xff]
      %v287 = vld [vmem:[%s210 + $0x1d0] sm:$0xff]
      %v288 = vld [vmem:[%s210 + $0x1d8] sm:$0xff]
      %v289 = vld [vmem:[%s210 + $0x1e0] sm:$0xff]
      %v290 = vld [vmem:[%s210 + $0x1e8] sm:$0xff]
      %v291 = vld [vmem:[%s210 + $0x1f0] sm:$0xff]
      %v292 = vld [vmem:[%s210 + $0x1f8] sm:$0xff]
      %v293 = vld [vmem:[%s215] sm:$0xf]
      %v294 = vld [vmem:[%s215 + $0x4] sm:$0xf]
      %v295 = vld [vmem:[%s215 + $0x8] sm:$0xf]
      %v296 = vld [vmem:[%s215 + $0xc] sm:$0xf]
      %v297 = vld [vmem:[%s215 + $0x10] sm:$0xf]
      %v298 = vld [vmem:[%s215 + $0x14] sm:$0xf]
      %v299 = vld [vmem:[%s215 + $0x18] sm:$0xf]
      %v300 = vld [vmem:[%s215 + $0x1c] sm:$0xf]
      %v301 = vld [vmem:[%s215 + $0x20] sm:$0xf]
      %v302 = vld [vmem:[%s215 + $0x24] sm:$0xf]
      %v303 = vld [vmem:[%s215 + $0x28] sm:$0xf]
      %v304 = vld [vmem:[%s215 + $0x2c] sm:$0xf]
      %v305 = vld [vmem:[%s215 + $0x30] sm:$0xf]
      %v306 = vld [vmem:[%s215 + $0x34] sm:$0xf]
      %v307 = vld [vmem:[%s215 + $0x38] sm:$0xf]
      %v308 = vld [vmem:[%s215 + $0x3c] sm:$0xf]
      %v309 = vld [vmem:[%s215 + $0x40] sm:$0xf]
      %v310 = vld [vmem:[%s215 + $0x44] sm:$0xf]
      %v311 = vld [vmem:[%s215 + $0x48] sm:$0xf]
      %v312 = vld [vmem:[%s215 + $0x4c] sm:$0xf]
      %v313 = vld [vmem:[%s215 + $0x50] sm:$0xf]
      %v314 = vld [vmem:[%s215 + $0x54] sm:$0xf]
      %v315 = vld [vmem:[%s215 + $0x58] sm:$0xf]
      %v316 = vld [vmem:[%s215 + $0x5c] sm:$0xf]
      %v317 = vld [vmem:[%s215 + $0x60] sm:$0xf]
      %v318 = vld [vmem:[%s215 + $0x64] sm:$0xf]
      %v319 = vld [vmem:[%s215 + $0x68] sm:$0xf]
      %v320 = vld [vmem:[%s215 + $0x6c] sm:$0xf]
      %v321 = vld [vmem:[%s215 + $0x70] sm:$0xf]
      %v322 = vld [vmem:[%s215 + $0x74] sm:$0xf]
      %v323 = vld [vmem:[%s215 + $0x78] sm:$0xf]
      %v324 = vld [vmem:[%s215 + $0x7c] sm:$0xf]
      %v325 = vld [vmem:[%s218] sm:$0x1]
      %v327 = vlaneseq
      %v328 = vshrl.u32 %v327, 7
      %v329 = vsub.s32 0, %v328
      %v330 = vrot.slane %v325, %v329
      %v396 = vunpack.c.l.b16 %v229
      %v397 = vunpack.c.h.b16 %v229
      %v398 = vunpack.c.l.b16 %v230
      %v399 = vunpack.c.h.b16 %v230
      %v400 = vunpack.c.l.b16 %v231
      %v401 = vunpack.c.h.b16 %v231
      %v402 = vunpack.c.l.b16 %v232
      %v403 = vunpack.c.h.b16 %v232
      %v404 = vunpack.c.l.b16 %v233
      %v405 = vunpack.c.h.b16 %v233
      %v406 = vunpack.c.l.b16 %v234
      %v407 = vunpack.c.h.b16 %v234
      %v408 = vunpack.c.l.b16 %v235
      %v409 = vunpack.c.h.b16 %v235
      %v410 = vunpack.c.l.b16 %v236
      %v411 = vunpack.c.h.b16 %v236
      %v412 = vunpack.c.l.b16 %v237
      %v413 = vunpack.c.h.b16 %v237
      %v414 = vunpack.c.l.b16 %v238
      %v415 = vunpack.c.h.b16 %v238
      %v416 = vunpack.c.l.b16 %v239
      %v417 = vunpack.c.h.b16 %v239
      %v418 = vunpack.c.l.b16 %v240
      %v419 = vunpack.c.h.b16 %v240
      %v420 = vunpack.c.l.b16 %v241
      %v421 = vunpack.c.h.b16 %v241
      %v422 = vunpack.c.l.b16 %v242
      %v423 = vunpack.c.h.b16 %v242
      %v424 = vunpack.c.l.b16 %v243
      %v425 = vunpack.c.h.b16 %v243
      %v426 = vunpack.c.l.b16 %v244
      %v427 = vunpack.c.h.b16 %v244
      %v428 = vunpack.c.l.b16 %v245
      %v429 = vunpack.c.h.b16 %v245
      %v430 = vunpack.c.l.b16 %v246
      %v431 = vunpack.c.h.b16 %v246
      %v432 = vunpack.c.l.b16 %v247
      %v433 = vunpack.c.h.b16 %v247
      %v434 = vunpack.c.l.b16 %v248
      %v435 = vunpack.c.h.b16 %v248
      %v436 = vunpack.c.l.b16 %v249
      %v437 = vunpack.c.h.b16 %v249
      %v438 = vunpack.c.l.b16 %v250
      %v439 = vunpack.c.h.b16 %v250
      %v440 = vunpack.c.l.b16 %v251
      %v441 = vunpack.c.h.b16 %v251
      %v442 = vunpack.c.l.b16 %v252
      %v443 = vunpack.c.h.b16 %v252
      %v444 = vunpack.c.l.b16 %v253
      %v445 = vunpack.c.h.b16 %v253
      %v446 = vunpack.c.l.b16 %v254
      %v447 = vunpack.c.h.b16 %v254
      %v448 = vunpack.c.l.b16 %v255
      %v449 = vunpack.c.h.b16 %v255
      %v450 = vunpack.c.l.b16 %v256
      %v451 = vunpack.c.h.b16 %v256
      %v452 = vunpack.c.l.b16 %v257
      %v453 = vunpack.c.h.b16 %v257
      %v454 = vunpack.c.l.b16 %v258
      %v455 = vunpack.c.h.b16 %v258
      %v456 = vunpack.c.l.b16 %v259
      %v457 = vunpack.c.h.b16 %v259
      %v458 = vunpack.c.l.b16 %v260
      %v459 = vunpack.c.h.b16 %v260
      %v460 = vunpack.c.l.b16 %v261
      %v461 = vunpack.c.h.b16 %v261
      %v462 = vunpack.c.l.b16 %v262
      %v463 = vunpack.c.h.b16 %v262
      %v464 = vunpack.c.l.b16 %v263
      %v465 = vunpack.c.h.b16 %v263
      %v466 = vunpack.c.l.b16 %v264
      %v467 = vunpack.c.h.b16 %v264
      %v468 = vunpack.c.l.b16 %v265
      %v469 = vunpack.c.h.b16 %v265
      %v470 = vunpack.c.l.b16 %v266
      %v471 = vunpack.c.h.b16 %v266
      %v472 = vunpack.c.l.b16 %v267
      %v473 = vunpack.c.h.b16 %v267
      %v474 = vunpack.c.l.b16 %v268
      %v475 = vunpack.c.h.b16 %v268
      %v476 = vunpack.c.l.b16 %v269
      %v477 = vunpack.c.h.b16 %v269
      %v478 = vunpack.c.l.b16 %v270
      %v479 = vunpack.c.h.b16 %v270
      %v480 = vunpack.c.l.b16 %v271
      %v481 = vunpack.c.h.b16 %v271
      %v482 = vunpack.c.l.b16 %v272
      %v483 = vunpack.c.h.b16 %v272
      %v484 = vunpack.c.l.b16 %v273
      %v485 = vunpack.c.h.b16 %v273
      %v486 = vunpack.c.l.b16 %v274
      %v487 = vunpack.c.h.b16 %v274
      %v488 = vunpack.c.l.b16 %v275
      %v489 = vunpack.c.h.b16 %v275
      %v490 = vunpack.c.l.b16 %v276
      %v491 = vunpack.c.h.b16 %v276
      %v492 = vunpack.c.l.b16 %v277
      %v493 = vunpack.c.h.b16 %v277
      %v494 = vunpack.c.l.b16 %v278
      %v495 = vunpack.c.h.b16 %v278
      %v496 = vunpack.c.l.b16 %v279
      %v497 = vunpack.c.h.b16 %v279
      %v498 = vunpack.c.l.b16 %v280
      %v499 = vunpack.c.h.b16 %v280
      %v500 = vunpack.c.l.b16 %v281
      %v501 = vunpack.c.h.b16 %v281
      %v502 = vunpack.c.l.b16 %v282
      %v503 = vunpack.c.h.b16 %v282
      %v504 = vunpack.c.l.b16 %v283
      %v505 = vunpack.c.h.b16 %v283
      %v506 = vunpack.c.l.b16 %v284
      %v507 = vunpack.c.h.b16 %v284
      %v508 = vunpack.c.l.b16 %v285
      %v509 = vunpack.c.h.b16 %v285
      %v510 = vunpack.c.l.b16 %v286
      %v511 = vunpack.c.h.b16 %v286
      %v512 = vunpack.c.l.b16 %v287
      %v513 = vunpack.c.h.b16 %v287
      %v514 = vunpack.c.l.b16 %v288
      %v515 = vunpack.c.h.b16 %v288
      %v516 = vunpack.c.l.b16 %v289
      %v517 = vunpack.c.h.b16 %v289
      %v518 = vunpack.c.l.b16 %v290
      %v519 = vunpack.c.h.b16 %v290
      %v520 = vunpack.c.l.b16 %v291
      %v521 = vunpack.c.h.b16 %v291
      %v522 = vunpack.c.l.b16 %v292
      %v523 = vunpack.c.h.b16 %v292
      %v524 = vpack.c.b16 %v398, %v396
      %v525 = vpack.c.b16 %v399, %v397
      %v526 = vpack.c.b16 %v402, %v400
      %v527 = vpack.c.b16 %v403, %v401
      %v528 = vpack.c.b16 %v406, %v404
      %v529 = vpack.c.b16 %v407, %v405
      %v530 = vpack.c.b16 %v410, %v408
      %v531 = vpack.c.b16 %v411, %v409
      %v532 = vpack.c.b16 %v414, %v412
      %v533 = vpack.c.b16 %v415, %v413
      %v534 = vpack.c.b16 %v418, %v416
      %v535 = vpack.c.b16 %v419, %v417
      %v536 = vpack.c.b16 %v422, %v420
      %v537 = vpack.c.b16 %v423, %v421
      %v538 = vpack.c.b16 %v426, %v424
      %v539 = vpack.c.b16 %v427, %v425
      %v540 = vpack.c.b16 %v430, %v428
      %v541 = vpack.c.b16 %v431, %v429
      %v542 = vpack.c.b16 %v434, %v432
      %v543 = vpack.c.b16 %v435, %v433
      %v544 = vpack.c.b16 %v438, %v436
      %v545 = vpack.c.b16 %v439, %v437
      %v546 = vpack.c.b16 %v442, %v440
      %v547 = vpack.c.b16 %v443, %v441
      %v548 = vpack.c.b16 %v446, %v444
      %v549 = vpack.c.b16 %v447, %v445
      %v550 = vpack.c.b16 %v450, %v448
      %v551 = vpack.c.b16 %v451, %v449
      %v552 = vpack.c.b16 %v454, %v452
      %v553 = vpack.c.b16 %v455, %v453
      %v554 = vpack.c.b16 %v458, %v456
      %v555 = vpack.c.b16 %v459, %v457
      %v556 = vpack.c.b16 %v462, %v460
      %v557 = vpack.c.b16 %v463, %v461
      %v558 = vpack.c.b16 %v466, %v464
      %v559 = vpack.c.b16 %v467, %v465
      %v560 = vpack.c.b16 %v470, %v468
      %v561 = vpack.c.b16 %v471, %v469
      %v562 = vpack.c.b16 %v474, %v472
      %v563 = vpack.c.b16 %v475, %v473
      %v564 = vpack.c.b16 %v478, %v476
      %v565 = vpack.c.b16 %v479, %v477
      %v566 = vpack.c.b16 %v482, %v480
      %v567 = vpack.c.b16 %v483, %v481
      %v568 = vpack.c.b16 %v486, %v484
      %v569 = vpack.c.b16 %v487, %v485
      %v570 = vpack.c.b16 %v490, %v488
      %v571 = vpack.c.b16 %v491, %v489
      %v572 = vpack.c.b16 %v494, %v492
      %v573 = vpack.c.b16 %v495, %v493
      %v574 = vpack.c.b16 %v498, %v496
      %v575 = vpack.c.b16 %v499, %v497
      %v576 = vpack.c.b16 %v502, %v500
      %v577 = vpack.c.b16 %v503, %v501
      %v578 = vpack.c.b16 %v506, %v504
      %v579 = vpack.c.b16 %v507, %v505
      %v580 = vpack.c.b16 %v510, %v508
      %v581 = vpack.c.b16 %v511, %v509
      %v582 = vpack.c.b16 %v514, %v512
      %v583 = vpack.c.b16 %v515, %v513
      %v584 = vpack.c.b16 %v518, %v516
      %v585 = vpack.c.b16 %v519, %v517
      %v586 = vpack.c.b16 %v522, %v520
      %v587 = vpack.c.b16 %v523, %v521
      %v684 = vunpack.c.l.b16 %v293
      %v685 = vunpack.c.l.b16 %v294
      %v686 = vunpack.c.l.b16 %v295
      %v687 = vunpack.c.l.b16 %v296
      %v688 = vunpack.c.l.b16 %v297
      %v689 = vunpack.c.l.b16 %v298
      %v690 = vunpack.c.l.b16 %v299
      %v691 = vunpack.c.l.b16 %v300
      %v692 = vunpack.c.l.b16 %v301
      %v693 = vunpack.c.l.b16 %v302
      %v694 = vunpack.c.l.b16 %v303
      %v695 = vunpack.c.l.b16 %v304
      %v696 = vunpack.c.l.b16 %v305
      %v697 = vunpack.c.l.b16 %v306
      %v698 = vunpack.c.l.b16 %v307
      %v699 = vunpack.c.l.b16 %v308
      %v700 = vunpack.c.l.b16 %v309
      %v701 = vunpack.c.l.b16 %v310
      %v702 = vunpack.c.l.b16 %v311
      %v703 = vunpack.c.l.b16 %v312
      %v704 = vunpack.c.l.b16 %v313
      %v705 = vunpack.c.l.b16 %v314
      %v706 = vunpack.c.l.b16 %v315
      %v707 = vunpack.c.l.b16 %v316
      %v708 = vunpack.c.l.b16 %v317
      %v709 = vunpack.c.l.b16 %v318
      %v710 = vunpack.c.l.b16 %v319
      %v711 = vunpack.c.l.b16 %v320
      %v712 = vunpack.c.l.b16 %v321
      %v713 = vunpack.c.l.b16 %v322
      %v714 = vunpack.c.l.b16 %v323
      %v715 = vunpack.c.l.b16 %v324
      %v716 = vpack.c.b16 %v685, %v684
      %v717 = vpack.c.b16 %v687, %v686
      %v718 = vpack.c.b16 %v689, %v688
      %v719 = vpack.c.b16 %v691, %v690
      %v720 = vpack.c.b16 %v693, %v692
      %v721 = vpack.c.b16 %v695, %v694
      %v722 = vpack.c.b16 %v697, %v696
      %v723 = vpack.c.b16 %v699, %v698
      %v724 = vpack.c.b16 %v701, %v700
      %v725 = vpack.c.b16 %v703, %v702
      %v726 = vpack.c.b16 %v705, %v704
      %v727 = vpack.c.b16 %v707, %v706
      %v728 = vpack.c.b16 %v709, %v708
      %v729 = vpack.c.b16 %v711, %v710
      %v730 = vpack.c.b16 %v713, %v712
      %v731 = vpack.c.b16 %v715, %v714
      %748 = vmatprep.subr.bf16.mxu0 0
      %749 = vmatpush1.bf16.msra.mxu0 %v723
      %750 = vmatprep.subr.bf16.mxu0 0
      %751 = vmatpush1.bf16.msra.mxu0 %v722
      %752 = vmatprep.subr.bf16.mxu0 0
      %753 = vmatpush1.bf16.msra.mxu0 %v721
      %754 = vmatprep.subr.bf16.mxu0 0
      %755 = vmatpush1.bf16.msra.mxu0 %v720
      %756 = vmatprep.subr.bf16.mxu0 0
      %757 = vmatpush1.bf16.msra.mxu0 %v719
      %758 = vmatprep.subr.bf16.mxu0 0
      %759 = vmatpush1.bf16.msra.mxu0 %v718
      %760 = vmatprep.subr.bf16.mxu0 0
      %761 = vmatpush1.bf16.msra.mxu0 %v717
      %762 = vmatprep.subr.bf16.mxu0 0
      %763 = vmatpush1.bf16.msra.mxu0 %v716
      %764 = vmatprep.subr.bf16.mxu0 0
      %765 = vmatpush2.bf16.msra.mxu0 %v731
      %766 = vmatprep.subr.bf16.mxu0 0
      %767 = vmatpush2.bf16.msra.mxu0 %v730
      %768 = vmatprep.subr.bf16.mxu0 0
      %769 = vmatpush2.bf16.msra.mxu0 %v729
      %770 = vmatprep.subr.bf16.mxu0 0
      %771 = vmatpush2.bf16.msra.mxu0 %v728
      %772 = vmatprep.subr.bf16.mxu0 0
      %773 = vmatpush2.bf16.msra.mxu0 %v727
      %774 = vmatprep.subr.bf16.mxu0 0
      %775 = vmatpush2.bf16.msra.mxu0 %v726
      %776 = vmatprep.subr.bf16.mxu0 0
      %777 = vmatpush2.bf16.msra.mxu0 %v725
      %778 = vmatprep.subr.bf16.mxu0 0
      %779 = vmatpush2.bf16.msra.mxu0 %v724
      %780 = vmatprep.mubr.bf16.mxu0 %v525
      %781 = vmatmul.mubr.bf16.gmra.mxu0 %v524
      %v782 = vpop.f32.mrf.mxu0
      %v783 = vadd.f32 %v330, %v782
      %v784 = vpop.f32.mrf.mxu0
      %v785 = vpop.f32.mrf.mxu0
      %v786 = vadd.f32 %v330, %v785
      %v787 = vpop.f32.mrf.mxu0
      %788 = vmatprep.mubr.bf16.mxu0 %v527
      %789 = vmatmul.mubr.bf16.gmra.mxu0 %v526
      %v790 = vpop.f32.mrf.mxu0
      %v791 = vadd.f32 %v330, %v790
      %v792 = vpop.f32.mrf.mxu0
      %v793 = vpop.f32.mrf.mxu0
      %v794 = vadd.f32 %v330, %v793
      %v795 = vpop.f32.mrf.mxu0
      %796 = vmatprep.mubr.bf16.mxu0 %v529
      %797 = vmatmul.mubr.bf16.gmra.mxu0 %v528
      %v798 = vpop.f32.mrf.mxu0
      %v799 = vadd.f32 %v330, %v798
      %v800 = vpop.f32.mrf.mxu0
      %v801 = vpop.f32.mrf.mxu0
      %v802 = vadd.f32 %v330, %v801
      %v803 = vpop.f32.mrf.mxu0
      %804 = vmatprep.mubr.bf16.mxu0 %v531
      %805 = vmatmul.mubr.bf16.gmra.mxu0 %v530
      %v806 = vpop.f32.mrf.mxu0
      %v807 = vadd.f32 %v330, %v806
      %v808 = vpop.f32.mrf.mxu0
      %v809 = vpop.f32.mrf.mxu0
      %v810 = vadd.f32 %v330, %v809
      %v811 = vpop.f32.mrf.mxu0
      %812 = vmatprep.mubr.bf16.mxu0 %v533
      %813 = vmatmul.mubr.bf16.gmra.mxu0 %v532
      %v814 = vpop.f32.mrf.mxu0
      %v815 = vadd.f32 %v330, %v814
      %v816 = vpop.f32.mrf.mxu0
      %v817 = vpop.f32.mrf.mxu0
      %v818 = vadd.f32 %v330, %v817
      %v819 = vpop.f32.mrf.mxu0
      %820 = vmatprep.mubr.bf16.mxu0 %v535
      %821 = vmatmul.mubr.bf16.gmra.mxu0 %v534
      %v822 = vpop.f32.mrf.mxu0
      %v823 = vadd.f32 %v330, %v822
      %v824 = vpop.f32.mrf.mxu0
      %v825 = vpop.f32.mrf.mxu0
      %v826 = vadd.f32 %v330, %v825
      %v827 = vpop.f32.mrf.mxu0
      %828 = vmatprep.mubr.bf16.mxu0 %v537
      %829 = vmatmul.mubr.bf16.gmra.mxu0 %v536
      %v830 = vpop.f32.mrf.mxu0
      %v831 = vadd.f32 %v330, %v830
      %v832 = vpop.f32.mrf.mxu0
      %v833 = vpop.f32.mrf.mxu0
      %v834 = vadd.f32 %v330, %v833
      %v835 = vpop.f32.mrf.mxu0
      %836 = vmatprep.mubr.bf16.mxu0 %v539
      %837 = vmatmul.mubr.bf16.gmra.mxu0 %v538
      %v838 = vpop.f32.mrf.mxu0
      %v839 = vadd.f32 %v330, %v838
      %v840 = vpop.f32.mrf.mxu0
      %v841 = vpop.f32.mrf.mxu0
      %v842 = vadd.f32 %v330, %v841
      %v843 = vpop.f32.mrf.mxu0
      %844 = vmatprep.mubr.bf16.mxu0 %v541
      %845 = vmatmul.mubr.bf16.gmra.mxu0 %v540
      %v846 = vpop.f32.mrf.mxu0
      %v847 = vadd.f32 %v330, %v846
      %v848 = vpop.f32.mrf.mxu0
      %v849 = vpop.f32.mrf.mxu0
      %v850 = vadd.f32 %v330, %v849
      %v851 = vpop.f32.mrf.mxu0
      %852 = vmatprep.mubr.bf16.mxu0 %v543
      %853 = vmatmul.mubr.bf16.gmra.mxu0 %v542
      %v854 = vpop.f32.mrf.mxu0
      %v855 = vadd.f32 %v330, %v854
      %v856 = vpop.f32.mrf.mxu0
      %v857 = vpop.f32.mrf.mxu0
      %v858 = vadd.f32 %v330, %v857
      %v859 = vpop.f32.mrf.mxu0
      %860 = vmatprep.mubr.bf16.mxu0 %v545
      %861 = vmatmul.mubr.bf16.gmra.mxu0 %v544
      %v862 = vpop.f32.mrf.mxu0
      %v863 = vadd.f32 %v330, %v862
      %v864 = vpop.f32.mrf.mxu0
      %v865 = vpop.f32.mrf.mxu0
      %v866 = vadd.f32 %v330, %v865
      %v867 = vpop.f32.mrf.mxu0
      %868 = vmatprep.mubr.bf16.mxu0 %v547
      %869 = vmatmul.mubr.bf16.gmra.mxu0 %v546
      %v870 = vpop.f32.mrf.mxu0
      %v871 = vadd.f32 %v330, %v870
      %v872 = vpop.f32.mrf.mxu0
      %v873 = vpop.f32.mrf.mxu0
      %v874 = vadd.f32 %v330, %v873
      %v875 = vpop.f32.mrf.mxu0
      %876 = vmatprep.mubr.bf16.mxu0 %v549
      %877 = vmatmul.mubr.bf16.gmra.mxu0 %v548
      %v878 = vpop.f32.mrf.mxu0
      %v879 = vadd.f32 %v330, %v878
      %v880 = vpop.f32.mrf.mxu0
      %v881 = vpop.f32.mrf.mxu0
      %v882 = vadd.f32 %v330, %v881
      %v883 = vpop.f32.mrf.mxu0
      %884 = vmatprep.mubr.bf16.mxu0 %v551
      %885 = vmatmul.mubr.bf16.gmra.mxu0 %v550
      %v886 = vpop.f32.mrf.mxu0
      %v887 = vadd.f32 %v330, %v886
      %v888 = vpop.f32.mrf.mxu0
      %v889 = vpop.f32.mrf.mxu0
      %v890 = vadd.f32 %v330, %v889
      %v891 = vpop.f32.mrf.mxu0
      %892 = vmatprep.mubr.bf16.mxu0 %v553
      %893 = vmatmul.mubr.bf16.gmra.mxu0 %v552
      %v894 = vpop.f32.mrf.mxu0
      %v895 = vadd.f32 %v330, %v894
      %v896 = vpop.f32.mrf.mxu0
      %v897 = vpop.f32.mrf.mxu0
      %v898 = vadd.f32 %v330, %v897
      %v899 = vpop.f32.mrf.mxu0
      %900 = vmatprep.mubr.bf16.mxu0 %v555
      %901 = vmatmul.mubr.bf16.gmra.mxu0 %v554
      %v902 = vpop.f32.mrf.mxu0
      %v903 = vadd.f32 %v330, %v902
      %v904 = vpop.f32.mrf.mxu0
      %v905 = vpop.f32.mrf.mxu0
      %v906 = vadd.f32 %v330, %v905
      %v907 = vpop.f32.mrf.mxu0
      %908 = vmatprep.mubr.bf16.mxu0 %v557
      %909 = vmatmul.mubr.bf16.gmra.mxu0 %v556
      %v910 = vpop.f32.mrf.mxu0
      %v911 = vadd.f32 %v330, %v910
      %v912 = vpop.f32.mrf.mxu0
      %v913 = vpop.f32.mrf.mxu0
      %v914 = vadd.f32 %v330, %v913
      %v915 = vpop.f32.mrf.mxu0
      %916 = vmatprep.mubr.bf16.mxu0 %v559
      %917 = vmatmul.mubr.bf16.gmra.mxu0 %v558
      %v918 = vpop.f32.mrf.mxu0
      %v919 = vadd.f32 %v330, %v918
      %v920 = vpop.f32.mrf.mxu0
      %v921 = vpop.f32.mrf.mxu0
      %v922 = vadd.f32 %v330, %v921
      %v923 = vpop.f32.mrf.mxu0
      %924 = vmatprep.mubr.bf16.mxu0 %v561
      %925 = vmatmul.mubr.bf16.gmra.mxu0 %v560
      %v926 = vpop.f32.mrf.mxu0
      %v927 = vadd.f32 %v330, %v926
      %v928 = vpop.f32.mrf.mxu0
      %v929 = vpop.f32.mrf.mxu0
      %v930 = vadd.f32 %v330, %v929
      %v931 = vpop.f32.mrf.mxu0
      %932 = vmatprep.mubr.bf16.mxu0 %v563
      %933 = vmatmul.mubr.bf16.gmra.mxu0 %v562
      %v934 = vpop.f32.mrf.mxu0
      %v935 = vadd.f32 %v330, %v934
      %v936 = vpop.f32.mrf.mxu0
      %v937 = vpop.f32.mrf.mxu0
      %v938 = vadd.f32 %v330, %v937
      %v939 = vpop.f32.mrf.mxu0
      %940 = vmatprep.mubr.bf16.mxu0 %v565
      %941 = vmatmul.mubr.bf16.gmra.mxu0 %v564
      %v942 = vpop.f32.mrf.mxu0
      %v943 = vadd.f32 %v330, %v942
      %v944 = vpop.f32.mrf.mxu0
      %v945 = vpop.f32.mrf.mxu0
      %v946 = vadd.f32 %v330, %v945
      %v947 = vpop.f32.mrf.mxu0
      %948 = vmatprep.mubr.bf16.mxu0 %v567
      %949 = vmatmul.mubr.bf16.gmra.mxu0 %v566
      %v950 = vpop.f32.mrf.mxu0
      %v951 = vadd.f32 %v330, %v950
      %v952 = vpop.f32.mrf.mxu0
      %v953 = vpop.f32.mrf.mxu0
      %v954 = vadd.f32 %v330, %v953
      %v955 = vpop.f32.mrf.mxu0
      %956 = vmatprep.mubr.bf16.mxu0 %v569
      %957 = vmatmul.mubr.bf16.gmra.mxu0 %v568
      %v958 = vpop.f32.mrf.mxu0
      %v959 = vadd.f32 %v330, %v958
      %v960 = vpop.f32.mrf.mxu0
      %v961 = vpop.f32.mrf.mxu0
      %v962 = vadd.f32 %v330, %v961
      %v963 = vpop.f32.mrf.mxu0
      %964 = vmatprep.mubr.bf16.mxu0 %v571
      %965 = vmatmul.mubr.bf16.gmra.mxu0 %v570
      %v966 = vpop.f32.mrf.mxu0
      %v967 = vadd.f32 %v330, %v966
      %v968 = vpop.f32.mrf.mxu0
      %v969 = vpop.f32.mrf.mxu0
      %v970 = vadd.f32 %v330, %v969
      %v971 = vpop.f32.mrf.mxu0
      %972 = vmatprep.mubr.bf16.mxu0 %v573
      %973 = vmatmul.mubr.bf16.gmra.mxu0 %v572
      %v974 = vpop.f32.mrf.mxu0
      %v975 = vadd.f32 %v330, %v974
      %v976 = vpop.f32.mrf.mxu0
      %v977 = vpop.f32.mrf.mxu0
      %v978 = vadd.f32 %v330, %v977
      %v979 = vpop.f32.mrf.mxu0
      %980 = vmatprep.mubr.bf16.mxu0 %v575
      %981 = vmatmul.mubr.bf16.gmra.mxu0 %v574
      %v982 = vpop.f32.mrf.mxu0
      %v983 = vadd.f32 %v330, %v982
      %v984 = vpop.f32.mrf.mxu0
      %v985 = vpop.f32.mrf.mxu0
      %v986 = vadd.f32 %v330, %v985
      %v987 = vpop.f32.mrf.mxu0
      %988 = vmatprep.mubr.bf16.mxu0 %v577
      %989 = vmatmul.mubr.bf16.gmra.mxu0 %v576
      %v990 = vpop.f32.mrf.mxu0
      %v991 = vadd.f32 %v330, %v990
      %v992 = vpop.f32.mrf.mxu0
      %v993 = vpop.f32.mrf.mxu0
      %v994 = vadd.f32 %v330, %v993
      %v995 = vpop.f32.mrf.mxu0
      %996 = vmatprep.mubr.bf16.mxu0 %v579
      %997 = vmatmul.mubr.bf16.gmra.mxu0 %v578
      %v998 = vpop.f32.mrf.mxu0
      %v999 = vadd.f32 %v330, %v998
      %v1000 = vpop.f32.mrf.mxu0
      %v1001 = vpop.f32.mrf.mxu0
      %v1002 = vadd.f32 %v330, %v1001
      %v1003 = vpop.f32.mrf.mxu0
      %1004 = vmatprep.mubr.bf16.mxu0 %v581
      %1005 = vmatmul.mubr.bf16.gmra.mxu0 %v580
      %v1006 = vpop.f32.mrf.mxu0
      %v1007 = vadd.f32 %v330, %v1006
      %v1008 = vpop.f32.mrf.mxu0
      %v1009 = vpop.f32.mrf.mxu0
      %v1010 = vadd.f32 %v330, %v1009
      %v1011 = vpop.f32.mrf.mxu0
      %1012 = vmatprep.mubr.bf16.mxu0 %v583
      %1013 = vmatmul.mubr.bf16.gmra.mxu0 %v582
      %v1014 = vpop.f32.mrf.mxu0
      %v1015 = vadd.f32 %v330, %v1014
      %v1016 = vpop.f32.mrf.mxu0
      %v1017 = vpop.f32.mrf.mxu0
      %v1018 = vadd.f32 %v330, %v1017
      %v1019 = vpop.f32.mrf.mxu0
      %1020 = vmatprep.mubr.bf16.mxu0 %v585
      %1021 = vmatmul.mubr.bf16.gmra.mxu0 %v584
      %v1022 = vpop.f32.mrf.mxu0
      %v1023 = vadd.f32 %v330, %v1022
      %v1024 = vpop.f32.mrf.mxu0
      %v1025 = vpop.f32.mrf.mxu0
      %v1026 = vadd.f32 %v330, %v1025
      %v1027 = vpop.f32.mrf.mxu0
      %1028 = vmatprep.mubr.bf16.mxu0 %v587
      %1029 = vmatmul.mubr.bf16.gmra.mxu0 %v586
      %v1030 = vpop.f32.mrf.mxu0
      %v1031 = vadd.f32 %v330, %v1030
      %v1032 = vpop.f32.mrf.mxu0
      %v1033 = vpop.f32.mrf.mxu0
      %v1034 = vadd.f32 %v330, %v1033
      %v1035 = vpop.f32.mrf.mxu0
      %1036 = vdwg.mxu0
      %v1037 = vmax.f32 %v783, 0.0
      %v1038 = vmax.f32 %v786, 0.0
      %v1039 = vmax.f32 %v791, 0.0
      %v1040 = vmax.f32 %v794, 0.0
      %v1041 = vmax.f32 %v799, 0.0
      %v1042 = vmax.f32 %v802, 0.0
      %v1043 = vmax.f32 %v807, 0.0
      %v1044 = vmax.f32 %v810, 0.0
      %v1045 = vmax.f32 %v815, 0.0
      %v1046 = vmax.f32 %v818, 0.0
      %v1047 = vmax.f32 %v823, 0.0
      %v1048 = vmax.f32 %v826, 0.0
      %v1049 = vmax.f32 %v831, 0.0
      %v1050 = vmax.f32 %v834, 0.0
      %v1051 = vmax.f32 %v839, 0.0
      %v1052 = vmax.f32 %v842, 0.0
      %v1053 = vmax.f32 %v847, 0.0
      %v1054 = vmax.f32 %v850, 0.0
      %v1055 = vmax.f32 %v855, 0.0
      %v1056 = vmax.f32 %v858, 0.0
      %v1057 = vmax.f32 %v863, 0.0
      %v1058 = vmax.f32 %v866, 0.0
      %v1059 = vmax.f32 %v871, 0.0
      %v1060 = vmax.f32 %v874, 0.0
      %v1061 = vmax.f32 %v879, 0.0
      %v1062 = vmax.f32 %v882, 0.0
      %v1063 = vmax.f32 %v887, 0.0
      %v1064 = vmax.f32 %v890, 0.0
      %v1065 = vmax.f32 %v895, 0.0
      %v1066 = vmax.f32 %v898, 0.0
      %v1067 = vmax.f32 %v903, 0.0
      %v1068 = vmax.f32 %v906, 0.0
      %v1069 = vmax.f32 %v911, 0.0
      %v1070 = vmax.f32 %v914, 0.0
      %v1071 = vmax.f32 %v919, 0.0
      %v1072 = vmax.f32 %v922, 0.0
      %v1073 = vmax.f32 %v927, 0.0
      %v1074 = vmax.f32 %v930, 0.0
      %v1075 = vmax.f32 %v935, 0.0
      %v1076 = vmax.f32 %v938, 0.0
      %v1077 = vmax.f32 %v943, 0.0
      %v1078 = vmax.f32 %v946, 0.0
      %v1079 = vmax.f32 %v951, 0.0
      %v1080 = vmax.f32 %v954, 0.0
      %v1081 = vmax.f32 %v959, 0.0
      %v1082 = vmax.f32 %v962, 0.0
      %v1083 = vmax.f32 %v967, 0.0
      %v1084 = vmax.f32 %v970, 0.0
      %v1085 = vmax.f32 %v975, 0.0
      %v1086 = vmax.f32 %v978, 0.0
      %v1087 = vmax.f32 %v983, 0.0
      %v1088 = vmax.f32 %v986, 0.0
      %v1089 = vmax.f32 %v991, 0.0
      %v1090 = vmax.f32 %v994, 0.0
      %v1091 = vmax.f32 %v999, 0.0
      %v1092 = vmax.f32 %v1002, 0.0
      %v1093 = vmax.f32 %v1007, 0.0
      %v1094 = vmax.f32 %v1010, 0.0
      %v1095 = vmax.f32 %v1015, 0.0
      %v1096 = vmax.f32 %v1018, 0.0
      %v1097 = vmax.f32 %v1023, 0.0
      %v1098 = vmax.f32 %v1026, 0.0
      %v1099 = vmax.f32 %v1031, 0.0
      %v1100 = vmax.f32 %v1034, 0.0
      %v1101 = vpack.c.bf16 %v1038, %v1037
      %v1102 = vpack.c.bf16 %v1040, %v1039
      %v1103 = vpack.c.bf16 %v1042, %v1041
      %v1104 = vpack.c.bf16 %v1044, %v1043
      %v1105 = vpack.c.bf16 %v1046, %v1045
      %v1106 = vpack.c.bf16 %v1048, %v1047
      %v1107 = vpack.c.bf16 %v1050, %v1049
      %v1108 = vpack.c.bf16 %v1052, %v1051
      %v1109 = vpack.c.bf16 %v1054, %v1053
      %v1110 = vpack.c.bf16 %v1056, %v1055
      %v1111 = vpack.c.bf16 %v1058, %v1057
      %v1112 = vpack.c.bf16 %v1060, %v1059
      %v1113 = vpack.c.bf16 %v1062, %v1061
      %v1114 = vpack.c.bf16 %v1064, %v1063
      %v1115 = vpack.c.bf16 %v1066, %v1065
      %v1116 = vpack.c.bf16 %v1068, %v1067
      %v1117 = vpack.c.bf16 %v1070, %v1069
      %v1118 = vpack.c.bf16 %v1072, %v1071
      %v1119 = vpack.c.bf16 %v1074, %v1073
      %v1120 = vpack.c.bf16 %v1076, %v1075
      %v1121 = vpack.c.bf16 %v1078, %v1077
      %v1122 = vpack.c.bf16 %v1080, %v1079
      %v1123 = vpack.c.bf16 %v1082, %v1081
      %v1124 = vpack.c.bf16 %v1084, %v1083
      %v1125 = vpack.c.bf16 %v1086, %v1085
      %v1126 = vpack.c.bf16 %v1088, %v1087
      %v1127 = vpack.c.bf16 %v1090, %v1089
      %v1128 = vpack.c.bf16 %v1092, %v1091
      %v1129 = vpack.c.bf16 %v1094, %v1093
      %v1130 = vpack.c.bf16 %v1096, %v1095
      %v1131 = vpack.c.bf16 %v1098, %v1097
      %v1132 = vpack.c.bf16 %v1100, %v1099
      %v1165 = vunpack.c.l.b16 %v1101
      %v1166 = vunpack.c.h.b16 %v1101
      %v1167 = vunpack.c.l.b16 %v1102
      %v1168 = vunpack.c.h.b16 %v1102
      %v1169 = vunpack.c.l.b16 %v1103
      %v1170 = vunpack.c.h.b16 %v1103
      %v1171 = vunpack.c.l.b16 %v1104
      %v1172 = vunpack.c.h.b16 %v1104
      %v1173 = vunpack.c.l.b16 %v1105
      %v1174 = vunpack.c.h.b16 %v1105
      %v1175 = vunpack.c.l.b16 %v1106
      %v1176 = vunpack.c.h.b16 %v1106
      %v1177 = vunpack.c.l.b16 %v1107
      %v1178 = vunpack.c.h.b16 %v1107
      %v1179 = vunpack.c.l.b16 %v1108
      %v1180 = vunpack.c.h.b16 %v1108
      %v1181 = vunpack.c.l.b16 %v1109
      %v1182 = vunpack.c.h.b16 %v1109
      %v1183 = vunpack.c.l.b16 %v1110
      %v1184 = vunpack.c.h.b16 %v1110
      %v1185 = vunpack.c.l.b16 %v1111
      %v1186 = vunpack.c.h.b16 %v1111
      %v1187 = vunpack.c.l.b16 %v1112
      %v1188 = vunpack.c.h.b16 %v1112
      %v1189 = vunpack.c.l.b16 %v1113
      %v1190 = vunpack.c.h.b16 %v1113
      %v1191 = vunpack.c.l.b16 %v1114
      %v1192 = vunpack.c.h.b16 %v1114
      %v1193 = vunpack.c.l.b16 %v1115
      %v1194 = vunpack.c.h.b16 %v1115
      %v1195 = vunpack.c.l.b16 %v1116
      %v1196 = vunpack.c.h.b16 %v1116
      %v1197 = vunpack.c.l.b16 %v1117
      %v1198 = vunpack.c.h.b16 %v1117
      %v1199 = vunpack.c.l.b16 %v1118
      %v1200 = vunpack.c.h.b16 %v1118
      %v1201 = vunpack.c.l.b16 %v1119
      %v1202 = vunpack.c.h.b16 %v1119
      %v1203 = vunpack.c.l.b16 %v1120
      %v1204 = vunpack.c.h.b16 %v1120
      %v1205 = vunpack.c.l.b16 %v1121
      %v1206 = vunpack.c.h.b16 %v1121
      %v1207 = vunpack.c.l.b16 %v1122
      %v1208 = vunpack.c.h.b16 %v1122
      %v1209 = vunpack.c.l.b16 %v1123
      %v1210 = vunpack.c.h.b16 %v1123
      %v1211 = vunpack.c.l.b16 %v1124
      %v1212 = vunpack.c.h.b16 %v1124
      %v1213 = vunpack.c.l.b16 %v1125
      %v1214 = vunpack.c.h.b16 %v1125
      %v1215 = vunpack.c.l.b16 %v1126
      %v1216 = vunpack.c.h.b16 %v1126
      %v1217 = vunpack.c.l.b16 %v1127
      %v1218 = vunpack.c.h.b16 %v1127
      %v1219 = vunpack.c.l.b16 %v1128
      %v1220 = vunpack.c.h.b16 %v1128
      %v1221 = vunpack.c.l.b16 %v1129
      %v1222 = vunpack.c.h.b16 %v1129
      %v1223 = vunpack.c.l.b16 %v1130
      %v1224 = vunpack.c.h.b16 %v1130
      %v1225 = vunpack.c.l.b16 %v1131
      %v1226 = vunpack.c.h.b16 %v1131
      %v1227 = vunpack.c.l.b16 %v1132
      %v1228 = vunpack.c.h.b16 %v1132
      %v1229 = vpack.c.b16 %v1165, %v1165
      %v1230 = vpack.c.b16 %v1166, %v1166
      %v1231 = vpack.c.b16 %v1167, %v1167
      %v1232 = vpack.c.b16 %v1168, %v1168
      %v1233 = vpack.c.b16 %v1169, %v1169
      %v1234 = vpack.c.b16 %v1170, %v1170
      %v1235 = vpack.c.b16 %v1171, %v1171
      %v1236 = vpack.c.b16 %v1172, %v1172
      %v1237 = vpack.c.b16 %v1173, %v1173
      %v1238 = vpack.c.b16 %v1174, %v1174
      %v1239 = vpack.c.b16 %v1175, %v1175
      %v1240 = vpack.c.b16 %v1176, %v1176
      %v1241 = vpack.c.b16 %v1177, %v1177
      %v1242 = vpack.c.b16 %v1178, %v1178
      %v1243 = vpack.c.b16 %v1179, %v1179
      %v1244 = vpack.c.b16 %v1180, %v1180
      %v1245 = vpack.c.b16 %v1181, %v1181
      %v1246 = vpack.c.b16 %v1182, %v1182
      %v1247 = vpack.c.b16 %v1183, %v1183
      %v1248 = vpack.c.b16 %v1184, %v1184
      %v1249 = vpack.c.b16 %v1185, %v1185
      %v1250 = vpack.c.b16 %v1186, %v1186
      %v1251 = vpack.c.b16 %v1187, %v1187
      %v1252 = vpack.c.b16 %v1188, %v1188
      %v1253 = vpack.c.b16 %v1189, %v1189
      %v1254 = vpack.c.b16 %v1190, %v1190
      %v1255 = vpack.c.b16 %v1191, %v1191
      %v1256 = vpack.c.b16 %v1192, %v1192
      %v1257 = vpack.c.b16 %v1193, %v1193
      %v1258 = vpack.c.b16 %v1194, %v1194
      %v1259 = vpack.c.b16 %v1195, %v1195
      %v1260 = vpack.c.b16 %v1196, %v1196
      %v1261 = vpack.c.b16 %v1197, %v1197
      %v1262 = vpack.c.b16 %v1198, %v1198
      %v1263 = vpack.c.b16 %v1199, %v1199
      %v1264 = vpack.c.b16 %v1200, %v1200
      %v1265 = vpack.c.b16 %v1201, %v1201
      %v1266 = vpack.c.b16 %v1202, %v1202
      %v1267 = vpack.c.b16 %v1203, %v1203
      %v1268 = vpack.c.b16 %v1204, %v1204
      %v1269 = vpack.c.b16 %v1205, %v1205
      %v1270 = vpack.c.b16 %v1206, %v1206
      %v1271 = vpack.c.b16 %v1207, %v1207
      %v1272 = vpack.c.b16 %v1208, %v1208
      %v1273 = vpack.c.b16 %v1209, %v1209
      %v1274 = vpack.c.b16 %v1210, %v1210
      %v1275 = vpack.c.b16 %v1211, %v1211
      %v1276 = vpack.c.b16 %v1212, %v1212
      %v1277 = vpack.c.b16 %v1213, %v1213
      %v1278 = vpack.c.b16 %v1214, %v1214
      %v1279 = vpack.c.b16 %v1215, %v1215
      %v1280 = vpack.c.b16 %v1216, %v1216
      %v1281 = vpack.c.b16 %v1217, %v1217
      %v1282 = vpack.c.b16 %v1218, %v1218
      %v1283 = vpack.c.b16 %v1219, %v1219
      %v1284 = vpack.c.b16 %v1220, %v1220
      %v1285 = vpack.c.b16 %v1221, %v1221
      %v1286 = vpack.c.b16 %v1222, %v1222
      %v1287 = vpack.c.b16 %v1223, %v1223
      %v1288 = vpack.c.b16 %v1224, %v1224
      %v1289 = vpack.c.b16 %v1225, %v1225
      %v1290 = vpack.c.b16 %v1226, %v1226
      %v1291 = vpack.c.b16 %v1227, %v1227
      %v1292 = vpack.c.b16 %v1228, %v1228
      %1357 = vst [vmem:[%s226] sm:$0xf] %v1229
      %1358 = vst [vmem:[%s226 + $0x4] sm:$0xf] %v1230
      %1359 = vst [vmem:[%s226 + $0x8] sm:$0xf] %v1231
      %1360 = vst [vmem:[%s226 + $0xc] sm:$0xf] %v1232
      %1361 = vst [vmem:[%s226 + $0x10] sm:$0xf] %v1233
      %1362 = vst [vmem:[%s226 + $0x14] sm:$0xf] %v1234
      %1363 = vst [vmem:[%s226 + $0x18] sm:$0xf] %v1235
      %1364 = vst [vmem:[%s226 + $0x1c] sm:$0xf] %v1236
      %1365 = vst [vmem:[%s226 + $0x20] sm:$0xf] %v1237
      %1366 = vst [vmem:[%s226 + $0x24] sm:$0xf] %v1238
      %1367 = vst [vmem:[%s226 + $0x28] sm:$0xf] %v1239
      %1368 = vst [vmem:[%s226 + $0x2c] sm:$0xf] %v1240
      %1369 = vst [vmem:[%s226 + $0x30] sm:$0xf] %v1241
      %1370 = vst [vmem:[%s226 + $0x34] sm:$0xf] %v1242
      %1371 = vst [vmem:[%s226 + $0x38] sm:$0xf] %v1243
      %1372 = vst [vmem:[%s226 + $0x3c] sm:$0xf] %v1244
      %1373 = vst [vmem:[%s226 + $0x40] sm:$0xf] %v1245
      %1374 = vst [vmem:[%s226 + $0x44] sm:$0xf] %v1246
      %1375 = vst [vmem:[%s226 + $0x48] sm:$0xf] %v1247
      %1376 = vst [vmem:[%s226 + $0x4c] sm:$0xf] %v1248
      %1377 = vst [vmem:[%s226 + $0x50] sm:$0xf] %v1249
      %1378 = vst [vmem:[%s226 + $0x54] sm:$0xf] %v1250
      %1379 = vst [vmem:[%s226 + $0x58] sm:$0xf] %v1251
      %1380 = vst [vmem:[%s226 + $0x5c] sm:$0xf] %v1252
      %1381 = vst [vmem:[%s226 + $0x60] sm:$0xf] %v1253
      %1382 = vst [vmem:[%s226 + $0x64] sm:$0xf] %v1254
      %1383 = vst [vmem:[%s226 + $0x68] sm:$0xf] %v1255
      %1384 = vst [vmem:[%s226 + $0x6c] sm:$0xf] %v1256
      %1385 = vst [vmem:[%s226 + $0x70] sm:$0xf] %v1257
      %1386 = vst [vmem:[%s226 + $0x74] sm:$0xf] %v1258
      %1387 = vst [vmem:[%s226 + $0x78] sm:$0xf] %v1259
      %1388 = vst [vmem:[%s226 + $0x7c] sm:$0xf] %v1260
      %1389 = vst [vmem:[%s226 + $0x80] sm:$0xf] %v1261
      %1390 = vst [vmem:[%s226 + $0x84] sm:$0xf] %v1262
      %1391 = vst [vmem:[%s226 + $0x88] sm:$0xf] %v1263
      %1392 = vst [vmem:[%s226 + $0x8c] sm:$0xf] %v1264
      %1393 = vst [vmem:[%s226 + $0x90] sm:$0xf] %v1265
      %1394 = vst [vmem:[%s226 + $0x94] sm:$0xf] %v1266
      %1395 = vst [vmem:[%s226 + $0x98] sm:$0xf] %v1267
      %1396 = vst [vmem:[%s226 + $0x9c] sm:$0xf] %v1268
      %1397 = vst [vmem:[%s226 + $0xa0] sm:$0xf] %v1269
      %1398 = vst [vmem:[%s226 + $0xa4] sm:$0xf] %v1270
      %1399 = vst [vmem:[%s226 + $0xa8] sm:$0xf] %v1271
      %1400 = vst [vmem:[%s226 + $0xac] sm:$0xf] %v1272
      %1401 = vst [vmem:[%s226 + $0xb0] sm:$0xf] %v1273
      %1402 = vst [vmem:[%s226 + $0xb4] sm:$0xf] %v1274
      %1403 = vst [vmem:[%s226 + $0xb8] sm:$0xf] %v1275
      %1404 = vst [vmem:[%s226 + $0xbc] sm:$0xf] %v1276
      %1405 = vst [vmem:[%s226 + $0xc0] sm:$0xf] %v1277
      %1406 = vst [vmem:[%s226 + $0xc4] sm:$0xf] %v1278
      %1407 = vst [vmem:[%s226 + $0xc8] sm:$0xf] %v1279
      %1408 = vst [vmem:[%s226 + $0xcc] sm:$0xf] %v1280
      %1409 = vst [vmem:[%s226 + $0xd0] sm:$0xf] %v1281
      %1410 = vst [vmem:[%s226 + $0xd4] sm:$0xf] %v1282
      %1411 = vst [vmem:[%s226 + $0xd8] sm:$0xf] %v1283
      %1412 = vst [vmem:[%s226 + $0xdc] sm:$0xf] %v1284
      %1413 = vst [vmem:[%s226 + $0xe0] sm:$0xf] %v1285
      %1414 = vst [vmem:[%s226 + $0xe4] sm:$0xf] %v1286
      %1415 = vst [vmem:[%s226 + $0xe8] sm:$0xf] %v1287
      %1416 = vst [vmem:[%s226 + $0xec] sm:$0xf] %v1288
      %1417 = vst [vmem:[%s226 + $0xf0] sm:$0xf] %v1289
      %1418 = vst [vmem:[%s226 + $0xf4] sm:$0xf] %v1290
      %1419 = vst [vmem:[%s226 + $0xf8] sm:$0xf] %v1291
      %1420 = vst [vmem:[%s226 + $0xfc] sm:$0xf] %v1292
      %s1421 = smul.u32 64, %s18
      %p1422 = scmp.lt.s32.totalorder %s1421, 447
      %s1423 = scalar_select %p1422, %s1421, 447
      %p1424 = scmp.lt.s32.totalorder %s19, 0
      %s1425 = scalar_select %p1424, %s19, 0
      %s1426 = sadd.s32 %s1425, %s1423
      %s1427 = smul.addr %s1426, 4
      %s1428 = scalar_lea.vmem %s3, %s1427
      // Predicated region
      $region33: #{nature_conv_body.4} parent=31 // pred_check
        %p1429 = pneg %p124
      $region34: #{nature_conv_body.4} parent=31 // pred_check_branch
        %1431 = sbr.rel (%p1429) target = $region36
      $region35: #{nature_conv_body.4} parent=31 // pred_region
        %s1432 = smul.u32 64, %s18
      $region36: #{nature_conv_body.4} parent=31 // pred_fallthru
        _
    $region32: #{nature_conv_body.4} parent=5 // pred_fallthru
      _
    %p1433 = scmp.le.s32.totalorder 2, %s9
    // Predicated region
    $region37: #{nature_conv_body.4} parent=5 // pred_check
      %p1434 = pneg %p1433
    $region38: #{nature_conv_body.4} parent=5 // pred_check_branch
      %1436 = sbr.rel (%p1434) target = $region40
    $region39: #{nature_conv_body.4} parent=5 // pred_region
      %s1437 = ssub.s32 %s9, 2
      // Predicated region
      $region41: #{nature_conv_body.4} parent=39 // pred_check
        %p1438 = pneg %p130
      $region42: #{nature_conv_body.4} parent=39 // pred_check_branch
        %1440 = sbr.rel (%p1438) target = $region44
      $region43: #{nature_conv_body.4} parent=39 // pred_region
        %s1441 = smul.u32 64, %s20
        %p1442 = scmp.lt.s32.totalorder %s1441, 447
        %s1443 = scalar_select %p1442, %s1441, 447
        %p1444 = scmp.lt.s32.totalorder %s21, 0
        %s1445 = scalar_select %p1444, %s21, 0
        %s1446 = sadd.s32 %s1445, %s1443
        %s1447 = smul.addr %s1446, 4
        %s1448 = scalar_lea.vmem %s3, %s1447
      $region44: #{nature_conv_body.4} parent=39 // pred_fallthru
        _
    $region40: #{nature_conv_body.4} parent=5 // pred_fallthru
      _
  $region6: #{nature_conv_body.4} parent=0 // loop_footer
    %s13 = sadd.s32 1, %s9
  $region7: #{nature_conv_body.4} parent=0 // loop_footer_branch
    %8 = sbr.rel target = $region3
  $region8: #{nature_conv_body.4} parent=0 // loop_exit
    _

// kernel: nature_conv_body.5
$region0: #{nature_conv_body.5}
  #allocation0 [shape = 'u32[]', space=smem, size = 0x4, offset = 0x4, fixed_abs, tag = 'smem constant byte address 0x4 - core index']
  #allocation1 [shape = 'u32[144,128]{1,0:T(1,128)}', space=vmem, size = 0x12000, scoped, tag = 'internal scratch']
  %s0 = inlined_call_operand.vmem [shape: bf16[1024,384], index: 0, kind: input, shape index: {}]
  %s1 = inlined_call_operand.vmem [shape: bf16[384,128], index: 1, kind: input, shape index: {}]
  %s2 = inlined_call_operand.vmem [shape: f32[1,128], index: 2, kind: input, shape index: {}]
  %s3 = inlined_call_operand.vmem [shape: bf16[1024,128], index: 3, kind: output, shape index: {}]
  %s4 = sld [smem:[#allocation0]]
  $region45: #{nature_conv_body.5} parent=0
    _
  %s6 = ssub.s32 1, %s4
  %s7 = scalar_select 0, %s6, %s4
  loop: start=0, step=1, limit=4
  $region2: #{nature_conv_body.5} parent=0 // loop_pre_header
    _
  $region3: #{nature_conv_body.5} parent=0 // loop_header
    %s9 = sphi 0, %s13
    %p10 = scmp.ge.s32.totalorder %s9, 4
    %s16 = sphi 0, %s28
    %s17 = sphi 0, %s24
    %s18 = sphi 0, %s16
    %s19 = sphi 0, %s17
    %s20 = sphi 0, %s18
    %s21 = sphi 0, %s19
    %s31 = sphi 0, %s33
    %s34 = sphi 0, %s31
    %s35 = sphi 0, %s34
    %s51 = sphi 0, %s35
    %s57 = sphi 0, %s59
    %s60 = sphi 0, %s57
    %s61 = sphi 0, %s60
    %s77 = sphi 0, %s61
    %s83 = sphi 0, %s85
    %s86 = sphi 0, %s83
    %s87 = sphi 0, %s86
    %s103 = sphi 0, %s87
    %s111 = sphi 0, %s113
    %s114 = sphi 0, %s111
    %s115 = sphi 0, %s114
    %s131 = sphi 0, %s115
  $region4: #{nature_conv_body.5} parent=0 // loop_header_branch
    %12 = sbr.rel (%p10) target = $region8
  $region5: #{nature_conv_body.5} parent=0 // loop_body
    %s14 = ssub.s32 %s9, 1
    %s15 = ssub.s32 %s9, 2
    %s22 = sadd.s32 1, %s17
    %p23 = scmp.ge.s32.totalorder %s22, 1
    %s24 = scalar_select %p23, 0, %s22
    %s25 = sadd.s32 1, %s16
    %s26 = scalar_select %p23, %s25, %s16
    %p27 = scmp.ge.s32.totalorder %s26, 2
    %s28 = scalar_select %p27, 0, %s26
    %s29 = ssub.s32 %s16, %s28
    %p30 = scmp.eq.s32.totalorder %s29, 0
    %s32 = sadd.s32 %s31, 1
    %s33 = scalar_select %p30, %s31, %s32
    %p36 = pneg %p30
    %p37 = scmp.eq.s32.totalorder %s9, 1
    %p38 = por %p36, %p37
    %p39 = scmp.ne.s32.totalorder %s31, %s34
    %p40 = scmp.eq.s32.totalorder %s9, 0
    %p41 = por %p39, %p40
    %p42 = scmp.ne.s32.totalorder %s31, %s34
    %p43 = scmp.eq.s32.totalorder %s14, 1
    %p44 = por %p42, %p43
    %p45 = scmp.ne.s32.totalorder %s34, %s35
    %p46 = scmp.eq.s32.totalorder %s14, 0
    %p47 = por %p45, %p46
    %p48 = scmp.ne.s32.totalorder %s34, %s35
    %p49 = scmp.eq.s32.totalorder %s15, 1
    %p50 = por %p48, %p49
    %p52 = scmp.ne.s32.totalorder %s35, %s51
    %p53 = scmp.eq.s32.totalorder %s15, 0
    %p54 = por %p52, %p53
    %s55 = ssub.s32 %s17, %s24
    %p56 = scmp.eq.s32.totalorder %s55, 0
    %s58 = sadd.s32 %s57, 1
    %s59 = scalar_select %p56, %s57, %s58
    %p62 = pneg %p56
    %p63 = scmp.eq.s32.totalorder %s9, 1
    %p64 = por %p62, %p63
    %p65 = scmp.ne.s32.totalorder %s57, %s60
    %p66 = scmp.eq.s32.totalorder %s9, 0
    %p67 = por %p65, %p66
    %p68 = scmp.ne.s32.totalorder %s57, %s60
    %p69 = scmp.eq.s32.totalorder %s14, 1
    %p70 = por %p68, %p69
    %p71 = scmp.ne.s32.totalorder %s60, %s61
    %p72 = scmp.eq.s32.totalorder %s14, 0
    %p73 = por %p71, %p72
    %p74 = scmp.ne.s32.totalorder %s60, %s61
    %p75 = scmp.eq.s32.totalorder %s15, 1
    %p76 = por %p74, %p75
    %p78 = scmp.ne.s32.totalorder %s61, %s77
    %p79 = scmp.eq.s32.totalorder %s15, 0
    %p80 = por %p78, %p79
    %s81 = ssub.s32 %s17, %s24
    %p82 = scmp.eq.s32.totalorder %s81, 0
    %s84 = sadd.s32 %s83, 1
    %s85 = scalar_select %p82, %s83, %s84
    %p88 = pneg %p82
    %p89 = scmp.eq.s32.totalorder %s9, 1
    %p90 = por %p88, %p89
    %p91 = scmp.ne.s32.totalorder %s83, %s86
    %p92 = scmp.eq.s32.totalorder %s9, 0
    %p93 = por %p91, %p92
    %p94 = scmp.ne.s32.totalorder %s83, %s86
    %p95 = scmp.eq.s32.totalorder %s14, 1
    %p96 = por %p94, %p95
    %p97 = scmp.ne.s32.totalorder %s86, %s87
    %p98 = scmp.eq.s32.totalorder %s14, 0
    %p99 = por %p97, %p98
    %p100 = scmp.ne.s32.totalorder %s86, %s87
    %p101 = scmp.eq.s32.totalorder %s15, 1
    %p102 = por %p100, %p101
    %p104 = scmp.ne.s32.totalorder %s87, %s103
    %p105 = scmp.eq.s32.totalorder %s15, 0
    %p106 = por %p104, %p105
    %s107 = ssub.s32 %s16, %s28
    %s108 = ssub.s32 %s17, %s24
    %s109 = sor.u32 %s107, %s108
    %p110 = scmp.eq.s32.totalorder %s109, 0
    %s112 = sadd.s32 %s111, 1
    %s113 = scalar_select %p110, %s111, %s112
    %p116 = pneg %p110
    %p117 = scmp.eq.s32.totalorder %s9, 1
    %p118 = por %p116, %p117
    %p119 = scmp.ne.s32.totalorder %s111, %s114
    %p120 = scmp.eq.s32.totalorder %s9, 0
    %p121 = por %p119, %p120
    %p122 = scmp.ne.s32.totalorder %s111, %s114
    %p123 = scmp.eq.s32.totalorder %s14, 1
    %p124 = por %p122, %p123
    %p125 = scmp.ne.s32.totalorder %s114, %s115
    %p126 = scmp.eq.s32.totalorder %s14, 0
    %p127 = por %p125, %p126
    %p128 = scmp.ne.s32.totalorder %s114, %s115
    %p129 = scmp.eq.s32.totalorder %s15, 1
    %p130 = por %p128, %p129
    %p132 = scmp.ne.s32.totalorder %s115, %s131
    %p133 = scmp.eq.s32.totalorder %s15, 0
    %p134 = por %p132, %p133
    %p135 = scmp.le.s32.totalorder 1, %s9
    %p136 = scmp.lt.s32.totalorder %s9, 3
    %p137 = pnand %p135, %p136
    %p138 = pneg %p137
    // Predicated region
    $region9: #{nature_conv_body.5} parent=5 // pred_check
      _
    $region10: #{nature_conv_body.5} parent=5 // pred_check_branch
      %140 = sbr.rel (%p137) target = $region12
    $region11: #{nature_conv_body.5} parent=5 // pred_region
      %s141 = ssub.s32 %s9, 1
      // Predicated region
      $region13: #{nature_conv_body.5} parent=11 // pred_check
        %p142 = pneg %p73
      $region14: #{nature_conv_body.5} parent=11 // pred_check_branch
        %144 = sbr.rel (%p142) target = $region16
      $region15: #{nature_conv_body.5} parent=11 // pred_region
        %p145 = scmp.lt.s32.totalorder %s19, 0
        %s146 = scalar_select %p145, %s19, 0
        %s147 = smul.addr %s146, 4
        %s148 = scalar_lea.vmem %s1, %s147
      $region16: #{nature_conv_body.5} parent=11 // pred_fallthru
        _
      // Predicated region
      $region17: #{nature_conv_body.5} parent=11 // pred_check
        %p149 = pneg %p99
      $region18: #{nature_conv_body.5} parent=11 // pred_check_branch
        %151 = sbr.rel (%p149) target = $region20
      $region19: #{nature_conv_body.5} parent=11 // pred_region
        %p152 = scmp.lt.s32.totalorder %s19, 0
        %s153 = scalar_select %p152, %s19, 0
        %s154 = scalar_lea.vmem %s2, %s153
      $region20: #{nature_conv_body.5} parent=11 // pred_fallthru
        _
    $region12: #{nature_conv_body.5} parent=5 // pred_fallthru
      _
    %p155 = scmp.lt.s32.totalorder %s9, 2
    // Predicated region
    $region21: #{nature_conv_body.5} parent=5 // pred_check
      %p156 = pneg %p155
    $region22: #{nature_conv_body.5} parent=5 // pred_check_branch
      %158 = sbr.rel (%p156) target = $region24
    $region23: #{nature_conv_body.5} parent=5 // pred_region
      // Predicated region
      $region25: #{nature_conv_body.5} parent=23 // pred_check
        %p159 = pneg %p41
      $region26: #{nature_conv_body.5} parent=23 // pred_check_branch
        %161 = sbr.rel (%p159) target = $region28
      $region27: #{nature_conv_body.5} parent=23 // pred_region
        %s162 = smul.u32 64, %s16
        %p163 = scmp.lt.s32.totalorder %s162, 127
        %s164 = scalar_select %p163, %s162, 127
        %s165 = smul.addr %s164, 3
        %s166 = smul.addr %s165, 4
        %s167 = scalar_lea.vmem %s0, %s166
        %s168 = smul.u32 64, %s16
      $region28: #{nature_conv_body.5} parent=23 // pred_fallthru
        _
    $region24: #{nature_conv_body.5} parent=5 // pred_fallthru
      _
    %p169 = scmp.le.s32.totalorder 1, %s9
    %p170 = scmp.lt.s32.totalorder %s9, 3
    %p171 = pnand %p169, %p170
    %p172 = pneg %p171
    // Predicated region
    $region29: #{nature_conv_body.5} parent=5 // pred_check
      _
    $region30: #{nature_conv_body.5} parent=5 // pred_check_branch
      %174 = sbr.rel (%p171) target = $region32
    $region31: #{nature_conv_body.5} parent=5 // pred_region
      %s175 = ssub.s32 %s9, 1
      %s176 = smul.u32 64, %s18
      %p177 = scmp.lt.s32.totalorder %s176, 127
      %s178 = scalar_select %p177, %s176, 127
      %s179 = smul.addr %s178, 3
      %s180 = smul.addr %s179, 4
      %s181 = scalar_lea.vmem %s0, %s180
      %p182 = pneg %p47
      %p183 = pneg %p44
      %p184 = scmp.lt.s32.totalorder %s19, 0
      %s185 = scalar_select %p184, %s19, 0
      %s186 = smul.addr %s185, 4
      %s187 = scalar_lea.vmem %s1, %s186
      %p188 = pneg %p73
      %p189 = pneg %p70
      %p190 = scmp.lt.s32.totalorder %s19, 0
      %s191 = scalar_select %p190, %s19, 0
      %s192 = scalar_lea.vmem %s2, %s191
      %p193 = pneg %p99
      %p194 = pneg %p96
      %p195 = pneg %p127
      %p196 = pneg %p124
      %s197 = smul.u32 64, %s18
      %p198 = scmp.lt.s32.totalorder %s197, 127
      %s199 = scalar_select %p198, %s197, 127
      %p200 = scmp.lt.s32.totalorder %s19, 0
      %s201 = scalar_select %p200, %s19, 0
      %s202 = sadd.s32 %s201, %s199
      %s203 = smul.addr %s202, 4
      %s204 = scalar_lea.vmem %s3, %s203
      %s205 = smul.u32 64, %s18
      %p206 = scmp.lt.s32.totalorder %s205, 127
      %s207 = scalar_select %p206, %s205, 127
      %s208 = smul.addr %s207, 3
      %s209 = smul.addr %s208, 4
      %s210 = scalar_lea.vmem %s0, %s209
      %s211 = smul.u32 64, %s18
      %p212 = scmp.lt.s32.totalorder %s19, 0
      %s213 = scalar_select %p212, %s19, 0
      %s214 = smul.addr %s213, 4
      %s215 = scalar_lea.vmem %s1, %s214
      %p216 = scmp.lt.s32.totalorder %s19, 0
      %s217 = scalar_select %p216, %s19, 0
      %s218 = scalar_lea.vmem %s2, %s217
      %s219 = smul.u32 64, %s18
      %p220 = scmp.lt.s32.totalorder %s219, 127
      %s221 = scalar_select %p220, %s219, 127
      %p222 = scmp.lt.s32.totalorder %s19, 0
      %s223 = scalar_select %p222, %s19, 0
      %s224 = sadd.s32 %s223, %s221
      %s225 = smul.addr %s224, 4
      %s226 = scalar_lea.vmem %s3, %s225
      %s227 = smul.u32 64, %s18
      %v229 = vld [vmem:[%s210] sm:$0xff]
      %v230 = vld [vmem:[%s210 + $0x8] sm:$0xf]
      %v231 = vld [vmem:[%s210 + $0xc] sm:$0xff]
      %v232 = vld [vmem:[%s210 + $0x14] sm:$0xf]
      %v233 = vld [vmem:[%s210 + $0x18] sm:$0xff]
      %v234 = vld [vmem:[%s210 + $0x20] sm:$0xf]
      %v235 = vld [vmem:[%s210 + $0x24] sm:$0xff]
      %v236 = vld [vmem:[%s210 + $0x2c] sm:$0xf]
      %v237 = vld [vmem:[%s210 + $0x30] sm:$0xff]
      %v238 = vld [vmem:[%s210 + $0x38] sm:$0xf]
      %v239 = vld [vmem:[%s210 + $0x3c] sm:$0xff]
      %v240 = vld [vmem:[%s210 + $0x44] sm:$0xf]
      %v241 = vld [vmem:[%s210 + $0x48] sm:$0xff]
      %v242 = vld [vmem:[%s210 + $0x50] sm:$0xf]
      %v243 = vld [vmem:[%s210 + $0x54] sm:$0xff]
      %v244 = vld [vmem:[%s210 + $0x5c] sm:$0xf]
      %v245 = vld [vmem:[%s210 + $0x60] sm:$0xff]
      %v246 = vld [vmem:[%s210 + $0x68] sm:$0xf]
      %v247 = vld [vmem:[%s210 + $0x6c] sm:$0xff]
      %v248 = vld [vmem:[%s210 + $0x74] sm:$0xf]
      %v249 = vld [vmem:[%s210 + $0x78] sm:$0xff]
      %v250 = vld [vmem:[%s210 + $0x80] sm:$0xf]
      %v251 = vld [vmem:[%s210 + $0x84] sm:$0xff]
      %v252 = vld [vmem:[%s210 + $0x8c] sm:$0xf]
      %v253 = vld [vmem:[%s210 + $0x90] sm:$0xff]
      %v254 = vld [vmem:[%s210 + $0x98] sm:$0xf]
      %v255 = vld [vmem:[%s210 + $0x9c] sm:$0xff]
      %v256 = vld [vmem:[%s210 + $0xa4] sm:$0xf]
      %v257 = vld [vmem:[%s210 + $0xa8] sm:$0xff]
      %v258 = vld [vmem:[%s210 + $0xb0] sm:$0xf]
      %v259 = vld [vmem:[%s210 + $0xb4] sm:$0xff]
      %v260 = vld [vmem:[%s210 + $0xbc] sm:$0xf]
      %v261 = vld [vmem:[%s210 + $0xc0] sm:$0xff]
      %v262 = vld [vmem:[%s210 + $0xc8] sm:$0xf]
      %v263 = vld [vmem:[%s210 + $0xcc] sm:$0xff]
      %v264 = vld [vmem:[%s210 + $0xd4] sm:$0xf]
      %v265 = vld [vmem:[%s210 + $0xd8] sm:$0xff]
      %v266 = vld [vmem:[%s210 + $0xe0] sm:$0xf]
      %v267 = vld [vmem:[%s210 + $0xe4] sm:$0xff]
      %v268 = vld [vmem:[%s210 + $0xec] sm:$0xf]
      %v269 = vld [vmem:[%s210 + $0xf0] sm:$0xff]
      %v270 = vld [vmem:[%s210 + $0xf8] sm:$0xf]
      %v271 = vld [vmem:[%s210 + $0xfc] sm:$0xff]
      %v272 = vld [vmem:[%s210 + $0x104] sm:$0xf]
      %v273 = vld [vmem:[%s210 + $0x108] sm:$0xff]
      %v274 = vld [vmem:[%s210 + $0x110] sm:$0xf]
      %v275 = vld [vmem:[%s210 + $0x114] sm:$0xff]
      %v276 = vld [vmem:[%s210 + $0x11c] sm:$0xf]
      %v277 = vld [vmem:[%s210 + $0x120] sm:$0xff]
      %v278 = vld [vmem:[%s210 + $0x128] sm:$0xf]
      %v279 = vld [vmem:[%s210 + $0x12c] sm:$0xff]
      %v280 = vld [vmem:[%s210 + $0x134] sm:$0xf]
      %v281 = vld [vmem:[%s210 + $0x138] sm:$0xff]
      %v282 = vld [vmem:[%s210 + $0x140] sm:$0xf]
      %v283 = vld [vmem:[%s210 + $0x144] sm:$0xff]
      %v284 = vld [vmem:[%s210 + $0x14c] sm:$0xf]
      %v285 = vld [vmem:[%s210 + $0x150] sm:$0xff]
      %v286 = vld [vmem:[%s210 + $0x158] sm:$0xf]
      %v287 = vld [vmem:[%s210 + $0x15c] sm:$0xff]
      %v288 = vld [vmem:[%s210 + $0x164] sm:$0xf]
      %v289 = vld [vmem:[%s210 + $0x168] sm:$0xff]
      %v290 = vld [vmem:[%s210 + $0x170] sm:$0xf]
      %v291 = vld [vmem:[%s210 + $0x174] sm:$0xff]
      %v292 = vld [vmem:[%s210 + $0x17c] sm:$0xf]
      %v293 = vld [vmem:[%s210 + $0x180] sm:$0xff]
      %v294 = vld [vmem:[%s210 + $0x188] sm:$0xf]
      %v295 = vld [vmem:[%s210 + $0x18c] sm:$0xff]
      %v296 = vld [vmem:[%s210 + $0x194] sm:$0xf]
      %v297 = vld [vmem:[%s210 + $0x198] sm:$0xff]
      %v298 = vld [vmem:[%s210 + $0x1a0] sm:$0xf]
      %v299 = vld [vmem:[%s210 + $0x1a4] sm:$0xff]
      %v300 = vld [vmem:[%s210 + $0x1ac] sm:$0xf]
      %v301 = vld [vmem:[%s210 + $0x1b0] sm:$0xff]
      %v302 = vld [vmem:[%s210 + $0x1b8] sm:$0xf]
      %v303 = vld [vmem:[%s210 + $0x1bc] sm:$0xff]
      %v304 = vld [vmem:[%s210 + $0x1c4] sm:$0xf]
      %v305 = vld [vmem:[%s210 + $0x1c8] sm:$0xff]
      %v306 = vld [vmem:[%s210 + $0x1d0] sm:$0xf]
      %v307 = vld [vmem:[%s210 + $0x1d4] sm:$0xff]
      %v308 = vld [vmem:[%s210 + $0x1dc] sm:$0xf]
      %v309 = vld [vmem:[%s210 + $0x1e0] sm:$0xff]
      %v310 = vld [vmem:[%s210 + $0x1e8] sm:$0xf]
      %v311 = vld [vmem:[%s210 + $0x1ec] sm:$0xff]
      %v312 = vld [vmem:[%s210 + $0x1f4] sm:$0xf]
      %v313 = vld [vmem:[%s210 + $0x1f8] sm:$0xff]
      %v314 = vld [vmem:[%s210 + $0x200] sm:$0xf]
      %v315 = vld [vmem:[%s210 + $0x204] sm:$0xff]
      %v316 = vld [vmem:[%s210 + $0x20c] sm:$0xf]
      %v317 = vld [vmem:[%s210 + $0x210] sm:$0xff]
      %v318 = vld [vmem:[%s210 + $0x218] sm:$0xf]
      %v319 = vld [vmem:[%s210 + $0x21c] sm:$0xff]
      %v320 = vld [vmem:[%s210 + $0x224] sm:$0xf]
      %v321 = vld [vmem:[%s210 + $0x228] sm:$0xff]
      %v322 = vld [vmem:[%s210 + $0x230] sm:$0xf]
      %v323 = vld [vmem:[%s210 + $0x234] sm:$0xff]
      %v324 = vld [vmem:[%s210 + $0x23c] sm:$0xf]
      %v325 = vld [vmem:[%s210 + $0x240] sm:$0xff]
      %v326 = vld [vmem:[%s210 + $0x248] sm:$0xf]
      %v327 = vld [vmem:[%s210 + $0x24c] sm:$0xff]
      %v328 = vld [vmem:[%s210 + $0x254] sm:$0xf]
      %v329 = vld [vmem:[%s210 + $0x258] sm:$0xff]
      %v330 = vld [vmem:[%s210 + $0x260] sm:$0xf]
      %v331 = vld [vmem:[%s210 + $0x264] sm:$0xff]
      %v332 = vld [vmem:[%s210 + $0x26c] sm:$0xf]
      %v333 = vld [vmem:[%s210 + $0x270] sm:$0xff]
      %v334 = vld [vmem:[%s210 + $0x278] sm:$0xf]
      %v335 = vld [vmem:[%s210 + $0x27c] sm:$0xff]
      %v336 = vld [vmem:[%s210 + $0x284] sm:$0xf]
      %v337 = vld [vmem:[%s210 + $0x288] sm:$0xff]
      %v338 = vld [vmem:[%s210 + $0x290] sm:$0xf]
      %v339 = vld [vmem:[%s210 + $0x294] sm:$0xff]
      %v340 = vld [vmem:[%s210 + $0x29c] sm:$0xf]
      %v341 = vld [vmem:[%s210 + $0x2a0] sm:$0xff]
      %v342 = vld [vmem:[%s210 + $0x2a8] sm:$0xf]
      %v343 = vld [vmem:[%s210 + $0x2ac] sm:$0xff]
      %v344 = vld [vmem:[%s210 + $0x2b4] sm:$0xf]
      %v345 = vld [vmem:[%s210 + $0x2b8] sm:$0xff]
      %v346 = vld [vmem:[%s210 + $0x2c0] sm:$0xf]
      %v347 = vld [vmem:[%s210 + $0x2c4] sm:$0xff]
      %v348 = vld [vmem:[%s210 + $0x2cc] sm:$0xf]
      %v349 = vld [vmem:[%s210 + $0x2d0] sm:$0xff]
      %v350 = vld [vmem:[%s210 + $0x2d8] sm:$0xf]
      %v351 = vld [vmem:[%s210 + $0x2dc] sm:$0xff]
      %v352 = vld [vmem:[%s210 + $0x2e4] sm:$0xf]
      %v353 = vld [vmem:[%s210 + $0x2e8] sm:$0xff]
      %v354 = vld [vmem:[%s210 + $0x2f0] sm:$0xf]
      %v355 = vld [vmem:[%s210 + $0x2f4] sm:$0xff]
      %v356 = vld [vmem:[%s210 + $0x2fc] sm:$0xf]
      %v357 = vld [vmem:[%s215] sm:$0xf]
      %v358 = vld [vmem:[%s215 + $0x4] sm:$0xf]
      %v359 = vld [vmem:[%s215 + $0x8] sm:$0xf]
      %v360 = vld [vmem:[%s215 + $0xc] sm:$0xf]
      %v361 = vld [vmem:[%s215 + $0x10] sm:$0xf]
      %v362 = vld [vmem:[%s215 + $0x14] sm:$0xf]
      %v363 = vld [vmem:[%s215 + $0x18] sm:$0xf]
      %v364 = vld [vmem:[%s215 + $0x1c] sm:$0xf]
      %v365 = vld [vmem:[%s215 + $0x20] sm:$0xf]
      %v366 = vld [vmem:[%s215 + $0x24] sm:$0xf]
      %v367 = vld [vmem:[%s215 + $0x28] sm:$0xf]
      %v368 = vld [vmem:[%s215 + $0x2c] sm:$0xf]
      %v369 = vld [vmem:[%s215 + $0x30] sm:$0xf]
      %v370 = vld [vmem:[%s215 + $0x34] sm:$0xf]
      %v371 = vld [vmem:[%s215 + $0x38] sm:$0xf]
      %v372 = vld [vmem:[%s215 + $0x3c] sm:$0xf]
      %v373 = vld [vmem:[%s215 + $0x40] sm:$0xf]
      %v374 = vld [vmem:[%s215 + $0x44] sm:$0xf]
      %v375 = vld [vmem:[%s215 + $0x48] sm:$0xf]
      %v376 = vld [vmem:[%s215 + $0x4c] sm:$0xf]
      %v377 = vld [vmem:[%s215 + $0x50] sm:$0xf]
      %v378 = vld [vmem:[%s215 + $0x54] sm:$0xf]
      %v379 = vld [vmem:[%s215 + $0x58] sm:$0xf]
      %v380 = vld [vmem:[%s215 + $0x5c] sm:$0xf]
      %v381 = vld [vmem:[%s215 + $0x60] sm:$0xf]
      %v382 = vld [vmem:[%s215 + $0x64] sm:$0xf]
      %v383 = vld [vmem:[%s215 + $0x68] sm:$0xf]
      %v384 = vld [vmem:[%s215 + $0x6c] sm:$0xf]
      %v385 = vld [vmem:[%s215 + $0x70] sm:$0xf]
      %v386 = vld [vmem:[%s215 + $0x74] sm:$0xf]
      %v387 = vld [vmem:[%s215 + $0x78] sm:$0xf]
      %v388 = vld [vmem:[%s215 + $0x7c] sm:$0xf]
      %v389 = vld [vmem:[%s215 + $0x80] sm:$0xf]
      %v390 = vld [vmem:[%s215 + $0x84] sm:$0xf]
      %v391 = vld [vmem:[%s215 + $0x88] sm:$0xf]
      %v392 = vld [vmem:[%s215 + $0x8c] sm:$0xf]
      %v393 = vld [vmem:[%s215 + $0x90] sm:$0xf]
      %v394 = vld [vmem:[%s215 + $0x94] sm:$0xf]
      %v395 = vld [vmem:[%s215 + $0x98] sm:$0xf]
      %v396 = vld [vmem:[%s215 + $0x9c] sm:$0xf]
      %v397 = vld [vmem:[%s215 + $0xa0] sm:$0xf]
      %v398 = vld [vmem:[%s215 + $0xa4] sm:$0xf]
      %v399 = vld [vmem:[%s215 + $0xa8] sm:$0xf]
      %v400 = vld [vmem:[%s215 + $0xac] sm:$0xf]
      %v401 = vld [vmem:[%s215 + $0xb0] sm:$0xf]
      %v402 = vld [vmem:[%s215 + $0xb4] sm:$0xf]
      %v403 = vld [vmem:[%s215 + $0xb8] sm:$0xf]
      %v404 = vld [vmem:[%s215 + $0xbc] sm:$0xf]
      %v405 = vld [vmem:[%s218] sm:$0x1]
      %v407 = vlaneseq
      %v408 = vshrl.u32 %v407, 7
      %v409 = vsub.s32 0, %v408
      %v410 = vrot.slane %v405, %v409
      %v540 = vunpack.c.l.b16 %v229
      %v541 = vunpack.c.h.b16 %v229
      %v542 = vunpack.c.l.b16 %v230
      %v543 = vunpack.c.l.b16 %v231
      %v544 = vunpack.c.h.b16 %v231
      %v545 = vunpack.c.l.b16 %v232
      %v546 = vunpack.c.l.b16 %v233
      %v547 = vunpack.c.h.b16 %v233
      %v548 = vunpack.c.l.b16 %v234
      %v549 = vunpack.c.l.b16 %v235
      %v550 = vunpack.c.h.b16 %v235
      %v551 = vunpack.c.l.b16 %v236
      %v552 = vunpack.c.l.b16 %v237
      %v553 = vunpack.c.h.b16 %v237
      %v554 = vunpack.c.l.b16 %v238
      %v555 = vunpack.c.l.b16 %v239
      %v556 = vunpack.c.h.b16 %v239
      %v557 = vunpack.c.l.b16 %v240
      %v558 = vunpack.c.l.b16 %v241
      %v559 = vunpack.c.h.b16 %v241
      %v560 = vunpack.c.l.b16 %v242
      %v561 = vunpack.c.l.b16 %v243
      %v562 = vunpack.c.h.b16 %v243
      %v563 = vunpack.c.l.b16 %v244
      %v564 = vunpack.c.l.b16 %v245
      %v565 = vunpack.c.h.b16 %v245
      %v566 = vunpack.c.l.b16 %v246
      %v567 = vunpack.c.l.b16 %v247
      %v568 = vunpack.c.h.b16 %v247
      %v569 = vunpack.c.l.b16 %v248
      %v570 = vunpack.c.l.b16 %v249
      %v571 = vunpack.c.h.b16 %v249
      %v572 = vunpack.c.l.b16 %v250
      %v573 = vunpack.c.l.b16 %v251
      %v574 = vunpack.c.h.b16 %v251
      %v575 = vunpack.c.l.b16 %v252
      %v576 = vunpack.c.l.b16 %v253
      %v577 = vunpack.c.h.b16 %v253
      %v578 = vunpack.c.l.b16 %v254
      %v579 = vunpack.c.l.b16 %v255
      %v580 = vunpack.c.h.b16 %v255
      %v581 = vunpack.c.l.b16 %v256
      %v582 = vunpack.c.l.b16 %v257
      %v583 = vunpack.c.h.b16 %v257
      %v584 = vunpack.c.l.b16 %v258
      %v585 = vunpack.c.l.b16 %v259
      %v586 = vunpack.c.h.b16 %v259
      %v587 = vunpack.c.l.b16 %v260
      %v588 = vunpack.c.l.b16 %v261
      %v589 = vunpack.c.h.b16 %v261
      %v590 = vunpack.c.l.b16 %v262
      %v591 = vunpack.c.l.b16 %v263
      %v592 = vunpack.c.h.b16 %v263
      %v593 = vunpack.c.l.b16 %v264
      %v594 = vunpack.c.l.b16 %v265
      %v595 = vunpack.c.h.b16 %v265
      %v596 = vunpack.c.l.b16 %v266
      %v597 = vunpack.c.l.b16 %v267
      %v598 = vunpack.c.h.b16 %v267
      %v599 = vunpack.c.l.b16 %v268
      %v600 = vunpack.c.l.b16 %v269
      %v601 = vunpack.c.h.b16 %v269
      %v602 = vunpack.c.l.b16 %v270
      %v603 = vunpack.c.l.b16 %v271
      %v604 = vunpack.c.h.b16 %v271
      %v605 = vunpack.c.l.b16 %v272
      %v606 = vunpack.c.l.b16 %v273
      %v607 = vunpack.c.h.b16 %v273
      %v608 = vunpack.c.l.b16 %v274
      %v609 = vunpack.c.l.b16 %v275
      %v610 = vunpack.c.h.b16 %v275
      %v611 = vunpack.c.l.b16 %v276
      %v612 = vunpack.c.l.b16 %v277
      %v613 = vunpack.c.h.b16 %v277
      %v614 = vunpack.c.l.b16 %v278
      %v615 = vunpack.c.l.b16 %v279
      %v616 = vunpack.c.h.b16 %v279
      %v617 = vunpack.c.l.b16 %v280
      %v618 = vunpack.c.l.b16 %v281
      %v619 = vunpack.c.h.b16 %v281
      %v620 = vunpack.c.l.b16 %v282
      %v621 = vunpack.c.l.b16 %v283
      %v622 = vunpack.c.h.b16 %v283
      %v623 = vunpack.c.l.b16 %v284
      %v624 = vunpack.c.l.b16 %v285
      %v625 = vunpack.c.h.b16 %v285
      %v626 = vunpack.c.l.b16 %v286
      %v627 = vunpack.c.l.b16 %v287
      %v628 = vunpack.c.h.b16 %v287
      %v629 = vunpack.c.l.b16 %v288
      %v630 = vunpack.c.l.b16 %v289
      %v631 = vunpack.c.h.b16 %v289
      %v632 = vunpack.c.l.b16 %v290
      %v633 = vunpack.c.l.b16 %v291
      %v634 = vunpack.c.h.b16 %v291
      %v635 = vunpack.c.l.b16 %v292
      %v636 = vunpack.c.l.b16 %v293
      %v637 = vunpack.c.h.b16 %v293
      %v638 = vunpack.c.l.b16 %v294
      %v639 = vunpack.c.l.b16 %v295
      %v640 = vunpack.c.h.b16 %v295
      %v641 = vunpack.c.l.b16 %v296
      %v642 = vunpack.c.l.b16 %v297
      %v643 = vunpack.c.h.b16 %v297
      %v644 = vunpack.c.l.b16 %v298
      %v645 = vunpack.c.l.b16 %v299
      %v646 = vunpack.c.h.b16 %v299
      %v647 = vunpack.c.l.b16 %v300
      %v648 = vunpack.c.l.b16 %v301
      %v649 = vunpack.c.h.b16 %v301
      %v650 = vunpack.c.l.b16 %v302
      %v651 = vunpack.c.l.b16 %v303
      %v652 = vunpack.c.h.b16 %v303
      %v653 = vunpack.c.l.b16 %v304
      %v654 = vunpack.c.l.b16 %v305
      %v655 = vunpack.c.h.b16 %v305
      %v656 = vunpack.c.l.b16 %v306
      %v657 = vunpack.c.l.b16 %v307
      %v658 = vunpack.c.h.b16 %v307
      %v659 = vunpack.c.l.b16 %v308
      %v660 = vunpack.c.l.b16 %v309
      %v661 = vunpack.c.h.b16 %v309
      %v662 = vunpack.c.l.b16 %v310
      %v663 = vunpack.c.l.b16 %v311
      %v664 = vunpack.c.h.b16 %v311
      %v665 = vunpack.c.l.b16 %v312
      %v666 = vunpack.c.l.b16 %v313
      %v667 = vunpack.c.h.b16 %v313
      %v668 = vunpack.c.l.b16 %v314
      %v669 = vunpack.c.l.b16 %v315
      %v670 = vunpack.c.h.b16 %v315
      %v671 = vunpack.c.l.b16 %v316
      %v672 = vunpack.c.l.b16 %v317
      %v673 = vunpack.c.h.b16 %v317
      %v674 = vunpack.c.l.b16 %v318
      %v675 = vunpack.c.l.b16 %v319
      %v676 = vunpack.c.h.b16 %v319
      %v677 = vunpack.c.l.b16 %v320
      %v678 = vunpack.c.l.b16 %v321
      %v679 = vunpack.c.h.b16 %v321
      %v680 = vunpack.c.l.b16 %v322
      %v681 = vunpack.c.l.b16 %v323
      %v682 = vunpack.c.h.b16 %v323
      %v683 = vunpack.c.l.b16 %v324
      %v684 = vunpack.c.l.b16 %v325
      %v685 = vunpack.c.h.b16 %v325
      %v686 = vunpack.c.l.b16 %v326
      %v687 = vunpack.c.l.b16 %v327
      %v688 = vunpack.c.h.b16 %v327
      %v689 = vunpack.c.l.b16 %v328
      %v690 = vunpack.c.l.b16 %v329
      %v691 = vunpack.c.h.b16 %v329
      %v692 = vunpack.c.l.b16 %v330
      %v693 = vunpack.c.l.b16 %v331
      %v694 = vunpack.c.h.b16 %v331
      %v695 = vunpack.c.l.b16 %v332
      %v696 = vunpack.c.l.b16 %v333
      %v697 = vunpack.c.h.b16 %v333
      %v698 = vunpack.c.l.b16 %v334
      %v699 = vunpack.c.l.b16 %v335
      %v700 = vunpack.c.h.b16 %v335
      %v701 = vunpack.c.l.b16 %v336
      %v702 = vunpack.c.l.b16 %v337
      %v703 = vunpack.c.h.b16 %v337
      %v704 = vunpack.c.l.b16 %v338
      %v705 = vunpack.c.l.b16 %v339
      %v706 = vunpack.c.h.b16 %v339
      %v707 = vunpack.c.l.b16 %v340
      %v708 = vunpack.c.l.b16 %v341
      %v709 = vunpack.c.h.b16 %v341
      %v710 = vunpack.c.l.b16 %v342
      %v711 = vunpack.c.l.b16 %v343
      %v712 = vunpack.c.h.b16 %v343
      %v713 = vunpack.c.l.b16 %v344
      %v714 = vunpack.c.l.b16 %v345
      %v715 = vunpack.c.h.b16 %v345
      %v716 = vunpack.c.l.b16 %v346
      %v717 = vunpack.c.l.b16 %v347
      %v718 = vunpack.c.h.b16 %v347
      %v719 = vunpack.c.l.b16 %v348
      %v720 = vunpack.c.l.b16 %v349
      %v721 = vunpack.c.h.b16 %v349
      %v722 = vunpack.c.l.b16 %v350
      %v723 = vunpack.c.l.b16 %v351
      %v724 = vunpack.c.h.b16 %v351
      %v725 = vunpack.c.l.b16 %v352
      %v726 = vunpack.c.l.b16 %v353
      %v727 = vunpack.c.h.b16 %v353
      %v728 = vunpack.c.l.b16 %v354
      %v729 = vunpack.c.l.b16 %v355
      %v730 = vunpack.c.h.b16 %v355
      %v731 = vunpack.c.l.b16 %v356
      %v732 = vpack.c.b16 %v543, %v540
      %v733 = vpack.c.b16 %v544, %v541
      %v734 = vpack.c.b16 %v545, %v542
      %v735 = vpack.c.b16 %v549, %v546
      %v736 = vpack.c.b16 %v550, %v547
      %v737 = vpack.c.b16 %v551, %v548
      %v738 = vpack.c.b16 %v555, %v552
      %v739 = vpack.c.b16 %v556, %v553
      %v740 = vpack.c.b16 %v557, %v554
      %v741 = vpack.c.b16 %v561, %v558
      %v742 = vpack.c.b16 %v562, %v559
      %v743 = vpack.c.b16 %v563, %v560
      %v744 = vpack.c.b16 %v567, %v564
      %v745 = vpack.c.b16 %v568, %v565
      %v746 = vpack.c.b16 %v569, %v566
      %v747 = vpack.c.b16 %v573, %v570
      %v748 = vpack.c.b16 %v574, %v571
      %v749 = vpack.c.b16 %v575, %v572
      %v750 = vpack.c.b16 %v579, %v576
      %v751 = vpack.c.b16 %v580, %v577
      %v752 = vpack.c.b16 %v581, %v578
      %v753 = vpack.c.b16 %v585, %v582
      %v754 = vpack.c.b16 %v586, %v583
      %v755 = vpack.c.b16 %v587, %v584
      %v756 = vpack.c.b16 %v591, %v588
      %v757 = vpack.c.b16 %v592, %v589
      %v758 = vpack.c.b16 %v593, %v590
      %v759 = vpack.c.b16 %v597, %v594
      %v760 = vpack.c.b16 %v598, %v595
      %v761 = vpack.c.b16 %v599, %v596
      %v762 = vpack.c.b16 %v603, %v600
      %v763 = vpack.c.b16 %v604, %v601
      %v764 = vpack.c.b16 %v605, %v602
      %v765 = vpack.c.b16 %v609, %v606
      %v766 = vpack.c.b16 %v610, %v607
      %v767 = vpack.c.b16 %v611, %v608
      %v768 = vpack.c.b16 %v615, %v612
      %v769 = vpack.c.b16 %v616, %v613
      %v770 = vpack.c.b16 %v617, %v614
      %v771 = vpack.c.b16 %v621, %v618
      %v772 = vpack.c.b16 %v622, %v619
      %v773 = vpack.c.b16 %v623, %v620
      %v774 = vpack.c.b16 %v627, %v624
      %v775 = vpack.c.b16 %v628, %v625
      %v776 = vpack.c.b16 %v629, %v626
      %v777 = vpack.c.b16 %v633, %v630
      %v778 = vpack.c.b16 %v634, %v631
      %v779 = vpack.c.b16 %v635, %v632
      %v780 = vpack.c.b16 %v639, %v636
      %v781 = vpack.c.b16 %v640, %v637
      %v782 = vpack.c.b16 %v641, %v638
      %v783 = vpack.c.b16 %v645, %v642
      %v784 = vpack.c.b16 %v646, %v643
      %v785 = vpack.c.b16 %v647, %v644
      %v786 = vpack.c.b16 %v651, %v648
      %v787 = vpack.c.b16 %v652, %v649
      %v788 = vpack.c.b16 %v653, %v650
      %v789 = vpack.c.b16 %v657, %v654
      %v790 = vpack.c.b16 %v658, %v655
      %v791 = vpack.c.b16 %v659, %v656
      %v792 = vpack.c.b16 %v663, %v660
      %v793 = vpack.c.b16 %v664, %v661
      %v794 = vpack.c.b16 %v665, %v662
      %v795 = vpack.c.b16 %v669, %v666
      %v796 = vpack.c.b16 %v670, %v667
      %v797 = vpack.c.b16 %v671, %v668
      %v798 = vpack.c.b16 %v675, %v672
      %v799 = vpack.c.b16 %v676, %v673
      %v800 = vpack.c.b16 %v677, %v674
      %v801 = vpack.c.b16 %v681, %v678
      %v802 = vpack.c.b16 %v682, %v679
      %v803 = vpack.c.b16 %v683, %v680
      %v804 = vpack.c.b16 %v687, %v684
      %v805 = vpack.c.b16 %v688, %v685
      %v806 = vpack.c.b16 %v689, %v686
      %v807 = vpack.c.b16 %v693, %v690
      %v808 = vpack.c.b16 %v694, %v691
      %v809 = vpack.c.b16 %v695, %v692
      %v810 = vpack.c.b16 %v699, %v696
      %v811 = vpack.c.b16 %v700, %v697
      %v812 = vpack.c.b16 %v701, %v698
      %v813 = vpack.c.b16 %v705, %v702
      %v814 = vpack.c.b16 %v706, %v703
      %v815 = vpack.c.b16 %v707, %v704
      %v816 = vpack.c.b16 %v711, %v708
      %v817 = vpack.c.b16 %v712, %v709
      %v818 = vpack.c.b16 %v713, %v710
      %v819 = vpack.c.b16 %v717, %v714
      %v820 = vpack.c.b16 %v718, %v715
      %v821 = vpack.c.b16 %v719, %v716
      %v822 = vpack.c.b16 %v723, %v720
      %v823 = vpack.c.b16 %v724, %v721
      %v824 = vpack.c.b16 %v725, %v722
      %v825 = vpack.c.b16 %v729, %v726
      %v826 = vpack.c.b16 %v730, %v727
      %v827 = vpack.c.b16 %v731, %v728
      %v972 = vunpack.c.l.b16 %v357
      %v973 = vunpack.c.l.b16 %v358
      %v974 = vunpack.c.l.b16 %v359
      %v975 = vunpack.c.l.b16 %v360
      %v976 = vunpack.c.l.b16 %v361
      %v977 = vunpack.c.l.b16 %v362
      %v978 = vunpack.c.l.b16 %v363
      %v979 = vunpack.c.l.b16 %v364
      %v980 = vunpack.c.l.b16 %v365
      %v981 = vunpack.c.l.b16 %v366
      %v982 = vunpack.c.l.b16 %v367
      %v983 = vunpack.c.l.b16 %v368
      %v984 = vunpack.c.l.b16 %v369
      %v985 = vunpack.c.l.b16 %v370
      %v986 = vunpack.c.l.b16 %v371
      %v987 = vunpack.c.l.b16 %v372
      %v988 = vunpack.c.l.b16 %v373
      %v989 = vunpack.c.l.b16 %v374
      %v990 = vunpack.c.l.b16 %v375
      %v991 = vunpack.c.l.b16 %v376
      %v992 = vunpack.c.l.b16 %v377
      %v993 = vunpack.c.l.b16 %v378
      %v994 = vunpack.c.l.b16 %v379
      %v995 = vunpack.c.l.b16 %v380
      %v996 = vunpack.c.l.b16 %v381
      %v997 = vunpack.c.l.b16 %v382
      %v998 = vunpack.c.l.b16 %v383
      %v999 = vunpack.c.l.b16 %v384
      %v1000 = vunpack.c.l.b16 %v385
      %v1001 = vunpack.c.l.b16 %v386
      %v1002 = vunpack.c.l.b16 %v387
      %v1003 = vunpack.c.l.b16 %v388
      %v1004 = vunpack.c.l.b16 %v389
      %v1005 = vunpack.c.l.b16 %v390
      %v1006 = vunpack.c.l.b16 %v391
      %v1007 = vunpack.c.l.b16 %v392
      %v1008 = vunpack.c.l.b16 %v393
      %v1009 = vunpack.c.l.b16 %v394
      %v1010 = vunpack.c.l.b16 %v395
      %v1011 = vunpack.c.l.b16 %v396
      %v1012 = vunpack.c.l.b16 %v397
      %v1013 = vunpack.c.l.b16 %v398
      %v1014 = vunpack.c.l.b16 %v399
      %v1015 = vunpack.c.l.b16 %v400
      %v1016 = vunpack.c.l.b16 %v401
      %v1017 = vunpack.c.l.b16 %v402
      %v1018 = vunpack.c.l.b16 %v403
      %v1019 = vunpack.c.l.b16 %v404
      %v1020 = vpack.c.b16 %v973, %v972
      %v1021 = vpack.c.b16 %v975, %v974
      %v1022 = vpack.c.b16 %v977, %v976
      %v1023 = vpack.c.b16 %v979, %v978
      %v1024 = vpack.c.b16 %v981, %v980
      %v1025 = vpack.c.b16 %v983, %v982
      %v1026 = vpack.c.b16 %v985, %v984
      %v1027 = vpack.c.b16 %v987, %v986
      %v1028 = vpack.c.b16 %v989, %v988
      %v1029 = vpack.c.b16 %v991, %v990
      %v1030 = vpack.c.b16 %v993, %v992
      %v1031 = vpack.c.b16 %v995, %v994
      %v1032 = vpack.c.b16 %v997, %v996
      %v1033 = vpack.c.b16 %v999, %v998
      %v1034 = vpack.c.b16 %v1001, %v1000
      %v1035 = vpack.c.b16 %v1003, %v1002
      %v1036 = vpack.c.b16 %v1005, %v1004
      %v1037 = vpack.c.b16 %v1007, %v1006
      %v1038 = vpack.c.b16 %v1009, %v1008
      %v1039 = vpack.c.b16 %v1011, %v1010
      %v1040 = vpack.c.b16 %v1013, %v1012
      %v1041 = vpack.c.b16 %v1015, %v1014
      %v1042 = vpack.c.b16 %v1017, %v1016
      %v1043 = vpack.c.b16 %v1019, %v1018
      %1068 = vmatprep.subr.bf16.mxu0 0
      %1069 = vmatpush1.bf16.msra.mxu0 %v1027
      %1070 = vmatprep.subr.bf16.mxu0 0
      %1071 = vmatpush1.bf16.msra.mxu0 %v1026
      %1072 = vmatprep.subr.bf16.mxu0 0
      %1073 = vmatpush1.bf16.msra.mxu0 %v1025
      %1074 = vmatprep.subr.bf16.mxu0 0
      %1075 = vmatpush1.bf16.msra.mxu0 %v1024
      %1076 = vmatprep.subr.bf16.mxu0 0
      %1077 = vmatpush1.bf16.msra.mxu0 %v1023
      %1078 = vmatprep.subr.bf16.mxu0 0
      %1079 = vmatpush1.bf16.msra.mxu0 %v1022
      %1080 = vmatprep.subr.bf16.mxu0 0
      %1081 = vmatpush1.bf16.msra.mxu0 %v1021
      %1082 = vmatprep.subr.bf16.mxu0 0
      %1083 = vmatpush1.bf16.msra.mxu0 %v1020
      %1084 = vmatprep.subr.bf16.mxu0 0
      %1085 = vmatpush2.bf16.msra.mxu0 %v1035
      %1086 = vmatprep.subr.bf16.mxu0 0
      %1087 = vmatpush2.bf16.msra.mxu0 %v1034
      %1088 = vmatprep.subr.bf16.mxu0 0
      %1089 = vmatpush2.bf16.msra.mxu0 %v1033
      %1090 = vmatprep.subr.bf16.mxu0 0
      %1091 = vmatpush2.bf16.msra.mxu0 %v1032
      %1092 = vmatprep.subr.bf16.mxu0 0
      %1093 = vmatpush2.bf16.msra.mxu0 %v1031
      %1094 = vmatprep.subr.bf16.mxu0 0
      %1095 = vmatpush2.bf16.msra.mxu0 %v1030
      %1096 = vmatprep.subr.bf16.mxu0 0
      %1097 = vmatpush2.bf16.msra.mxu0 %v1029
      %1098 = vmatprep.subr.bf16.mxu0 0
      %1099 = vmatpush2.bf16.msra.mxu0 %v1028
      %1100 = vmatprep.mubr.bf16.mxu0 %v733
      %1101 = vmatmul.mubr.bf16.gmra.mxu0 %v732
      %v1102 = vpop.f32.mrf.mxu0
      %v1103 = vadd.f32 %v410, %v1102
      %v1104 = vpop.f32.mrf.mxu0
      %v1105 = vpop.f32.mrf.mxu0
      %v1106 = vadd.f32 %v410, %v1105
      %v1107 = vpop.f32.mrf.mxu0
      %1108 = vmatprep.mubr.bf16.mxu0 %v736
      %1109 = vmatmul.mubr.bf16.gmra.mxu0 %v735
      %v1110 = vpop.f32.mrf.mxu0
      %v1111 = vadd.f32 %v410, %v1110
      %v1112 = vpop.f32.mrf.mxu0
      %v1113 = vpop.f32.mrf.mxu0
      %v1114 = vadd.f32 %v410, %v1113
      %v1115 = vpop.f32.mrf.mxu0
      %1116 = vmatprep.mubr.bf16.mxu0 %v739
      %1117 = vmatmul.mubr.bf16.gmra.mxu0 %v738
      %v1118 = vpop.f32.mrf.mxu0
      %v1119 = vadd.f32 %v410, %v1118
      %v1120 = vpop.f32.mrf.mxu0
      %v1121 = vpop.f32.mrf.mxu0
      %v1122 = vadd.f32 %v410, %v1121
      %v1123 = vpop.f32.mrf.mxu0
      %1124 = vmatprep.mubr.bf16.mxu0 %v742
      %1125 = vmatmul.mubr.bf16.gmra.mxu0 %v741
      %v1126 = vpop.f32.mrf.mxu0
      %v1127 = vadd.f32 %v410, %v1126
      %v1128 = vpop.f32.mrf.mxu0
      %v1129 = vpop.f32.mrf.mxu0
      %v1130 = vadd.f32 %v410, %v1129
      %v1131 = vpop.f32.mrf.mxu0
      %1132 = vmatprep.mubr.bf16.mxu0 %v745
      %1133 = vmatmul.mubr.bf16.gmra.mxu0 %v744
      %v1134 = vpop.f32.mrf.mxu0
      %v1135 = vadd.f32 %v410, %v1134
      %v1136 = vpop.f32.mrf.mxu0
      %v1137 = vpop.f32.mrf.mxu0
      %v1138 = vadd.f32 %v410, %v1137
      %v1139 = vpop.f32.mrf.mxu0
      %1140 = vmatprep.mubr.bf16.mxu0 %v748
      %1141 = vmatmul.mubr.bf16.gmra.mxu0 %v747
      %v1142 = vpop.f32.mrf.mxu0
      %v1143 = vadd.f32 %v410, %v1142
      %v1144 = vpop.f32.mrf.mxu0
      %v1145 = vpop.f32.mrf.mxu0
      %v1146 = vadd.f32 %v410, %v1145
      %v1147 = vpop.f32.mrf.mxu0
      %1148 = vmatprep.mubr.bf16.mxu0 %v751
      %1149 = vmatmul.mubr.bf16.gmra.mxu0 %v750
      %v1150 = vpop.f32.mrf.mxu0
      %v1151 = vadd.f32 %v410, %v1150
      %v1152 = vpop.f32.mrf.mxu0
      %v1153 = vpop.f32.mrf.mxu0
      %v1154 = vadd.f32 %v410, %v1153
      %v1155 = vpop.f32.mrf.mxu0
      %1156 = vmatprep.mubr.bf16.mxu0 %v754
      %1157 = vmatmul.mubr.bf16.gmra.mxu0 %v753
      %v1158 = vpop.f32.mrf.mxu0
      %v1159 = vadd.f32 %v410, %v1158
      %v1160 = vpop.f32.mrf.mxu0
      %v1161 = vpop.f32.mrf.mxu0
      %v1162 = vadd.f32 %v410, %v1161
      %v1163 = vpop.f32.mrf.mxu0
      %1164 = vmatprep.mubr.bf16.mxu0 %v757
      %1165 = vmatmul.mubr.bf16.gmra.mxu0 %v756
      %v1166 = vpop.f32.mrf.mxu0
      %v1167 = vadd.f32 %v410, %v1166
      %v1168 = vpop.f32.mrf.mxu0
      %v1169 = vpop.f32.mrf.mxu0
      %v1170 = vadd.f32 %v410, %v1169
      %v1171 = vpop.f32.mrf.mxu0
      %1172 = vmatprep.mubr.bf16.mxu0 %v760
      %1173 = vmatmul.mubr.bf16.gmra.mxu0 %v759
      %v1174 = vpop.f32.mrf.mxu0
      %v1175 = vadd.f32 %v410, %v1174
      %v1176 = vpop.f32.mrf.mxu0
      %v1177 = vpop.f32.mrf.mxu0
      %v1178 = vadd.f32 %v410, %v1177
      %v1179 = vpop.f32.mrf.mxu0
      %1180 = vmatprep.mubr.bf16.mxu0 %v763
      %1181 = vmatmul.mubr.bf16.gmra.mxu0 %v762
      %v1182 = vpop.f32.mrf.mxu0
      %v1183 = vadd.f32 %v410, %v1182
      %v1184 = vpop.f32.mrf.mxu0
      %v1185 = vpop.f32.mrf.mxu0
      %v1186 = vadd.f32 %v410, %v1185
      %v1187 = vpop.f32.mrf.mxu0
      %1188 = vmatprep.mubr.bf16.mxu0 %v766
      %1189 = vmatmul.mubr.bf16.gmra.mxu0 %v765
      %v1190 = vpop.f32.mrf.mxu0
      %v1191 = vadd.f32 %v410, %v1190
      %v1192 = vpop.f32.mrf.mxu0
      %v1193 = vpop.f32.mrf.mxu0
      %v1194 = vadd.f32 %v410, %v1193
      %v1195 = vpop.f32.mrf.mxu0
      %1196 = vmatprep.mubr.bf16.mxu0 %v769
      %1197 = vmatmul.mubr.bf16.gmra.mxu0 %v768
      %v1198 = vpop.f32.mrf.mxu0
      %v1199 = vadd.f32 %v410, %v1198
      %v1200 = vpop.f32.mrf.mxu0
      %v1201 = vpop.f32.mrf.mxu0
      %v1202 = vadd.f32 %v410, %v1201
      %v1203 = vpop.f32.mrf.mxu0
      %1204 = vmatprep.mubr.bf16.mxu0 %v772
      %1205 = vmatmul.mubr.bf16.gmra.mxu0 %v771
      %v1206 = vpop.f32.mrf.mxu0
      %v1207 = vadd.f32 %v410, %v1206
      %v1208 = vpop.f32.mrf.mxu0
      %v1209 = vpop.f32.mrf.mxu0
      %v1210 = vadd.f32 %v410, %v1209
      %v1211 = vpop.f32.mrf.mxu0
      %1212 = vmatprep.mubr.bf16.mxu0 %v775
      %1213 = vmatmul.mubr.bf16.gmra.mxu0 %v774
      %v1214 = vpop.f32.mrf.mxu0
      %v1215 = vadd.f32 %v410, %v1214
      %v1216 = vpop.f32.mrf.mxu0
      %v1217 = vpop.f32.mrf.mxu0
      %v1218 = vadd.f32 %v410, %v1217
      %v1219 = vpop.f32.mrf.mxu0
      %1220 = vmatprep.mubr.bf16.mxu0 %v778
      %1221 = vmatmul.mubr.bf16.gmra.mxu0 %v777
      %v1222 = vpop.f32.mrf.mxu0
      %v1223 = vadd.f32 %v410, %v1222
      %v1224 = vpop.f32.mrf.mxu0
      %v1225 = vpop.f32.mrf.mxu0
      %v1226 = vadd.f32 %v410, %v1225
      %v1227 = vpop.f32.mrf.mxu0
      %1228 = vmatprep.mubr.bf16.mxu0 %v781
      %1229 = vmatmul.mubr.bf16.gmra.mxu0 %v780
      %v1230 = vpop.f32.mrf.mxu0
      %v1231 = vadd.f32 %v410, %v1230
      %v1232 = vpop.f32.mrf.mxu0
      %v1233 = vpop.f32.mrf.mxu0
      %v1234 = vadd.f32 %v410, %v1233
      %v1235 = vpop.f32.mrf.mxu0
      %1236 = vmatprep.mubr.bf16.mxu0 %v784
      %1237 = vmatmul.mubr.bf16.gmra.mxu0 %v783
      %v1238 = vpop.f32.mrf.mxu0
      %v1239 = vadd.f32 %v410, %v1238
      %v1240 = vpop.f32.mrf.mxu0
      %v1241 = vpop.f32.mrf.mxu0
      %v1242 = vadd.f32 %v410, %v1241
      %v1243 = vpop.f32.mrf.mxu0
      %1244 = vmatprep.mubr.bf16.mxu0 %v787
      %1245 = vmatmul.mubr.bf16.gmra.mxu0 %v786
      %v1246 = vpop.f32.mrf.mxu0
      %v1247 = vadd.f32 %v410, %v1246
      %v1248 = vpop.f32.mrf.mxu0
      %v1249 = vpop.f32.mrf.mxu0
      %v1250 = vadd.f32 %v410, %v1249
      %v1251 = vpop.f32.mrf.mxu0
      %1252 = vmatprep.mubr.bf16.mxu0 %v790
      %1253 = vmatmul.mubr.bf16.gmra.mxu0 %v789
      %v1254 = vpop.f32.mrf.mxu0
      %v1255 = vadd.f32 %v410, %v1254
      %v1256 = vpop.f32.mrf.mxu0
      %v1257 = vpop.f32.mrf.mxu0
      %v1258 = vadd.f32 %v410, %v1257
      %v1259 = vpop.f32.mrf.mxu0
      %1260 = vmatprep.mubr.bf16.mxu0 %v793
      %1261 = vmatmul.mubr.bf16.gmra.mxu0 %v792
      %v1262 = vpop.f32.mrf.mxu0
      %v1263 = vadd.f32 %v410, %v1262
      %v1264 = vpop.f32.mrf.mxu0
      %v1265 = vpop.f32.mrf.mxu0
      %v1266 = vadd.f32 %v410, %v1265
      %v1267 = vpop.f32.mrf.mxu0
      %1268 = vmatprep.mubr.bf16.mxu0 %v796
      %1269 = vmatmul.mubr.bf16.gmra.mxu0 %v795
      %v1270 = vpop.f32.mrf.mxu0
      %v1271 = vadd.f32 %v410, %v1270
      %v1272 = vpop.f32.mrf.mxu0
      %v1273 = vpop.f32.mrf.mxu0
      %v1274 = vadd.f32 %v410, %v1273
      %v1275 = vpop.f32.mrf.mxu0
      %1276 = vmatprep.mubr.bf16.mxu0 %v799
      %1277 = vmatmul.mubr.bf16.gmra.mxu0 %v798
      %v1278 = vpop.f32.mrf.mxu0
      %v1279 = vadd.f32 %v410, %v1278
      %v1280 = vpop.f32.mrf.mxu0
      %v1281 = vpop.f32.mrf.mxu0
      %v1282 = vadd.f32 %v410, %v1281
      %v1283 = vpop.f32.mrf.mxu0
      %1284 = vmatprep.mubr.bf16.mxu0 %v802
      %1285 = vmatmul.mubr.bf16.gmra.mxu0 %v801
      %v1286 = vpop.f32.mrf.mxu0
      %v1287 = vadd.f32 %v410, %v1286
      %v1288 = vpop.f32.mrf.mxu0
      %v1289 = vpop.f32.mrf.mxu0
      %v1290 = vadd.f32 %v410, %v1289
      %v1291 = vpop.f32.mrf.mxu0
      %1292 = vmatprep.mubr.bf16.mxu0 %v805
      %1293 = vmatmul.mubr.bf16.gmra.mxu0 %v804
      %v1294 = vpop.f32.mrf.mxu0
      %v1295 = vadd.f32 %v410, %v1294
      %v1296 = vpop.f32.mrf.mxu0
      %v1297 = vpop.f32.mrf.mxu0
      %v1298 = vadd.f32 %v410, %v1297
      %v1299 = vpop.f32.mrf.mxu0
      %1300 = vmatprep.mubr.bf16.mxu0 %v808
      %1301 = vmatmul.mubr.bf16.gmra.mxu0 %v807
      %v1302 = vpop.f32.mrf.mxu0
      %v1303 = vadd.f32 %v410, %v1302
      %v1304 = vpop.f32.mrf.mxu0
      %v1305 = vpop.f32.mrf.mxu0
      %v1306 = vadd.f32 %v410, %v1305
      %v1307 = vpop.f32.mrf.mxu0
      %1308 = vmatprep.mubr.bf16.mxu0 %v811
      %1309 = vmatmul.mubr.bf16.gmra.mxu0 %v810
      %v1310 = vpop.f32.mrf.mxu0
      %v1311 = vadd.f32 %v410, %v1310
      %v1312 = vpop.f32.mrf.mxu0
      %v1313 = vpop.f32.mrf.mxu0
      %v1314 = vadd.f32 %v410, %v1313
      %v1315 = vpop.f32.mrf.mxu0
      %1316 = vmatprep.mubr.bf16.mxu0 %v814
      %1317 = vmatmul.mubr.bf16.gmra.mxu0 %v813
      %v1318 = vpop.f32.mrf.mxu0
      %v1319 = vadd.f32 %v410, %v1318
      %v1320 = vpop.f32.mrf.mxu0
      %v1321 = vpop.f32.mrf.mxu0
      %v1322 = vadd.f32 %v410, %v1321
      %v1323 = vpop.f32.mrf.mxu0
      %1324 = vmatprep.mubr.bf16.mxu0 %v817
      %1325 = vmatmul.mubr.bf16.gmra.mxu0 %v816
      %v1326 = vpop.f32.mrf.mxu0
      %v1327 = vadd.f32 %v410, %v1326
      %v1328 = vpop.f32.mrf.mxu0
      %v1329 = vpop.f32.mrf.mxu0
      %v1330 = vadd.f32 %v410, %v1329
      %v1331 = vpop.f32.mrf.mxu0
      %1332 = vmatprep.mubr.bf16.mxu0 %v820
      %1333 = vmatmul.mubr.bf16.gmra.mxu0 %v819
      %v1334 = vpop.f32.mrf.mxu0
      %v1335 = vadd.f32 %v410, %v1334
      %v1336 = vpop.f32.mrf.mxu0
      %v1337 = vpop.f32.mrf.mxu0
      %v1338 = vadd.f32 %v410, %v1337
      %v1339 = vpop.f32.mrf.mxu0
      %1340 = vmatprep.mubr.bf16.mxu0 %v823
      %1341 = vmatmul.mubr.bf16.gmra.mxu0 %v822
      %v1342 = vpop.f32.mrf.mxu0
      %v1343 = vadd.f32 %v410, %v1342
      %v1344 = vpop.f32.mrf.mxu0
      %v1345 = vpop.f32.mrf.mxu0
      %v1346 = vadd.f32 %v410, %v1345
      %v1347 = vpop.f32.mrf.mxu0
      %1348 = vmatprep.mubr.bf16.mxu0 %v826
      %1349 = vmatmul.mubr.bf16.gmra.mxu0 %v825
      %v1350 = vpop.f32.mrf.mxu0
      %v1351 = vadd.f32 %v410, %v1350
      %v1352 = vpop.f32.mrf.mxu0
      %v1353 = vpop.f32.mrf.mxu0
      %v1354 = vadd.f32 %v410, %v1353
      %v1355 = vpop.f32.mrf.mxu0
      %1356 = vdwg.mxu0
      %1357 = vmatprep.subr.bf16.mxu0 0
      %1358 = vmatpush1.bf16.msra.mxu0 %v1043
      %1359 = vmatprep.subr.bf16.mxu0 0
      %1360 = vmatpush1.bf16.msra.mxu0 %v1042
      %1361 = vmatprep.subr.bf16.mxu0 0
      %1362 = vmatpush1.bf16.msra.mxu0 %v1041
      %1363 = vmatprep.subr.bf16.mxu0 0
      %1364 = vmatpush1.bf16.msra.mxu0 %v1040
      %1365 = vmatprep.subr.bf16.mxu0 0
      %1366 = vmatpush1.bf16.msra.mxu0 %v1039
      %1367 = vmatprep.subr.bf16.mxu0 0
      %1368 = vmatpush1.bf16.msra.mxu0 %v1038
      %1369 = vmatprep.subr.bf16.mxu0 0
      %1370 = vmatpush1.bf16.msra.mxu0 %v1037
      %1371 = vmatprep.subr.bf16.mxu0 0
      %1372 = vmatpush1.bf16.msra.mxu0 %v1036
      %1373 = vmatprep.subr.bf16.mxu0 0
      %1374 = vmatpush2.bf16.msra.mxu0 0
      %1375 = vmatprep.subr.bf16.mxu0 0
      %1376 = vmatpush2.bf16.msra.mxu0 0
      %1377 = vmatprep.subr.bf16.mxu0 0
      %1378 = vmatpush2.bf16.msra.mxu0 0
      %1379 = vmatprep.subr.bf16.mxu0 0
      %1380 = vmatpush2.bf16.msra.mxu0 0
      %1381 = vmatprep.subr.bf16.mxu0 0
      %1382 = vmatpush2.bf16.msra.mxu0 0
      %1383 = vmatprep.subr.bf16.mxu0 0
      %1384 = vmatpush2.bf16.msra.mxu0 0
      %1385 = vmatprep.subr.bf16.mxu0 0
      %1386 = vmatpush2.bf16.msra.mxu0 0
      %1387 = vmatprep.subr.bf16.mxu0 0
      %1388 = vmatpush2.bf16.msra.mxu0 0
      %1389 = vmatprep.mubr.bf16.mxu0 0
      %1390 = vmatmul.mubr.bf16.gmra.mxu0 %v734
      %v1391 = vpop.f32.mrf.mxu0
      %v1392 = vadd.f32 %v1103, %v1391
      %v1393 = vpop.f32.mrf.mxu0
      %v1394 = vpop.f32.mrf.mxu0
      %v1395 = vadd.f32 %v1106, %v1394
      %v1396 = vpop.f32.mrf.mxu0
      %1397 = vmatprep.mubr.bf16.mxu0 0
      %1398 = vmatmul.mubr.bf16.gmra.mxu0 %v737
      %v1399 = vpop.f32.mrf.mxu0
      %v1400 = vadd.f32 %v1111, %v1399
      %v1401 = vpop.f32.mrf.mxu0
      %v1402 = vpop.f32.mrf.mxu0
      %v1403 = vadd.f32 %v1114, %v1402
      %v1404 = vpop.f32.mrf.mxu0
      %1405 = vmatprep.mubr.bf16.mxu0 0
      %1406 = vmatmul.mubr.bf16.gmra.mxu0 %v740
      %v1407 = vpop.f32.mrf.mxu0
      %v1408 = vadd.f32 %v1119, %v1407
      %v1409 = vpop.f32.mrf.mxu0
      %v1410 = vpop.f32.mrf.mxu0
      %v1411 = vadd.f32 %v1122, %v1410
      %v1412 = vpop.f32.mrf.mxu0
      %1413 = vmatprep.mubr.bf16.mxu0 0
      %1414 = vmatmul.mubr.bf16.gmra.mxu0 %v743
      %v1415 = vpop.f32.mrf.mxu0
      %v1416 = vadd.f32 %v1127, %v1415
      %v1417 = vpop.f32.mrf.mxu0
      %v1418 = vpop.f32.mrf.mxu0
      %v1419 = vadd.f32 %v1130, %v1418
      %v1420 = vpop.f32.mrf.mxu0
      %1421 = vmatprep.mubr.bf16.mxu0 0
      %1422 = vmatmul.mubr.bf16.gmra.mxu0 %v746
      %v1423 = vpop.f32.mrf.mxu0
      %v1424 = vadd.f32 %v1135, %v1423
      %v1425 = vpop.f32.mrf.mxu0
      %v1426 = vpop.f32.mrf.mxu0
      %v1427 = vadd.f32 %v1138, %v1426
      %v1428 = vpop.f32.mrf.mxu0
      %1429 = vmatprep.mubr.bf16.mxu0 0
      %1430 = vmatmul.mubr.bf16.gmra.mxu0 %v749
      %v1431 = vpop.f32.mrf.mxu0
      %v1432 = vadd.f32 %v1143, %v1431
      %v1433 = vpop.f32.mrf.mxu0
      %v1434 = vpop.f32.mrf.mxu0
      %v1435 = vadd.f32 %v1146, %v1434
      %v1436 = vpop.f32.mrf.mxu0
      %1437 = vmatprep.mubr.bf16.mxu0 0
      %1438 = vmatmul.mubr.bf16.gmra.mxu0 %v752
      %v1439 = vpop.f32.mrf.mxu0
      %v1440 = vadd.f32 %v1151, %v1439
      %v1441 = vpop.f32.mrf.mxu0
      %v1442 = vpop.f32.mrf.mxu0
      %v1443 = vadd.f32 %v1154, %v1442
      %v1444 = vpop.f32.mrf.mxu0
      %1445 = vmatprep.mubr.bf16.mxu0 0
      %1446 = vmatmul.mubr.bf16.gmra.mxu0 %v755
      %v1447 = vpop.f32.mrf.mxu0
      %v1448 = vadd.f32 %v1159, %v1447
      %v1449 = vpop.f32.mrf.mxu0
      %v1450 = vpop.f32.mrf.mxu0
      %v1451 = vadd.f32 %v1162, %v1450
      %v1452 = vpop.f32.mrf.mxu0
      %1453 = vmatprep.mubr.bf16.mxu0 0
      %1454 = vmatmul.mubr.bf16.gmra.mxu0 %v758
      %v1455 = vpop.f32.mrf.mxu0
      %v1456 = vadd.f32 %v1167, %v1455
      %v1457 = vpop.f32.mrf.mxu0
      %v1458 = vpop.f32.mrf.mxu0
      %v1459 = vadd.f32 %v1170, %v1458
      %v1460 = vpop.f32.mrf.mxu0
      %1461 = vmatprep.mubr.bf16.mxu0 0
      %1462 = vmatmul.mubr.bf16.gmra.mxu0 %v761
      %v1463 = vpop.f32.mrf.mxu0
      %v1464 = vadd.f32 %v1175, %v1463
      %v1465 = vpop.f32.mrf.mxu0
      %v1466 = vpop.f32.mrf.mxu0
      %v1467 = vadd.f32 %v1178, %v1466
      %v1468 = vpop.f32.mrf.mxu0
      %1469 = vmatprep.mubr.bf16.mxu0 0
      %1470 = vmatmul.mubr.bf16.gmra.mxu0 %v764
      %v1471 = vpop.f32.mrf.mxu0
      %v1472 = vadd.f32 %v1183, %v1471
      %v1473 = vpop.f32.mrf.mxu0
      %v1474 = vpop.f32.mrf.mxu0
      %v1475 = vadd.f32 %v1186, %v1474
      %v1476 = vpop.f32.mrf.mxu0
      %1477 = vmatprep.mubr.bf16.mxu0 0
      %1478 = vmatmul.mubr.bf16.gmra.mxu0 %v767
      %v1479 = vpop.f32.mrf.mxu0
      %v1480 = vadd.f32 %v1191, %v1479
      %v1481 = vpop.f32.mrf.mxu0
      %v1482 = vpop.f32.mrf.mxu0
      %v1483 = vadd.f32 %v1194, %v1482
      %v1484 = vpop.f32.mrf.mxu0
      %1485 = vmatprep.mubr.bf16.mxu0 0
      %1486 = vmatmul.mubr.bf16.gmra.mxu0 %v770
      %v1487 = vpop.f32.mrf.mxu0
      %v1488 = vadd.f32 %v1199, %v1487
      %v1489 = vpop.f32.mrf.mxu0
      %v1490 = vpop.f32.mrf.mxu0
      %v1491 = vadd.f32 %v1202, %v1490
      %v1492 = vpop.f32.mrf.mxu0
      %1493 = vmatprep.mubr.bf16.mxu0 0
      %1494 = vmatmul.mubr.bf16.gmra.mxu0 %v773
      %v1495 = vpop.f32.mrf.mxu0
      %v1496 = vadd.f32 %v1207, %v1495
      %v1497 = vpop.f32.mrf.mxu0
      %v1498 = vpop.f32.mrf.mxu0
      %v1499 = vadd.f32 %v1210, %v1498
      %v1500 = vpop.f32.mrf.mxu0
      %1501 = vmatprep.mubr.bf16.mxu0 0
      %1502 = vmatmul.mubr.bf16.gmra.mxu0 %v776
      %v1503 = vpop.f32.mrf.mxu0
      %v1504 = vadd.f32 %v1215, %v1503
      %v1505 = vpop.f32.mrf.mxu0
      %v1506 = vpop.f32.mrf.mxu0
      %v1507 = vadd.f32 %v1218, %v1506
      %v1508 = vpop.f32.mrf.mxu0
      %1509 = vmatprep.mubr.bf16.mxu0 0
      %1510 = vmatmul.mubr.bf16.gmra.mxu0 %v779
      %v1511 = vpop.f32.mrf.mxu0
      %v1512 = vadd.f32 %v1223, %v1511
      %v1513 = vpop.f32.mrf.mxu0
      %v1514 = vpop.f32.mrf.mxu0
      %v1515 = vadd.f32 %v1226, %v1514
      %v1516 = vpop.f32.mrf.mxu0
      %1517 = vmatprep.mubr.bf16.mxu0 0
      %1518 = vmatmul.mubr.bf16.gmra.mxu0 %v782
      %v1519 = vpop.f32.mrf.mxu0
      %v1520 = vadd.f32 %v1231, %v1519
      %v1521 = vpop.f32.mrf.mxu0
      %v1522 = vpop.f32.mrf.mxu0
      %v1523 = vadd.f32 %v1234, %v1522
      %v1524 = vpop.f32.mrf.mxu0
      %1525 = vmatprep.mubr.bf16.mxu0 0
      %1526 = vmatmul.mubr.bf16.gmra.mxu0 %v785
      %v1527 = vpop.f32.mrf.mxu0
      %v1528 = vadd.f32 %v1239, %v1527
      %v1529 = vpop.f32.mrf.mxu0
      %v1530 = vpop.f32.mrf.mxu0
      %v1531 = vadd.f32 %v1242, %v1530
      %v1532 = vpop.f32.mrf.mxu0
      %1533 = vmatprep.mubr.bf16.mxu0 0
      %1534 = vmatmul.mubr.bf16.gmra.mxu0 %v788
      %v1535 = vpop.f32.mrf.mxu0
      %v1536 = vadd.f32 %v1247, %v1535
      %v1537 = vpop.f32.mrf.mxu0
      %v1538 = vpop.f32.mrf.mxu0
      %v1539 = vadd.f32 %v1250, %v1538
      %v1540 = vpop.f32.mrf.mxu0
      %1541 = vmatprep.mubr.bf16.mxu0 0
      %1542 = vmatmul.mubr.bf16.gmra.mxu0 %v791
      %v1543 = vpop.f32.mrf.mxu0
      %v1544 = vadd.f32 %v1255, %v1543
      %v1545 = vpop.f32.mrf.mxu0
      %v1546 = vpop.f32.mrf.mxu0
      %v1547 = vadd.f32 %v1258, %v1546
      %v1548 = vpop.f32.mrf.mxu0
      %1549 = vmatprep.mubr.bf16.mxu0 0
      %1550 = vmatmul.mubr.bf16.gmra.mxu0 %v794
      %v1551 = vpop.f32.mrf.mxu0
      %v1552 = vadd.f32 %v1263, %v1551
      %v1553 = vpop.f32.mrf.mxu0
      %v1554 = vpop.f32.mrf.mxu0
      %v1555 = vadd.f32 %v1266, %v1554
      %v1556 = vpop.f32.mrf.mxu0
      %1557 = vmatprep.mubr.bf16.mxu0 0
      %1558 = vmatmul.mubr.bf16.gmra.mxu0 %v797
      %v1559 = vpop.f32.mrf.mxu0
      %v1560 = vadd.f32 %v1271, %v1559
      %v1561 = vpop.f32.mrf.mxu0
      %v1562 = vpop.f32.mrf.mxu0
      %v1563 = vadd.f32 %v1274, %v1562
      %v1564 = vpop.f32.mrf.mxu0
      %1565 = vmatprep.mubr.bf16.mxu0 0
      %1566 = vmatmul.mubr.bf16.gmra.mxu0 %v800
      %v1567 = vpop.f32.mrf.mxu0
      %v1568 = vadd.f32 %v1279, %v1567
      %v1569 = vpop.f32.mrf.mxu0
      %v1570 = vpop.f32.mrf.mxu0
      %v1571 = vadd.f32 %v1282, %v1570
      %v1572 = vpop.f32.mrf.mxu0
      %1573 = vmatprep.mubr.bf16.mxu0 0
      %1574 = vmatmul.mubr.bf16.gmra.mxu0 %v803
      %v1575 = vpop.f32.mrf.mxu0
      %v1576 = vadd.f32 %v1287, %v1575
      %v1577 = vpop.f32.mrf.mxu0
      %v1578 = vpop.f32.mrf.mxu0
      %v1579 = vadd.f32 %v1290, %v1578
      %v1580 = vpop.f32.mrf.mxu0
      %1581 = vmatprep.mubr.bf16.mxu0 0
      %1582 = vmatmul.mubr.bf16.gmra.mxu0 %v806
      %v1583 = vpop.f32.mrf.mxu0
      %v1584 = vadd.f32 %v1295, %v1583
      %v1585 = vpop.f32.mrf.mxu0
      %v1586 = vpop.f32.mrf.mxu0
      %v1587 = vadd.f32 %v1298, %v1586
      %v1588 = vpop.f32.mrf.mxu0
      %1589 = vmatprep.mubr.bf16.mxu0 0
      %1590 = vmatmul.mubr.bf16.gmra.mxu0 %v809
      %v1591 = vpop.f32.mrf.mxu0
      %v1592 = vadd.f32 %v1303, %v1591
      %v1593 = vpop.f32.mrf.mxu0
      %v1594 = vpop.f32.mrf.mxu0
      %v1595 = vadd.f32 %v1306, %v1594
      %v1596 = vpop.f32.mrf.mxu0
      %1597 = vmatprep.mubr.bf16.mxu0 0
      %1598 = vmatmul.mubr.bf16.gmra.mxu0 %v812
      %v1599 = vpop.f32.mrf.mxu0
      %v1600 = vadd.f32 %v1311, %v1599
      %v1601 = vpop.f32.mrf.mxu0
      %v1602 = vpop.f32.mrf.mxu0
      %v1603 = vadd.f32 %v1314, %v1602
      %v1604 = vpop.f32.mrf.mxu0
      %1605 = vmatprep.mubr.bf16.mxu0 0
      %1606 = vmatmul.mubr.bf16.gmra.mxu0 %v815
      %v1607 = vpop.f32.mrf.mxu0
      %v1608 = vadd.f32 %v1319, %v1607
      %v1609 = vpop.f32.mrf.mxu0
      %v1610 = vpop.f32.mrf.mxu0
      %v1611 = vadd.f32 %v1322, %v1610
      %v1612 = vpop.f32.mrf.mxu0
      %1613 = vmatprep.mubr.bf16.mxu0 0
      %1614 = vmatmul.mubr.bf16.gmra.mxu0 %v818
      %v1615 = vpop.f32.mrf.mxu0
      %v1616 = vadd.f32 %v1327, %v1615
      %v1617 = vpop.f32.mrf.mxu0
      %v1618 = vpop.f32.mrf.mxu0
      %v1619 = vadd.f32 %v1330, %v1618
      %v1620 = vpop.f32.mrf.mxu0
      %1621 = vmatprep.mubr.bf16.mxu0 0
      %1622 = vmatmul.mubr.bf16.gmra.mxu0 %v821
      %v1623 = vpop.f32.mrf.mxu0
      %v1624 = vadd.f32 %v1335, %v1623
      %v1625 = vpop.f32.mrf.mxu0
      %v1626 = vpop.f32.mrf.mxu0
      %v1627 = vadd.f32 %v1338, %v1626
      %v1628 = vpop.f32.mrf.mxu0
      %1629 = vmatprep.mubr.bf16.mxu0 0
      %1630 = vmatmul.mubr.bf16.gmra.mxu0 %v824
      %v1631 = vpop.f32.mrf.mxu0
      %v1632 = vadd.f32 %v1343, %v1631
      %v1633 = vpop.f32.mrf.mxu0
      %v1634 = vpop.f32.mrf.mxu0
      %v1635 = vadd.f32 %v1346, %v1634
      %v1636 = vpop.f32.mrf.mxu0
      %1637 = vmatprep.mubr.bf16.mxu0 0
      %1638 = vmatmul.mubr.bf16.gmra.mxu0 %v827
      %v1639 = vpop.f32.mrf.mxu0
      %v1640 = vadd.f32 %v1351, %v1639
      %v1641 = vpop.f32.mrf.mxu0
      %v1642 = vpop.f32.mrf.mxu0
      %v1643 = vadd.f32 %v1354, %v1642
      %v1644 = vpop.f32.mrf.mxu0
      %1645 = vdwg.mxu0
      %v1646 = vmax.f32 %v1392, 0.0
      %v1647 = vmax.f32 %v1395, 0.0
      %v1648 = vmax.f32 %v1400, 0.0
      %v1649 = vmax.f32 %v1403, 0.0
      %v1650 = vmax.f32 %v1408, 0.0
      %v1651 = vmax.f32 %v1411, 0.0
      %v1652 = vmax.f32 %v1416, 0.0
      %v1653 = vmax.f32 %v1419, 0.0
      %v1654 = vmax.f32 %v1424, 0.0
      %v1655 = vmax.f32 %v1427, 0.0
      %v1656 = vmax.f32 %v1432, 0.0
      %v1657 = vmax.f32 %v1435, 0.0
      %v1658 = vmax.f32 %v1440, 0.0
      %v1659 = vmax.f32 %v1443, 0.0
      %v1660 = vmax.f32 %v1448, 0.0
      %v1661 = vmax.f32 %v1451, 0.0
      %v1662 = vmax.f32 %v1456, 0.0
      %v1663 = vmax.f32 %v1459, 0.0
      %v1664 = vmax.f32 %v1464, 0.0
      %v1665 = vmax.f32 %v1467, 0.0
      %v1666 = vmax.f32 %v1472, 0.0
      %v1667 = vmax.f32 %v1475, 0.0
      %v1668 = vmax.f32 %v1480, 0.0
      %v1669 = vmax.f32 %v1483, 0.0
      %v1670 = vmax.f32 %v1488, 0.0
      %v1671 = vmax.f32 %v1491, 0.0
      %v1672 = vmax.f32 %v1496, 0.0
      %v1673 = vmax.f32 %v1499, 0.0
      %v1674 = vmax.f32 %v1504, 0.0
      %v1675 = vmax.f32 %v1507, 0.0
      %v1676 = vmax.f32 %v1512, 0.0
      %v1677 = vmax.f32 %v1515, 0.0
      %v1678 = vmax.f32 %v1520, 0.0
      %v1679 = vmax.f32 %v1523, 0.0
      %v1680 = vmax.f32 %v1528, 0.0
      %v1681 = vmax.f32 %v1531, 0.0
      %v1682 = vmax.f32 %v1536, 0.0
      %v1683 = vmax.f32 %v1539, 0.0
      %v1684 = vmax.f32 %v1544, 0.0
      %v1685 = vmax.f32 %v1547, 0.0
      %v1686 = vmax.f32 %v1552, 0.0
      %v1687 = vmax.f32 %v1555, 0.0
      %v1688 = vmax.f32 %v1560, 0.0
      %v1689 = vmax.f32 %v1563, 0.0
      %v1690 = vmax.f32 %v1568, 0.0
      %v1691 = vmax.f32 %v1571, 0.0
      %v1692 = vmax.f32 %v1576, 0.0
      %v1693 = vmax.f32 %v1579, 0.0
      %v1694 = vmax.f32 %v1584, 0.0
      %v1695 = vmax.f32 %v1587, 0.0
      %v1696 = vmax.f32 %v1592, 0.0
      %v1697 = vmax.f32 %v1595, 0.0
      %v1698 = vmax.f32 %v1600, 0.0
      %v1699 = vmax.f32 %v1603, 0.0
      %v1700 = vmax.f32 %v1608, 0.0
      %v1701 = vmax.f32 %v1611, 0.0
      %v1702 = vmax.f32 %v1616, 0.0
      %v1703 = vmax.f32 %v1619, 0.0
      %v1704 = vmax.f32 %v1624, 0.0
      %v1705 = vmax.f32 %v1627, 0.0
      %v1706 = vmax.f32 %v1632, 0.0
      %v1707 = vmax.f32 %v1635, 0.0
      %v1708 = vmax.f32 %v1640, 0.0
      %v1709 = vmax.f32 %v1643, 0.0
      %v1710 = vpack.c.bf16 %v1647, %v1646
      %v1711 = vpack.c.bf16 %v1649, %v1648
      %v1712 = vpack.c.bf16 %v1651, %v1650
      %v1713 = vpack.c.bf16 %v1653, %v1652
      %v1714 = vpack.c.bf16 %v1655, %v1654
      %v1715 = vpack.c.bf16 %v1657, %v1656
      %v1716 = vpack.c.bf16 %v1659, %v1658
      %v1717 = vpack.c.bf16 %v1661, %v1660
      %v1718 = vpack.c.bf16 %v1663, %v1662
      %v1719 = vpack.c.bf16 %v1665, %v1664
      %v1720 = vpack.c.bf16 %v1667, %v1666
      %v1721 = vpack.c.bf16 %v1669, %v1668
      %v1722 = vpack.c.bf16 %v1671, %v1670
      %v1723 = vpack.c.bf16 %v1673, %v1672
      %v1724 = vpack.c.bf16 %v1675, %v1674
      %v1725 = vpack.c.bf16 %v1677, %v1676
      %v1726 = vpack.c.bf16 %v1679, %v1678
      %v1727 = vpack.c.bf16 %v1681, %v1680
      %v1728 = vpack.c.bf16 %v1683, %v1682
      %v1729 = vpack.c.bf16 %v1685, %v1684
      %v1730 = vpack.c.bf16 %v1687, %v1686
      %v1731 = vpack.c.bf16 %v1689, %v1688
      %v1732 = vpack.c.bf16 %v1691, %v1690
      %v1733 = vpack.c.bf16 %v1693, %v1692
      %v1734 = vpack.c.bf16 %v1695, %v1694
      %v1735 = vpack.c.bf16 %v1697, %v1696
      %v1736 = vpack.c.bf16 %v1699, %v1698
      %v1737 = vpack.c.bf16 %v1701, %v1700
      %v1738 = vpack.c.bf16 %v1703, %v1702
      %v1739 = vpack.c.bf16 %v1705, %v1704
      %v1740 = vpack.c.bf16 %v1707, %v1706
      %v1741 = vpack.c.bf16 %v1709, %v1708
      %v1774 = vunpack.c.l.b16 %v1710
      %v1775 = vunpack.c.h.b16 %v1710
      %v1776 = vunpack.c.l.b16 %v1711
      %v1777 = vunpack.c.h.b16 %v1711
      %v1778 = vunpack.c.l.b16 %v1712
      %v1779 = vunpack.c.h.b16 %v1712
      %v1780 = vunpack.c.l.b16 %v1713
      %v1781 = vunpack.c.h.b16 %v1713
      %v1782 = vunpack.c.l.b16 %v1714
      %v1783 = vunpack.c.h.b16 %v1714
      %v1784 = vunpack.c.l.b16 %v1715
      %v1785 = vunpack.c.h.b16 %v1715
      %v1786 = vunpack.c.l.b16 %v1716
      %v1787 = vunpack.c.h.b16 %v1716
      %v1788 = vunpack.c.l.b16 %v1717
      %v1789 = vunpack.c.h.b16 %v1717
      %v1790 = vunpack.c.l.b16 %v1718
      %v1791 = vunpack.c.h.b16 %v1718
      %v1792 = vunpack.c.l.b16 %v1719
      %v1793 = vunpack.c.h.b16 %v1719
      %v1794 = vunpack.c.l.b16 %v1720
      %v1795 = vunpack.c.h.b16 %v1720
      %v1796 = vunpack.c.l.b16 %v1721
      %v1797 = vunpack.c.h.b16 %v1721
      %v1798 = vunpack.c.l.b16 %v1722
      %v1799 = vunpack.c.h.b16 %v1722
      %v1800 = vunpack.c.l.b16 %v1723
      %v1801 = vunpack.c.h.b16 %v1723
      %v1802 = vunpack.c.l.b16 %v1724
      %v1803 = vunpack.c.h.b16 %v1724
      %v1804 = vunpack.c.l.b16 %v1725
      %v1805 = vunpack.c.h.b16 %v1725
      %v1806 = vunpack.c.l.b16 %v1726
      %v1807 = vunpack.c.h.b16 %v1726
      %v1808 = vunpack.c.l.b16 %v1727
      %v1809 = vunpack.c.h.b16 %v1727
      %v1810 = vunpack.c.l.b16 %v1728
      %v1811 = vunpack.c.h.b16 %v1728
      %v1812 = vunpack.c.l.b16 %v1729
      %v1813 = vunpack.c.h.b16 %v1729
      %v1814 = vunpack.c.l.b16 %v1730
      %v1815 = vunpack.c.h.b16 %v1730
      %v1816 = vunpack.c.l.b16 %v1731
      %v1817 = vunpack.c.h.b16 %v1731
      %v1818 = vunpack.c.l.b16 %v1732
      %v1819 = vunpack.c.h.b16 %v1732
      %v1820 = vunpack.c.l.b16 %v1733
      %v1821 = vunpack.c.h.b16 %v1733
      %v1822 = vunpack.c.l.b16 %v1734
      %v1823 = vunpack.c.h.b16 %v1734
      %v1824 = vunpack.c.l.b16 %v1735
      %v1825 = vunpack.c.h.b16 %v1735
      %v1826 = vunpack.c.l.b16 %v1736
      %v1827 = vunpack.c.h.b16 %v1736
      %v1828 = vunpack.c.l.b16 %v1737
      %v1829 = vunpack.c.h.b16 %v1737
      %v1830 = vunpack.c.l.b16 %v1738
      %v1831 = vunpack.c.h.b16 %v1738
      %v1832 = vunpack.c.l.b16 %v1739
      %v1833 = vunpack.c.h.b16 %v1739
      %v1834 = vunpack.c.l.b16 %v1740
      %v1835 = vunpack.c.h.b16 %v1740
      %v1836 = vunpack.c.l.b16 %v1741
      %v1837 = vunpack.c.h.b16 %v1741
      %v1838 = vpack.c.b16 %v1774, %v1774
      %v1839 = vpack.c.b16 %v1775, %v1775
      %v1840 = vpack.c.b16 %v1776, %v1776
      %v1841 = vpack.c.b16 %v1777, %v1777
      %v1842 = vpack.c.b16 %v1778, %v1778
      %v1843 = vpack.c.b16 %v1779, %v1779
      %v1844 = vpack.c.b16 %v1780, %v1780
      %v1845 = vpack.c.b16 %v1781, %v1781
      %v1846 = vpack.c.b16 %v1782, %v1782
      %v1847 = vpack.c.b16 %v1783, %v1783
      %v1848 = vpack.c.b16 %v1784, %v1784
      %v1849 = vpack.c.b16 %v1785, %v1785
      %v1850 = vpack.c.b16 %v1786, %v1786
      %v1851 = vpack.c.b16 %v1787, %v1787
      %v1852 = vpack.c.b16 %v1788, %v1788
      %v1853 = vpack.c.b16 %v1789, %v1789
      %v1854 = vpack.c.b16 %v1790, %v1790
      %v1855 = vpack.c.b16 %v1791, %v1791
      %v1856 = vpack.c.b16 %v1792, %v1792
      %v1857 = vpack.c.b16 %v1793, %v1793
      %v1858 = vpack.c.b16 %v1794, %v1794
      %v1859 = vpack.c.b16 %v1795, %v1795
      %v1860 = vpack.c.b16 %v1796, %v1796
      %v1861 = vpack.c.b16 %v1797, %v1797
      %v1862 = vpack.c.b16 %v1798, %v1798
      %v1863 = vpack.c.b16 %v1799, %v1799
      %v1864 = vpack.c.b16 %v1800, %v1800
      %v1865 = vpack.c.b16 %v1801, %v1801
      %v1866 = vpack.c.b16 %v1802, %v1802
      %v1867 = vpack.c.b16 %v1803, %v1803
      %v1868 = vpack.c.b16 %v1804, %v1804
      %v1869 = vpack.c.b16 %v1805, %v1805
      %v1870 = vpack.c.b16 %v1806, %v1806
      %v1871 = vpack.c.b16 %v1807, %v1807
      %v1872 = vpack.c.b16 %v1808, %v1808
      %v1873 = vpack.c.b16 %v1809, %v1809
      %v1874 = vpack.c.b16 %v1810, %v1810
      %v1875 = vpack.c.b16 %v1811, %v1811
      %v1876 = vpack.c.b16 %v1812, %v1812
      %v1877 = vpack.c.b16 %v1813, %v1813
      %v1878 = vpack.c.b16 %v1814, %v1814
      %v1879 = vpack.c.b16 %v1815, %v1815
      %v1880 = vpack.c.b16 %v1816, %v1816
      %v1881 = vpack.c.b16 %v1817, %v1817
      %v1882 = vpack.c.b16 %v1818, %v1818
      %v1883 = vpack.c.b16 %v1819, %v1819
      %v1884 = vpack.c.b16 %v1820, %v1820
      %v1885 = vpack.c.b16 %v1821, %v1821
      %v1886 = vpack.c.b16 %v1822, %v1822
      %v1887 = vpack.c.b16 %v1823, %v1823
      %v1888 = vpack.c.b16 %v1824, %v1824
      %v1889 = vpack.c.b16 %v1825, %v1825
      %v1890 = vpack.c.b16 %v1826, %v1826
      %v1891 = vpack.c.b16 %v1827, %v1827
      %v1892 = vpack.c.b16 %v1828, %v1828
      %v1893 = vpack.c.b16 %v1829, %v1829
      %v1894 = vpack.c.b16 %v1830, %v1830
      %v1895 = vpack.c.b16 %v1831, %v1831
      %v1896 = vpack.c.b16 %v1832, %v1832
      %v1897 = vpack.c.b16 %v1833, %v1833
      %v1898 = vpack.c.b16 %v1834, %v1834
      %v1899 = vpack.c.b16 %v1835, %v1835
      %v1900 = vpack.c.b16 %v1836, %v1836
      %v1901 = vpack.c.b16 %v1837, %v1837
      %1966 = vst [vmem:[%s226] sm:$0xf] %v1838
      %1967 = vst [vmem:[%s226 + $0x4] sm:$0xf] %v1839
      %1968 = vst [vmem:[%s226 + $0x8] sm:$0xf] %v1840
      %1969 = vst [vmem:[%s226 + $0xc] sm:$0xf] %v1841
      %1970 = vst [vmem:[%s226 + $0x10] sm:$0xf] %v1842
      %1971 = vst [vmem:[%s226 + $0x14] sm:$0xf] %v1843
      %1972 = vst [vmem:[%s226 + $0x18] sm:$0xf] %v1844
      %1973 = vst [vmem:[%s226 + $0x1c] sm:$0xf] %v1845
      %1974 = vst [vmem:[%s226 + $0x20] sm:$0xf] %v1846
      %1975 = vst [vmem:[%s226 + $0x24] sm:$0xf] %v1847
      %1976 = vst [vmem:[%s226 + $0x28] sm:$0xf] %v1848
      %1977 = vst [vmem:[%s226 + $0x2c] sm:$0xf] %v1849
      %1978 = vst [vmem:[%s226 + $0x30] sm:$0xf] %v1850
      %1979 = vst [vmem:[%s226 + $0x34] sm:$0xf] %v1851
      %1980 = vst [vmem:[%s226 + $0x38] sm:$0xf] %v1852
      %1981 = vst [vmem:[%s226 + $0x3c] sm:$0xf] %v1853
      %1982 = vst [vmem:[%s226 + $0x40] sm:$0xf] %v1854
      %1983 = vst [vmem:[%s226 + $0x44] sm:$0xf] %v1855
      %1984 = vst [vmem:[%s226 + $0x48] sm:$0xf] %v1856
      %1985 = vst [vmem:[%s226 + $0x4c] sm:$0xf] %v1857
      %1986 = vst [vmem:[%s226 + $0x50] sm:$0xf] %v1858
      %1987 = vst [vmem:[%s226 + $0x54] sm:$0xf] %v1859
      %1988 = vst [vmem:[%s226 + $0x58] sm:$0xf] %v1860
      %1989 = vst [vmem:[%s226 + $0x5c] sm:$0xf] %v1861
      %1990 = vst [vmem:[%s226 + $0x60] sm:$0xf] %v1862
      %1991 = vst [vmem:[%s226 + $0x64] sm:$0xf] %v1863
      %1992 = vst [vmem:[%s226 + $0x68] sm:$0xf] %v1864
      %1993 = vst [vmem:[%s226 + $0x6c] sm:$0xf] %v1865
      %1994 = vst [vmem:[%s226 + $0x70] sm:$0xf] %v1866
      %1995 = vst [vmem:[%s226 + $0x74] sm:$0xf] %v1867
      %1996 = vst [vmem:[%s226 + $0x78] sm:$0xf] %v1868
      %1997 = vst [vmem:[%s226 + $0x7c] sm:$0xf] %v1869
      %1998 = vst [vmem:[%s226 + $0x80] sm:$0xf] %v1870
      %1999 = vst [vmem:[%s226 + $0x84] sm:$0xf] %v1871
      %2000 = vst [vmem:[%s226 + $0x88] sm:$0xf] %v1872
      %2001 = vst [vmem:[%s226 + $0x8c] sm:$0xf] %v1873
      %2002 = vst [vmem:[%s226 + $0x90] sm:$0xf] %v1874
      %2003 = vst [vmem:[%s226 + $0x94] sm:$0xf] %v1875
      %2004 = vst [vmem:[%s226 + $0x98] sm:$0xf] %v1876
      %2005 = vst [vmem:[%s226 + $0x9c] sm:$0xf] %v1877
      %2006 = vst [vmem:[%s226 + $0xa0] sm:$0xf] %v1878
      %2007 = vst [vmem:[%s226 + $0xa4] sm:$0xf] %v1879
      %2008 = vst [vmem:[%s226 + $0xa8] sm:$0xf] %v1880
      %2009 = vst [vmem:[%s226 + $0xac] sm:$0xf] %v1881
      %2010 = vst [vmem:[%s226 + $0xb0] sm:$0xf] %v1882
      %2011 = vst [vmem:[%s226 + $0xb4] sm:$0xf] %v1883
      %2012 = vst [vmem:[%s226 + $0xb8] sm:$0xf] %v1884
      %2013 = vst [vmem:[%s226 + $0xbc] sm:$0xf] %v1885
      %2014 = vst [vmem:[%s226 + $0xc0] sm:$0xf] %v1886
      %2015 = vst [vmem:[%s226 + $0xc4] sm:$0xf] %v1887
      %2016 = vst [vmem:[%s226 + $0xc8] sm:$0xf] %v1888
      %2017 = vst [vmem:[%s226 + $0xcc] sm:$0xf] %v1889
      %2018 = vst [vmem:[%s226 + $0xd0] sm:$0xf] %v1890
      %2019 = vst [vmem:[%s226 + $0xd4] sm:$0xf] %v1891
      %2020 = vst [vmem:[%s226 + $0xd8] sm:$0xf] %v1892
      %2021 = vst [vmem:[%s226 + $0xdc] sm:$0xf] %v1893
      %2022 = vst [vmem:[%s226 + $0xe0] sm:$0xf] %v1894
      %2023 = vst [vmem:[%s226 + $0xe4] sm:$0xf] %v1895
      %2024 = vst [vmem:[%s226 + $0xe8] sm:$0xf] %v1896
      %2025 = vst [vmem:[%s226 + $0xec] sm:$0xf] %v1897
      %2026 = vst [vmem:[%s226 + $0xf0] sm:$0xf] %v1898
      %2027 = vst [vmem:[%s226 + $0xf4] sm:$0xf] %v1899
      %2028 = vst [vmem:[%s226 + $0xf8] sm:$0xf] %v1900
      %2029 = vst [vmem:[%s226 + $0xfc] sm:$0xf] %v1901
      %s2030 = smul.u32 64, %s18
      %p2031 = scmp.lt.s32.totalorder %s2030, 127
      %s2032 = scalar_select %p2031, %s2030, 127
      %p2033 = scmp.lt.s32.totalorder %s19, 0
      %s2034 = scalar_select %p2033, %s19, 0
      %s2035 = sadd.s32 %s2034, %s2032
      %s2036 = smul.addr %s2035, 4
      %s2037 = scalar_lea.vmem %s3, %s2036
      // Predicated region
      $region33: #{nature_conv_body.5} parent=31 // pred_check
        %p2038 = pneg %p124
      $region34: #{nature_conv_body.5} parent=31 // pred_check_branch
        %2040 = sbr.rel (%p2038) target = $region36
      $region35: #{nature_conv_body.5} parent=31 // pred_region
        %s2041 = smul.u32 64, %s18
      $region36: #{nature_conv_body.5} parent=31 // pred_fallthru
        _
    $region32: #{nature_conv_body.5} parent=5 // pred_fallthru
      _
    %p2042 = scmp.le.s32.totalorder 2, %s9
    // Predicated region
    $region37: #{nature_conv_body.5} parent=5 // pred_check
      %p2043 = pneg %p2042
    $region38: #{nature_conv_body.5} parent=5 // pred_check_branch
      %2045 = sbr.rel (%p2043) target = $region40
    $region39: #{nature_conv_body.5} parent=5 // pred_region
      %s2046 = ssub.s32 %s9, 2
      // Predicated region
      $region41: #{nature_conv_body.5} parent=39 // pred_check
        %p2047 = pneg %p130
      $region42: #{nature_conv_body.5} parent=39 // pred_check_branch
        %2049 = sbr.rel (%p2047) target = $region44
      $region43: #{nature_conv_body.5} parent=39 // pred_region
        %s2050 = smul.u32 64, %s20
        %p2051 = scmp.lt.s32.totalorder %s2050, 127
        %s2052 = scalar_select %p2051, %s2050, 127
        %p2053 = scmp.lt.s32.totalorder %s21, 0
        %s2054 = scalar_select %p2053, %s21, 0
        %s2055 = sadd.s32 %s2054, %s2052
        %s2056 = smul.addr %s2055, 4
        %s2057 = scalar_lea.vmem %s3, %s2056
      $region44: #{nature_conv_body.5} parent=39 // pred_fallthru
        _
    $region40: #{nature_conv_body.5} parent=5 // pred_fallthru
      _
  $region6: #{nature_conv_body.5} parent=0 // loop_footer
    %s13 = sadd.s32 1, %s9
  $region7: #{nature_conv_body.5} parent=0 // loop_footer_branch
    %8 = sbr.rel target = $region3
  $region8: #{nature_conv_body.5} parent=0 // loop_exit
    _

// kernel: nature_conv_body.6
$region0: #{nature_conv_body.6}
  #allocation0 [shape = 'u32[]', space=smem, size = 0x4, offset = 0x4, fixed_abs, tag = 'smem constant byte address 0x4 - core index']
  #allocation1 [shape = 'u32[144,128]{1,0:T(1,128)}', space=vmem, size = 0x12000, scoped, tag = 'internal scratch']
  %s0 = inlined_call_operand.vmem [shape: bf16[1024,640], index: 0, kind: input, shape index: {}]
  %s1 = inlined_call_operand.vmem [shape: bf16[640,128], index: 1, kind: input, shape index: {}]
  %s2 = inlined_call_operand.vmem [shape: f32[1,128], index: 2, kind: input, shape index: {}]
  %s3 = inlined_call_operand.vmem [shape: bf16[1024,128], index: 3, kind: output, shape index: {}]
  %s4 = sld [smem:[#allocation0]]
  $region45: #{nature_conv_body.6} parent=0
    _
  %s6 = ssub.s32 1, %s4
  %s7 = scalar_select 0, %s6, %s4
  loop: start=0, step=1, limit=4
  $region2: #{nature_conv_body.6} parent=0 // loop_pre_header
    _
  $region3: #{nature_conv_body.6} parent=0 // loop_header
    %s9 = sphi 0, %s13
    %p10 = scmp.ge.s32.totalorder %s9, 4
    %s16 = sphi 0, %s28
    %s17 = sphi 0, %s24
    %s18 = sphi 0, %s16
    %s19 = sphi 0, %s17
    %s20 = sphi 0, %s18
    %s21 = sphi 0, %s19
    %s31 = sphi 0, %s33
    %s34 = sphi 0, %s31
    %s35 = sphi 0, %s34
    %s51 = sphi 0, %s35
    %s57 = sphi 0, %s59
    %s60 = sphi 0, %s57
    %s61 = sphi 0, %s60
    %s77 = sphi 0, %s61
    %s83 = sphi 0, %s85
    %s86 = sphi 0, %s83
    %s87 = sphi 0, %s86
    %s103 = sphi 0, %s87
    %s111 = sphi 0, %s113
    %s114 = sphi 0, %s111
    %s115 = sphi 0, %s114
    %s131 = sphi 0, %s115
  $region4: #{nature_conv_body.6} parent=0 // loop_header_branch
    %12 = sbr.rel (%p10) target = $region8
  $region5: #{nature_conv_body.6} parent=0 // loop_body
    %s14 = ssub.s32 %s9, 1
    %s15 = ssub.s32 %s9, 2
    %s22 = sadd.s32 1, %s17
    %p23 = scmp.ge.s32.totalorder %s22, 1
    %s24 = scalar_select %p23, 0, %s22
    %s25 = sadd.s32 1, %s16
    %s26 = scalar_select %p23, %s25, %s16
    %p27 = scmp.ge.s32.totalorder %s26, 2
    %s28 = scalar_select %p27, 0, %s26
    %s29 = ssub.s32 %s16, %s28
    %p30 = scmp.eq.s32.totalorder %s29, 0
    %s32 = sadd.s32 %s31, 1
    %s33 = scalar_select %p30, %s31, %s32
    %p36 = pneg %p30
    %p37 = scmp.eq.s32.totalorder %s9, 1
    %p38 = por %p36, %p37
    %p39 = scmp.ne.s32.totalorder %s31, %s34
    %p40 = scmp.eq.s32.totalorder %s9, 0
    %p41 = por %p39, %p40
    %p42 = scmp.ne.s32.totalorder %s31, %s34
    %p43 = scmp.eq.s32.totalorder %s14, 1
    %p44 = por %p42, %p43
    %p45 = scmp.ne.s32.totalorder %s34, %s35
    %p46 = scmp.eq.s32.totalorder %s14, 0
    %p47 = por %p45, %p46
    %p48 = scmp.ne.s32.totalorder %s34, %s35
    %p49 = scmp.eq.s32.totalorder %s15, 1
    %p50 = por %p48, %p49
    %p52 = scmp.ne.s32.totalorder %s35, %s51
    %p53 = scmp.eq.s32.totalorder %s15, 0
    %p54 = por %p52, %p53
    %s55 = ssub.s32 %s17, %s24
    %p56 = scmp.eq.s32.totalorder %s55, 0
    %s58 = sadd.s32 %s57, 1
    %s59 = scalar_select %p56, %s57, %s58
    %p62 = pneg %p56
    %p63 = scmp.eq.s32.totalorder %s9, 1
    %p64 = por %p62, %p63
    %p65 = scmp.ne.s32.totalorder %s57, %s60
    %p66 = scmp.eq.s32.totalorder %s9, 0
    %p67 = por %p65, %p66
    %p68 = scmp.ne.s32.totalorder %s57, %s60
    %p69 = scmp.eq.s32.totalorder %s14, 1
    %p70 = por %p68, %p69
    %p71 = scmp.ne.s32.totalorder %s60, %s61
    %p72 = scmp.eq.s32.totalorder %s14, 0
    %p73 = por %p71, %p72
    %p74 = scmp.ne.s32.totalorder %s60, %s61
    %p75 = scmp.eq.s32.totalorder %s15, 1
    %p76 = por %p74, %p75
    %p78 = scmp.ne.s32.totalorder %s61, %s77
    %p79 = scmp.eq.s32.totalorder %s15, 0
    %p80 = por %p78, %p79
    %s81 = ssub.s32 %s17, %s24
    %p82 = scmp.eq.s32.totalorder %s81, 0
    %s84 = sadd.s32 %s83, 1
    %s85 = scalar_select %p82, %s83, %s84
    %p88 = pneg %p82
    %p89 = scmp.eq.s32.totalorder %s9, 1
    %p90 = por %p88, %p89
    %p91 = scmp.ne.s32.totalorder %s83, %s86
    %p92 = scmp.eq.s32.totalorder %s9, 0
    %p93 = por %p91, %p92
    %p94 = scmp.ne.s32.totalorder %s83, %s86
    %p95 = scmp.eq.s32.totalorder %s14, 1
    %p96 = por %p94, %p95
    %p97 = scmp.ne.s32.totalorder %s86, %s87
    %p98 = scmp.eq.s32.totalorder %s14, 0
    %p99 = por %p97, %p98
    %p100 = scmp.ne.s32.totalorder %s86, %s87
    %p101 = scmp.eq.s32.totalorder %s15, 1
    %p102 = por %p100, %p101
    %p104 = scmp.ne.s32.totalorder %s87, %s103
    %p105 = scmp.eq.s32.totalorder %s15, 0
    %p106 = por %p104, %p105
    %s107 = ssub.s32 %s16, %s28
    %s108 = ssub.s32 %s17, %s24
    %s109 = sor.u32 %s107, %s108
    %p110 = scmp.eq.s32.totalorder %s109, 0
    %s112 = sadd.s32 %s111, 1
    %s113 = scalar_select %p110, %s111, %s112
    %p116 = pneg %p110
    %p117 = scmp.eq.s32.totalorder %s9, 1
    %p118 = por %p116, %p117
    %p119 = scmp.ne.s32.totalorder %s111, %s114
    %p120 = scmp.eq.s32.totalorder %s9, 0
    %p121 = por %p119, %p120
    %p122 = scmp.ne.s32.totalorder %s111, %s114
    %p123 = scmp.eq.s32.totalorder %s14, 1
    %p124 = por %p122, %p123
    %p125 = scmp.ne.s32.totalorder %s114, %s115
    %p126 = scmp.eq.s32.totalorder %s14, 0
    %p127 = por %p125, %p126
    %p128 = scmp.ne.s32.totalorder %s114, %s115
    %p129 = scmp.eq.s32.totalorder %s15, 1
    %p130 = por %p128, %p129
    %p132 = scmp.ne.s32.totalorder %s115, %s131
    %p133 = scmp.eq.s32.totalorder %s15, 0
    %p134 = por %p132, %p133
    %p135 = scmp.le.s32.totalorder 1, %s9
    %p136 = scmp.lt.s32.totalorder %s9, 3
    %p137 = pnand %p135, %p136
    %p138 = pneg %p137
    // Predicated region
    $region9: #{nature_conv_body.6} parent=5 // pred_check
      _
    $region10: #{nature_conv_body.6} parent=5 // pred_check_branch
      %140 = sbr.rel (%p137) target = $region12
    $region11: #{nature_conv_body.6} parent=5 // pred_region
      %s141 = ssub.s32 %s9, 1
      // Predicated region
      $region13: #{nature_conv_body.6} parent=11 // pred_check
        %p142 = pneg %p73
      $region14: #{nature_conv_body.6} parent=11 // pred_check_branch
        %144 = sbr.rel (%p142) target = $region16
      $region15: #{nature_conv_body.6} parent=11 // pred_region
        %p145 = scmp.lt.s32.totalorder %s19, 0
        %s146 = scalar_select %p145, %s19, 0
        %s147 = smul.addr %s146, 4
        %s148 = scalar_lea.vmem %s1, %s147
      $region16: #{nature_conv_body.6} parent=11 // pred_fallthru
        _
      // Predicated region
      $region17: #{nature_conv_body.6} parent=11 // pred_check
        %p149 = pneg %p99
      $region18: #{nature_conv_body.6} parent=11 // pred_check_branch
        %151 = sbr.rel (%p149) target = $region20
      $region19: #{nature_conv_body.6} parent=11 // pred_region
        %p152 = scmp.lt.s32.totalorder %s19, 0
        %s153 = scalar_select %p152, %s19, 0
        %s154 = scalar_lea.vmem %s2, %s153
      $region20: #{nature_conv_body.6} parent=11 // pred_fallthru
        _
    $region12: #{nature_conv_body.6} parent=5 // pred_fallthru
      _
    %p155 = scmp.lt.s32.totalorder %s9, 2
    // Predicated region
    $region21: #{nature_conv_body.6} parent=5 // pred_check
      %p156 = pneg %p155
    $region22: #{nature_conv_body.6} parent=5 // pred_check_branch
      %158 = sbr.rel (%p156) target = $region24
    $region23: #{nature_conv_body.6} parent=5 // pred_region
      // Predicated region
      $region25: #{nature_conv_body.6} parent=23 // pred_check
        %p159 = pneg %p41
      $region26: #{nature_conv_body.6} parent=23 // pred_check_branch
        %161 = sbr.rel (%p159) target = $region28
      $region27: #{nature_conv_body.6} parent=23 // pred_region
        %s162 = smul.u32 64, %s16
        %p163 = scmp.lt.s32.totalorder %s162, 127
        %s164 = scalar_select %p163, %s162, 127
        %s165 = smul.addr %s164, 5
        %s166 = smul.addr %s165, 4
        %s167 = scalar_lea.vmem %s0, %s166
        %s168 = smul.u32 64, %s16
      $region28: #{nature_conv_body.6} parent=23 // pred_fallthru
        _
    $region24: #{nature_conv_body.6} parent=5 // pred_fallthru
      _
    %p169 = scmp.le.s32.totalorder 1, %s9
    %p170 = scmp.lt.s32.totalorder %s9, 3
    %p171 = pnand %p169, %p170
    %p172 = pneg %p171
    // Predicated region
    $region29: #{nature_conv_body.6} parent=5 // pred_check
      _
    $region30: #{nature_conv_body.6} parent=5 // pred_check_branch
      %174 = sbr.rel (%p171) target = $region32
    $region31: #{nature_conv_body.6} parent=5 // pred_region
      %s175 = ssub.s32 %s9, 1
      %s176 = smul.u32 64, %s18
      %p177 = scmp.lt.s32.totalorder %s176, 127
      %s178 = scalar_select %p177, %s176, 127
      %s179 = smul.addr %s178, 5
      %s180 = smul.addr %s179, 4
      %s181 = scalar_lea.vmem %s0, %s180
      %p182 = pneg %p47
      %p183 = pneg %p44
      %p184 = scmp.lt.s32.totalorder %s19, 0
      %s185 = scalar_select %p184, %s19, 0
      %s186 = smul.addr %s185, 4
      %s187 = scalar_lea.vmem %s1, %s186
      %p188 = pneg %p73
      %p189 = pneg %p70
      %p190 = scmp.lt.s32.totalorder %s19, 0
      %s191 = scalar_select %p190, %s19, 0
      %s192 = scalar_lea.vmem %s2, %s191
      %p193 = pneg %p99
      %p194 = pneg %p96
      %p195 = pneg %p127
      %p196 = pneg %p124
      %s197 = smul.u32 64, %s18
      %p198 = scmp.lt.s32.totalorder %s197, 127
      %s199 = scalar_select %p198, %s197, 127
      %p200 = scmp.lt.s32.totalorder %s19, 0
      %s201 = scalar_select %p200, %s19, 0
      %s202 = sadd.s32 %s201, %s199
      %s203 = smul.addr %s202, 4
      %s204 = scalar_lea.vmem %s3, %s203
      %s205 = smul.u32 64, %s18
      %p206 = scmp.lt.s32.totalorder %s205, 127
      %s207 = scalar_select %p206, %s205, 127
      %s208 = smul.addr %s207, 5
      %s209 = smul.addr %s208, 4
      %s210 = scalar_lea.vmem %s0, %s209
      %s211 = smul.u32 64, %s18
      %p212 = scmp.lt.s32.totalorder %s19, 0
      %s213 = scalar_select %p212, %s19, 0
      %s214 = smul.addr %s213, 4
      %s215 = scalar_lea.vmem %s1, %s214
      %p216 = scmp.lt.s32.totalorder %s19, 0
      %s217 = scalar_select %p216, %s19, 0
      %s218 = scalar_lea.vmem %s2, %s217
      %s219 = smul.u32 64, %s18
      %p220 = scmp.lt.s32.totalorder %s219, 127
      %s221 = scalar_select %p220, %s219, 127
      %p222 = scmp.lt.s32.totalorder %s19, 0
      %s223 = scalar_select %p222, %s19, 0
      %s224 = sadd.s32 %s223, %s221
      %s225 = smul.addr %s224, 4
      %s226 = scalar_lea.vmem %s3, %s225
      %s227 = smul.u32 64, %s18
      %v229 = vld [vmem:[%s210] sm:$0xff]
      %v230 = vld [vmem:[%s210 + $0x8] sm:$0xff]
      %v231 = vld [vmem:[%s210 + $0x10] sm:$0xf]
      %v232 = vld [vmem:[%s210 + $0x14] sm:$0xff]
      %v233 = vld [vmem:[%s210 + $0x1c] sm:$0xff]
      %v234 = vld [vmem:[%s210 + $0x24] sm:$0xf]
      %v235 = vld [vmem:[%s210 + $0x28] sm:$0xff]
      %v236 = vld [vmem:[%s210 + $0x30] sm:$0xff]
      %v237 = vld [vmem:[%s210 + $0x38] sm:$0xf]
      %v238 = vld [vmem:[%s210 + $0x3c] sm:$0xff]
      %v239 = vld [vmem:[%s210 + $0x44] sm:$0xff]
      %v240 = vld [vmem:[%s210 + $0x4c] sm:$0xf]
      %v241 = vld [vmem:[%s210 + $0x50] sm:$0xff]
      %v242 = vld [vmem:[%s210 + $0x58] sm:$0xff]
      %v243 = vld [vmem:[%s210 + $0x60] sm:$0xf]
      %v244 = vld [vmem:[%s210 + $0x64] sm:$0xff]
      %v245 = vld [vmem:[%s210 + $0x6c] sm:$0xff]
      %v246 = vld [vmem:[%s210 + $0x74] sm:$0xf]
      %v247 = vld [vmem:[%s210 + $0x78] sm:$0xff]
      %v248 = vld [vmem:[%s210 + $0x80] sm:$0xff]
      %v249 = vld [vmem:[%s210 + $0x88] sm:$0xf]
      %v250 = vld [vmem:[%s210 + $0x8c] sm:$0xff]
      %v251 = vld [vmem:[%s210 + $0x94] sm:$0xff]
      %v252 = vld [vmem:[%s210 + $0x9c] sm:$0xf]
      %v253 = vld [vmem:[%s210 + $0xa0] sm:$0xff]
      %v254 = vld [vmem:[%s210 + $0xa8] sm:$0xff]
      %v255 = vld [vmem:[%s210 + $0xb0] sm:$0xf]
      %v256 = vld [vmem:[%s210 + $0xb4] sm:$0xff]
      %v257 = vld [vmem:[%s210 + $0xbc] sm:$0xff]
      %v258 = vld [vmem:[%s210 + $0xc4] sm:$0xf]
      %v259 = vld [vmem:[%s210 + $0xc8] sm:$0xff]
      %v260 = vld [vmem:[%s210 + $0xd0] sm:$0xff]
      %v261 = vld [vmem:[%s210 + $0xd8] sm:$0xf]
      %v262 = vld [vmem:[%s210 + $0xdc] sm:$0xff]
      %v263 = vld [vmem:[%s210 + $0xe4] sm:$0xff]
      %v264 = vld [vmem:[%s210 + $0xec] sm:$0xf]
      %v265 = vld [vmem:[%s210 + $0xf0] sm:$0xff]
      %v266 = vld [vmem:[%s210 + $0xf8] sm:$0xff]
      %v267 = vld [vmem:[%s210 + $0x100] sm:$0xf]
      %v268 = vld [vmem:[%s210 + $0x104] sm:$0xff]
      %v269 = vld [vmem:[%s210 + $0x10c] sm:$0xff]
      %v270 = vld [vmem:[%s210 + $0x114] sm:$0xf]
      %v271 = vld [vmem:[%s210 + $0x118] sm:$0xff]
      %v272 = vld [vmem:[%s210 + $0x120] sm:$0xff]
      %v273 = vld [vmem:[%s210 + $0x128] sm:$0xf]
      %v274 = vld [vmem:[%s210 + $0x12c] sm:$0xff]
      %v275 = vld [vmem:[%s210 + $0x134] sm:$0xff]
      %v276 = vld [vmem:[%s210 + $0x13c] sm:$0xf]
      %v277 = vld [vmem:[%s210 + $0x140] sm:$0xff]
      %v278 = vld [vmem:[%s210 + $0x148] sm:$0xff]
      %v279 = vld [vmem:[%s210 + $0x150] sm:$0xf]
      %v280 = vld [vmem:[%s210 + $0x154] sm:$0xff]
      %v281 = vld [vmem:[%s210 + $0x15c] sm:$0xff]
      %v282 = vld [vmem:[%s210 + $0x164] sm:$0xf]
      %v283 = vld [vmem:[%s210 + $0x168] sm:$0xff]
      %v284 = vld [vmem:[%s210 + $0x170] sm:$0xff]
      %v285 = vld [vmem:[%s210 + $0x178] sm:$0xf]
      %v286 = vld [vmem:[%s210 + $0x17c] sm:$0xff]
      %v287 = vld [vmem:[%s210 + $0x184] sm:$0xff]
      %v288 = vld [vmem:[%s210 + $0x18c] sm:$0xf]
      %v289 = vld [vmem:[%s210 + $0x190] sm:$0xff]
      %v290 = vld [vmem:[%s210 + $0x198] sm:$0xff]
      %v291 = vld [vmem:[%s210 + $0x1a0] sm:$0xf]
      %v292 = vld [vmem:[%s210 + $0x1a4] sm:$0xff]
      %v293 = vld [vmem:[%s210 + $0x1ac] sm:$0xff]
      %v294 = vld [vmem:[%s210 + $0x1b4] sm:$0xf]
      %v295 = vld [vmem:[%s210 + $0x1b8] sm:$0xff]
      %v296 = vld [vmem:[%s210 + $0x1c0] sm:$0xff]
      %v297 = vld [vmem:[%s210 + $0x1c8] sm:$0xf]
      %v298 = vld [vmem:[%s210 + $0x1cc] sm:$0xff]
      %v299 = vld [vmem:[%s210 + $0x1d4] sm:$0xff]
      %v300 = vld [vmem:[%s210 + $0x1dc] sm:$0xf]
      %v301 = vld [vmem:[%s210 + $0x1e0] sm:$0xff]
      %v302 = vld [vmem:[%s210 + $0x1e8] sm:$0xff]
      %v303 = vld [vmem:[%s210 + $0x1f0] sm:$0xf]
      %v304 = vld [vmem:[%s210 + $0x1f4] sm:$0xff]
      %v305 = vld [vmem:[%s210 + $0x1fc] sm:$0xff]
      %v306 = vld [vmem:[%s210 + $0x204] sm:$0xf]
      %v307 = vld [vmem:[%s210 + $0x208] sm:$0xff]
      %v308 = vld [vmem:[%s210 + $0x210] sm:$0xff]
      %v309 = vld [vmem:[%s210 + $0x218] sm:$0xf]
      %v310 = vld [vmem:[%s210 + $0x21c] sm:$0xff]
      %v311 = vld [vmem:[%s210 + $0x224] sm:$0xff]
      %v312 = vld [vmem:[%s210 + $0x22c] sm:$0xf]
      %v313 = vld [vmem:[%s210 + $0x230] sm:$0xff]
      %v314 = vld [vmem:[%s210 + $0x238] sm:$0xff]
      %v315 = vld [vmem:[%s210 + $0x240] sm:$0xf]
      %v316 = vld [vmem:[%s210 + $0x244] sm:$0xff]
      %v317 = vld [vmem:[%s210 + $0x24c] sm:$0xff]
      %v318 = vld [vmem:[%s210 + $0x254] sm:$0xf]
      %v319 = vld [vmem:[%s210 + $0x258] sm:$0xff]
      %v320 = vld [vmem:[%s210 + $0x260] sm:$0xff]
      %v321 = vld [vmem:[%s210 + $0x268] sm:$0xf]
      %v322 = vld [vmem:[%s210 + $0x26c] sm:$0xff]
      %v323 = vld [vmem:[%s210 + $0x274] sm:$0xff]
      %v324 = vld [vmem:[%s210 + $0x27c] sm:$0xf]
      %v325 = vld [vmem:[%s210 + $0x280] sm:$0xff]
      %v326 = vld [vmem:[%s210 + $0x288] sm:$0xff]
      %v327 = vld [vmem:[%s210 + $0x290] sm:$0xf]
      %v328 = vld [vmem:[%s210 + $0x294] sm:$0xff]
      %v329 = vld [vmem:[%s210 + $0x29c] sm:$0xff]
      %v330 = vld [vmem:[%s210 + $0x2a4] sm:$0xf]
      %v331 = vld [vmem:[%s210 + $0x2a8] sm:$0xff]
      %v332 = vld [vmem:[%s210 + $0x2b0] sm:$0xff]
      %v333 = vld [vmem:[%s210 + $0x2b8] sm:$0xf]
      %v334 = vld [vmem:[%s210 + $0x2bc] sm:$0xff]
      %v335 = vld [vmem:[%s210 + $0x2c4] sm:$0xff]
      %v336 = vld [vmem:[%s210 + $0x2cc] sm:$0xf]
      %v337 = vld [vmem:[%s210 + $0x2d0] sm:$0xff]
      %v338 = vld [vmem:[%s210 + $0x2d8] sm:$0xff]
      %v339 = vld [vmem:[%s210 + $0x2e0] sm:$0xf]
      %v340 = vld [vmem:[%s210 + $0x2e4] sm:$0xff]
      %v341 = vld [vmem:[%s210 + $0x2ec] sm:$0xff]
      %v342 = vld [vmem:[%s210 + $0x2f4] sm:$0xf]
      %v343 = vld [vmem:[%s210 + $0x2f8] sm:$0xff]
      %v344 = vld [vmem:[%s210 + $0x300] sm:$0xff]
      %v345 = vld [vmem:[%s210 + $0x308] sm:$0xf]
      %v346 = vld [vmem:[%s210 + $0x30c] sm:$0xff]
      %v347 = vld [vmem:[%s210 + $0x314] sm:$0xff]
      %v348 = vld [vmem:[%s210 + $0x31c] sm:$0xf]
      %v349 = vld [vmem:[%s210 + $0x320] sm:$0xff]
      %v350 = vld [vmem:[%s210 + $0x328] sm:$0xff]
      %v351 = vld [vmem:[%s210 + $0x330] sm:$0xf]
      %v352 = vld [vmem:[%s210 + $0x334] sm:$0xff]
      %v353 = vld [vmem:[%s210 + $0x33c] sm:$0xff]
      %v354 = vld [vmem:[%s210 + $0x344] sm:$0xf]
      %v355 = vld [vmem:[%s210 + $0x348] sm:$0xff]
      %v356 = vld [vmem:[%s210 + $0x350] sm:$0xff]
      %v357 = vld [vmem:[%s210 + $0x358] sm:$0xf]
      %v358 = vld [vmem:[%s210 + $0x35c] sm:$0xff]
      %v359 = vld [vmem:[%s210 + $0x364] sm:$0xff]
      %v360 = vld [vmem:[%s210 + $0x36c] sm:$0xf]
      %v361 = vld [vmem:[%s210 + $0x370] sm:$0xff]
      %v362 = vld [vmem:[%s210 + $0x378] sm:$0xff]
      %v363 = vld [vmem:[%s210 + $0x380] sm:$0xf]
      %v364 = vld [vmem:[%s210 + $0x384] sm:$0xff]
      %v365 = vld [vmem:[%s210 + $0x38c] sm:$0xff]
      %v366 = vld [vmem:[%s210 + $0x394] sm:$0xf]
      %v367 = vld [vmem:[%s210 + $0x398] sm:$0xff]
      %v368 = vld [vmem:[%s210 + $0x3a0] sm:$0xff]
      %v369 = vld [vmem:[%s210 + $0x3a8] sm:$0xf]
      %v370 = vld [vmem:[%s210 + $0x3ac] sm:$0xff]
      %v371 = vld [vmem:[%s210 + $0x3b4] sm:$0xff]
      %v372 = vld [vmem:[%s210 + $0x3bc] sm:$0xf]
      %v373 = vld [vmem:[%s210 + $0x3c0] sm:$0xff]
      %v374 = vld [vmem:[%s210 + $0x3c8] sm:$0xff]
      %v375 = vld [vmem:[%s210 + $0x3d0] sm:$0xf]
      %v376 = vld [vmem:[%s210 + $0x3d4] sm:$0xff]
      %v377 = vld [vmem:[%s210 + $0x3dc] sm:$0xff]
      %v378 = vld [vmem:[%s210 + $0x3e4] sm:$0xf]
      %v379 = vld [vmem:[%s210 + $0x3e8] sm:$0xff]
      %v380 = vld [vmem:[%s210 + $0x3f0] sm:$0xff]
      %v381 = vld [vmem:[%s210 + $0x3f8] sm:$0xf]
      %v382 = vld [vmem:[%s210 + $0x3fc] sm:$0xff]
      %v383 = vld [vmem:[%s210 + $0x404] sm:$0xff]
      %v384 = vld [vmem:[%s210 + $0x40c] sm:$0xf]
      %v385 = vld [vmem:[%s210 + $0x410] sm:$0xff]
      %v386 = vld [vmem:[%s210 + $0x418] sm:$0xff]
      %v387 = vld [vmem:[%s210 + $0x420] sm:$0xf]
      %v388 = vld [vmem:[%s210 + $0x424] sm:$0xff]
      %v389 = vld [vmem:[%s210 + $0x42c] sm:$0xff]
      %v390 = vld [vmem:[%s210 + $0x434] sm:$0xf]
      %v391 = vld [vmem:[%s210 + $0x438] sm:$0xff]
      %v392 = vld [vmem:[%s210 + $0x440] sm:$0xff]
      %v393 = vld [vmem:[%s210 + $0x448] sm:$0xf]
      %v394 = vld [vmem:[%s210 + $0x44c] sm:$0xff]
      %v395 = vld [vmem:[%s210 + $0x454] sm:$0xff]
      %v396 = vld [vmem:[%s210 + $0x45c] sm:$0xf]
      %v397 = vld [vmem:[%s210 + $0x460] sm:$0xff]
      %v398 = vld [vmem:[%s210 + $0x468] sm:$0xff]
      %v399 = vld [vmem:[%s210 + $0x470] sm:$0xf]
      %v400 = vld [vmem:[%s210 + $0x474] sm:$0xff]
      %v401 = vld [vmem:[%s210 + $0x47c] sm:$0xff]
      %v402 = vld [vmem:[%s210 + $0x484] sm:$0xf]
      %v403 = vld [vmem:[%s210 + $0x488] sm:$0xff]
      %v404 = vld [vmem:[%s210 + $0x490] sm:$0xff]
      %v405 = vld [vmem:[%s210 + $0x498] sm:$0xf]
      %v406 = vld [vmem:[%s210 + $0x49c] sm:$0xff]
      %v407 = vld [vmem:[%s210 + $0x4a4] sm:$0xff]
      %v408 = vld [vmem:[%s210 + $0x4ac] sm:$0xf]
      %v409 = vld [vmem:[%s210 + $0x4b0] sm:$0xff]
      %v410 = vld [vmem:[%s210 + $0x4b8] sm:$0xff]
      %v411 = vld [vmem:[%s210 + $0x4c0] sm:$0xf]
      %v412 = vld [vmem:[%s210 + $0x4c4] sm:$0xff]
      %v413 = vld [vmem:[%s210 + $0x4cc] sm:$0xff]
      %v414 = vld [vmem:[%s210 + $0x4d4] sm:$0xf]
      %v415 = vld [vmem:[%s210 + $0x4d8] sm:$0xff]
      %v416 = vld [vmem:[%s210 + $0x4e0] sm:$0xff]
      %v417 = vld [vmem:[%s210 + $0x4e8] sm:$0xf]
      %v418 = vld [vmem:[%s210 + $0x4ec] sm:$0xff]
      %v419 = vld [vmem:[%s210 + $0x4f4] sm:$0xff]
      %v420 = vld [vmem:[%s210 + $0x4fc] sm:$0xf]
      %v421 = vld [vmem:[%s215] sm:$0xf]
      %v422 = vld [vmem:[%s215 + $0x4] sm:$0xf]
      %v423 = vld [vmem:[%s215 + $0x8] sm:$0xf]
      %v424 = vld [vmem:[%s215 + $0xc] sm:$0xf]
      %v425 = vld [vmem:[%s215 + $0x10] sm:$0xf]
      %v426 = vld [vmem:[%s215 + $0x14] sm:$0xf]
      %v427 = vld [vmem:[%s215 + $0x18] sm:$0xf]
      %v428 = vld [vmem:[%s215 + $0x1c] sm:$0xf]
      %v429 = vld [vmem:[%s215 + $0x20] sm:$0xf]
      %v430 = vld [vmem:[%s215 + $0x24] sm:$0xf]
      %v431 = vld [vmem:[%s215 + $0x28] sm:$0xf]
      %v432 = vld [vmem:[%s215 + $0x2c] sm:$0xf]
      %v433 = vld [vmem:[%s215 + $0x30] sm:$0xf]
      %v434 = vld [vmem:[%s215 + $0x34] sm:$0xf]
      %v435 = vld [vmem:[%s215 + $0x38] sm:$0xf]
      %v436 = vld [vmem:[%s215 + $0x3c] sm:$0xf]
      %v437 = vld [vmem:[%s215 + $0x40] sm:$0xf]
      %v438 = vld [vmem:[%s215 + $0x44] sm:$0xf]
      %v439 = vld [vmem:[%s215 + $0x48] sm:$0xf]
      %v440 = vld [vmem:[%s215 + $0x4c] sm:$0xf]
      %v441 = vld [vmem:[%s215 + $0x50] sm:$0xf]
      %v442 = vld [vmem:[%s215 + $0x54] sm:$0xf]
      %v443 = vld [vmem:[%s215 + $0x58] sm:$0xf]
      %v444 = vld [vmem:[%s215 + $0x5c] sm:$0xf]
      %v445 = vld [vmem:[%s215 + $0x60] sm:$0xf]
      %v446 = vld [vmem:[%s215 + $0x64] sm:$0xf]
      %v447 = vld [vmem:[%s215 + $0x68] sm:$0xf]
      %v448 = vld [vmem:[%s215 + $0x6c] sm:$0xf]
      %v449 = vld [vmem:[%s215 + $0x70] sm:$0xf]
      %v450 = vld [vmem:[%s215 + $0x74] sm:$0xf]
      %v451 = vld [vmem:[%s215 + $0x78] sm:$0xf]
      %v452 = vld [vmem:[%s215 + $0x7c] sm:$0xf]
      %v453 = vld [vmem:[%s215 + $0x80] sm:$0xf]
      %v454 = vld [vmem:[%s215 + $0x84] sm:$0xf]
      %v455 = vld [vmem:[%s215 + $0x88] sm:$0xf]
      %v456 = vld [vmem:[%s215 + $0x8c] sm:$0xf]
      %v457 = vld [vmem:[%s215 + $0x90] sm:$0xf]
      %v458 = vld [vmem:[%s215 + $0x94] sm:$0xf]
      %v459 = vld [vmem:[%s215 + $0x98] sm:$0xf]
      %v460 = vld [vmem:[%s215 + $0x9c] sm:$0xf]
      %v461 = vld [vmem:[%s215 + $0xa0] sm:$0xf]
      %v462 = vld [vmem:[%s215 + $0xa4] sm:$0xf]
      %v463 = vld [vmem:[%s215 + $0xa8] sm:$0xf]
      %v464 = vld [vmem:[%s215 + $0xac] sm:$0xf]
      %v465 = vld [vmem:[%s215 + $0xb0] sm:$0xf]
      %v466 = vld [vmem:[%s215 + $0xb4] sm:$0xf]
      %v467 = vld [vmem:[%s215 + $0xb8] sm:$0xf]
      %v468 = vld [vmem:[%s215 + $0xbc] sm:$0xf]
      %v469 = vld [vmem:[%s215 + $0xc0] sm:$0xf]
      %v470 = vld [vmem:[%s215 + $0xc4] sm:$0xf]
      %v471 = vld [vmem:[%s215 + $0xc8] sm:$0xf]
      %v472 = vld [vmem:[%s215 + $0xcc] sm:$0xf]
      %v473 = vld [vmem:[%s215 + $0xd0] sm:$0xf]
      %v474 = vld [vmem:[%s215 + $0xd4] sm:$0xf]
      %v475 = vld [vmem:[%s215 + $0xd8] sm:$0xf]
      %v476 = vld [vmem:[%s215 + $0xdc] sm:$0xf]
      %v477 = vld [vmem:[%s215 + $0xe0] sm:$0xf]
      %v478 = vld [vmem:[%s215 + $0xe4] sm:$0xf]
      %v479 = vld [vmem:[%s215 + $0xe8] sm:$0xf]
      %v480 = vld [vmem:[%s215 + $0xec] sm:$0xf]
      %v481 = vld [vmem:[%s215 + $0xf0] sm:$0xf]
      %v482 = vld [vmem:[%s215 + $0xf4] sm:$0xf]
      %v483 = vld [vmem:[%s215 + $0xf8] sm:$0xf]
      %v484 = vld [vmem:[%s215 + $0xfc] sm:$0xf]
      %v485 = vld [vmem:[%s215 + $0x100] sm:$0xf]
      %v486 = vld [vmem:[%s215 + $0x104] sm:$0xf]
      %v487 = vld [vmem:[%s215 + $0x108] sm:$0xf]
      %v488 = vld [vmem:[%s215 + $0x10c] sm:$0xf]
      %v489 = vld [vmem:[%s215 + $0x110] sm:$0xf]
      %v490 = vld [vmem:[%s215 + $0x114] sm:$0xf]
      %v491 = vld [vmem:[%s215 + $0x118] sm:$0xf]
      %v492 = vld [vmem:[%s215 + $0x11c] sm:$0xf]
      %v493 = vld [vmem:[%s215 + $0x120] sm:$0xf]
      %v494 = vld [vmem:[%s215 + $0x124] sm:$0xf]
      %v495 = vld [vmem:[%s215 + $0x128] sm:$0xf]
      %v496 = vld [vmem:[%s215 + $0x12c] sm:$0xf]
      %v497 = vld [vmem:[%s215 + $0x130] sm:$0xf]
      %v498 = vld [vmem:[%s215 + $0x134] sm:$0xf]
      %v499 = vld [vmem:[%s215 + $0x138] sm:$0xf]
      %v500 = vld [vmem:[%s215 + $0x13c] sm:$0xf]
      %v501 = vld [vmem:[%s218] sm:$0x1]
      %v503 = vlaneseq
      %v504 = vshrl.u32 %v503, 7
      %v505 = vsub.s32 0, %v504
      %v506 = vrot.slane %v501, %v505
      %v700 = vunpack.c.l.b16 %v229
      %v701 = vunpack.c.h.b16 %v229
      %v702 = vunpack.c.l.b16 %v230
      %v703 = vunpack.c.h.b16 %v230
      %v704 = vunpack.c.l.b16 %v231
      %v705 = vunpack.c.l.b16 %v232
      %v706 = vunpack.c.h.b16 %v232
      %v707 = vunpack.c.l.b16 %v233
      %v708 = vunpack.c.h.b16 %v233
      %v709 = vunpack.c.l.b16 %v234
      %v710 = vunpack.c.l.b16 %v235
      %v711 = vunpack.c.h.b16 %v235
      %v712 = vunpack.c.l.b16 %v236
      %v713 = vunpack.c.h.b16 %v236
      %v714 = vunpack.c.l.b16 %v237
      %v715 = vunpack.c.l.b16 %v238
      %v716 = vunpack.c.h.b16 %v238
      %v717 = vunpack.c.l.b16 %v239
      %v718 = vunpack.c.h.b16 %v239
      %v719 = vunpack.c.l.b16 %v240
      %v720 = vunpack.c.l.b16 %v241
      %v721 = vunpack.c.h.b16 %v241
      %v722 = vunpack.c.l.b16 %v242
      %v723 = vunpack.c.h.b16 %v242
      %v724 = vunpack.c.l.b16 %v243
      %v725 = vunpack.c.l.b16 %v244
      %v726 = vunpack.c.h.b16 %v244
      %v727 = vunpack.c.l.b16 %v245
      %v728 = vunpack.c.h.b16 %v245
      %v729 = vunpack.c.l.b16 %v246
      %v730 = vunpack.c.l.b16 %v247
      %v731 = vunpack.c.h.b16 %v247
      %v732 = vunpack.c.l.b16 %v248
      %v733 = vunpack.c.h.b16 %v248
      %v734 = vunpack.c.l.b16 %v249
      %v735 = vunpack.c.l.b16 %v250
      %v736 = vunpack.c.h.b16 %v250
      %v737 = vunpack.c.l.b16 %v251
      %v738 = vunpack.c.h.b16 %v251
      %v739 = vunpack.c.l.b16 %v252
      %v740 = vunpack.c.l.b16 %v253
      %v741 = vunpack.c.h.b16 %v253
      %v742 = vunpack.c.l.b16 %v254
      %v743 = vunpack.c.h.b16 %v254
      %v744 = vunpack.c.l.b16 %v255
      %v745 = vunpack.c.l.b16 %v256
      %v746 = vunpack.c.h.b16 %v256
      %v747 = vunpack.c.l.b16 %v257
      %v748 = vunpack.c.h.b16 %v257
      %v749 = vunpack.c.l.b16 %v258
      %v750 = vunpack.c.l.b16 %v259
      %v751 = vunpack.c.h.b16 %v259
      %v752 = vunpack.c.l.b16 %v260
      %v753 = vunpack.c.h.b16 %v260
      %v754 = vunpack.c.l.b16 %v261
      %v755 = vunpack.c.l.b16 %v262
      %v756 = vunpack.c.h.b16 %v262
      %v757 = vunpack.c.l.b16 %v263
      %v758 = vunpack.c.h.b16 %v263
      %v759 = vunpack.c.l.b16 %v264
      %v760 = vunpack.c.l.b16 %v265
      %v761 = vunpack.c.h.b16 %v265
      %v762 = vunpack.c.l.b16 %v266
      %v763 = vunpack.c.h.b16 %v266
      %v764 = vunpack.c.l.b16 %v267
      %v765 = vunpack.c.l.b16 %v268
      %v766 = vunpack.c.h.b16 %v268
      %v767 = vunpack.c.l.b16 %v269
      %v768 = vunpack.c.h.b16 %v269
      %v769 = vunpack.c.l.b16 %v270
      %v770 = vunpack.c.l.b16 %v271
      %v771 = vunpack.c.h.b16 %v271
      %v772 = vunpack.c.l.b16 %v272
      %v773 = vunpack.c.h.b16 %v272
      %v774 = vunpack.c.l.b16 %v273
      %v775 = vunpack.c.l.b16 %v274
      %v776 = vunpack.c.h.b16 %v274
      %v777 = vunpack.c.l.b16 %v275
      %v778 = vunpack.c.h.b16 %v275
      %v779 = vunpack.c.l.b16 %v276
      %v780 = vunpack.c.l.b16 %v277
      %v781 = vunpack.c.h.b16 %v277
      %v782 = vunpack.c.l.b16 %v278
      %v783 = vunpack.c.h.b16 %v278
      %v784 = vunpack.c.l.b16 %v279
      %v785 = vunpack.c.l.b16 %v280
      %v786 = vunpack.c.h.b16 %v280
      %v787 = vunpack.c.l.b16 %v281
      %v788 = vunpack.c.h.b16 %v281
      %v789 = vunpack.c.l.b16 %v282
      %v790 = vunpack.c.l.b16 %v283
      %v791 = vunpack.c.h.b16 %v283
      %v792 = vunpack.c.l.b16 %v284
      %v793 = vunpack.c.h.b16 %v284
      %v794 = vunpack.c.l.b16 %v285
      %v795 = vunpack.c.l.b16 %v286
      %v796 = vunpack.c.h.b16 %v286
      %v797 = vunpack.c.l.b16 %v287
      %v798 = vunpack.c.h.b16 %v287
      %v799 = vunpack.c.l.b16 %v288
      %v800 = vunpack.c.l.b16 %v289
      %v801 = vunpack.c.h.b16 %v289
      %v802 = vunpack.c.l.b16 %v290
      %v803 = vunpack.c.h.b16 %v290
      %v804 = vunpack.c.l.b16 %v291
      %v805 = vunpack.c.l.b16 %v292
      %v806 = vunpack.c.h.b16 %v292
      %v807 = vunpack.c.l.b16 %v293
      %v808 = vunpack.c.h.b16 %v293
      %v809 = vunpack.c.l.b16 %v294
      %v810 = vunpack.c.l.b16 %v295
      %v811 = vunpack.c.h.b16 %v295
      %v812 = vunpack.c.l.b16 %v296
      %v813 = vunpack.c.h.b16 %v296
      %v814 = vunpack.c.l.b16 %v297
      %v815 = vunpack.c.l.b16 %v298
      %v816 = vunpack.c.h.b16 %v298
      %v817 = vunpack.c.l.b16 %v299
      %v818 = vunpack.c.h.b16 %v299
      %v819 = vunpack.c.l.b16 %v300
      %v820 = vunpack.c.l.b16 %v301
      %v821 = vunpack.c.h.b16 %v301
      %v822 = vunpack.c.l.b16 %v302
      %v823 = vunpack.c.h.b16 %v302
      %v824 = vunpack.c.l.b16 %v303
      %v825 = vunpack.c.l.b16 %v304
      %v826 = vunpack.c.h.b16 %v304
      %v827 = vunpack.c.l.b16 %v305
      %v828 = vunpack.c.h.b16 %v305
      %v829 = vunpack.c.l.b16 %v306
      %v830 = vunpack.c.l.b16 %v307
      %v831 = vunpack.c.h.b16 %v307
      %v832 = vunpack.c.l.b16 %v308
      %v833 = vunpack.c.h.b16 %v308
      %v834 = vunpack.c.l.b16 %v309
      %v835 = vunpack.c.l.b16 %v310
      %v836 = vunpack.c.h.b16 %v310
      %v837 = vunpack.c.l.b16 %v311
      %v838 = vunpack.c.h.b16 %v311
      %v839 = vunpack.c.l.b16 %v312
      %v840 = vunpack.c.l.b16 %v313
      %v841 = vunpack.c.h.b16 %v313
      %v842 = vunpack.c.l.b16 %v314
      %v843 = vunpack.c.h.b16 %v314
      %v844 = vunpack.c.l.b16 %v315
      %v845 = vunpack.c.l.b16 %v316
      %v846 = vunpack.c.h.b16 %v316
      %v847 = vunpack.c.l.b16 %v317
      %v848 = vunpack.c.h.b16 %v317
      %v849 = vunpack.c.l.b16 %v318
      %v850 = vunpack.c.l.b16 %v319
      %v851 = vunpack.c.h.b16 %v319
      %v852 = vunpack.c.l.b16 %v320
      %v853 = vunpack.c.h.b16 %v320
      %v854 = vunpack.c.l.b16 %v321
      %v855 = vunpack.c.l.b16 %v322
      %v856 = vunpack.c.h.b16 %v322
      %v857 = vunpack.c.l.b16 %v323
      %v858 = vunpack.c.h.b16 %v323
      %v859 = vunpack.c.l.b16 %v324
      %v860 = vunpack.c.l.b16 %v325
      %v861 = vunpack.c.h.b16 %v325
      %v862 = vunpack.c.l.b16 %v326
      %v863 = vunpack.c.h.b16 %v326
      %v864 = vunpack.c.l.b16 %v327
      %v865 = vunpack.c.l.b16 %v328
      %v866 = vunpack.c.h.b16 %v328
      %v867 = vunpack.c.l.b16 %v329
      %v868 = vunpack.c.h.b16 %v329
      %v869 = vunpack.c.l.b16 %v330
      %v870 = vunpack.c.l.b16 %v331
      %v871 = vunpack.c.h.b16 %v331
      %v872 = vunpack.c.l.b16 %v332
      %v873 = vunpack.c.h.b16 %v332
      %v874 = vunpack.c.l.b16 %v333
      %v875 = vunpack.c.l.b16 %v334
      %v876 = vunpack.c.h.b16 %v334
      %v877 = vunpack.c.l.b16 %v335
      %v878 = vunpack.c.h.b16 %v335
      %v879 = vunpack.c.l.b16 %v336
      %v880 = vunpack.c.l.b16 %v337
      %v881 = vunpack.c.h.b16 %v337
      %v882 = vunpack.c.l.b16 %v338
      %v883 = vunpack.c.h.b16 %v338
      %v884 = vunpack.c.l.b16 %v339
      %v885 = vunpack.c.l.b16 %v340
      %v886 = vunpack.c.h.b16 %v340
      %v887 = vunpack.c.l.b16 %v341
      %v888 = vunpack.c.h.b16 %v341
      %v889 = vunpack.c.l.b16 %v342
      %v890 = vunpack.c.l.b16 %v343
      %v891 = vunpack.c.h.b16 %v343
      %v892 = vunpack.c.l.b16 %v344
      %v893 = vunpack.c.h.b16 %v344
      %v894 = vunpack.c.l.b16 %v345
      %v895 = vunpack.c.l.b16 %v346
      %v896 = vunpack.c.h.b16 %v346
      %v897 = vunpack.c.l.b16 %v347
      %v898 = vunpack.c.h.b16 %v347
      %v899 = vunpack.c.l.b16 %v348
      %v900 = vunpack.c.l.b16 %v349
      %v901 = vunpack.c.h.b16 %v349
      %v902 = vunpack.c.l.b16 %v350
      %v903 = vunpack.c.h.b16 %v350
      %v904 = vunpack.c.l.b16 %v351
      %v905 = vunpack.c.l.b16 %v352
      %v906 = vunpack.c.h.b16 %v352
      %v907 = vunpack.c.l.b16 %v353
      %v908 = vunpack.c.h.b16 %v353
      %v909 = vunpack.c.l.b16 %v354
      %v910 = vunpack.c.l.b16 %v355
      %v911 = vunpack.c.h.b16 %v355
      %v912 = vunpack.c.l.b16 %v356
      %v913 = vunpack.c.h.b16 %v356
      %v914 = vunpack.c.l.b16 %v357
      %v915 = vunpack.c.l.b16 %v358
      %v916 = vunpack.c.h.b16 %v358
      %v917 = vunpack.c.l.b16 %v359
      %v918 = vunpack.c.h.b16 %v359
      %v919 = vunpack.c.l.b16 %v360
      %v920 = vunpack.c.l.b16 %v361
      %v921 = vunpack.c.h.b16 %v361
      %v922 = vunpack.c.l.b16 %v362
      %v923 = vunpack.c.h.b16 %v362
      %v924 = vunpack.c.l.b16 %v363
      %v925 = vunpack.c.l.b16 %v364
      %v926 = vunpack.c.h.b16 %v364
      %v927 = vunpack.c.l.b16 %v365
      %v928 = vunpack.c.h.b16 %v365
      %v929 = vunpack.c.l.b16 %v366
      %v930 = vunpack.c.l.b16 %v367
      %v931 = vunpack.c.h.b16 %v367
      %v932 = vunpack.c.l.b16 %v368
      %v933 = vunpack.c.h.b16 %v368
      %v934 = vunpack.c.l.b16 %v369
      %v935 = vunpack.c.l.b16 %v370
      %v936 = vunpack.c.h.b16 %v370
      %v937 = vunpack.c.l.b16 %v371
      %v938 = vunpack.c.h.b16 %v371
      %v939 = vunpack.c.l.b16 %v372
      %v940 = vunpack.c.l.b16 %v373
      %v941 = vunpack.c.h.b16 %v373
      %v942 = vunpack.c.l.b16 %v374
      %v943 = vunpack.c.h.b16 %v374
      %v944 = vunpack.c.l.b16 %v375
      %v945 = vunpack.c.l.b16 %v376
      %v946 = vunpack.c.h.b16 %v376
      %v947 = vunpack.c.l.b16 %v377
      %v948 = vunpack.c.h.b16 %v377
      %v949 = vunpack.c.l.b16 %v378
      %v950 = vunpack.c.l.b16 %v379
      %v951 = vunpack.c.h.b16 %v379
      %v952 = vunpack.c.l.b16 %v380
      %v953 = vunpack.c.h.b16 %v380
      %v954 = vunpack.c.l.b16 %v381
      %v955 = vunpack.c.l.b16 %v382
      %v956 = vunpack.c.h.b16 %v382
      %v957 = vunpack.c.l.b16 %v383
      %v958 = vunpack.c.h.b16 %v383
      %v959 = vunpack.c.l.b16 %v384
      %v960 = vunpack.c.l.b16 %v385
      %v961 = vunpack.c.h.b16 %v385
      %v962 = vunpack.c.l.b16 %v386
      %v963 = vunpack.c.h.b16 %v386
      %v964 = vunpack.c.l.b16 %v387
      %v965 = vunpack.c.l.b16 %v388
      %v966 = vunpack.c.h.b16 %v388
      %v967 = vunpack.c.l.b16 %v389
      %v968 = vunpack.c.h.b16 %v389
      %v969 = vunpack.c.l.b16 %v390
      %v970 = vunpack.c.l.b16 %v391
      %v971 = vunpack.c.h.b16 %v391
      %v972 = vunpack.c.l.b16 %v392
      %v973 = vunpack.c.h.b16 %v392
      %v974 = vunpack.c.l.b16 %v393
      %v975 = vunpack.c.l.b16 %v394
      %v976 = vunpack.c.h.b16 %v394
      %v977 = vunpack.c.l.b16 %v395
      %v978 = vunpack.c.h.b16 %v395
      %v979 = vunpack.c.l.b16 %v396
      %v980 = vunpack.c.l.b16 %v397
      %v981 = vunpack.c.h.b16 %v397
      %v982 = vunpack.c.l.b16 %v398
      %v983 = vunpack.c.h.b16 %v398
      %v984 = vunpack.c.l.b16 %v399
      %v985 = vunpack.c.l.b16 %v400
      %v986 = vunpack.c.h.b16 %v400
      %v987 = vunpack.c.l.b16 %v401
      %v988 = vunpack.c.h.b16 %v401
      %v989 = vunpack.c.l.b16 %v402
      %v990 = vunpack.c.l.b16 %v403
      %v991 = vunpack.c.h.b16 %v403
      %v992 = vunpack.c.l.b16 %v404
      %v993 = vunpack.c.h.b16 %v404
      %v994 = vunpack.c.l.b16 %v405
      %v995 = vunpack.c.l.b16 %v406
      %v996 = vunpack.c.h.b16 %v406
      %v997 = vunpack.c.l.b16 %v407
      %v998 = vunpack.c.h.b16 %v407
      %v999 = vunpack.c.l.b16 %v408
      %v1000 = vunpack.c.l.b16 %v409
      %v1001 = vunpack.c.h.b16 %v409
      %v1002 = vunpack.c.l.b16 %v410
      %v1003 = vunpack.c.h.b16 %v410
      %v1004 = vunpack.c.l.b16 %v411
      %v1005 = vunpack.c.l.b16 %v412
      %v1006 = vunpack.c.h.b16 %v412
      %v1007 = vunpack.c.l.b16 %v413
      %v1008 = vunpack.c.h.b16 %v413
      %v1009 = vunpack.c.l.b16 %v414
      %v1010 = vunpack.c.l.b16 %v415
      %v1011 = vunpack.c.h.b16 %v415
      %v1012 = vunpack.c.l.b16 %v416
      %v1013 = vunpack.c.h.b16 %v416
      %v1014 = vunpack.c.l.b16 %v417
      %v1015 = vunpack.c.l.b16 %v418
      %v1016 = vunpack.c.h.b16 %v418
      %v1017 = vunpack.c.l.b16 %v419
      %v1018 = vunpack.c.h.b16 %v419
      %v1019 = vunpack.c.l.b16 %v420
      %v1020 = vpack.c.b16 %v705, %v700
      %v1021 = vpack.c.b16 %v706, %v701
      %v1022 = vpack.c.b16 %v707, %v702
      %v1023 = vpack.c.b16 %v708, %v703
      %v1024 = vpack.c.b16 %v709, %v704
      %v1025 = vpack.c.b16 %v715, %v710
      %v1026 = vpack.c.b16 %v716, %v711
      %v1027 = vpack.c.b16 %v717, %v712
      %v1028 = vpack.c.b16 %v718, %v713
      %v1029 = vpack.c.b16 %v719, %v714
      %v1030 = vpack.c.b16 %v725, %v720
      %v1031 = vpack.c.b16 %v726, %v721
      %v1032 = vpack.c.b16 %v727, %v722
      %v1033 = vpack.c.b16 %v728, %v723
      %v1034 = vpack.c.b16 %v729, %v724
      %v1035 = vpack.c.b16 %v735, %v730
      %v1036 = vpack.c.b16 %v736, %v731
      %v1037 = vpack.c.b16 %v737, %v732
      %v1038 = vpack.c.b16 %v738, %v733
      %v1039 = vpack.c.b16 %v739, %v734
      %v1040 = vpack.c.b16 %v745, %v740
      %v1041 = vpack.c.b16 %v746, %v741
      %v1042 = vpack.c.b16 %v747, %v742
      %v1043 = vpack.c.b16 %v748, %v743
      %v1044 = vpack.c.b16 %v749, %v744
      %v1045 = vpack.c.b16 %v755, %v750
      %v1046 = vpack.c.b16 %v756, %v751
      %v1047 = vpack.c.b16 %v757, %v752
      %v1048 = vpack.c.b16 %v758, %v753
      %v1049 = vpack.c.b16 %v759, %v754
      %v1050 = vpack.c.b16 %v765, %v760
      %v1051 = vpack.c.b16 %v766, %v761
      %v1052 = vpack.c.b16 %v767, %v762
      %v1053 = vpack.c.b16 %v768, %v763
      %v1054 = vpack.c.b16 %v769, %v764
      %v1055 = vpack.c.b16 %v775, %v770
      %v1056 = vpack.c.b16 %v776, %v771
      %v1057 = vpack.c.b16 %v777, %v772
      %v1058 = vpack.c.b16 %v778, %v773
      %v1059 = vpack.c.b16 %v779, %v774
      %v1060 = vpack.c.b16 %v785, %v780
      %v1061 = vpack.c.b16 %v786, %v781
      %v1062 = vpack.c.b16 %v787, %v782
      %v1063 = vpack.c.b16 %v788, %v783
      %v1064 = vpack.c.b16 %v789, %v784
      %v1065 = vpack.c.b16 %v795, %v790
      %v1066 = vpack.c.b16 %v796, %v791
      %v1067 = vpack.c.b16 %v797, %v792
      %v1068 = vpack.c.b16 %v798, %v793
      %v1069 = vpack.c.b16 %v799, %v794
      %v1070 = vpack.c.b16 %v805, %v800
      %v1071 = vpack.c.b16 %v806, %v801
      %v1072 = vpack.c.b16 %v807, %v802
      %v1073 = vpack.c.b16 %v808, %v803
      %v1074 = vpack.c.b16 %v809, %v804
      %v1075 = vpack.c.b16 %v815, %v810
      %v1076 = vpack.c.b16 %v816, %v811
      %v1077 = vpack.c.b16 %v817, %v812
      %v1078 = vpack.c.b16 %v818, %v813
      %v1079 = vpack.c.b16 %v819, %v814
      %v1080 = vpack.c.b16 %v825, %v820
      %v1081 = vpack.c.b16 %v826, %v821
      %v1082 = vpack.c.b16 %v827, %v822
      %v1083 = vpack.c.b16 %v828, %v823
      %v1084 = vpack.c.b16 %v829, %v824
      %v1085 = vpack.c.b16 %v835, %v830
      %v1086 = vpack.c.b16 %v836, %v831
      %v1087 = vpack.c.b16 %v837, %v832
      %v1088 = vpack.c.b16 %v838, %v833
      %v1089 = vpack.c.b16 %v839, %v834
      %v1090 = vpack.c.b16 %v845, %v840
      %v1091 = vpack.c.b16 %v846, %v841
      %v1092 = vpack.c.b16 %v847, %v842
      %v1093 = vpack.c.b16 %v848, %v843
      %v1094 = vpack.c.b16 %v849, %v844
      %v1095 = vpack.c.b16 %v855, %v850
      %v1096 = vpack.c.b16 %v856, %v851
      %v1097 = vpack.c.b16 %v857, %v852
      %v1098 = vpack.c.b16 %v858, %v853
      %v1099 = vpack.c.b16 %v859, %v854
      %v1100 = vpack.c.b16 %v865, %v860
      %v1101 = vpack.c.b16 %v866, %v861
      %v1102 = vpack.c.b16 %v867, %v862
      %v1103 = vpack.c.b16 %v868, %v863
      %v1104 = vpack.c.b16 %v869, %v864
      %v1105 = vpack.c.b16 %v875, %v870
      %v1106 = vpack.c.b16 %v876, %v871
      %v1107 = vpack.c.b16 %v877, %v872
      %v1108 = vpack.c.b16 %v878, %v873
      %v1109 = vpack.c.b16 %v879, %v874
      %v1110 = vpack.c.b16 %v885, %v880
      %v1111 = vpack.c.b16 %v886, %v881
      %v1112 = vpack.c.b16 %v887, %v882
      %v1113 = vpack.c.b16 %v888, %v883
      %v1114 = vpack.c.b16 %v889, %v884
      %v1115 = vpack.c.b16 %v895, %v890
      %v1116 = vpack.c.b16 %v896, %v891
      %v1117 = vpack.c.b16 %v897, %v892
      %v1118 = vpack.c.b16 %v898, %v893
      %v1119 = vpack.c.b16 %v899, %v894
      %v1120 = vpack.c.b16 %v905, %v900
      %v1121 = vpack.c.b16 %v906, %v901
      %v1122 = vpack.c.b16 %v907, %v902
      %v1123 = vpack.c.b16 %v908, %v903
      %v1124 = vpack.c.b16 %v909, %v904
      %v1125 = vpack.c.b16 %v915, %v910
      %v1126 = vpack.c.b16 %v916, %v911
      %v1127 = vpack.c.b16 %v917, %v912
      %v1128 = vpack.c.b16 %v918, %v913
      %v1129 = vpack.c.b16 %v919, %v914
      %v1130 = vpack.c.b16 %v925, %v920
      %v1131 = vpack.c.b16 %v926, %v921
      %v1132 = vpack.c.b16 %v927, %v922
      %v1133 = vpack.c.b16 %v928, %v923
      %v1134 = vpack.c.b16 %v929, %v924
      %v1135 = vpack.c.b16 %v935, %v930
      %v1136 = vpack.c.b16 %v936, %v931
      %v1137 = vpack.c.b16 %v937, %v932
      %v1138 = vpack.c.b16 %v938, %v933
      %v1139 = vpack.c.b16 %v939, %v934
      %v1140 = vpack.c.b16 %v945, %v940
      %v1141 = vpack.c.b16 %v946, %v941
      %v1142 = vpack.c.b16 %v947, %v942
      %v1143 = vpack.c.b16 %v948, %v943
      %v1144 = vpack.c.b16 %v949, %v944
      %v1145 = vpack.c.b16 %v955, %v950
      %v1146 = vpack.c.b16 %v956, %v951
      %v1147 = vpack.c.b16 %v957, %v952
      %v1148 = vpack.c.b16 %v958, %v953
      %v1149 = vpack.c.b16 %v959, %v954
      %v1150 = vpack.c.b16 %v965, %v960
      %v1151 = vpack.c.b16 %v966, %v961
      %v1152 = vpack.c.b16 %v967, %v962
      %v1153 = vpack.c.b16 %v968, %v963
      %v1154 = vpack.c.b16 %v969, %v964
      %v1155 = vpack.c.b16 %v975, %v970
      %v1156 = vpack.c.b16 %v976, %v971
      %v1157 = vpack.c.b16 %v977, %v972
      %v1158 = vpack.c.b16 %v978, %v973
      %v1159 = vpack.c.b16 %v979, %v974
      %v1160 = vpack.c.b16 %v985, %v980
      %v1161 = vpack.c.b16 %v986, %v981
      %v1162 = vpack.c.b16 %v987, %v982
      %v1163 = vpack.c.b16 %v988, %v983
      %v1164 = vpack.c.b16 %v989, %v984
      %v1165 = vpack.c.b16 %v995, %v990
      %v1166 = vpack.c.b16 %v996, %v991
      %v1167 = vpack.c.b16 %v997, %v992
      %v1168 = vpack.c.b16 %v998, %v993
      %v1169 = vpack.c.b16 %v999, %v994
      %v1170 = vpack.c.b16 %v1005, %v1000
      %v1171 = vpack.c.b16 %v1006, %v1001
      %v1172 = vpack.c.b16 %v1007, %v1002
      %v1173 = vpack.c.b16 %v1008, %v1003
      %v1174 = vpack.c.b16 %v1009, %v1004
      %v1175 = vpack.c.b16 %v1015, %v1010
      %v1176 = vpack.c.b16 %v1016, %v1011
      %v1177 = vpack.c.b16 %v1017, %v1012
      %v1178 = vpack.c.b16 %v1018, %v1013
      %v1179 = vpack.c.b16 %v1019, %v1014
      %v1420 = vunpack.c.l.b16 %v421
      %v1421 = vunpack.c.l.b16 %v422
      %v1422 = vunpack.c.l.b16 %v423
      %v1423 = vunpack.c.l.b16 %v424
      %v1424 = vunpack.c.l.b16 %v425
      %v1425 = vunpack.c.l.b16 %v426
      %v1426 = vunpack.c.l.b16 %v427
      %v1427 = vunpack.c.l.b16 %v428
      %v1428 = vunpack.c.l.b16 %v429
      %v1429 = vunpack.c.l.b16 %v430
      %v1430 = vunpack.c.l.b16 %v431
      %v1431 = vunpack.c.l.b16 %v432
      %v1432 = vunpack.c.l.b16 %v433
      %v1433 = vunpack.c.l.b16 %v434
      %v1434 = vunpack.c.l.b16 %v435
      %v1435 = vunpack.c.l.b16 %v436
      %v1436 = vunpack.c.l.b16 %v437
      %v1437 = vunpack.c.l.b16 %v438
      %v1438 = vunpack.c.l.b16 %v439
      %v1439 = vunpack.c.l.b16 %v440
      %v1440 = vunpack.c.l.b16 %v441
      %v1441 = vunpack.c.l.b16 %v442
      %v1442 = vunpack.c.l.b16 %v443
      %v1443 = vunpack.c.l.b16 %v444
      %v1444 = vunpack.c.l.b16 %v445
      %v1445 = vunpack.c.l.b16 %v446
      %v1446 = vunpack.c.l.b16 %v447
      %v1447 = vunpack.c.l.b16 %v448
      %v1448 = vunpack.c.l.b16 %v449
      %v1449 = vunpack.c.l.b16 %v450
      %v1450 = vunpack.c.l.b16 %v451
      %v1451 = vunpack.c.l.b16 %v452
      %v1452 = vunpack.c.l.b16 %v453
      %v1453 = vunpack.c.l.b16 %v454
      %v1454 = vunpack.c.l.b16 %v455
      %v1455 = vunpack.c.l.b16 %v456
      %v1456 = vunpack.c.l.b16 %v457
      %v1457 = vunpack.c.l.b16 %v458
      %v1458 = vunpack.c.l.b16 %v459
      %v1459 = vunpack.c.l.b16 %v460
      %v1460 = vunpack.c.l.b16 %v461
      %v1461 = vunpack.c.l.b16 %v462
      %v1462 = vunpack.c.l.b16 %v463
      %v1463 = vunpack.c.l.b16 %v464
      %v1464 = vunpack.c.l.b16 %v465
      %v1465 = vunpack.c.l.b16 %v466
      %v1466 = vunpack.c.l.b16 %v467
      %v1467 = vunpack.c.l.b16 %v468
      %v1468 = vunpack.c.l.b16 %v469
      %v1469 = vunpack.c.l.b16 %v470
      %v1470 = vunpack.c.l.b16 %v471
      %v1471 = vunpack.c.l.b16 %v472
      %v1472 = vunpack.c.l.b16 %v473
      %v1473 = vunpack.c.l.b16 %v474
      %v1474 = vunpack.c.l.b16 %v475
      %v1475 = vunpack.c.l.b16 %v476
      %v1476 = vunpack.c.l.b16 %v477
      %v1477 = vunpack.c.l.b16 %v478
      %v1478 = vunpack.c.l.b16 %v479
      %v1479 = vunpack.c.l.b16 %v480
      %v1480 = vunpack.c.l.b16 %v481
      %v1481 = vunpack.c.l.b16 %v482
      %v1482 = vunpack.c.l.b16 %v483
      %v1483 = vunpack.c.l.b16 %v484
      %v1484 = vunpack.c.l.b16 %v485
      %v1485 = vunpack.c.l.b16 %v486
      %v1486 = vunpack.c.l.b16 %v487
      %v1487 = vunpack.c.l.b16 %v488
      %v1488 = vunpack.c.l.b16 %v489
      %v1489 = vunpack.c.l.b16 %v490
      %v1490 = vunpack.c.l.b16 %v491
      %v1491 = vunpack.c.l.b16 %v492
      %v1492 = vunpack.c.l.b16 %v493
      %v1493 = vunpack.c.l.b16 %v494
      %v1494 = vunpack.c.l.b16 %v495
      %v1495 = vunpack.c.l.b16 %v496
      %v1496 = vunpack.c.l.b16 %v497
      %v1497 = vunpack.c.l.b16 %v498
      %v1498 = vunpack.c.l.b16 %v499
      %v1499 = vunpack.c.l.b16 %v500
      %v1500 = vpack.c.b16 %v1421, %v1420
      %v1501 = vpack.c.b16 %v1423, %v1422
      %v1502 = vpack.c.b16 %v1425, %v1424
      %v1503 = vpack.c.b16 %v1427, %v1426
      %v1504 = vpack.c.b16 %v1429, %v1428
      %v1505 = vpack.c.b16 %v1431, %v1430
      %v1506 = vpack.c.b16 %v1433, %v1432
      %v1507 = vpack.c.b16 %v1435, %v1434
      %v1508 = vpack.c.b16 %v1437, %v1436
      %v1509 = vpack.c.b16 %v1439, %v1438
      %v1510 = vpack.c.b16 %v1441, %v1440
      %v1511 = vpack.c.b16 %v1443, %v1442
      %v1512 = vpack.c.b16 %v1445, %v1444
      %v1513 = vpack.c.b16 %v1447, %v1446
      %v1514 = vpack.c.b16 %v1449, %v1448
      %v1515 = vpack.c.b16 %v1451, %v1450
      %v1516 = vpack.c.b16 %v1453, %v1452
      %v1517 = vpack.c.b16 %v1455, %v1454
      %v1518 = vpack.c.b16 %v1457, %v1456
      %v1519 = vpack.c.b16 %v1459, %v1458
      %v1520 = vpack.c.b16 %v1461, %v1460
      %v1521 = vpack.c.b16 %v1463, %v1462
      %v1522 = vpack.c.b16 %v1465, %v1464
      %v1523 = vpack.c.b16 %v1467, %v1466
      %v1524 = vpack.c.b16 %v1469, %v1468
      %v1525 = vpack.c.b16 %v1471, %v1470
      %v1526 = vpack.c.b16 %v1473, %v1472
      %v1527 = vpack.c.b16 %v1475, %v1474
      %v1528 = vpack.c.b16 %v1477, %v1476
      %v1529 = vpack.c.b16 %v1479, %v1478
      %v1530 = vpack.c.b16 %v1481, %v1480
      %v1531 = vpack.c.b16 %v1483, %v1482
      %v1532 = vpack.c.b16 %v1485, %v1484
      %v1533 = vpack.c.b16 %v1487, %v1486
      %v1534 = vpack.c.b16 %v1489, %v1488
      %v1535 = vpack.c.b16 %v1491, %v1490
      %v1536 = vpack.c.b16 %v1493, %v1492
      %v1537 = vpack.c.b16 %v1495, %v1494
      %v1538 = vpack.c.b16 %v1497, %v1496
      %v1539 = vpack.c.b16 %v1499, %v1498
      %1580 = vmatprep.subr.bf16.mxu0 0
      %1581 = vmatpush1.bf16.msra.mxu0 %v1507
      %1582 = vmatprep.subr.bf16.mxu0 0
      %1583 = vmatpush1.bf16.msra.mxu0 %v1506
      %1584 = vmatprep.subr.bf16.mxu0 0
      %1585 = vmatpush1.bf16.msra.mxu0 %v1505
      %1586 = vmatprep.subr.bf16.mxu0 0
      %1587 = vmatpush1.bf16.msra.mxu0 %v1504
      %1588 = vmatprep.subr.bf16.mxu0 0
      %1589 = vmatpush1.bf16.msra.mxu0 %v1503
      %1590 = vmatprep.subr.bf16.mxu0 0
      %1591 = vmatpush1.bf16.msra.mxu0 %v1502
      %1592 = vmatprep.subr.bf16.mxu0 0
      %1593 = vmatpush1.bf16.msra.mxu0 %v1501
      %1594 = vmatprep.subr.bf16.mxu0 0
      %1595 = vmatpush1.bf16.msra.mxu0 %v1500
      %1596 = vmatprep.subr.bf16.mxu0 0
      %1597 = vmatpush2.bf16.msra.mxu0 %v1515
      %1598 = vmatprep.subr.bf16.mxu0 0
      %1599 = vmatpush2.bf16.msra.mxu0 %v1514
      %1600 = vmatprep.subr.bf16.mxu0 0
      %1601 = vmatpush2.bf16.msra.mxu0 %v1513
      %1602 = vmatprep.subr.bf16.mxu0 0
      %1603 = vmatpush2.bf16.msra.mxu0 %v1512
      %1604 = vmatprep.subr.bf16.mxu0 0
      %1605 = vmatpush2.bf16.msra.mxu0 %v1511
      %1606 = vmatprep.subr.bf16.mxu0 0
      %1607 = vmatpush2.bf16.msra.mxu0 %v1510
      %1608 = vmatprep.subr.bf16.mxu0 0
      %1609 = vmatpush2.bf16.msra.mxu0 %v1509
      %1610 = vmatprep.subr.bf16.mxu0 0
      %1611 = vmatpush2.bf16.msra.mxu0 %v1508
      %1612 = vmatprep.mubr.bf16.mxu0 %v1021
      %1613 = vmatmul.mubr.bf16.gmra.mxu0 %v1020
      %v1614 = vpop.f32.mrf.mxu0
      %v1615 = vadd.f32 %v506, %v1614
      %v1616 = vpop.f32.mrf.mxu0
      %v1617 = vpop.f32.mrf.mxu0
      %v1618 = vadd.f32 %v506, %v1617
      %v1619 = vpop.f32.mrf.mxu0
      %1620 = vmatprep.mubr.bf16.mxu0 %v1026
      %1621 = vmatmul.mubr.bf16.gmra.mxu0 %v1025
      %v1622 = vpop.f32.mrf.mxu0
      %v1623 = vadd.f32 %v506, %v1622
      %v1624 = vpop.f32.mrf.mxu0
      %v1625 = vpop.f32.mrf.mxu0
      %v1626 = vadd.f32 %v506, %v1625
      %v1627 = vpop.f32.mrf.mxu0
      %1628 = vmatprep.mubr.bf16.mxu0 %v1031
      %1629 = vmatmul.mubr.bf16.gmra.mxu0 %v1030
      %v1630 = vpop.f32.mrf.mxu0
      %v1631 = vadd.f32 %v506, %v1630
      %v1632 = vpop.f32.mrf.mxu0
      %v1633 = vpop.f32.mrf.mxu0
      %v1634 = vadd.f32 %v506, %v1633
      %v1635 = vpop.f32.mrf.mxu0
      %1636 = vmatprep.mubr.bf16.mxu0 %v1036
      %1637 = vmatmul.mubr.bf16.gmra.mxu0 %v1035
      %v1638 = vpop.f32.mrf.mxu0
      %v1639 = vadd.f32 %v506, %v1638
      %v1640 = vpop.f32.mrf.mxu0
      %v1641 = vpop.f32.mrf.mxu0
      %v1642 = vadd.f32 %v506, %v1641
      %v1643 = vpop.f32.mrf.mxu0
      %1644 = vmatprep.mubr.bf16.mxu0 %v1041
      %1645 = vmatmul.mubr.bf16.gmra.mxu0 %v1040
      %v1646 = vpop.f32.mrf.mxu0
      %v1647 = vadd.f32 %v506, %v1646
      %v1648 = vpop.f32.mrf.mxu0
      %v1649 = vpop.f32.mrf.mxu0
      %v1650 = vadd.f32 %v506, %v1649
      %v1651 = vpop.f32.mrf.mxu0
      %1652 = vmatprep.mubr.bf16.mxu0 %v1046
      %1653 = vmatmul.mubr.bf16.gmra.mxu0 %v1045
      %v1654 = vpop.f32.mrf.mxu0
      %v1655 = vadd.f32 %v506, %v1654
      %v1656 = vpop.f32.mrf.mxu0
      %v1657 = vpop.f32.mrf.mxu0
      %v1658 = vadd.f32 %v506, %v1657
      %v1659 = vpop.f32.mrf.mxu0
      %1660 = vmatprep.mubr.bf16.mxu0 %v1051
      %1661 = vmatmul.mubr.bf16.gmra.mxu0 %v1050
      %v1662 = vpop.f32.mrf.mxu0
      %v1663 = vadd.f32 %v506, %v1662
      %v1664 = vpop.f32.mrf.mxu0
      %v1665 = vpop.f32.mrf.mxu0
      %v1666 = vadd.f32 %v506, %v1665
      %v1667 = vpop.f32.mrf.mxu0
      %1668 = vmatprep.mubr.bf16.mxu0 %v1056
      %1669 = vmatmul.mubr.bf16.gmra.mxu0 %v1055
      %v1670 = vpop.f32.mrf.mxu0
      %v1671 = vadd.f32 %v506, %v1670
      %v1672 = vpop.f32.mrf.mxu0
      %v1673 = vpop.f32.mrf.mxu0
      %v1674 = vadd.f32 %v506, %v1673
      %v1675 = vpop.f32.mrf.mxu0
      %1676 = vmatprep.mubr.bf16.mxu0 %v1061
      %1677 = vmatmul.mubr.bf16.gmra.mxu0 %v1060
      %v1678 = vpop.f32.mrf.mxu0
      %v1679 = vadd.f32 %v506, %v1678
      %v1680 = vpop.f32.mrf.mxu0
      %v1681 = vpop.f32.mrf.mxu0
      %v1682 = vadd.f32 %v506, %v1681
      %v1683 = vpop.f32.mrf.mxu0
      %1684 = vmatprep.mubr.bf16.mxu0 %v1066
      %1685 = vmatmul.mubr.bf16.gmra.mxu0 %v1065
      %v1686 = vpop.f32.mrf.mxu0
      %v1687 = vadd.f32 %v506, %v1686
      %v1688 = vpop.f32.mrf.mxu0
      %v1689 = vpop.f32.mrf.mxu0
      %v1690 = vadd.f32 %v506, %v1689
      %v1691 = vpop.f32.mrf.mxu0
      %1692 = vmatprep.mubr.bf16.mxu0 %v1071
      %1693 = vmatmul.mubr.bf16.gmra.mxu0 %v1070
      %v1694 = vpop.f32.mrf.mxu0
      %v1695 = vadd.f32 %v506, %v1694
      %v1696 = vpop.f32.mrf.mxu0
      %v1697 = vpop.f32.mrf.mxu0
      %v1698 = vadd.f32 %v506, %v1697
      %v1699 = vpop.f32.mrf.mxu0
      %1700 = vmatprep.mubr.bf16.mxu0 %v1076
      %1701 = vmatmul.mubr.bf16.gmra.mxu0 %v1075
      %v1702 = vpop.f32.mrf.mxu0
      %v1703 = vadd.f32 %v506, %v1702
      %v1704 = vpop.f32.mrf.mxu0
      %v1705 = vpop.f32.mrf.mxu0
      %v1706 = vadd.f32 %v506, %v1705
      %v1707 = vpop.f32.mrf.mxu0
      %1708 = vmatprep.mubr.bf16.mxu0 %v1081
      %1709 = vmatmul.mubr.bf16.gmra.mxu0 %v1080
      %v1710 = vpop.f32.mrf.mxu0
      %v1711 = vadd.f32 %v506, %v1710
      %v1712 = vpop.f32.mrf.mxu0
      %v1713 = vpop.f32.mrf.mxu0
      %v1714 = vadd.f32 %v506, %v1713
      %v1715 = vpop.f32.mrf.mxu0
      %1716 = vmatprep.mubr.bf16.mxu0 %v1086
      %1717 = vmatmul.mubr.bf16.gmra.mxu0 %v1085
      %v1718 = vpop.f32.mrf.mxu0
      %v1719 = vadd.f32 %v506, %v1718
      %v1720 = vpop.f32.mrf.mxu0
      %v1721 = vpop.f32.mrf.mxu0
      %v1722 = vadd.f32 %v506, %v1721
      %v1723 = vpop.f32.mrf.mxu0
      %1724 = vmatprep.mubr.bf16.mxu0 %v1091
      %1725 = vmatmul.mubr.bf16.gmra.mxu0 %v1090
      %v1726 = vpop.f32.mrf.mxu0
      %v1727 = vadd.f32 %v506, %v1726
      %v1728 = vpop.f32.mrf.mxu0
      %v1729 = vpop.f32.mrf.mxu0
      %v1730 = vadd.f32 %v506, %v1729
      %v1731 = vpop.f32.mrf.mxu0
      %1732 = vmatprep.mubr.bf16.mxu0 %v1096
      %1733 = vmatmul.mubr.bf16.gmra.mxu0 %v1095
      %v1734 = vpop.f32.mrf.mxu0
      %v1735 = vadd.f32 %v506, %v1734
      %v1736 = vpop.f32.mrf.mxu0
      %v1737 = vpop.f32.mrf.mxu0
      %v1738 = vadd.f32 %v506, %v1737
      %v1739 = vpop.f32.mrf.mxu0
      %1740 = vmatprep.mubr.bf16.mxu0 %v1101
      %1741 = vmatmul.mubr.bf16.gmra.mxu0 %v1100
      %v1742 = vpop.f32.mrf.mxu0
      %v1743 = vadd.f32 %v506, %v1742
      %v1744 = vpop.f32.mrf.mxu0
      %v1745 = vpop.f32.mrf.mxu0
      %v1746 = vadd.f32 %v506, %v1745
      %v1747 = vpop.f32.mrf.mxu0
      %1748 = vmatprep.mubr.bf16.mxu0 %v1106
      %1749 = vmatmul.mubr.bf16.gmra.mxu0 %v1105
      %v1750 = vpop.f32.mrf.mxu0
      %v1751 = vadd.f32 %v506, %v1750
      %v1752 = vpop.f32.mrf.mxu0
      %v1753 = vpop.f32.mrf.mxu0
      %v1754 = vadd.f32 %v506, %v1753
      %v1755 = vpop.f32.mrf.mxu0
      %1756 = vmatprep.mubr.bf16.mxu0 %v1111
      %1757 = vmatmul.mubr.bf16.gmra.mxu0 %v1110
      %v1758 = vpop.f32.mrf.mxu0
      %v1759 = vadd.f32 %v506, %v1758
      %v1760 = vpop.f32.mrf.mxu0
      %v1761 = vpop.f32.mrf.mxu0
      %v1762 = vadd.f32 %v506, %v1761
      %v1763 = vpop.f32.mrf.mxu0
      %1764 = vmatprep.mubr.bf16.mxu0 %v1116
      %1765 = vmatmul.mubr.bf16.gmra.mxu0 %v1115
      %v1766 = vpop.f32.mrf.mxu0
      %v1767 = vadd.f32 %v506, %v1766
      %v1768 = vpop.f32.mrf.mxu0
      %v1769 = vpop.f32.mrf.mxu0
      %v1770 = vadd.f32 %v506, %v1769
      %v1771 = vpop.f32.mrf.mxu0
      %1772 = vmatprep.mubr.bf16.mxu0 %v1121
      %1773 = vmatmul.mubr.bf16.gmra.mxu0 %v1120
      %v1774 = vpop.f32.mrf.mxu0
      %v1775 = vadd.f32 %v506, %v1774
      %v1776 = vpop.f32.mrf.mxu0
      %v1777 = vpop.f32.mrf.mxu0
      %v1778 = vadd.f32 %v506, %v1777
      %v1779 = vpop.f32.mrf.mxu0
      %1780 = vmatprep.mubr.bf16.mxu0 %v1126
      %1781 = vmatmul.mubr.bf16.gmra.mxu0 %v1125
      %v1782 = vpop.f32.mrf.mxu0
      %v1783 = vadd.f32 %v506, %v1782
      %v1784 = vpop.f32.mrf.mxu0
      %v1785 = vpop.f32.mrf.mxu0
      %v1786 = vadd.f32 %v506, %v1785
      %v1787 = vpop.f32.mrf.mxu0
      %1788 = vmatprep.mubr.bf16.mxu0 %v1131
      %1789 = vmatmul.mubr.bf16.gmra.mxu0 %v1130
      %v1790 = vpop.f32.mrf.mxu0
      %v1791 = vadd.f32 %v506, %v1790
      %v1792 = vpop.f32.mrf.mxu0
      %v1793 = vpop.f32.mrf.mxu0
      %v1794 = vadd.f32 %v506, %v1793
      %v1795 = vpop.f32.mrf.mxu0
      %1796 = vmatprep.mubr.bf16.mxu0 %v1136
      %1797 = vmatmul.mubr.bf16.gmra.mxu0 %v1135
      %v1798 = vpop.f32.mrf.mxu0
      %v1799 = vadd.f32 %v506, %v1798
      %v1800 = vpop.f32.mrf.mxu0
      %v1801 = vpop.f32.mrf.mxu0
      %v1802 = vadd.f32 %v506, %v1801
      %v1803 = vpop.f32.mrf.mxu0
      %1804 = vmatprep.mubr.bf16.mxu0 %v1141
      %1805 = vmatmul.mubr.bf16.gmra.mxu0 %v1140
      %v1806 = vpop.f32.mrf.mxu0
      %v1807 = vadd.f32 %v506, %v1806
      %v1808 = vpop.f32.mrf.mxu0
      %v1809 = vpop.f32.mrf.mxu0
      %v1810 = vadd.f32 %v506, %v1809
      %v1811 = vpop.f32.mrf.mxu0
      %1812 = vmatprep.mubr.bf16.mxu0 %v1146
      %1813 = vmatmul.mubr.bf16.gmra.mxu0 %v1145
      %v1814 = vpop.f32.mrf.mxu0
      %v1815 = vadd.f32 %v506, %v1814
      %v1816 = vpop.f32.mrf.mxu0
      %v1817 = vpop.f32.mrf.mxu0
      %v1818 = vadd.f32 %v506, %v1817
      %v1819 = vpop.f32.mrf.mxu0
      %1820 = vmatprep.mubr.bf16.mxu0 %v1151
      %1821 = vmatmul.mubr.bf16.gmra.mxu0 %v1150
      %v1822 = vpop.f32.mrf.mxu0
      %v1823 = vadd.f32 %v506, %v1822
      %v1824 = vpop.f32.mrf.mxu0
      %v1825 = vpop.f32.mrf.mxu0
      %v1826 = vadd.f32 %v506, %v1825
      %v1827 = vpop.f32.mrf.mxu0
      %1828 = vmatprep.mubr.bf16.mxu0 %v1156
      %1829 = vmatmul.mubr.bf16.gmra.mxu0 %v1155
      %v1830 = vpop.f32.mrf.mxu0
      %v1831 = vadd.f32 %v506, %v1830
      %v1832 = vpop.f32.mrf.mxu0
      %v1833 = vpop.f32.mrf.mxu0
      %v1834 = vadd.f32 %v506, %v1833
      %v1835 = vpop.f32.mrf.mxu0
      %1836 = vmatprep.mubr.bf16.mxu0 %v1161
      %1837 = vmatmul.mubr.bf16.gmra.mxu0 %v1160
      %v1838 = vpop.f32.mrf.mxu0
      %v1839 = vadd.f32 %v506, %v1838
      %v1840 = vpop.f32.mrf.mxu0
      %v1841 = vpop.f32.mrf.mxu0
      %v1842 = vadd.f32 %v506, %v1841
      %v1843 = vpop.f32.mrf.mxu0
      %1844 = vmatprep.mubr.bf16.mxu0 %v1166
      %1845 = vmatmul.mubr.bf16.gmra.mxu0 %v1165
      %v1846 = vpop.f32.mrf.mxu0
      %v1847 = vadd.f32 %v506, %v1846
      %v1848 = vpop.f32.mrf.mxu0
      %v1849 = vpop.f32.mrf.mxu0
      %v1850 = vadd.f32 %v506, %v1849
      %v1851 = vpop.f32.mrf.mxu0
      %1852 = vmatprep.mubr.bf16.mxu0 %v1171
      %1853 = vmatmul.mubr.bf16.gmra.mxu0 %v1170
      %v1854 = vpop.f32.mrf.mxu0
      %v1855 = vadd.f32 %v506, %v1854
      %v1856 = vpop.f32.mrf.mxu0
      %v1857 = vpop.f32.mrf.mxu0
      %v1858 = vadd.f32 %v506, %v1857
      %v1859 = vpop.f32.mrf.mxu0
      %1860 = vmatprep.mubr.bf16.mxu0 %v1176
      %1861 = vmatmul.mubr.bf16.gmra.mxu0 %v1175
      %v1862 = vpop.f32.mrf.mxu0
      %v1863 = vadd.f32 %v506, %v1862
      %v1864 = vpop.f32.mrf.mxu0
      %v1865 = vpop.f32.mrf.mxu0
      %v1866 = vadd.f32 %v506, %v1865
      %v1867 = vpop.f32.mrf.mxu0
      %1868 = vdwg.mxu0
      %1869 = vmatprep.subr.bf16.mxu0 0
      %1870 = vmatpush1.bf16.msra.mxu0 %v1523
      %1871 = vmatprep.subr.bf16.mxu0 0
      %1872 = vmatpush1.bf16.msra.mxu0 %v1522
      %1873 = vmatprep.subr.bf16.mxu0 0
      %1874 = vmatpush1.bf16.msra.mxu0 %v1521
      %1875 = vmatprep.subr.bf16.mxu0 0
      %1876 = vmatpush1.bf16.msra.mxu0 %v1520
      %1877 = vmatprep.subr.bf16.mxu0 0
      %1878 = vmatpush1.bf16.msra.mxu0 %v1519
      %1879 = vmatprep.subr.bf16.mxu0 0
      %1880 = vmatpush1.bf16.msra.mxu0 %v1518
      %1881 = vmatprep.subr.bf16.mxu0 0
      %1882 = vmatpush1.bf16.msra.mxu0 %v1517
      %1883 = vmatprep.subr.bf16.mxu0 0
      %1884 = vmatpush1.bf16.msra.mxu0 %v1516
      %1885 = vmatprep.subr.bf16.mxu0 0
      %1886 = vmatpush2.bf16.msra.mxu0 %v1531
      %1887 = vmatprep.subr.bf16.mxu0 0
      %1888 = vmatpush2.bf16.msra.mxu0 %v1530
      %1889 = vmatprep.subr.bf16.mxu0 0
      %1890 = vmatpush2.bf16.msra.mxu0 %v1529
      %1891 = vmatprep.subr.bf16.mxu0 0
      %1892 = vmatpush2.bf16.msra.mxu0 %v1528
      %1893 = vmatprep.subr.bf16.mxu0 0
      %1894 = vmatpush2.bf16.msra.mxu0 %v1527
      %1895 = vmatprep.subr.bf16.mxu0 0
      %1896 = vmatpush2.bf16.msra.mxu0 %v1526
      %1897 = vmatprep.subr.bf16.mxu0 0
      %1898 = vmatpush2.bf16.msra.mxu0 %v1525
      %1899 = vmatprep.subr.bf16.mxu0 0
      %1900 = vmatpush2.bf16.msra.mxu0 %v1524
      %1901 = vmatprep.mubr.bf16.mxu0 %v1023
      %1902 = vmatmul.mubr.bf16.gmra.mxu0 %v1022
      %v1903 = vpop.f32.mrf.mxu0
      %v1904 = vadd.f32 %v1615, %v1903
      %v1905 = vpop.f32.mrf.mxu0
      %v1906 = vpop.f32.mrf.mxu0
      %v1907 = vadd.f32 %v1618, %v1906
      %v1908 = vpop.f32.mrf.mxu0
      %1909 = vmatprep.mubr.bf16.mxu0 %v1028
      %1910 = vmatmul.mubr.bf16.gmra.mxu0 %v1027
      %v1911 = vpop.f32.mrf.mxu0
      %v1912 = vadd.f32 %v1623, %v1911
      %v1913 = vpop.f32.mrf.mxu0
      %v1914 = vpop.f32.mrf.mxu0
      %v1915 = vadd.f32 %v1626, %v1914
      %v1916 = vpop.f32.mrf.mxu0
      %1917 = vmatprep.mubr.bf16.mxu0 %v1033
      %1918 = vmatmul.mubr.bf16.gmra.mxu0 %v1032
      %v1919 = vpop.f32.mrf.mxu0
      %v1920 = vadd.f32 %v1631, %v1919
      %v1921 = vpop.f32.mrf.mxu0
      %v1922 = vpop.f32.mrf.mxu0
      %v1923 = vadd.f32 %v1634, %v1922
      %v1924 = vpop.f32.mrf.mxu0
      %1925 = vmatprep.mubr.bf16.mxu0 %v1038
      %1926 = vmatmul.mubr.bf16.gmra.mxu0 %v1037
      %v1927 = vpop.f32.mrf.mxu0
      %v1928 = vadd.f32 %v1639, %v1927
      %v1929 = vpop.f32.mrf.mxu0
      %v1930 = vpop.f32.mrf.mxu0
      %v1931 = vadd.f32 %v1642, %v1930
      %v1932 = vpop.f32.mrf.mxu0
      %1933 = vmatprep.mubr.bf16.mxu0 %v1043
      %1934 = vmatmul.mubr.bf16.gmra.mxu0 %v1042
      %v1935 = vpop.f32.mrf.mxu0
      %v1936 = vadd.f32 %v1647, %v1935
      %v1937 = vpop.f32.mrf.mxu0
      %v1938 = vpop.f32.mrf.mxu0
      %v1939 = vadd.f32 %v1650, %v1938
      %v1940 = vpop.f32.mrf.mxu0
      %1941 = vmatprep.mubr.bf16.mxu0 %v1048
      %1942 = vmatmul.mubr.bf16.gmra.mxu0 %v1047
      %v1943 = vpop.f32.mrf.mxu0
      %v1944 = vadd.f32 %v1655, %v1943
      %v1945 = vpop.f32.mrf.mxu0
      %v1946 = vpop.f32.mrf.mxu0
      %v1947 = vadd.f32 %v1658, %v1946
      %v1948 = vpop.f32.mrf.mxu0
      %1949 = vmatprep.mubr.bf16.mxu0 %v1053
      %1950 = vmatmul.mubr.bf16.gmra.mxu0 %v1052
      %v1951 = vpop.f32.mrf.mxu0
      %v1952 = vadd.f32 %v1663, %v1951
      %v1953 = vpop.f32.mrf.mxu0
      %v1954 = vpop.f32.mrf.mxu0
      %v1955 = vadd.f32 %v1666, %v1954
      %v1956 = vpop.f32.mrf.mxu0
      %1957 = vmatprep.mubr.bf16.mxu0 %v1058
      %1958 = vmatmul.mubr.bf16.gmra.mxu0 %v1057
      %v1959 = vpop.f32.mrf.mxu0
      %v1960 = vadd.f32 %v1671, %v1959
      %v1961 = vpop.f32.mrf.mxu0
      %v1962 = vpop.f32.mrf.mxu0
      %v1963 = vadd.f32 %v1674, %v1962
      %v1964 = vpop.f32.mrf.mxu0
      %1965 = vmatprep.mubr.bf16.mxu0 %v1063
      %1966 = vmatmul.mubr.bf16.gmra.mxu0 %v1062
      %v1967 = vpop.f32.mrf.mxu0
      %v1968 = vadd.f32 %v1679, %v1967
      %v1969 = vpop.f32.mrf.mxu0
      %v1970 = vpop.f32.mrf.mxu0
      %v1971 = vadd.f32 %v1682, %v1970
      %v1972 = vpop.f32.mrf.mxu0
      %1973 = vmatprep.mubr.bf16.mxu0 %v1068
      %1974 = vmatmul.mubr.bf16.gmra.mxu0 %v1067
      %v1975 = vpop.f32.mrf.mxu0
      %v1976 = vadd.f32 %v1687, %v1975
      %v1977 = vpop.f32.mrf.mxu0
      %v1978 = vpop.f32.mrf.mxu0
      %v1979 = vadd.f32 %v1690, %v1978
      %v1980 = vpop.f32.mrf.mxu0
      %1981 = vmatprep.mubr.bf16.mxu0 %v1073
      %1982 = vmatmul.mubr.bf16.gmra.mxu0 %v1072
      %v1983 = vpop.f32.mrf.mxu0
      %v1984 = vadd.f32 %v1695, %v1983
      %v1985 = vpop.f32.mrf.mxu0
      %v1986 = vpop.f32.mrf.mxu0
      %v1987 = vadd.f32 %v1698, %v1986
      %v1988 = vpop.f32.mrf.mxu0
      %1989 = vmatprep.mubr.bf16.mxu0 %v1078
      %1990 = vmatmul.mubr.bf16.gmra.mxu0 %v1077
      %v1991 = vpop.f32.mrf.mxu0
      %v1992 = vadd.f32 %v1703, %v1991
      %v1993 = vpop.f32.mrf.mxu0
      %v1994 = vpop.f32.mrf.mxu0
      %v1995 = vadd.f32 %v1706, %v1994
      %v1996 = vpop.f32.mrf.mxu0
      %1997 = vmatprep.mubr.bf16.mxu0 %v1083
      %1998 = vmatmul.mubr.bf16.gmra.mxu0 %v1082
      %v1999 = vpop.f32.mrf.mxu0
      %v2000 = vadd.f32 %v1711, %v1999
      %v2001 = vpop.f32.mrf.mxu0
      %v2002 = vpop.f32.mrf.mxu0
      %v2003 = vadd.f32 %v1714, %v2002
      %v2004 = vpop.f32.mrf.mxu0
      %2005 = vmatprep.mubr.bf16.mxu0 %v1088
      %2006 = vmatmul.mubr.bf16.gmra.mxu0 %v1087
      %v2007 = vpop.f32.mrf.mxu0
      %v2008 = vadd.f32 %v1719, %v2007
      %v2009 = vpop.f32.mrf.mxu0
      %v2010 = vpop.f32.mrf.mxu0
      %v2011 = vadd.f32 %v1722, %v2010
      %v2012 = vpop.f32.mrf.mxu0
      %2013 = vmatprep.mubr.bf16.mxu0 %v1093
      %2014 = vmatmul.mubr.bf16.gmra.mxu0 %v1092
      %v2015 = vpop.f32.mrf.mxu0
      %v2016 = vadd.f32 %v1727, %v2015
      %v2017 = vpop.f32.mrf.mxu0
      %v2018 = vpop.f32.mrf.mxu0
      %v2019 = vadd.f32 %v1730, %v2018
      %v2020 = vpop.f32.mrf.mxu0
      %2021 = vmatprep.mubr.bf16.mxu0 %v1098
      %2022 = vmatmul.mubr.bf16.gmra.mxu0 %v1097
      %v2023 = vpop.f32.mrf.mxu0
      %v2024 = vadd.f32 %v1735, %v2023
      %v2025 = vpop.f32.mrf.mxu0
      %v2026 = vpop.f32.mrf.mxu0
      %v2027 = vadd.f32 %v1738, %v2026
      %v2028 = vpop.f32.mrf.mxu0
      %2029 = vmatprep.mubr.bf16.mxu0 %v1103
      %2030 = vmatmul.mubr.bf16.gmra.mxu0 %v1102
      %v2031 = vpop.f32.mrf.mxu0
      %v2032 = vadd.f32 %v1743, %v2031
      %v2033 = vpop.f32.mrf.mxu0
      %v2034 = vpop.f32.mrf.mxu0
      %v2035 = vadd.f32 %v1746, %v2034
      %v2036 = vpop.f32.mrf.mxu0
      %2037 = vmatprep.mubr.bf16.mxu0 %v1108
      %2038 = vmatmul.mubr.bf16.gmra.mxu0 %v1107
      %v2039 = vpop.f32.mrf.mxu0
      %v2040 = vadd.f32 %v1751, %v2039
      %v2041 = vpop.f32.mrf.mxu0
      %v2042 = vpop.f32.mrf.mxu0
      %v2043 = vadd.f32 %v1754, %v2042
      %v2044 = vpop.f32.mrf.mxu0
      %2045 = vmatprep.mubr.bf16.mxu0 %v1113
      %2046 = vmatmul.mubr.bf16.gmra.mxu0 %v1112
      %v2047 = vpop.f32.mrf.mxu0
      %v2048 = vadd.f32 %v1759, %v2047
      %v2049 = vpop.f32.mrf.mxu0
      %v2050 = vpop.f32.mrf.mxu0
      %v2051 = vadd.f32 %v1762, %v2050
      %v2052 = vpop.f32.mrf.mxu0
      %2053 = vmatprep.mubr.bf16.mxu0 %v1118
      %2054 = vmatmul.mubr.bf16.gmra.mxu0 %v1117
      %v2055 = vpop.f32.mrf.mxu0
      %v2056 = vadd.f32 %v1767, %v2055
      %v2057 = vpop.f32.mrf.mxu0
      %v2058 = vpop.f32.mrf.mxu0
      %v2059 = vadd.f32 %v1770, %v2058
      %v2060 = vpop.f32.mrf.mxu0
      %2061 = vmatprep.mubr.bf16.mxu0 %v1123
      %2062 = vmatmul.mubr.bf16.gmra.mxu0 %v1122
      %v2063 = vpop.f32.mrf.mxu0
      %v2064 = vadd.f32 %v1775, %v2063
      %v2065 = vpop.f32.mrf.mxu0
      %v2066 = vpop.f32.mrf.mxu0
      %v2067 = vadd.f32 %v1778, %v2066
      %v2068 = vpop.f32.mrf.mxu0
      %2069 = vmatprep.mubr.bf16.mxu0 %v1128
      %2070 = vmatmul.mubr.bf16.gmra.mxu0 %v1127
      %v2071 = vpop.f32.mrf.mxu0
      %v2072 = vadd.f32 %v1783, %v2071
      %v2073 = vpop.f32.mrf.mxu0
      %v2074 = vpop.f32.mrf.mxu0
      %v2075 = vadd.f32 %v1786, %v2074
      %v2076 = vpop.f32.mrf.mxu0
      %2077 = vmatprep.mubr.bf16.mxu0 %v1133
      %2078 = vmatmul.mubr.bf16.gmra.mxu0 %v1132
      %v2079 = vpop.f32.mrf.mxu0
      %v2080 = vadd.f32 %v1791, %v2079
      %v2081 = vpop.f32.mrf.mxu0
      %v2082 = vpop.f32.mrf.mxu0
      %v2083 = vadd.f32 %v1794, %v2082
      %v2084 = vpop.f32.mrf.mxu0
      %2085 = vmatprep.mubr.bf16.mxu0 %v1138
      %2086 = vmatmul.mubr.bf16.gmra.mxu0 %v1137
      %v2087 = vpop.f32.mrf.mxu0
      %v2088 = vadd.f32 %v1799, %v2087
      %v2089 = vpop.f32.mrf.mxu0
      %v2090 = vpop.f32.mrf.mxu0
      %v2091 = vadd.f32 %v1802, %v2090
      %v2092 = vpop.f32.mrf.mxu0
      %2093 = vmatprep.mubr.bf16.mxu0 %v1143
      %2094 = vmatmul.mubr.bf16.gmra.mxu0 %v1142
      %v2095 = vpop.f32.mrf.mxu0
      %v2096 = vadd.f32 %v1807, %v2095
      %v2097 = vpop.f32.mrf.mxu0
      %v2098 = vpop.f32.mrf.mxu0
      %v2099 = vadd.f32 %v1810, %v2098
      %v2100 = vpop.f32.mrf.mxu0
      %2101 = vmatprep.mubr.bf16.mxu0 %v1148
      %2102 = vmatmul.mubr.bf16.gmra.mxu0 %v1147
      %v2103 = vpop.f32.mrf.mxu0
      %v2104 = vadd.f32 %v1815, %v2103
      %v2105 = vpop.f32.mrf.mxu0
      %v2106 = vpop.f32.mrf.mxu0
      %v2107 = vadd.f32 %v1818, %v2106
      %v2108 = vpop.f32.mrf.mxu0
      %2109 = vmatprep.mubr.bf16.mxu0 %v1153
      %2110 = vmatmul.mubr.bf16.gmra.mxu0 %v1152
      %v2111 = vpop.f32.mrf.mxu0
      %v2112 = vadd.f32 %v1823, %v2111
      %v2113 = vpop.f32.mrf.mxu0
      %v2114 = vpop.f32.mrf.mxu0
      %v2115 = vadd.f32 %v1826, %v2114
      %v2116 = vpop.f32.mrf.mxu0
      %2117 = vmatprep.mubr.bf16.mxu0 %v1158
      %2118 = vmatmul.mubr.bf16.gmra.mxu0 %v1157
      %v2119 = vpop.f32.mrf.mxu0
      %v2120 = vadd.f32 %v1831, %v2119
      %v2121 = vpop.f32.mrf.mxu0
      %v2122 = vpop.f32.mrf.mxu0
      %v2123 = vadd.f32 %v1834, %v2122
      %v2124 = vpop.f32.mrf.mxu0
      %2125 = vmatprep.mubr.bf16.mxu0 %v1163
      %2126 = vmatmul.mubr.bf16.gmra.mxu0 %v1162
      %v2127 = vpop.f32.mrf.mxu0
      %v2128 = vadd.f32 %v1839, %v2127
      %v2129 = vpop.f32.mrf.mxu0
      %v2130 = vpop.f32.mrf.mxu0
      %v2131 = vadd.f32 %v1842, %v2130
      %v2132 = vpop.f32.mrf.mxu0
      %2133 = vmatprep.mubr.bf16.mxu0 %v1168
      %2134 = vmatmul.mubr.bf16.gmra.mxu0 %v1167
      %v2135 = vpop.f32.mrf.mxu0
      %v2136 = vadd.f32 %v1847, %v2135
      %v2137 = vpop.f32.mrf.mxu0
      %v2138 = vpop.f32.mrf.mxu0
      %v2139 = vadd.f32 %v1850, %v2138
      %v2140 = vpop.f32.mrf.mxu0
      %2141 = vmatprep.mubr.bf16.mxu0 %v1173
      %2142 = vmatmul.mubr.bf16.gmra.mxu0 %v1172
      %v2143 = vpop.f32.mrf.mxu0
      %v2144 = vadd.f32 %v1855, %v2143
      %v2145 = vpop.f32.mrf.mxu0
      %v2146 = vpop.f32.mrf.mxu0
      %v2147 = vadd.f32 %v1858, %v2146
      %v2148 = vpop.f32.mrf.mxu0
      %2149 = vmatprep.mubr.bf16.mxu0 %v1178
      %2150 = vmatmul.mubr.bf16.gmra.mxu0 %v1177
      %v2151 = vpop.f32.mrf.mxu0
      %v2152 = vadd.f32 %v1863, %v2151
      %v2153 = vpop.f32.mrf.mxu0
      %v2154 = vpop.f32.mrf.mxu0
      %v2155 = vadd.f32 %v1866, %v2154
      %v2156 = vpop.f32.mrf.mxu0
      %2157 = vdwg.mxu0
      %2158 = vmatprep.subr.bf16.mxu0 0
      %2159 = vmatpush1.bf16.msra.mxu0 %v1539
      %2160 = vmatprep.subr.bf16.mxu0 0
      %2161 = vmatpush1.bf16.msra.mxu0 %v1538
      %2162 = vmatprep.subr.bf16.mxu0 0
      %2163 = vmatpush1.bf16.msra.mxu0 %v1537
      %2164 = vmatprep.subr.bf16.mxu0 0
      %2165 = vmatpush1.bf16.msra.mxu0 %v1536
      %2166 = vmatprep.subr.bf16.mxu0 0
      %2167 = vmatpush1.bf16.msra.mxu0 %v1535
      %2168 = vmatprep.subr.bf16.mxu0 0
      %2169 = vmatpush1.bf16.msra.mxu0 %v1534
      %2170 = vmatprep.subr.bf16.mxu0 0
      %2171 = vmatpush1.bf16.msra.mxu0 %v1533
      %2172 = vmatprep.subr.bf16.mxu0 0
      %2173 = vmatpush1.bf16.msra.mxu0 %v1532
      %2174 = vmatprep.subr.bf16.mxu0 0
      %2175 = vmatpush2.bf16.msra.mxu0 0
      %2176 = vmatprep.subr.bf16.mxu0 0
      %2177 = vmatpush2.bf16.msra.mxu0 0
      %2178 = vmatprep.subr.bf16.mxu0 0
      %2179 = vmatpush2.bf16.msra.mxu0 0
      %2180 = vmatprep.subr.bf16.mxu0 0
      %2181 = vmatpush2.bf16.msra.mxu0 0
      %2182 = vmatprep.subr.bf16.mxu0 0
      %2183 = vmatpush2.bf16.msra.mxu0 0
      %2184 = vmatprep.subr.bf16.mxu0 0
      %2185 = vmatpush2.bf16.msra.mxu0 0
      %2186 = vmatprep.subr.bf16.mxu0 0
      %2187 = vmatpush2.bf16.msra.mxu0 0
      %2188 = vmatprep.subr.bf16.mxu0 0
      %2189 = vmatpush2.bf16.msra.mxu0 0
      %2190 = vmatprep.mubr.bf16.mxu0 0
      %2191 = vmatmul.mubr.bf16.gmra.mxu0 %v1024
      %v2192 = vpop.f32.mrf.mxu0
      %v2193 = vadd.f32 %v1904, %v2192
      %v2194 = vpop.f32.mrf.mxu0
      %v2195 = vpop.f32.mrf.mxu0
      %v2196 = vadd.f32 %v1907, %v2195
      %v2197 = vpop.f32.mrf.mxu0
      %2198 = vmatprep.mubr.bf16.mxu0 0
      %2199 = vmatmul.mubr.bf16.gmra.mxu0 %v1029
      %v2200 = vpop.f32.mrf.mxu0
      %v2201 = vadd.f32 %v1912, %v2200
      %v2202 = vpop.f32.mrf.mxu0
      %v2203 = vpop.f32.mrf.mxu0
      %v2204 = vadd.f32 %v1915, %v2203
      %v2205 = vpop.f32.mrf.mxu0
      %2206 = vmatprep.mubr.bf16.mxu0 0
      %2207 = vmatmul.mubr.bf16.gmra.mxu0 %v1034
      %v2208 = vpop.f32.mrf.mxu0
      %v2209 = vadd.f32 %v1920, %v2208
      %v2210 = vpop.f32.mrf.mxu0
      %v2211 = vpop.f32.mrf.mxu0
      %v2212 = vadd.f32 %v1923, %v2211
      %v2213 = vpop.f32.mrf.mxu0
      %2214 = vmatprep.mubr.bf16.mxu0 0
      %2215 = vmatmul.mubr.bf16.gmra.mxu0 %v1039
      %v2216 = vpop.f32.mrf.mxu0
      %v2217 = vadd.f32 %v1928, %v2216
      %v2218 = vpop.f32.mrf.mxu0
      %v2219 = vpop.f32.mrf.mxu0
      %v2220 = vadd.f32 %v1931, %v2219
      %v2221 = vpop.f32.mrf.mxu0
      %2222 = vmatprep.mubr.bf16.mxu0 0
      %2223 = vmatmul.mubr.bf16.gmra.mxu0 %v1044
      %v2224 = vpop.f32.mrf.mxu0
      %v2225 = vadd.f32 %v1936, %v2224
      %v2226 = vpop.f32.mrf.mxu0
      %v2227 = vpop.f32.mrf.mxu0
      %v2228 = vadd.f32 %v1939, %v2227
      %v2229 = vpop.f32.mrf.mxu0
      %2230 = vmatprep.mubr.bf16.mxu0 0
      %2231 = vmatmul.mubr.bf16.gmra.mxu0 %v1049
      %v2232 = vpop.f32.mrf.mxu0
      %v2233 = vadd.f32 %v1944, %v2232
      %v2234 = vpop.f32.mrf.mxu0
      %v2235 = vpop.f32.mrf.mxu0
      %v2236 = vadd.f32 %v1947, %v2235
      %v2237 = vpop.f32.mrf.mxu0
      %2238 = vmatprep.mubr.bf16.mxu0 0
      %2239 = vmatmul.mubr.bf16.gmra.mxu0 %v1054
      %v2240 = vpop.f32.mrf.mxu0
      %v2241 = vadd.f32 %v1952, %v2240
      %v2242 = vpop.f32.mrf.mxu0
      %v2243 = vpop.f32.mrf.mxu0
      %v2244 = vadd.f32 %v1955, %v2243
      %v2245 = vpop.f32.mrf.mxu0
      %2246 = vmatprep.mubr.bf16.mxu0 0
      %2247 = vmatmul.mubr.bf16.gmra.mxu0 %v1059
      %v2248 = vpop.f32.mrf.mxu0
      %v2249 = vadd.f32 %v1960, %v2248
      %v2250 = vpop.f32.mrf.mxu0
      %v2251 = vpop.f32.mrf.mxu0
      %v2252 = vadd.f32 %v1963, %v2251
      %v2253 = vpop.f32.mrf.mxu0
      %2254 = vmatprep.mubr.bf16.mxu0 0
      %2255 = vmatmul.mubr.bf16.gmra.mxu0 %v1064
      %v2256 = vpop.f32.mrf.mxu0
      %v2257 = vadd.f32 %v1968, %v2256
      %v2258 = vpop.f32.mrf.mxu0
      %v2259 = vpop.f32.mrf.mxu0
      %v2260 = vadd.f32 %v1971, %v2259
      %v2261 = vpop.f32.mrf.mxu0
      %2262 = vmatprep.mubr.bf16.mxu0 0
      %2263 = vmatmul.mubr.bf16.gmra.mxu0 %v1069
      %v2264 = vpop.f32.mrf.mxu0
      %v2265 = vadd.f32 %v1976, %v2264
      %v2266 = vpop.f32.mrf.mxu0
      %v2267 = vpop.f32.mrf.mxu0
      %v2268 = vadd.f32 %v1979, %v2267
      %v2269 = vpop.f32.mrf.mxu0
      %2270 = vmatprep.mubr.bf16.mxu0 0
      %2271 = vmatmul.mubr.bf16.gmra.mxu0 %v1074
      %v2272 = vpop.f32.mrf.mxu0
      %v2273 = vadd.f32 %v1984, %v2272
      %v2274 = vpop.f32.mrf.mxu0
      %v2275 = vpop.f32.mrf.mxu0
      %v2276 = vadd.f32 %v1987, %v2275
      %v2277 = vpop.f32.mrf.mxu0
      %2278 = vmatprep.mubr.bf16.mxu0 0
      %2279 = vmatmul.mubr.bf16.gmra.mxu0 %v1079
      %v2280 = vpop.f32.mrf.mxu0
      %v2281 = vadd.f32 %v1992, %v2280
      %v2282 = vpop.f32.mrf.mxu0
      %v2283 = vpop.f32.mrf.mxu0
      %v2284 = vadd.f32 %v1995, %v2283
      %v2285 = vpop.f32.mrf.mxu0
      %2286 = vmatprep.mubr.bf16.mxu0 0
      %2287 = vmatmul.mubr.bf16.gmra.mxu0 %v1084
      %v2288 = vpop.f32.mrf.mxu0
      %v2289 = vadd.f32 %v2000, %v2288
      %v2290 = vpop.f32.mrf.mxu0
      %v2291 = vpop.f32.mrf.mxu0
      %v2292 = vadd.f32 %v2003, %v2291
      %v2293 = vpop.f32.mrf.mxu0
      %2294 = vmatprep.mubr.bf16.mxu0 0
      %2295 = vmatmul.mubr.bf16.gmra.mxu0 %v1089
      %v2296 = vpop.f32.mrf.mxu0
      %v2297 = vadd.f32 %v2008, %v2296
      %v2298 = vpop.f32.mrf.mxu0
      %v2299 = vpop.f32.mrf.mxu0
      %v2300 = vadd.f32 %v2011, %v2299
      %v2301 = vpop.f32.mrf.mxu0
      %2302 = vmatprep.mubr.bf16.mxu0 0
      %2303 = vmatmul.mubr.bf16.gmra.mxu0 %v1094
      %v2304 = vpop.f32.mrf.mxu0
      %v2305 = vadd.f32 %v2016, %v2304
      %v2306 = vpop.f32.mrf.mxu0
      %v2307 = vpop.f32.mrf.mxu0
      %v2308 = vadd.f32 %v2019, %v2307
      %v2309 = vpop.f32.mrf.mxu0
      %2310 = vmatprep.mubr.bf16.mxu0 0
      %2311 = vmatmul.mubr.bf16.gmra.mxu0 %v1099
      %v2312 = vpop.f32.mrf.mxu0
      %v2313 = vadd.f32 %v2024, %v2312
      %v2314 = vpop.f32.mrf.mxu0
      %v2315 = vpop.f32.mrf.mxu0
      %v2316 = vadd.f32 %v2027, %v2315
      %v2317 = vpop.f32.mrf.mxu0
      %2318 = vmatprep.mubr.bf16.mxu0 0
      %2319 = vmatmul.mubr.bf16.gmra.mxu0 %v1104
      %v2320 = vpop.f32.mrf.mxu0
      %v2321 = vadd.f32 %v2032, %v2320
      %v2322 = vpop.f32.mrf.mxu0
      %v2323 = vpop.f32.mrf.mxu0
      %v2324 = vadd.f32 %v2035, %v2323
      %v2325 = vpop.f32.mrf.mxu0
      %2326 = vmatprep.mubr.bf16.mxu0 0
      %2327 = vmatmul.mubr.bf16.gmra.mxu0 %v1109
      %v2328 = vpop.f32.mrf.mxu0
      %v2329 = vadd.f32 %v2040, %v2328
      %v2330 = vpop.f32.mrf.mxu0
      %v2331 = vpop.f32.mrf.mxu0
      %v2332 = vadd.f32 %v2043, %v2331
      %v2333 = vpop.f32.mrf.mxu0
      %2334 = vmatprep.mubr.bf16.mxu0 0
      %2335 = vmatmul.mubr.bf16.gmra.mxu0 %v1114
      %v2336 = vpop.f32.mrf.mxu0
      %v2337 = vadd.f32 %v2048, %v2336
      %v2338 = vpop.f32.mrf.mxu0
      %v2339 = vpop.f32.mrf.mxu0
      %v2340 = vadd.f32 %v2051, %v2339
      %v2341 = vpop.f32.mrf.mxu0
      %2342 = vmatprep.mubr.bf16.mxu0 0
      %2343 = vmatmul.mubr.bf16.gmra.mxu0 %v1119
      %v2344 = vpop.f32.mrf.mxu0
      %v2345 = vadd.f32 %v2056, %v2344
      %v2346 = vpop.f32.mrf.mxu0
      %v2347 = vpop.f32.mrf.mxu0
      %v2348 = vadd.f32 %v2059, %v2347
      %v2349 = vpop.f32.mrf.mxu0
      %2350 = vmatprep.mubr.bf16.mxu0 0
      %2351 = vmatmul.mubr.bf16.gmra.mxu0 %v1124
      %v2352 = vpop.f32.mrf.mxu0
      %v2353 = vadd.f32 %v2064, %v2352
      %v2354 = vpop.f32.mrf.mxu0
      %v2355 = vpop.f32.mrf.mxu0
      %v2356 = vadd.f32 %v2067, %v2355
      %v2357 = vpop.f32.mrf.mxu0
      %2358 = vmatprep.mubr.bf16.mxu0 0
      %2359 = vmatmul.mubr.bf16.gmra.mxu0 %v1129
      %v2360 = vpop.f32.mrf.mxu0
      %v2361 = vadd.f32 %v2072, %v2360
      %v2362 = vpop.f32.mrf.mxu0
      %v2363 = vpop.f32.mrf.mxu0
      %v2364 = vadd.f32 %v2075, %v2363
      %v2365 = vpop.f32.mrf.mxu0
      %2366 = vmatprep.mubr.bf16.mxu0 0
      %2367 = vmatmul.mubr.bf16.gmra.mxu0 %v1134
      %v2368 = vpop.f32.mrf.mxu0
      %v2369 = vadd.f32 %v2080, %v2368
      %v2370 = vpop.f32.mrf.mxu0
      %v2371 = vpop.f32.mrf.mxu0
      %v2372 = vadd.f32 %v2083, %v2371
      %v2373 = vpop.f32.mrf.mxu0
      %2374 = vmatprep.mubr.bf16.mxu0 0
      %2375 = vmatmul.mubr.bf16.gmra.mxu0 %v1139
      %v2376 = vpop.f32.mrf.mxu0
      %v2377 = vadd.f32 %v2088, %v2376
      %v2378 = vpop.f32.mrf.mxu0
      %v2379 = vpop.f32.mrf.mxu0
      %v2380 = vadd.f32 %v2091, %v2379
      %v2381 = vpop.f32.mrf.mxu0
      %2382 = vmatprep.mubr.bf16.mxu0 0
      %2383 = vmatmul.mubr.bf16.gmra.mxu0 %v1144
      %v2384 = vpop.f32.mrf.mxu0
      %v2385 = vadd.f32 %v2096, %v2384
      %v2386 = vpop.f32.mrf.mxu0
      %v2387 = vpop.f32.mrf.mxu0
      %v2388 = vadd.f32 %v2099, %v2387
      %v2389 = vpop.f32.mrf.mxu0
      %2390 = vmatprep.mubr.bf16.mxu0 0
      %2391 = vmatmul.mubr.bf16.gmra.mxu0 %v1149
      %v2392 = vpop.f32.mrf.mxu0
      %v2393 = vadd.f32 %v2104, %v2392
      %v2394 = vpop.f32.mrf.mxu0
      %v2395 = vpop.f32.mrf.mxu0
      %v2396 = vadd.f32 %v2107, %v2395
      %v2397 = vpop.f32.mrf.mxu0
      %2398 = vmatprep.mubr.bf16.mxu0 0
      %2399 = vmatmul.mubr.bf16.gmra.mxu0 %v1154
      %v2400 = vpop.f32.mrf.mxu0
      %v2401 = vadd.f32 %v2112, %v2400
      %v2402 = vpop.f32.mrf.mxu0
      %v2403 = vpop.f32.mrf.mxu0
      %v2404 = vadd.f32 %v2115, %v2403
      %v2405 = vpop.f32.mrf.mxu0
      %2406 = vmatprep.mubr.bf16.mxu0 0
      %2407 = vmatmul.mubr.bf16.gmra.mxu0 %v1159
      %v2408 = vpop.f32.mrf.mxu0
      %v2409 = vadd.f32 %v2120, %v2408
      %v2410 = vpop.f32.mrf.mxu0
      %v2411 = vpop.f32.mrf.mxu0
      %v2412 = vadd.f32 %v2123, %v2411
      %v2413 = vpop.f32.mrf.mxu0
      %2414 = vmatprep.mubr.bf16.mxu0 0
      %2415 = vmatmul.mubr.bf16.gmra.mxu0 %v1164
      %v2416 = vpop.f32.mrf.mxu0
      %v2417 = vadd.f32 %v2128, %v2416
      %v2418 = vpop.f32.mrf.mxu0
      %v2419 = vpop.f32.mrf.mxu0
      %v2420 = vadd.f32 %v2131, %v2419
      %v2421 = vpop.f32.mrf.mxu0
      %2422 = vmatprep.mubr.bf16.mxu0 0
      %2423 = vmatmul.mubr.bf16.gmra.mxu0 %v1169
      %v2424 = vpop.f32.mrf.mxu0
      %v2425 = vadd.f32 %v2136, %v2424
      %v2426 = vpop.f32.mrf.mxu0
      %v2427 = vpop.f32.mrf.mxu0
      %v2428 = vadd.f32 %v2139, %v2427
      %v2429 = vpop.f32.mrf.mxu0
      %2430 = vmatprep.mubr.bf16.mxu0 0
      %2431 = vmatmul.mubr.bf16.gmra.mxu0 %v1174
      %v2432 = vpop.f32.mrf.mxu0
      %v2433 = vadd.f32 %v2144, %v2432
      %v2434 = vpop.f32.mrf.mxu0
      %v2435 = vpop.f32.mrf.mxu0
      %v2436 = vadd.f32 %v2147, %v2435
      %v2437 = vpop.f32.mrf.mxu0
      %2438 = vmatprep.mubr.bf16.mxu0 0
      %2439 = vmatmul.mubr.bf16.gmra.mxu0 %v1179
      %v2440 = vpop.f32.mrf.mxu0
      %v2441 = vadd.f32 %v2152, %v2440
      %v2442 = vpop.f32.mrf.mxu0
      %v2443 = vpop.f32.mrf.mxu0
      %v2444 = vadd.f32 %v2155, %v2443
      %v2445 = vpop.f32.mrf.mxu0
      %2446 = vdwg.mxu0
      %v2447 = vmax.f32 %v2193, 0.0
      %v2448 = vmax.f32 %v2196, 0.0
      %v2449 = vmax.f32 %v2201, 0.0
      %v2450 = vmax.f32 %v2204, 0.0
      %v2451 = vmax.f32 %v2209, 0.0
      %v2452 = vmax.f32 %v2212, 0.0
      %v2453 = vmax.f32 %v2217, 0.0
      %v2454 = vmax.f32 %v2220, 0.0
      %v2455 = vmax.f32 %v2225, 0.0
      %v2456 = vmax.f32 %v2228, 0.0
      %v2457 = vmax.f32 %v2233, 0.0
      %v2458 = vmax.f32 %v2236, 0.0
      %v2459 = vmax.f32 %v2241, 0.0
      %v2460 = vmax.f32 %v2244, 0.0
      %v2461 = vmax.f32 %v2249, 0.0
      %v2462 = vmax.f32 %v2252, 0.0
      %v2463 = vmax.f32 %v2257, 0.0
      %v2464 = vmax.f32 %v2260, 0.0
      %v2465 = vmax.f32 %v2265, 0.0
      %v2466 = vmax.f32 %v2268, 0.0
      %v2467 = vmax.f32 %v2273, 0.0
      %v2468 = vmax.f32 %v2276, 0.0
      %v2469 = vmax.f32 %v2281, 0.0
      %v2470 = vmax.f32 %v2284, 0.0
      %v2471 = vmax.f32 %v2289, 0.0
      %v2472 = vmax.f32 %v2292, 0.0
      %v2473 = vmax.f32 %v2297, 0.0
      %v2474 = vmax.f32 %v2300, 0.0
      %v2475 = vmax.f32 %v2305, 0.0
      %v2476 = vmax.f32 %v2308, 0.0
      %v2477 = vmax.f32 %v2313, 0.0
      %v2478 = vmax.f32 %v2316, 0.0
      %v2479 = vmax.f32 %v2321, 0.0
      %v2480 = vmax.f32 %v2324, 0.0
      %v2481 = vmax.f32 %v2329, 0.0
      %v2482 = vmax.f32 %v2332, 0.0
      %v2483 = vmax.f32 %v2337, 0.0
      %v2484 = vmax.f32 %v2340, 0.0
      %v2485 = vmax.f32 %v2345, 0.0
      %v2486 = vmax.f32 %v2348, 0.0
      %v2487 = vmax.f32 %v2353, 0.0
      %v2488 = vmax.f32 %v2356, 0.0
      %v2489 = vmax.f32 %v2361, 0.0
      %v2490 = vmax.f32 %v2364, 0.0
      %v2491 = vmax.f32 %v2369, 0.0
      %v2492 = vmax.f32 %v2372, 0.0
      %v2493 = vmax.f32 %v2377, 0.0
      %v2494 = vmax.f32 %v2380, 0.0
      %v2495 = vmax.f32 %v2385, 0.0
      %v2496 = vmax.f32 %v2388, 0.0
      %v2497 = vmax.f32 %v2393, 0.0
      %v2498 = vmax.f32 %v2396, 0.0
      %v2499 = vmax.f32 %v2401, 0.0
      %v2500 = vmax.f32 %v2404, 0.0
      %v2501 = vmax.f32 %v2409, 0.0
      %v2502 = vmax.f32 %v2412, 0.0
      %v2503 = vmax.f32 %v2417, 0.0
      %v2504 = vmax.f32 %v2420, 0.0
      %v2505 = vmax.f32 %v2425, 0.0
      %v2506 = vmax.f32 %v2428, 0.0
      %v2507 = vmax.f32 %v2433, 0.0
      %v2508 = vmax.f32 %v2436, 0.0
      %v2509 = vmax.f32 %v2441, 0.0
      %v2510 = vmax.f32 %v2444, 0.0
      %v2511 = vpack.c.bf16 %v2448, %v2447
      %v2512 = vpack.c.bf16 %v2450, %v2449
      %v2513 = vpack.c.bf16 %v2452, %v2451
      %v2514 = vpack.c.bf16 %v2454, %v2453
      %v2515 = vpack.c.bf16 %v2456, %v2455
      %v2516 = vpack.c.bf16 %v2458, %v2457
      %v2517 = vpack.c.bf16 %v2460, %v2459
      %v2518 = vpack.c.bf16 %v2462, %v2461
      %v2519 = vpack.c.bf16 %v2464, %v2463
      %v2520 = vpack.c.bf16 %v2466, %v2465
      %v2521 = vpack.c.bf16 %v2468, %v2467
      %v2522 = vpack.c.bf16 %v2470, %v2469
      %v2523 = vpack.c.bf16 %v2472, %v2471
      %v2524 = vpack.c.bf16 %v2474, %v2473
      %v2525 = vpack.c.bf16 %v2476, %v2475
      %v2526 = vpack.c.bf16 %v2478, %v2477
      %v2527 = vpack.c.bf16 %v2480, %v2479
      %v2528 = vpack.c.bf16 %v2482, %v2481
      %v2529 = vpack.c.bf16 %v2484, %v2483
      %v2530 = vpack.c.bf16 %v2486, %v2485
      %v2531 = vpack.c.bf16 %v2488, %v2487
      %v2532 = vpack.c.bf16 %v2490, %v2489
      %v2533 = vpack.c.bf16 %v2492, %v2491
      %v2534 = vpack.c.bf16 %v2494, %v2493
      %v2535 = vpack.c.bf16 %v2496, %v2495
      %v2536 = vpack.c.bf16 %v2498, %v2497
      %v2537 = vpack.c.bf16 %v2500, %v2499
      %v2538 = vpack.c.bf16 %v2502, %v2501
      %v2539 = vpack.c.bf16 %v2504, %v2503
      %v2540 = vpack.c.bf16 %v2506, %v2505
      %v2541 = vpack.c.bf16 %v2508, %v2507
      %v2542 = vpack.c.bf16 %v2510, %v2509
      %v2575 = vunpack.c.l.b16 %v2511
      %v2576 = vunpack.c.h.b16 %v2511
      %v2577 = vunpack.c.l.b16 %v2512
      %v2578 = vunpack.c.h.b16 %v2512
      %v2579 = vunpack.c.l.b16 %v2513
      %v2580 = vunpack.c.h.b16 %v2513
      %v2581 = vunpack.c.l.b16 %v2514
      %v2582 = vunpack.c.h.b16 %v2514
      %v2583 = vunpack.c.l.b16 %v2515
      %v2584 = vunpack.c.h.b16 %v2515
      %v2585 = vunpack.c.l.b16 %v2516
      %v2586 = vunpack.c.h.b16 %v2516
      %v2587 = vunpack.c.l.b16 %v2517
      %v2588 = vunpack.c.h.b16 %v2517
      %v2589 = vunpack.c.l.b16 %v2518
      %v2590 = vunpack.c.h.b16 %v2518
      %v2591 = vunpack.c.l.b16 %v2519
      %v2592 = vunpack.c.h.b16 %v2519
      %v2593 = vunpack.c.l.b16 %v2520
      %v2594 = vunpack.c.h.b16 %v2520
      %v2595 = vunpack.c.l.b16 %v2521
      %v2596 = vunpack.c.h.b16 %v2521
      %v2597 = vunpack.c.l.b16 %v2522
      %v2598 = vunpack.c.h.b16 %v2522
      %v2599 = vunpack.c.l.b16 %v2523
      %v2600 = vunpack.c.h.b16 %v2523
      %v2601 = vunpack.c.l.b16 %v2524
      %v2602 = vunpack.c.h.b16 %v2524
      %v2603 = vunpack.c.l.b16 %v2525
      %v2604 = vunpack.c.h.b16 %v2525
      %v2605 = vunpack.c.l.b16 %v2526
      %v2606 = vunpack.c.h.b16 %v2526
      %v2607 = vunpack.c.l.b16 %v2527
      %v2608 = vunpack.c.h.b16 %v2527
      %v2609 = vunpack.c.l.b16 %v2528
      %v2610 = vunpack.c.h.b16 %v2528
      %v2611 = vunpack.c.l.b16 %v2529
      %v2612 = vunpack.c.h.b16 %v2529
      %v2613 = vunpack.c.l.b16 %v2530
      %v2614 = vunpack.c.h.b16 %v2530
      %v2615 = vunpack.c.l.b16 %v2531
      %v2616 = vunpack.c.h.b16 %v2531
      %v2617 = vunpack.c.l.b16 %v2532
      %v2618 = vunpack.c.h.b16 %v2532
      %v2619 = vunpack.c.l.b16 %v2533
      %v2620 = vunpack.c.h.b16 %v2533
      %v2621 = vunpack.c.l.b16 %v2534
      %v2622 = vunpack.c.h.b16 %v2534
      %v2623 = vunpack.c.l.b16 %v2535
      %v2624 = vunpack.c.h.b16 %v2535
      %v2625 = vunpack.c.l.b16 %v2536
      %v2626 = vunpack.c.h.b16 %v2536
      %v2627 = vunpack.c.l.b16 %v2537
      %v2628 = vunpack.c.h.b16 %v2537
      %v2629 = vunpack.c.l.b16 %v2538
      %v2630 = vunpack.c.h.b16 %v2538
      %v2631 = vunpack.c.l.b16 %v2539
      %v2632 = vunpack.c.h.b16 %v2539
      %v2633 = vunpack.c.l.b16 %v2540
      %v2634 = vunpack.c.h.b16 %v2540
      %v2635 = vunpack.c.l.b16 %v2541
      %v2636 = vunpack.c.h.b16 %v2541
      %v2637 = vunpack.c.l.b16 %v2542
      %v2638 = vunpack.c.h.b16 %v2542
      %v2639 = vpack.c.b16 %v2575, %v2575
      %v2640 = vpack.c.b16 %v2576, %v2576
      %v2641 = vpack.c.b16 %v2577, %v2577
      %v2642 = vpack.c.b16 %v2578, %v2578
      %v2643 = vpack.c.b16 %v2579, %v2579
      %v2644 = vpack.c.b16 %v2580, %v2580
      %v2645 = vpack.c.b16 %v2581, %v2581
      %v2646 = vpack.c.b16 %v2582, %v2582
      %v2647 = vpack.c.b16 %v2583, %v2583
      %v2648 = vpack.c.b16 %v2584, %v2584
      %v2649 = vpack.c.b16 %v2585, %v2585
      %v2650 = vpack.c.b16 %v2586, %v2586
      %v2651 = vpack.c.b16 %v2587, %v2587
      %v2652 = vpack.c.b16 %v2588, %v2588
      %v2653 = vpack.c.b16 %v2589, %v2589
      %v2654 = vpack.c.b16 %v2590, %v2590
      %v2655 = vpack.c.b16 %v2591, %v2591
      %v2656 = vpack.c.b16 %v2592, %v2592
      %v2657 = vpack.c.b16 %v2593, %v2593
      %v2658 = vpack.c.b16 %v2594, %v2594
      %v2659 = vpack.c.b16 %v2595, %v2595
      %v2660 = vpack.c.b16 %v2596, %v2596
      %v2661 = vpack.c.b16 %v2597, %v2597
      %v2662 = vpack.c.b16 %v2598, %v2598
      %v2663 = vpack.c.b16 %v2599, %v2599
      %v2664 = vpack.c.b16 %v2600, %v2600
      %v2665 = vpack.c.b16 %v2601, %v2601
      %v2666 = vpack.c.b16 %v2602, %v2602
      %v2667 = vpack.c.b16 %v2603, %v2603
      %v2668 = vpack.c.b16 %v2604, %v2604
      %v2669 = vpack.c.b16 %v2605, %v2605
      %v2670 = vpack.c.b16 %v2606, %v2606
      %v2671 = vpack.c.b16 %v2607, %v2607
      %v2672 = vpack.c.b16 %v2608, %v2608
      %v2673 = vpack.c.b16 %v2609, %v2609
      %v2674 = vpack.c.b16 %v2610, %v2610
      %v2675 = vpack.c.b16 %v2611, %v2611
      %v2676 = vpack.c.b16 %v2612, %v2612
      %v2677 = vpack.c.b16 %v2613, %v2613
      %v2678 = vpack.c.b16 %v2614, %v2614
      %v2679 = vpack.c.b16 %v2615, %v2615
      %v2680 = vpack.c.b16 %v2616, %v2616
      %v2681 = vpack.c.b16 %v2617, %v2617
      %v2682 = vpack.c.b16 %v2618, %v2618
      %v2683 = vpack.c.b16 %v2619, %v2619
      %v2684 = vpack.c.b16 %v2620, %v2620
      %v2685 = vpack.c.b16 %v2621, %v2621
      %v2686 = vpack.c.b16 %v2622, %v2622
      %v2687 = vpack.c.b16 %v2623, %v2623
      %v2688 = vpack.c.b16 %v2624, %v2624
      %v2689 = vpack.c.b16 %v2625, %v2625
      %v2690 = vpack.c.b16 %v2626, %v2626
      %v2691 = vpack.c.b16 %v2627, %v2627
      %v2692 = vpack.c.b16 %v2628, %v2628
      %v2693 = vpack.c.b16 %v2629, %v2629
      %v2694 = vpack.c.b16 %v2630, %v2630
      %v2695 = vpack.c.b16 %v2631, %v2631
      %v2696 = vpack.c.b16 %v2632, %v2632
      %v2697 = vpack.c.b16 %v2633, %v2633
      %v2698 = vpack.c.b16 %v2634, %v2634
      %v2699 = vpack.c.b16 %v2635, %v2635
      %v2700 = vpack.c.b16 %v2636, %v2636
      %v2701 = vpack.c.b16 %v2637, %v2637
      %v2702 = vpack.c.b16 %v2638, %v2638
      %2767 = vst [vmem:[%s226] sm:$0xf] %v2639
      %2768 = vst [vmem:[%s226 + $0x4] sm:$0xf] %v2640
      %2769 = vst [vmem:[%s226 + $0x8] sm:$0xf] %v2641
      %2770 = vst [vmem:[%s226 + $0xc] sm:$0xf] %v2642
      %2771 = vst [vmem:[%s226 + $0x10] sm:$0xf] %v2643
      %2772 = vst [vmem:[%s226 + $0x14] sm:$0xf] %v2644
      %2773 = vst [vmem:[%s226 + $0x18] sm:$0xf] %v2645
      %2774 = vst [vmem:[%s226 + $0x1c] sm:$0xf] %v2646
      %2775 = vst [vmem:[%s226 + $0x20] sm:$0xf] %v2647
      %2776 = vst [vmem:[%s226 + $0x24] sm:$0xf] %v2648
      %2777 = vst [vmem:[%s226 + $0x28] sm:$0xf] %v2649
      %2778 = vst [vmem:[%s226 + $0x2c] sm:$0xf] %v2650
      %2779 = vst [vmem:[%s226 + $0x30] sm:$0xf] %v2651
      %2780 = vst [vmem:[%s226 + $0x34] sm:$0xf] %v2652
      %2781 = vst [vmem:[%s226 + $0x38] sm:$0xf] %v2653
      %2782 = vst [vmem:[%s226 + $0x3c] sm:$0xf] %v2654
      %2783 = vst [vmem:[%s226 + $0x40] sm:$0xf] %v2655
      %2784 = vst [vmem:[%s226 + $0x44] sm:$0xf] %v2656
      %2785 = vst [vmem:[%s226 + $0x48] sm:$0xf] %v2657
      %2786 = vst [vmem:[%s226 + $0x4c] sm:$0xf] %v2658
      %2787 = vst [vmem:[%s226 + $0x50] sm:$0xf] %v2659
      %2788 = vst [vmem:[%s226 + $0x54] sm:$0xf] %v2660
      %2789 = vst [vmem:[%s226 + $0x58] sm:$0xf] %v2661
      %2790 = vst [vmem:[%s226 + $0x5c] sm:$0xf] %v2662
      %2791 = vst [vmem:[%s226 + $0x60] sm:$0xf] %v2663
      %2792 = vst [vmem:[%s226 + $0x64] sm:$0xf] %v2664
      %2793 = vst [vmem:[%s226 + $0x68] sm:$0xf] %v2665
      %2794 = vst [vmem:[%s226 + $0x6c] sm:$0xf] %v2666
      %2795 = vst [vmem:[%s226 + $0x70] sm:$0xf] %v2667
      %2796 = vst [vmem:[%s226 + $0x74] sm:$0xf] %v2668
      %2797 = vst [vmem:[%s226 + $0x78] sm:$0xf] %v2669
      %2798 = vst [vmem:[%s226 + $0x7c] sm:$0xf] %v2670
      %2799 = vst [vmem:[%s226 + $0x80] sm:$0xf] %v2671
      %2800 = vst [vmem:[%s226 + $0x84] sm:$0xf] %v2672
      %2801 = vst [vmem:[%s226 + $0x88] sm:$0xf] %v2673
      %2802 = vst [vmem:[%s226 + $0x8c] sm:$0xf] %v2674
      %2803 = vst [vmem:[%s226 + $0x90] sm:$0xf] %v2675
      %2804 = vst [vmem:[%s226 + $0x94] sm:$0xf] %v2676
      %2805 = vst [vmem:[%s226 + $0x98] sm:$0xf] %v2677
      %2806 = vst [vmem:[%s226 + $0x9c] sm:$0xf] %v2678
      %2807 = vst [vmem:[%s226 + $0xa0] sm:$0xf] %v2679
      %2808 = vst [vmem:[%s226 + $0xa4] sm:$0xf] %v2680
      %2809 = vst [vmem:[%s226 + $0xa8] sm:$0xf] %v2681
      %2810 = vst [vmem:[%s226 + $0xac] sm:$0xf] %v2682
      %2811 = vst [vmem:[%s226 + $0xb0] sm:$0xf] %v2683
      %2812 = vst [vmem:[%s226 + $0xb4] sm:$0xf] %v2684
      %2813 = vst [vmem:[%s226 + $0xb8] sm:$0xf] %v2685
      %2814 = vst [vmem:[%s226 + $0xbc] sm:$0xf] %v2686
      %2815 = vst [vmem:[%s226 + $0xc0] sm:$0xf] %v2687
      %2816 = vst [vmem:[%s226 + $0xc4] sm:$0xf] %v2688
      %2817 = vst [vmem:[%s226 + $0xc8] sm:$0xf] %v2689
      %2818 = vst [vmem:[%s226 + $0xcc] sm:$0xf] %v2690
      %2819 = vst [vmem:[%s226 + $0xd0] sm:$0xf] %v2691
      %2820 = vst [vmem:[%s226 + $0xd4] sm:$0xf] %v2692
      %2821 = vst [vmem:[%s226 + $0xd8] sm:$0xf] %v2693
      %2822 = vst [vmem:[%s226 + $0xdc] sm:$0xf] %v2694
      %2823 = vst [vmem:[%s226 + $0xe0] sm:$0xf] %v2695
      %2824 = vst [vmem:[%s226 + $0xe4] sm:$0xf] %v2696
      %2825 = vst [vmem:[%s226 + $0xe8] sm:$0xf] %v2697
      %2826 = vst [vmem:[%s226 + $0xec] sm:$0xf] %v2698
      %2827 = vst [vmem:[%s226 + $0xf0] sm:$0xf] %v2699
      %2828 = vst [vmem:[%s226 + $0xf4] sm:$0xf] %v2700
      %2829 = vst [vmem:[%s226 + $0xf8] sm:$0xf] %v2701
      %2830 = vst [vmem:[%s226 + $0xfc] sm:$0xf] %v2702
      %s2831 = smul.u32 64, %s18
      %p2832 = scmp.lt.s32.totalorder %s2831, 127
      %s2833 = scalar_select %p2832, %s2831, 127
      %p2834 = scmp.lt.s32.totalorder %s19, 0
      %s2835 = scalar_select %p2834, %s19, 0
      %s2836 = sadd.s32 %s2835, %s2833
      %s2837 = smul.addr %s2836, 4
      %s2838 = scalar_lea.vmem %s3, %s2837
      // Predicated region
      $region33: #{nature_conv_body.6} parent=31 // pred_check
        %p2839 = pneg %p124
      $region34: #{nature_conv_body.6} parent=31 // pred_check_branch
        %2841 = sbr.rel (%p2839) target = $region36
      $region35: #{nature_conv_body.6} parent=31 // pred_region
        %s2842 = smul.u32 64, %s18
      $region36: #{nature_conv_body.6} parent=31 // pred_fallthru
        _
    $region32: #{nature_conv_body.6} parent=5 // pred_fallthru
      _
    %p2843 = scmp.le.s32.totalorder 2, %s9
    // Predicated region
    $region37: #{nature_conv_body.6} parent=5 // pred_check
      %p2844 = pneg %p2843
    $region38: #{nature_conv_body.6} parent=5 // pred_check_branch
      %2846 = sbr.rel (%p2844) target = $region40
    $region39: #{nature_conv_body.6} parent=5 // pred_region
      %s2847 = ssub.s32 %s9, 2
      // Predicated region
      $region41: #{nature_conv_body.6} parent=39 // pred_check
        %p2848 = pneg %p130
      $region42: #{nature_conv_body.6} parent=39 // pred_check_branch
        %2850 = sbr.rel (%p2848) target = $region44
      $region43: #{nature_conv_body.6} parent=39 // pred_region
        %s2851 = smul.u32 64, %s20
        %p2852 = scmp.lt.s32.totalorder %s2851, 127
        %s2853 = scalar_select %p2852, %s2851, 127
        %p2854 = scmp.lt.s32.totalorder %s21, 0
        %s2855 = scalar_select %p2854, %s21, 0
        %s2856 = sadd.s32 %s2855, %s2853
        %s2857 = smul.addr %s2856, 4
        %s2858 = scalar_lea.vmem %s3, %s2857
      $region44: #{nature_conv_body.6} parent=39 // pred_fallthru
        _
    $region40: #{nature_conv_body.6} parent=5 // pred_fallthru
      _
  $region6: #{nature_conv_body.6} parent=0 // loop_footer
    %s13 = sadd.s32 1, %s9
  $region7: #{nature_conv_body.6} parent=0 // loop_footer_branch
    %8 = sbr.rel target = $region3
  $region8: #{nature_conv_body.6} parent=0 // loop_exit
    _

// kernel: nature_conv_body.7
$region0: #{nature_conv_body.7}
  #allocation0 [shape = 'u32[]', space=smem, size = 0x4, offset = 0x4, fixed_abs, tag = 'smem constant byte address 0x4 - core index']
  #allocation1 [shape = 'u32[144,128]{1,0:T(1,128)}', space=vmem, size = 0x12000, scoped, tag = 'internal scratch']
  #allocation2 [shape = 'f32[16,256]{1,0:T(8,128)}', space=vmem, size = 0x4000, scoped, tag = 'scratch operand']
  %s0 = inlined_call_operand.vmem [shape: bf16[16,20736], index: 0, kind: input, shape index: {}]
  %s1 = inlined_call_operand.vmem [shape: bf16[20736,512], index: 1, kind: input, shape index: {}]
  %s2 = inlined_call_operand.vmem [shape: f32[1,512], index: 2, kind: input, shape index: {}]
  %s3 = inlined_call_operand.vmem [shape: f32[16,512], index: 3, kind: output, shape index: {}]
  %s4 = sld [smem:[#allocation0]]
  $region133: #{nature_conv_body.7} parent=0
    _
  %s6 = ssub.s32 1, %s4
  %s7 = scalar_select 0, %s6, %s4
  $region1: #{nature_conv_body.7} parent=0
    #allocation3 [shape = 'u8[147456]{0}', space=vmem, size = 0x24000, scoped, tag = 'input window, operand 0']
    #allocation4 [shape = 'u8[2359296]{0}', space=vmem, size = 0x240000, scoped, tag = 'input window, operand 1']
    #allocation5 [shape = 'u8[32768]{0}', space=vmem, size = 0x8000, scoped, tag = 'output window, operand 0']
    loop: start=0, step=1, limit=20
    $region2: #{nature_conv_body.7} parent=1 // loop_pre_header
      _
    $region3: #{nature_conv_body.7} parent=1 // loop_header
      %s9 = sphi 0, %s13
      %p10 = scmp.ge.s32.totalorder %s9, 20
      %s16 = sphi 0, %s35
      %s17 = sphi 0, %s31
      %s18 = sphi 0, %s27
      %s19 = sphi 0, %s16
      %s20 = sphi 0, %s17
      %s21 = sphi 0, %s18
      %s22 = sphi 0, %s19
      %s23 = sphi 0, %s20
      %s24 = sphi 0, %s21
      %s40 = sphi 0, %s42
      %s43 = sphi 0, %s40
      %s44 = sphi 0, %s43
      %s60 = sphi 0, %s44
      %s68 = sphi 0, %s70
      %s71 = sphi 0, %s68
      %s72 = sphi 0, %s71
      %s88 = sphi 0, %s72
      %s94 = sphi 0, %s96
      %s97 = sphi 0, %s94
      %s98 = sphi 0, %s97
      %s114 = sphi 0, %s98
      %s122 = sphi 0, %s124
      %s125 = sphi 0, %s122
      %s126 = sphi 0, %s125
      %s142 = sphi 0, %s126
    $region4: #{nature_conv_body.7} parent=1 // loop_header_branch
      %12 = sbr.rel (%p10) target = $region8
    $region5: #{nature_conv_body.7} parent=1 // loop_body
      %s14 = ssub.s32 %s9, 1
      %s15 = ssub.s32 %s9, 2
      %s25 = sadd.s32 1, %s18
      %p26 = scmp.ge.s32.totalorder %s25, 9
      %s27 = scalar_select %p26, 0, %s25
      %s28 = sadd.s32 1, %s17
      %s29 = scalar_select %p26, %s28, %s17
      %p30 = scmp.ge.s32.totalorder %s29, 2
      %s31 = scalar_select %p30, 0, %s29
      %s32 = sadd.s32 1, %s16
      %s33 = scalar_select %p30, %s32, %s16
      %p34 = scmp.ge.s32.totalorder %s33, 1
      %s35 = scalar_select %p34, 0, %s33
      %s36 = ssub.s32 %s16, %s35
      %s37 = ssub.s32 %s18, %s27
      %s38 = sor.u32 %s36, %s37
      %p39 = scmp.eq.s32.totalorder %s38, 0
      %s41 = sadd.s32 %s40, 1
      %s42 = scalar_select %p39, %s40, %s41
      %p45 = pneg %p39
      %p46 = scmp.eq.s32.totalorder %s9, 17
      %p47 = por %p45, %p46
      %p48 = scmp.ne.s32.totalorder %s40, %s43
      %p49 = scmp.eq.s32.totalorder %s9, 0
      %p50 = por %p48, %p49
      %p51 = scmp.ne.s32.totalorder %s40, %s43
      %p52 = scmp.eq.s32.totalorder %s14, 17
      %p53 = por %p51, %p52
      %p54 = scmp.ne.s32.totalorder %s43, %s44
      %p55 = scmp.eq.s32.totalorder %s14, 0
      %p56 = por %p54, %p55
      %p57 = scmp.ne.s32.totalorder %s43, %s44
      %p58 = scmp.eq.s32.totalorder %s15, 17
      %p59 = por %p57, %p58
      %p61 = scmp.ne.s32.totalorder %s44, %s60
      %p62 = scmp.eq.s32.totalorder %s15, 0
      %p63 = por %p61, %p62
      %s64 = ssub.s32 %s18, %s27
      %s65 = ssub.s32 %s17, %s31
      %s66 = sor.u32 %s64, %s65
      %p67 = scmp.eq.s32.totalorder %s66, 0
      %s69 = sadd.s32 %s68, 1
      %s70 = scalar_select %p67, %s68, %s69
      %p73 = pneg %p67
      %p74 = scmp.eq.s32.totalorder %s9, 17
      %p75 = por %p73, %p74
      %p76 = scmp.ne.s32.totalorder %s68, %s71
      %p77 = scmp.eq.s32.totalorder %s9, 0
      %p78 = por %p76, %p77
      %p79 = scmp.ne.s32.totalorder %s68, %s71
      %p80 = scmp.eq.s32.totalorder %s14, 17
      %p81 = por %p79, %p80
      %p82 = scmp.ne.s32.totalorder %s71, %s72
      %p83 = scmp.eq.s32.totalorder %s14, 0
      %p84 = por %p82, %p83
      %p85 = scmp.ne.s32.totalorder %s71, %s72
      %p86 = scmp.eq.s32.totalorder %s15, 17
      %p87 = por %p85, %p86
      %p89 = scmp.ne.s32.totalorder %s72, %s88
      %p90 = scmp.eq.s32.totalorder %s15, 0
      %p91 = por %p89, %p90
      %s92 = ssub.s32 %s17, %s31
      %p93 = scmp.eq.s32.totalorder %s92, 0
      %s95 = sadd.s32 %s94, 1
      %s96 = scalar_select %p93, %s94, %s95
      %p99 = pneg %p93
      %p100 = scmp.eq.s32.totalorder %s9, 17
      %p101 = por %p99, %p100
      %p102 = scmp.ne.s32.totalorder %s94, %s97
      %p103 = scmp.eq.s32.totalorder %s9, 0
      %p104 = por %p102, %p103
      %p105 = scmp.ne.s32.totalorder %s94, %s97
      %p106 = scmp.eq.s32.totalorder %s14, 17
      %p107 = por %p105, %p106
      %p108 = scmp.ne.s32.totalorder %s97, %s98
      %p109 = scmp.eq.s32.totalorder %s14, 0
      %p110 = por %p108, %p109
      %p111 = scmp.ne.s32.totalorder %s97, %s98
      %p112 = scmp.eq.s32.totalorder %s15, 17
      %p113 = por %p111, %p112
      %p115 = scmp.ne.s32.totalorder %s98, %s114
      %p116 = scmp.eq.s32.totalorder %s15, 0
      %p117 = por %p115, %p116
      %s118 = ssub.s32 %s16, %s35
      %s119 = ssub.s32 %s17, %s31
      %s120 = sor.u32 %s118, %s119
      %p121 = scmp.eq.s32.totalorder %s120, 0
      %s123 = sadd.s32 %s122, 1
      %s124 = scalar_select %p121, %s122, %s123
      %p127 = pneg %p121
      %p128 = scmp.eq.s32.totalorder %s9, 17
      %p129 = por %p127, %p128
      %p130 = scmp.ne.s32.totalorder %s122, %s125
      %p131 = scmp.eq.s32.totalorder %s9, 0
      %p132 = por %p130, %p131
      %p133 = scmp.ne.s32.totalorder %s122, %s125
      %p134 = scmp.eq.s32.totalorder %s14, 17
      %p135 = por %p133, %p134
      %p136 = scmp.ne.s32.totalorder %s125, %s126
      %p137 = scmp.eq.s32.totalorder %s14, 0
      %p138 = por %p136, %p137
      %p139 = scmp.ne.s32.totalorder %s125, %s126
      %p140 = scmp.eq.s32.totalorder %s15, 17
      %p141 = por %p139, %p140
      %p143 = scmp.ne.s32.totalorder %s126, %s142
      %p144 = scmp.eq.s32.totalorder %s15, 0
      %p145 = por %p143, %p144
      %p146 = scmp.le.s32.totalorder 1, %s9
      %p147 = scmp.lt.s32.totalorder %s9, 19
      %p148 = pnand %p146, %p147
      %p149 = pneg %p148
      // Predicated region
      $region9: #{nature_conv_body.7} parent=5 // pred_check
        _
      $region10: #{nature_conv_body.7} parent=5 // pred_check_branch
        %151 = sbr.rel (%p148) target = $region12
      $region11: #{nature_conv_body.7} parent=5 // pred_region
        %s152 = ssub.s32 %s9, 1
      $region12: #{nature_conv_body.7} parent=5 // pred_fallthru
        _
      %p153 = scmp.lt.s32.totalorder %s9, 18
      // Predicated region
      $region13: #{nature_conv_body.7} parent=5 // pred_check
        %p154 = pneg %p153
      $region14: #{nature_conv_body.7} parent=5 // pred_check_branch
        %156 = sbr.rel (%p154) target = $region16
      $region15: #{nature_conv_body.7} parent=5 // pred_region
        // Predicated region
        $region17: #{nature_conv_body.7} parent=15 // pred_check
          %p157 = pneg %p50
        $region18: #{nature_conv_body.7} parent=15 // pred_check_branch
          %159 = sbr.rel (%p157) target = $region20
        $region19: #{nature_conv_body.7} parent=15 // pred_region
          %s160 = sand.u32 %s40, 1
          %s161 = sand.u32 %s40, 1
          %s162 = smul.addr %s161, 144
          %s163 = scalar_lea.vmem [#allocation3], %s162
          %s164 = smul.u32 2, %s16
          %s165 = smul.u32 18, %s18
          %s166 = smul.addr %s164, 162
          %s167 = sadd.s32 %s165, %s166
          %s168 = smul.addr %s167, 4
          %s169 = scalar_lea.vmem %s0, %s168
          // Predicated region
          $region21: #{nature_conv_body.7} parent=19 // pred_check
            _
          $region22: #{nature_conv_body.7} parent=19 // pred_check_branch
            %171 = sbr.rel (0) target = $region24
          $region23: #{nature_conv_body.7} parent=19 // pred_region
            // Predicated region
            $region25: #{nature_conv_body.7} parent=23 // pred_check
              _
            $region26: #{nature_conv_body.7} parent=23 // pred_check_branch
              %173 = sbr.rel (0) target = $region28
            $region27: #{nature_conv_body.7} parent=23 // pred_region
              loop: start=0, step=1, limit=1
              $region29: #{nature_conv_body.7} parent=27 // loop_pre_header
                _
              $region30: #{nature_conv_body.7} parent=27 // loop_header
                %s175 = sphi 0, %s179
                %p176 = scmp.ge.s32.totalorder %s175, 1
                %s180 = sphi %s169, %s169
                %s181 = sphi %s163, %s163
              $region31: #{nature_conv_body.7} parent=27 // loop_header_branch
                %178 = sbr.rel (%p176) target = $region35
              $region32: #{nature_conv_body.7} parent=27 // loop_body
                %v182 = vld [vmem:[%s180] sm:$0xff]
                %183 = vst [vmem:[%s181] sm:$0xff] %v182
                %v184 = vld [vmem:[%s180 + $0x8] sm:$0xff]
                %185 = vst [vmem:[%s181 + $0x8] sm:$0xff] %v184
                %v186 = vld [vmem:[%s180 + $0x10] sm:$0xff]
                %187 = vst [vmem:[%s181 + $0x10] sm:$0xff] %v186
                %v188 = vld [vmem:[%s180 + $0x18] sm:$0xff]
                %189 = vst [vmem:[%s181 + $0x18] sm:$0xff] %v188
                %v190 = vld [vmem:[%s180 + $0x20] sm:$0xff]
                %191 = vst [vmem:[%s181 + $0x20] sm:$0xff] %v190
                %v192 = vld [vmem:[%s180 + $0x28] sm:$0xff]
                %193 = vst [vmem:[%s181 + $0x28] sm:$0xff] %v192
                %v194 = vld [vmem:[%s180 + $0x30] sm:$0xff]
                %195 = vst [vmem:[%s181 + $0x30] sm:$0xff] %v194
                %v196 = vld [vmem:[%s180 + $0x38] sm:$0xff]
                %197 = vst [vmem:[%s181 + $0x38] sm:$0xff] %v196
                %v198 = vld [vmem:[%s180 + $0x40] sm:$0xff]
                %199 = vst [vmem:[%s181 + $0x40] sm:$0xff] %v198
                %v200 = vld [vmem:[%s180 + $0x288] sm:$0xff]
                %201 = vst [vmem:[%s181 + $0x48] sm:$0xff] %v200
                %v202 = vld [vmem:[%s180 + $0x290] sm:$0xff]
                %203 = vst [vmem:[%s181 + $0x50] sm:$0xff] %v202
                %v204 = vld [vmem:[%s180 + $0x298] sm:$0xff]
                %205 = vst [vmem:[%s181 + $0x58] sm:$0xff] %v204
                %v206 = vld [vmem:[%s180 + $0x2a0] sm:$0xff]
                %207 = vst [vmem:[%s181 + $0x60] sm:$0xff] %v206
                %v208 = vld [vmem:[%s180 + $0x2a8] sm:$0xff]
                %209 = vst [vmem:[%s181 + $0x68] sm:$0xff] %v208
                %v210 = vld [vmem:[%s180 + $0x2b0] sm:$0xff]
                %211 = vst [vmem:[%s181 + $0x70] sm:$0xff] %v210
                %v212 = vld [vmem:[%s180 + $0x2b8] sm:$0xff]
                %213 = vst [vmem:[%s181 + $0x78] sm:$0xff] %v212
                %v214 = vld [vmem:[%s180 + $0x2c0] sm:$0xff]
                %215 = vst [vmem:[%s181 + $0x80] sm:$0xff] %v214
                %v216 = vld [vmem:[%s180 + $0x2c8] sm:$0xff]
                %217 = vst [vmem:[%s181 + $0x88] sm:$0xff] %v216
              $region33: #{nature_conv_body.7} parent=27 // loop_footer
                %s179 = sadd.s32 1, %s175
              $region34: #{nature_conv_body.7} parent=27 // loop_footer_branch
                %174 = sbr.rel target = $region30
              $region35: #{nature_conv_body.7} parent=27 // loop_exit
                _
            $region28: #{nature_conv_body.7} parent=23 // pred_fallthru
              _
            // Predicated region
            $region36: #{nature_conv_body.7} parent=23 // pred_check
              _
            $region37: #{nature_conv_body.7} parent=23 // pred_check_branch
              %219 = sbr.rel target = $region39
            $region38: #{nature_conv_body.7} parent=23 // pred_region
              _
            $region39: #{nature_conv_body.7} parent=23 // pred_fallthru
              _
          $region24: #{nature_conv_body.7} parent=19 // pred_fallthru
            _
          %220 = vnop
        $region20: #{nature_conv_body.7} parent=15 // pred_fallthru
          _
        // Predicated region
        $region40: #{nature_conv_body.7} parent=15 // pred_check
          %p221 = pneg %p78
        $region41: #{nature_conv_body.7} parent=15 // pred_check_branch
          %223 = sbr.rel (%p221) target = $region43
        $region42: #{nature_conv_body.7} parent=15 // pred_region
          %s224 = sand.u32 %s68, 1
          %s225 = sand.u32 %s68, 1
          %s226 = smul.addr %s225, 2304
          %s227 = scalar_lea.vmem [#allocation4], %s226
          %s228 = smul.u32 288, %s18
          %s229 = smul.u32 2, %s17
          %s230 = smul.addr %s228, 4
          %s231 = sadd.s32 %s229, %s230
          %s232 = smul.addr %s231, 4
          %s233 = scalar_lea.vmem %s1, %s232
          // Predicated region
          $region44: #{nature_conv_body.7} parent=42 // pred_check
            _
          $region45: #{nature_conv_body.7} parent=42 // pred_check_branch
            %235 = sbr.rel (0) target = $region47
          $region46: #{nature_conv_body.7} parent=42 // pred_region
            // Predicated region
            $region48: #{nature_conv_body.7} parent=46 // pred_check
              _
            $region49: #{nature_conv_body.7} parent=46 // pred_check_branch
              %237 = sbr.rel (0) target = $region51
            $region50: #{nature_conv_body.7} parent=46 // pred_region
              // Predicated region
              $region63: #{nature_conv_body.7} parent=50 // pred_check
                _
              $region64: #{nature_conv_body.7} parent=50 // pred_check_branch
                %827 = sbr.rel (0) target = $region66
              $region65: #{nature_conv_body.7} parent=50 // pred_region
                loop: start=0, step=1, limit=1
                $region67: #{nature_conv_body.7} parent=65 // loop_pre_header
                  _
                $region68: #{nature_conv_body.7} parent=65 // loop_header
                  %s829 = sphi 0, %s833
                  %p830 = scmp.ge.s32.totalorder %s829, 1
                  %s834 = sphi %s233, %s233
                  %s835 = sphi %s227, %s227
                $region69: #{nature_conv_body.7} parent=65 // loop_header_branch
                  %832 = sbr.rel (%p830) target = $region73
                $region70: #{nature_conv_body.7} parent=65 // loop_body
                  %v836 = vld [vmem:[%s834] sm:$0xff]
                  %837 = vst [vmem:[%s835] sm:$0xff] %v836
                  %v838 = vld [vmem:[%s834 + $0x10] sm:$0xff]
                  %839 = vst [vmem:[%s835 + $0x8] sm:$0xff] %v838
                  %v840 = vld [vmem:[%s834 + $0x20] sm:$0xff]
                  %841 = vst [vmem:[%s835 + $0x10] sm:$0xff] %v840
                  %v842 = vld [vmem:[%s834 + $0x30] sm:$0xff]
                  %843 = vst [vmem:[%s835 + $0x18] sm:$0xff] %v842
                  %v844 = vld [vmem:[%s834 + $0x40] sm:$0xff]
                  %845 = vst [vmem:[%s835 + $0x20] sm:$0xff] %v844
                  %v846 = vld [vmem:[%s834 + $0x50] sm:$0xff]
                  %847 = vst [vmem:[%s835 + $0x28] sm:$0xff] %v846
                  %v848 = vld [vmem:[%s834 + $0x60] sm:$0xff]
                  %849 = vst [vmem:[%s835 + $0x30] sm:$0xff] %v848
                  %v850 = vld [vmem:[%s834 + $0x70] sm:$0xff]
                  %851 = vst [vmem:[%s835 + $0x38] sm:$0xff] %v850
                  %v852 = vld [vmem:[%s834 + $0x80] sm:$0xff]
                  %853 = vst [vmem:[%s835 + $0x40] sm:$0xff] %v852
                  %v854 = vld [vmem:[%s834 + $0x90] sm:$0xff]
                  %855 = vst [vmem:[%s835 + $0x48] sm:$0xff] %v854
                  %v856 = vld [vmem:[%s834 + $0xa0] sm:$0xff]
                  %857 = vst [vmem:[%s835 + $0x50] sm:$0xff] %v856
                  %v858 = vld [vmem:[%s834 + $0xb0] sm:$0xff]
                  %859 = vst [vmem:[%s835 + $0x58] sm:$0xff] %v858
                  %v860 = vld [vmem:[%s834 + $0xc0] sm:$0xff]
                  %861 = vst [vmem:[%s835 + $0x60] sm:$0xff] %v860
                  %v862 = vld [vmem:[%s834 + $0xd0] sm:$0xff]
                  %863 = vst [vmem:[%s835 + $0x68] sm:$0xff] %v862
                  %v864 = vld [vmem:[%s834 + $0xe0] sm:$0xff]
                  %865 = vst [vmem:[%s835 + $0x70] sm:$0xff] %v864
                  %v866 = vld [vmem:[%s834 + $0xf0] sm:$0xff]
                  %867 = vst [vmem:[%s835 + $0x78] sm:$0xff] %v866
                  %v868 = vld [vmem:[%s834 + $0x100] sm:$0xff]
                  %869 = vst [vmem:[%s835 + $0x80] sm:$0xff] %v868
                  %v870 = vld [vmem:[%s834 + $0x110] sm:$0xff]
                  %871 = vst [vmem:[%s835 + $0x88] sm:$0xff] %v870
                  %v872 = vld [vmem:[%s834 + $0x120] sm:$0xff]
                  %873 = vst [vmem:[%s835 + $0x90] sm:$0xff] %v872
                  %v874 = vld [vmem:[%s834 + $0x130] sm:$0xff]
                  %875 = vst [vmem:[%s835 + $0x98] sm:$0xff] %v874
                  %v876 = vld [vmem:[%s834 + $0x140] sm:$0xff]
                  %877 = vst [vmem:[%s835 + $0xa0] sm:$0xff] %v876
                  %v878 = vld [vmem:[%s834 + $0x150] sm:$0xff]
                  %879 = vst [vmem:[%s835 + $0xa8] sm:$0xff] %v878
                  %v880 = vld [vmem:[%s834 + $0x160] sm:$0xff]
                  %881 = vst [vmem:[%s835 + $0xb0] sm:$0xff] %v880
                  %v882 = vld [vmem:[%s834 + $0x170] sm:$0xff]
                  %883 = vst [vmem:[%s835 + $0xb8] sm:$0xff] %v882
                  %v884 = vld [vmem:[%s834 + $0x180] sm:$0xff]
                  %885 = vst [vmem:[%s835 + $0xc0] sm:$0xff] %v884
                  %v886 = vld [vmem:[%s834 + $0x190] sm:$0xff]
                  %887 = vst [vmem:[%s835 + $0xc8] sm:$0xff] %v886
                  %v888 = vld [vmem:[%s834 + $0x1a0] sm:$0xff]
                  %889 = vst [vmem:[%s835 + $0xd0] sm:$0xff] %v888
                  %v890 = vld [vmem:[%s834 + $0x1b0] sm:$0xff]
                  %891 = vst [vmem:[%s835 + $0xd8] sm:$0xff] %v890
                  %v892 = vld [vmem:[%s834 + $0x1c0] sm:$0xff]
                  %893 = vst [vmem:[%s835 + $0xe0] sm:$0xff] %v892
                  %v894 = vld [vmem:[%s834 + $0x1d0] sm:$0xff]
                  %895 = vst [vmem:[%s835 + $0xe8] sm:$0xff] %v894
                  %v896 = vld [vmem:[%s834 + $0x1e0] sm:$0xff]
                  %897 = vst [vmem:[%s835 + $0xf0] sm:$0xff] %v896
                  %v898 = vld [vmem:[%s834 + $0x1f0] sm:$0xff]
                  %899 = vst [vmem:[%s835 + $0xf8] sm:$0xff] %v898
                  %v900 = vld [vmem:[%s834 + $0x200] sm:$0xff]
                  %901 = vst [vmem:[%s835 + $0x100] sm:$0xff] %v900
                  %v902 = vld [vmem:[%s834 + $0x210] sm:$0xff]
                  %903 = vst [vmem:[%s835 + $0x108] sm:$0xff] %v902
                  %v904 = vld [vmem:[%s834 + $0x220] sm:$0xff]
                  %905 = vst [vmem:[%s835 + $0x110] sm:$0xff] %v904
                  %v906 = vld [vmem:[%s834 + $0x230] sm:$0xff]
                  %907 = vst [vmem:[%s835 + $0x118] sm:$0xff] %v906
                  %v908 = vld [vmem:[%s834 + $0x240] sm:$0xff]
                  %909 = vst [vmem:[%s835 + $0x120] sm:$0xff] %v908
                  %v910 = vld [vmem:[%s834 + $0x250] sm:$0xff]
                  %911 = vst [vmem:[%s835 + $0x128] sm:$0xff] %v910
                  %v912 = vld [vmem:[%s834 + $0x260] sm:$0xff]
                  %913 = vst [vmem:[%s835 + $0x130] sm:$0xff] %v912
                  %v914 = vld [vmem:[%s834 + $0x270] sm:$0xff]
                  %915 = vst [vmem:[%s835 + $0x138] sm:$0xff] %v914
                  %v916 = vld [vmem:[%s834 + $0x280] sm:$0xff]
                  %917 = vst [vmem:[%s835 + $0x140] sm:$0xff] %v916
                  %v918 = vld [vmem:[%s834 + $0x290] sm:$0xff]
                  %919 = vst [vmem:[%s835 + $0x148] sm:$0xff] %v918
                  %v920 = vld [vmem:[%s834 + $0x2a0] sm:$0xff]
                  %921 = vst [vmem:[%s835 + $0x150] sm:$0xff] %v920
                  %v922 = vld [vmem:[%s834 + $0x2b0] sm:$0xff]
                  %923 = vst [vmem:[%s835 + $0x158] sm:$0xff] %v922
                  %v924 = vld [vmem:[%s834 + $0x2c0] sm:$0xff]
                  %925 = vst [vmem:[%s835 + $0x160] sm:$0xff] %v924
                  %v926 = vld [vmem:[%s834 + $0x2d0] sm:$0xff]
                  %927 = vst [vmem:[%s835 + $0x168] sm:$0xff] %v926
                  %v928 = vld [vmem:[%s834 + $0x2e0] sm:$0xff]
                  %929 = vst [vmem:[%s835 + $0x170] sm:$0xff] %v928
                  %v930 = vld [vmem:[%s834 + $0x2f0] sm:$0xff]
                  %931 = vst [vmem:[%s835 + $0x178] sm:$0xff] %v930
                  %v932 = vld [vmem:[%s834 + $0x300] sm:$0xff]
                  %933 = vst [vmem:[%s835 + $0x180] sm:$0xff] %v932
                  %v934 = vld [vmem:[%s834 + $0x310] sm:$0xff]
                  %935 = vst [vmem:[%s835 + $0x188] sm:$0xff] %v934
                  %v936 = vld [vmem:[%s834 + $0x320] sm:$0xff]
                  %937 = vst [vmem:[%s835 + $0x190] sm:$0xff] %v936
                  %v938 = vld [vmem:[%s834 + $0x330] sm:$0xff]
                  %939 = vst [vmem:[%s835 + $0x198] sm:$0xff] %v938
                  %v940 = vld [vmem:[%s834 + $0x340] sm:$0xff]
                  %941 = vst [vmem:[%s835 + $0x1a0] sm:$0xff] %v940
                  %v942 = vld [vmem:[%s834 + $0x350] sm:$0xff]
                  %943 = vst [vmem:[%s835 + $0x1a8] sm:$0xff] %v942
                  %v944 = vld [vmem:[%s834 + $0x360] sm:$0xff]
                  %945 = vst [vmem:[%s835 + $0x1b0] sm:$0xff] %v944
                  %v946 = vld [vmem:[%s834 + $0x370] sm:$0xff]
                  %947 = vst [vmem:[%s835 + $0x1b8] sm:$0xff] %v946
                  %v948 = vld [vmem:[%s834 + $0x380] sm:$0xff]
                  %949 = vst [vmem:[%s835 + $0x1c0] sm:$0xff] %v948
                  %v950 = vld [vmem:[%s834 + $0x390] sm:$0xff]
                  %951 = vst [vmem:[%s835 + $0x1c8] sm:$0xff] %v950
                  %v952 = vld [vmem:[%s834 + $0x3a0] sm:$0xff]
                  %953 = vst [vmem:[%s835 + $0x1d0] sm:$0xff] %v952
                  %v954 = vld [vmem:[%s834 + $0x3b0] sm:$0xff]
                  %955 = vst [vmem:[%s835 + $0x1d8] sm:$0xff] %v954
                  %v956 = vld [vmem:[%s834 + $0x3c0] sm:$0xff]
                  %957 = vst [vmem:[%s835 + $0x1e0] sm:$0xff] %v956
                  %v958 = vld [vmem:[%s834 + $0x3d0] sm:$0xff]
                  %959 = vst [vmem:[%s835 + $0x1e8] sm:$0xff] %v958
                  %v960 = vld [vmem:[%s834 + $0x3e0] sm:$0xff]
                  %961 = vst [vmem:[%s835 + $0x1f0] sm:$0xff] %v960
                  %v962 = vld [vmem:[%s834 + $0x3f0] sm:$0xff]
                  %963 = vst [vmem:[%s835 + $0x1f8] sm:$0xff] %v962
                  %v964 = vld [vmem:[%s834 + $0x400] sm:$0xff]
                  %965 = vst [vmem:[%s835 + $0x200] sm:$0xff] %v964
                  %v966 = vld [vmem:[%s834 + $0x410] sm:$0xff]
                  %967 = vst [vmem:[%s835 + $0x208] sm:$0xff] %v966
                  %v968 = vld [vmem:[%s834 + $0x420] sm:$0xff]
                  %969 = vst [vmem:[%s835 + $0x210] sm:$0xff] %v968
                  %v970 = vld [vmem:[%s834 + $0x430] sm:$0xff]
                  %971 = vst [vmem:[%s835 + $0x218] sm:$0xff] %v970
                  %v972 = vld [vmem:[%s834 + $0x440] sm:$0xff]
                  %973 = vst [vmem:[%s835 + $0x220] sm:$0xff] %v972
                  %v974 = vld [vmem:[%s834 + $0x450] sm:$0xff]
                  %975 = vst [vmem:[%s835 + $0x228] sm:$0xff] %v974
                  %v976 = vld [vmem:[%s834 + $0x460] sm:$0xff]
                  %977 = vst [vmem:[%s835 + $0x230] sm:$0xff] %v976
                  %v978 = vld [vmem:[%s834 + $0x470] sm:$0xff]
                  %979 = vst [vmem:[%s835 + $0x238] sm:$0xff] %v978
                  %v980 = vld [vmem:[%s834 + $0x480] sm:$0xff]
                  %981 = vst [vmem:[%s835 + $0x240] sm:$0xff] %v980
                  %v982 = vld [vmem:[%s834 + $0x490] sm:$0xff]
                  %983 = vst [vmem:[%s835 + $0x248] sm:$0xff] %v982
                  %v984 = vld [vmem:[%s834 + $0x4a0] sm:$0xff]
                  %985 = vst [vmem:[%s835 + $0x250] sm:$0xff] %v984
                  %v986 = vld [vmem:[%s834 + $0x4b0] sm:$0xff]
                  %987 = vst [vmem:[%s835 + $0x258] sm:$0xff] %v986
                  %v988 = vld [vmem:[%s834 + $0x4c0] sm:$0xff]
                  %989 = vst [vmem:[%s835 + $0x260] sm:$0xff] %v988
                  %v990 = vld [vmem:[%s834 + $0x4d0] sm:$0xff]
                  %991 = vst [vmem:[%s835 + $0x268] sm:$0xff] %v990
                  %v992 = vld [vmem:[%s834 + $0x4e0] sm:$0xff]
                  %993 = vst [vmem:[%s835 + $0x270] sm:$0xff] %v992
                  %v994 = vld [vmem:[%s834 + $0x4f0] sm:$0xff]
                  %995 = vst [vmem:[%s835 + $0x278] sm:$0xff] %v994
                  %v996 = vld [vmem:[%s834 + $0x500] sm:$0xff]
                  %997 = vst [vmem:[%s835 + $0x280] sm:$0xff] %v996
                  %v998 = vld [vmem:[%s834 + $0x510] sm:$0xff]
                  %999 = vst [vmem:[%s835 + $0x288] sm:$0xff] %v998
                  %v1000 = vld [vmem:[%s834 + $0x520] sm:$0xff]
                  %1001 = vst [vmem:[%s835 + $0x290] sm:$0xff] %v1000
                  %v1002 = vld [vmem:[%s834 + $0x530] sm:$0xff]
                  %1003 = vst [vmem:[%s835 + $0x298] sm:$0xff] %v1002
                  %v1004 = vld [vmem:[%s834 + $0x540] sm:$0xff]
                  %1005 = vst [vmem:[%s835 + $0x2a0] sm:$0xff] %v1004
                  %v1006 = vld [vmem:[%s834 + $0x550] sm:$0xff]
                  %1007 = vst [vmem:[%s835 + $0x2a8] sm:$0xff] %v1006
                  %v1008 = vld [vmem:[%s834 + $0x560] sm:$0xff]
                  %1009 = vst [vmem:[%s835 + $0x2b0] sm:$0xff] %v1008
                  %v1010 = vld [vmem:[%s834 + $0x570] sm:$0xff]
                  %1011 = vst [vmem:[%s835 + $0x2b8] sm:$0xff] %v1010
                  %v1012 = vld [vmem:[%s834 + $0x580] sm:$0xff]
                  %1013 = vst [vmem:[%s835 + $0x2c0] sm:$0xff] %v1012
                  %v1014 = vld [vmem:[%s834 + $0x590] sm:$0xff]
                  %1015 = vst [vmem:[%s835 + $0x2c8] sm:$0xff] %v1014
                  %v1016 = vld [vmem:[%s834 + $0x5a0] sm:$0xff]
                  %1017 = vst [vmem:[%s835 + $0x2d0] sm:$0xff] %v1016
                  %v1018 = vld [vmem:[%s834 + $0x5b0] sm:$0xff]
                  %1019 = vst [vmem:[%s835 + $0x2d8] sm:$0xff] %v1018
                  %v1020 = vld [vmem:[%s834 + $0x5c0] sm:$0xff]
                  %1021 = vst [vmem:[%s835 + $0x2e0] sm:$0xff] %v1020
                  %v1022 = vld [vmem:[%s834 + $0x5d0] sm:$0xff]
                  %1023 = vst [vmem:[%s835 + $0x2e8] sm:$0xff] %v1022
                  %v1024 = vld [vmem:[%s834 + $0x5e0] sm:$0xff]
                  %1025 = vst [vmem:[%s835 + $0x2f0] sm:$0xff] %v1024
                  %v1026 = vld [vmem:[%s834 + $0x5f0] sm:$0xff]
                  %1027 = vst [vmem:[%s835 + $0x2f8] sm:$0xff] %v1026
                  %v1028 = vld [vmem:[%s834 + $0x600] sm:$0xff]
                  %1029 = vst [vmem:[%s835 + $0x300] sm:$0xff] %v1028
                  %v1030 = vld [vmem:[%s834 + $0x610] sm:$0xff]
                  %1031 = vst [vmem:[%s835 + $0x308] sm:$0xff] %v1030
                  %v1032 = vld [vmem:[%s834 + $0x620] sm:$0xff]
                  %1033 = vst [vmem:[%s835 + $0x310] sm:$0xff] %v1032
                  %v1034 = vld [vmem:[%s834 + $0x630] sm:$0xff]
                  %1035 = vst [vmem:[%s835 + $0x318] sm:$0xff] %v1034
                  %v1036 = vld [vmem:[%s834 + $0x640] sm:$0xff]
                  %1037 = vst [vmem:[%s835 + $0x320] sm:$0xff] %v1036
                  %v1038 = vld [vmem:[%s834 + $0x650] sm:$0xff]
                  %1039 = vst [vmem:[%s835 + $0x328] sm:$0xff] %v1038
                  %v1040 = vld [vmem:[%s834 + $0x660] sm:$0xff]
                  %1041 = vst [vmem:[%s835 + $0x330] sm:$0xff] %v1040
                  %v1042 = vld [vmem:[%s834 + $0x670] sm:$0xff]
                  %1043 = vst [vmem:[%s835 + $0x338] sm:$0xff] %v1042
                  %v1044 = vld [vmem:[%s834 + $0x680] sm:$0xff]
                  %1045 = vst [vmem:[%s835 + $0x340] sm:$0xff] %v1044
                  %v1046 = vld [vmem:[%s834 + $0x690] sm:$0xff]
                  %1047 = vst [vmem:[%s835 + $0x348] sm:$0xff] %v1046
                  %v1048 = vld [vmem:[%s834 + $0x6a0] sm:$0xff]
                  %1049 = vst [vmem:[%s835 + $0x350] sm:$0xff] %v1048
                  %v1050 = vld [vmem:[%s834 + $0x6b0] sm:$0xff]
                  %1051 = vst [vmem:[%s835 + $0x358] sm:$0xff] %v1050
                  %v1052 = vld [vmem:[%s834 + $0x6c0] sm:$0xff]
                  %1053 = vst [vmem:[%s835 + $0x360] sm:$0xff] %v1052
                  %v1054 = vld [vmem:[%s834 + $0x6d0] sm:$0xff]
                  %1055 = vst [vmem:[%s835 + $0x368] sm:$0xff] %v1054
                  %v1056 = vld [vmem:[%s834 + $0x6e0] sm:$0xff]
                  %1057 = vst [vmem:[%s835 + $0x370] sm:$0xff] %v1056
                  %v1058 = vld [vmem:[%s834 + $0x6f0] sm:$0xff]
                  %1059 = vst [vmem:[%s835 + $0x378] sm:$0xff] %v1058
                  %v1060 = vld [vmem:[%s834 + $0x700] sm:$0xff]
                  %1061 = vst [vmem:[%s835 + $0x380] sm:$0xff] %v1060
                  %v1062 = vld [vmem:[%s834 + $0x710] sm:$0xff]
                  %1063 = vst [vmem:[%s835 + $0x388] sm:$0xff] %v1062
                  %v1064 = vld [vmem:[%s834 + $0x720] sm:$0xff]
                  %1065 = vst [vmem:[%s835 + $0x390] sm:$0xff] %v1064
                  %v1066 = vld [vmem:[%s834 + $0x730] sm:$0xff]
                  %1067 = vst [vmem:[%s835 + $0x398] sm:$0xff] %v1066
                  %v1068 = vld [vmem:[%s834 + $0x740] sm:$0xff]
                  %1069 = vst [vmem:[%s835 + $0x3a0] sm:$0xff] %v1068
                  %v1070 = vld [vmem:[%s834 + $0x750] sm:$0xff]
                  %1071 = vst [vmem:[%s835 + $0x3a8] sm:$0xff] %v1070
                  %v1072 = vld [vmem:[%s834 + $0x760] sm:$0xff]
                  %1073 = vst [vmem:[%s835 + $0x3b0] sm:$0xff] %v1072
                  %v1074 = vld [vmem:[%s834 + $0x770] sm:$0xff]
                  %1075 = vst [vmem:[%s835 + $0x3b8] sm:$0xff] %v1074
                  %v1076 = vld [vmem:[%s834 + $0x780] sm:$0xff]
                  %1077 = vst [vmem:[%s835 + $0x3c0] sm:$0xff] %v1076
                  %v1078 = vld [vmem:[%s834 + $0x790] sm:$0xff]
                  %1079 = vst [vmem:[%s835 + $0x3c8] sm:$0xff] %v1078
                  %v1080 = vld [vmem:[%s834 + $0x7a0] sm:$0xff]
                  %1081 = vst [vmem:[%s835 + $0x3d0] sm:$0xff] %v1080
                  %v1082 = vld [vmem:[%s834 + $0x7b0] sm:$0xff]
                  %1083 = vst [vmem:[%s835 + $0x3d8] sm:$0xff] %v1082
                  %v1084 = vld [vmem:[%s834 + $0x7c0] sm:$0xff]
                  %1085 = vst [vmem:[%s835 + $0x3e0] sm:$0xff] %v1084
                  %v1086 = vld [vmem:[%s834 + $0x7d0] sm:$0xff]
                  %1087 = vst [vmem:[%s835 + $0x3e8] sm:$0xff] %v1086
                  %v1088 = vld [vmem:[%s834 + $0x7e0] sm:$0xff]
                  %1089 = vst [vmem:[%s835 + $0x3f0] sm:$0xff] %v1088
                  %v1090 = vld [vmem:[%s834 + $0x7f0] sm:$0xff]
                  %1091 = vst [vmem:[%s835 + $0x3f8] sm:$0xff] %v1090
                  %v1092 = vld [vmem:[%s834 + $0x800] sm:$0xff]
                  %1093 = vst [vmem:[%s835 + $0x400] sm:$0xff] %v1092
                  %v1094 = vld [vmem:[%s834 + $0x810] sm:$0xff]
                  %1095 = vst [vmem:[%s835 + $0x408] sm:$0xff] %v1094
                  %v1096 = vld [vmem:[%s834 + $0x820] sm:$0xff]
                  %1097 = vst [vmem:[%s835 + $0x410] sm:$0xff] %v1096
                  %v1098 = vld [vmem:[%s834 + $0x830] sm:$0xff]
                  %1099 = vst [vmem:[%s835 + $0x418] sm:$0xff] %v1098
                  %v1100 = vld [vmem:[%s834 + $0x840] sm:$0xff]
                  %1101 = vst [vmem:[%s835 + $0x420] sm:$0xff] %v1100
                  %v1102 = vld [vmem:[%s834 + $0x850] sm:$0xff]
                  %1103 = vst [vmem:[%s835 + $0x428] sm:$0xff] %v1102
                  %v1104 = vld [vmem:[%s834 + $0x860] sm:$0xff]
                  %1105 = vst [vmem:[%s835 + $0x430] sm:$0xff] %v1104
                  %v1106 = vld [vmem:[%s834 + $0x870] sm:$0xff]
                  %1107 = vst [vmem:[%s835 + $0x438] sm:$0xff] %v1106
                  %v1108 = vld [vmem:[%s834 + $0x880] sm:$0xff]
                  %1109 = vst [vmem:[%s835 + $0x440] sm:$0xff] %v1108
                  %v1110 = vld [vmem:[%s834 + $0x890] sm:$0xff]
                  %1111 = vst [vmem:[%s835 + $0x448] sm:$0xff] %v1110
                  %v1112 = vld [vmem:[%s834 + $0x8a0] sm:$0xff]
                  %1113 = vst [vmem:[%s835 + $0x450] sm:$0xff] %v1112
                  %v1114 = vld [vmem:[%s834 + $0x8b0] sm:$0xff]
                  %1115 = vst [vmem:[%s835 + $0x458] sm:$0xff] %v1114
                  %v1116 = vld [vmem:[%s834 + $0x8c0] sm:$0xff]
                  %1117 = vst [vmem:[%s835 + $0x460] sm:$0xff] %v1116
                  %v1118 = vld [vmem:[%s834 + $0x8d0] sm:$0xff]
                  %1119 = vst [vmem:[%s835 + $0x468] sm:$0xff] %v1118
                  %v1120 = vld [vmem:[%s834 + $0x8e0] sm:$0xff]
                  %1121 = vst [vmem:[%s835 + $0x470] sm:$0xff] %v1120
                  %v1122 = vld [vmem:[%s834 + $0x8f0] sm:$0xff]
                  %1123 = vst [vmem:[%s835 + $0x478] sm:$0xff] %v1122
                  %v1124 = vld [vmem:[%s834 + $0x900] sm:$0xff]
                  %1125 = vst [vmem:[%s835 + $0x480] sm:$0xff] %v1124
                  %v1126 = vld [vmem:[%s834 + $0x910] sm:$0xff]
                  %1127 = vst [vmem:[%s835 + $0x488] sm:$0xff] %v1126
                  %v1128 = vld [vmem:[%s834 + $0x920] sm:$0xff]
                  %1129 = vst [vmem:[%s835 + $0x490] sm:$0xff] %v1128
                  %v1130 = vld [vmem:[%s834 + $0x930] sm:$0xff]
                  %1131 = vst [vmem:[%s835 + $0x498] sm:$0xff] %v1130
                  %v1132 = vld [vmem:[%s834 + $0x940] sm:$0xff]
                  %1133 = vst [vmem:[%s835 + $0x4a0] sm:$0xff] %v1132
                  %v1134 = vld [vmem:[%s834 + $0x950] sm:$0xff]
                  %1135 = vst [vmem:[%s835 + $0x4a8] sm:$0xff] %v1134
                  %v1136 = vld [vmem:[%s834 + $0x960] sm:$0xff]
                  %1137 = vst [vmem:[%s835 + $0x4b0] sm:$0xff] %v1136
                  %v1138 = vld [vmem:[%s834 + $0x970] sm:$0xff]
                  %1139 = vst [vmem:[%s835 + $0x4b8] sm:$0xff] %v1138
                  %v1140 = vld [vmem:[%s834 + $0x980] sm:$0xff]
                  %1141 = vst [vmem:[%s835 + $0x4c0] sm:$0xff] %v1140
                  %v1142 = vld [vmem:[%s834 + $0x990] sm:$0xff]
                  %1143 = vst [vmem:[%s835 + $0x4c8] sm:$0xff] %v1142
                  %v1144 = vld [vmem:[%s834 + $0x9a0] sm:$0xff]
                  %1145 = vst [vmem:[%s835 + $0x4d0] sm:$0xff] %v1144
                  %v1146 = vld [vmem:[%s834 + $0x9b0] sm:$0xff]
                  %1147 = vst [vmem:[%s835 + $0x4d8] sm:$0xff] %v1146
                  %v1148 = vld [vmem:[%s834 + $0x9c0] sm:$0xff]
                  %1149 = vst [vmem:[%s835 + $0x4e0] sm:$0xff] %v1148
                  %v1150 = vld [vmem:[%s834 + $0x9d0] sm:$0xff]
                  %1151 = vst [vmem:[%s835 + $0x4e8] sm:$0xff] %v1150
                  %v1152 = vld [vmem:[%s834 + $0x9e0] sm:$0xff]
                  %1153 = vst [vmem:[%s835 + $0x4f0] sm:$0xff] %v1152
                  %v1154 = vld [vmem:[%s834 + $0x9f0] sm:$0xff]
                  %1155 = vst [vmem:[%s835 + $0x4f8] sm:$0xff] %v1154
                  %v1156 = vld [vmem:[%s834 + $0xa00] sm:$0xff]
                  %1157 = vst [vmem:[%s835 + $0x500] sm:$0xff] %v1156
                  %v1158 = vld [vmem:[%s834 + $0xa10] sm:$0xff]
                  %1159 = vst [vmem:[%s835 + $0x508] sm:$0xff] %v1158
                  %v1160 = vld [vmem:[%s834 + $0xa20] sm:$0xff]
                  %1161 = vst [vmem:[%s835 + $0x510] sm:$0xff] %v1160
                  %v1162 = vld [vmem:[%s834 + $0xa30] sm:$0xff]
                  %1163 = vst [vmem:[%s835 + $0x518] sm:$0xff] %v1162
                  %v1164 = vld [vmem:[%s834 + $0xa40] sm:$0xff]
                  %1165 = vst [vmem:[%s835 + $0x520] sm:$0xff] %v1164
                  %v1166 = vld [vmem:[%s834 + $0xa50] sm:$0xff]
                  %1167 = vst [vmem:[%s835 + $0x528] sm:$0xff] %v1166
                  %v1168 = vld [vmem:[%s834 + $0xa60] sm:$0xff]
                  %1169 = vst [vmem:[%s835 + $0x530] sm:$0xff] %v1168
                  %v1170 = vld [vmem:[%s834 + $0xa70] sm:$0xff]
                  %1171 = vst [vmem:[%s835 + $0x538] sm:$0xff] %v1170
                  %v1172 = vld [vmem:[%s834 + $0xa80] sm:$0xff]
                  %1173 = vst [vmem:[%s835 + $0x540] sm:$0xff] %v1172
                  %v1174 = vld [vmem:[%s834 + $0xa90] sm:$0xff]
                  %1175 = vst [vmem:[%s835 + $0x548] sm:$0xff] %v1174
                  %v1176 = vld [vmem:[%s834 + $0xaa0] sm:$0xff]
                  %1177 = vst [vmem:[%s835 + $0x550] sm:$0xff] %v1176
                  %v1178 = vld [vmem:[%s834 + $0xab0] sm:$0xff]
                  %1179 = vst [vmem:[%s835 + $0x558] sm:$0xff] %v1178
                  %v1180 = vld [vmem:[%s834 + $0xac0] sm:$0xff]
                  %1181 = vst [vmem:[%s835 + $0x560] sm:$0xff] %v1180
                  %v1182 = vld [vmem:[%s834 + $0xad0] sm:$0xff]
                  %1183 = vst [vmem:[%s835 + $0x568] sm:$0xff] %v1182
                  %v1184 = vld [vmem:[%s834 + $0xae0] sm:$0xff]
                  %1185 = vst [vmem:[%s835 + $0x570] sm:$0xff] %v1184
                  %v1186 = vld [vmem:[%s834 + $0xaf0] sm:$0xff]
                  %1187 = vst [vmem:[%s835 + $0x578] sm:$0xff] %v1186
                  %v1188 = vld [vmem:[%s834 + $0xb00] sm:$0xff]
                  %1189 = vst [vmem:[%s835 + $0x580] sm:$0xff] %v1188
                  %v1190 = vld [vmem:[%s834 + $0xb10] sm:$0xff]
                  %1191 = vst [vmem:[%s835 + $0x588] sm:$0xff] %v1190
                  %v1192 = vld [vmem:[%s834 + $0xb20] sm:$0xff]
                  %1193 = vst [vmem:[%s835 + $0x590] sm:$0xff] %v1192
                  %v1194 = vld [vmem:[%s834 + $0xb30] sm:$0xff]
                  %1195 = vst [vmem:[%s835 + $0x598] sm:$0xff] %v1194
                  %v1196 = vld [vmem:[%s834 + $0xb40] sm:$0xff]
                  %1197 = vst [vmem:[%s835 + $0x5a0] sm:$0xff] %v1196
                  %v1198 = vld [vmem:[%s834 + $0xb50] sm:$0xff]
                  %1199 = vst [vmem:[%s835 + $0x5a8] sm:$0xff] %v1198
                  %v1200 = vld [vmem:[%s834 + $0xb60] sm:$0xff]
                  %1201 = vst [vmem:[%s835 + $0x5b0] sm:$0xff] %v1200
                  %v1202 = vld [vmem:[%s834 + $0xb70] sm:$0xff]
                  %1203 = vst [vmem:[%s835 + $0x5b8] sm:$0xff] %v1202
                  %v1204 = vld [vmem:[%s834 + $0xb80] sm:$0xff]
                  %1205 = vst [vmem:[%s835 + $0x5c0] sm:$0xff] %v1204
                  %v1206 = vld [vmem:[%s834 + $0xb90] sm:$0xff]
                  %1207 = vst [vmem:[%s835 + $0x5c8] sm:$0xff] %v1206
                  %v1208 = vld [vmem:[%s834 + $0xba0] sm:$0xff]
                  %1209 = vst [vmem:[%s835 + $0x5d0] sm:$0xff] %v1208
                  %v1210 = vld [vmem:[%s834 + $0xbb0] sm:$0xff]
                  %1211 = vst [vmem:[%s835 + $0x5d8] sm:$0xff] %v1210
                  %v1212 = vld [vmem:[%s834 + $0xbc0] sm:$0xff]
                  %1213 = vst [vmem:[%s835 + $0x5e0] sm:$0xff] %v1212
                  %v1214 = vld [vmem:[%s834 + $0xbd0] sm:$0xff]
                  %1215 = vst [vmem:[%s835 + $0x5e8] sm:$0xff] %v1214
                  %v1216 = vld [vmem:[%s834 + $0xbe0] sm:$0xff]
                  %1217 = vst [vmem:[%s835 + $0x5f0] sm:$0xff] %v1216
                  %v1218 = vld [vmem:[%s834 + $0xbf0] sm:$0xff]
                  %1219 = vst [vmem:[%s835 + $0x5f8] sm:$0xff] %v1218
                  %v1220 = vld [vmem:[%s834 + $0xc00] sm:$0xff]
                  %1221 = vst [vmem:[%s835 + $0x600] sm:$0xff] %v1220
                  %v1222 = vld [vmem:[%s834 + $0xc10] sm:$0xff]
                  %1223 = vst [vmem:[%s835 + $0x608] sm:$0xff] %v1222
                  %v1224 = vld [vmem:[%s834 + $0xc20] sm:$0xff]
                  %1225 = vst [vmem:[%s835 + $0x610] sm:$0xff] %v1224
                  %v1226 = vld [vmem:[%s834 + $0xc30] sm:$0xff]
                  %1227 = vst [vmem:[%s835 + $0x618] sm:$0xff] %v1226
                  %v1228 = vld [vmem:[%s834 + $0xc40] sm:$0xff]
                  %1229 = vst [vmem:[%s835 + $0x620] sm:$0xff] %v1228
                  %v1230 = vld [vmem:[%s834 + $0xc50] sm:$0xff]
                  %1231 = vst [vmem:[%s835 + $0x628] sm:$0xff] %v1230
                  %v1232 = vld [vmem:[%s834 + $0xc60] sm:$0xff]
                  %1233 = vst [vmem:[%s835 + $0x630] sm:$0xff] %v1232
                  %v1234 = vld [vmem:[%s834 + $0xc70] sm:$0xff]
                  %1235 = vst [vmem:[%s835 + $0x638] sm:$0xff] %v1234
                  %v1236 = vld [vmem:[%s834 + $0xc80] sm:$0xff]
                  %1237 = vst [vmem:[%s835 + $0x640] sm:$0xff] %v1236
                  %v1238 = vld [vmem:[%s834 + $0xc90] sm:$0xff]
                  %1239 = vst [vmem:[%s835 + $0x648] sm:$0xff] %v1238
                  %v1240 = vld [vmem:[%s834 + $0xca0] sm:$0xff]
                  %1241 = vst [vmem:[%s835 + $0x650] sm:$0xff] %v1240
                  %v1242 = vld [vmem:[%s834 + $0xcb0] sm:$0xff]
                  %1243 = vst [vmem:[%s835 + $0x658] sm:$0xff] %v1242
                  %v1244 = vld [vmem:[%s834 + $0xcc0] sm:$0xff]
                  %1245 = vst [vmem:[%s835 + $0x660] sm:$0xff] %v1244
                  %v1246 = vld [vmem:[%s834 + $0xcd0] sm:$0xff]
                  %1247 = vst [vmem:[%s835 + $0x668] sm:$0xff] %v1246
                  %v1248 = vld [vmem:[%s834 + $0xce0] sm:$0xff]
                  %1249 = vst [vmem:[%s835 + $0x670] sm:$0xff] %v1248
                  %v1250 = vld [vmem:[%s834 + $0xcf0] sm:$0xff]
                  %1251 = vst [vmem:[%s835 + $0x678] sm:$0xff] %v1250
                  %v1252 = vld [vmem:[%s834 + $0xd00] sm:$0xff]
                  %1253 = vst [vmem:[%s835 + $0x680] sm:$0xff] %v1252
                  %v1254 = vld [vmem:[%s834 + $0xd10] sm:$0xff]
                  %1255 = vst [vmem:[%s835 + $0x688] sm:$0xff] %v1254
                  %v1256 = vld [vmem:[%s834 + $0xd20] sm:$0xff]
                  %1257 = vst [vmem:[%s835 + $0x690] sm:$0xff] %v1256
                  %v1258 = vld [vmem:[%s834 + $0xd30] sm:$0xff]
                  %1259 = vst [vmem:[%s835 + $0x698] sm:$0xff] %v1258
                  %v1260 = vld [vmem:[%s834 + $0xd40] sm:$0xff]
                  %1261 = vst [vmem:[%s835 + $0x6a0] sm:$0xff] %v1260
                  %v1262 = vld [vmem:[%s834 + $0xd50] sm:$0xff]
                  %1263 = vst [vmem:[%s835 + $0x6a8] sm:$0xff] %v1262
                  %v1264 = vld [vmem:[%s834 + $0xd60] sm:$0xff]
                  %1265 = vst [vmem:[%s835 + $0x6b0] sm:$0xff] %v1264
                  %v1266 = vld [vmem:[%s834 + $0xd70] sm:$0xff]
                  %1267 = vst [vmem:[%s835 + $0x6b8] sm:$0xff] %v1266
                  %v1268 = vld [vmem:[%s834 + $0xd80] sm:$0xff]
                  %1269 = vst [vmem:[%s835 + $0x6c0] sm:$0xff] %v1268
                  %v1270 = vld [vmem:[%s834 + $0xd90] sm:$0xff]
                  %1271 = vst [vmem:[%s835 + $0x6c8] sm:$0xff] %v1270
                  %v1272 = vld [vmem:[%s834 + $0xda0] sm:$0xff]
                  %1273 = vst [vmem:[%s835 + $0x6d0] sm:$0xff] %v1272
                  %v1274 = vld [vmem:[%s834 + $0xdb0] sm:$0xff]
                  %1275 = vst [vmem:[%s835 + $0x6d8] sm:$0xff] %v1274
                  %v1276 = vld [vmem:[%s834 + $0xdc0] sm:$0xff]
                  %1277 = vst [vmem:[%s835 + $0x6e0] sm:$0xff] %v1276
                  %v1278 = vld [vmem:[%s834 + $0xdd0] sm:$0xff]
                  %1279 = vst [vmem:[%s835 + $0x6e8] sm:$0xff] %v1278
                  %v1280 = vld [vmem:[%s834 + $0xde0] sm:$0xff]
                  %1281 = vst [vmem:[%s835 + $0x6f0] sm:$0xff] %v1280
                  %v1282 = vld [vmem:[%s834 + $0xdf0] sm:$0xff]
                  %1283 = vst [vmem:[%s835 + $0x6f8] sm:$0xff] %v1282
                  %v1284 = vld [vmem:[%s834 + $0xe00] sm:$0xff]
                  %1285 = vst [vmem:[%s835 + $0x700] sm:$0xff] %v1284
                  %v1286 = vld [vmem:[%s834 + $0xe10] sm:$0xff]
                  %1287 = vst [vmem:[%s835 + $0x708] sm:$0xff] %v1286
                  %v1288 = vld [vmem:[%s834 + $0xe20] sm:$0xff]
                  %1289 = vst [vmem:[%s835 + $0x710] sm:$0xff] %v1288
                  %v1290 = vld [vmem:[%s834 + $0xe30] sm:$0xff]
                  %1291 = vst [vmem:[%s835 + $0x718] sm:$0xff] %v1290
                  %v1292 = vld [vmem:[%s834 + $0xe40] sm:$0xff]
                  %1293 = vst [vmem:[%s835 + $0x720] sm:$0xff] %v1292
                  %v1294 = vld [vmem:[%s834 + $0xe50] sm:$0xff]
                  %1295 = vst [vmem:[%s835 + $0x728] sm:$0xff] %v1294
                  %v1296 = vld [vmem:[%s834 + $0xe60] sm:$0xff]
                  %1297 = vst [vmem:[%s835 + $0x730] sm:$0xff] %v1296
                  %v1298 = vld [vmem:[%s834 + $0xe70] sm:$0xff]
                  %1299 = vst [vmem:[%s835 + $0x738] sm:$0xff] %v1298
                  %v1300 = vld [vmem:[%s834 + $0xe80] sm:$0xff]
                  %1301 = vst [vmem:[%s835 + $0x740] sm:$0xff] %v1300
                  %v1302 = vld [vmem:[%s834 + $0xe90] sm:$0xff]
                  %1303 = vst [vmem:[%s835 + $0x748] sm:$0xff] %v1302
                  %v1304 = vld [vmem:[%s834 + $0xea0] sm:$0xff]
                  %1305 = vst [vmem:[%s835 + $0x750] sm:$0xff] %v1304
                  %v1306 = vld [vmem:[%s834 + $0xeb0] sm:$0xff]
                  %1307 = vst [vmem:[%s835 + $0x758] sm:$0xff] %v1306
                  %v1308 = vld [vmem:[%s834 + $0xec0] sm:$0xff]
                  %1309 = vst [vmem:[%s835 + $0x760] sm:$0xff] %v1308
                  %v1310 = vld [vmem:[%s834 + $0xed0] sm:$0xff]
                  %1311 = vst [vmem:[%s835 + $0x768] sm:$0xff] %v1310
                  %v1312 = vld [vmem:[%s834 + $0xee0] sm:$0xff]
                  %1313 = vst [vmem:[%s835 + $0x770] sm:$0xff] %v1312
                  %v1314 = vld [vmem:[%s834 + $0xef0] sm:$0xff]
                  %1315 = vst [vmem:[%s835 + $0x778] sm:$0xff] %v1314
                  %v1316 = vld [vmem:[%s834 + $0xf00] sm:$0xff]
                  %1317 = vst [vmem:[%s835 + $0x780] sm:$0xff] %v1316
                  %v1318 = vld [vmem:[%s834 + $0xf10] sm:$0xff]
                  %1319 = vst [vmem:[%s835 + $0x788] sm:$0xff] %v1318
                  %v1320 = vld [vmem:[%s834 + $0xf20] sm:$0xff]
                  %1321 = vst [vmem:[%s835 + $0x790] sm:$0xff] %v1320
                  %v1322 = vld [vmem:[%s834 + $0xf30] sm:$0xff]
                  %1323 = vst [vmem:[%s835 + $0x798] sm:$0xff] %v1322
                  %v1324 = vld [vmem:[%s834 + $0xf40] sm:$0xff]
                  %1325 = vst [vmem:[%s835 + $0x7a0] sm:$0xff] %v1324
                  %v1326 = vld [vmem:[%s834 + $0xf50] sm:$0xff]
                  %1327 = vst [vmem:[%s835 + $0x7a8] sm:$0xff] %v1326
                  %v1328 = vld [vmem:[%s834 + $0xf60] sm:$0xff]
                  %1329 = vst [vmem:[%s835 + $0x7b0] sm:$0xff] %v1328
                  %v1330 = vld [vmem:[%s834 + $0xf70] sm:$0xff]
                  %1331 = vst [vmem:[%s835 + $0x7b8] sm:$0xff] %v1330
                  %v1332 = vld [vmem:[%s834 + $0xf80] sm:$0xff]
                  %1333 = vst [vmem:[%s835 + $0x7c0] sm:$0xff] %v1332
                  %v1334 = vld [vmem:[%s834 + $0xf90] sm:$0xff]
                  %1335 = vst [vmem:[%s835 + $0x7c8] sm:$0xff] %v1334
                  %v1336 = vld [vmem:[%s834 + $0xfa0] sm:$0xff]
                  %1337 = vst [vmem:[%s835 + $0x7d0] sm:$0xff] %v1336
                  %v1338 = vld [vmem:[%s834 + $0xfb0] sm:$0xff]
                  %1339 = vst [vmem:[%s835 + $0x7d8] sm:$0xff] %v1338
                  %v1340 = vld [vmem:[%s834 + $0xfc0] sm:$0xff]
                  %1341 = vst [vmem:[%s835 + $0x7e0] sm:$0xff] %v1340
                  %v1342 = vld [vmem:[%s834 + $0xfd0] sm:$0xff]
                  %1343 = vst [vmem:[%s835 + $0x7e8] sm:$0xff] %v1342
                  %v1344 = vld [vmem:[%s834 + $0xfe0] sm:$0xff]
                  %1345 = vst [vmem:[%s835 + $0x7f0] sm:$0xff] %v1344
                  %v1346 = vld [vmem:[%s834 + $0xff0] sm:$0xff]
                  %1347 = vst [vmem:[%s835 + $0x7f8] sm:$0xff] %v1346
                  %v1348 = vld [vmem:[%s834 + $0x1000] sm:$0xff]
                  %1349 = vst [vmem:[%s835 + $0x800] sm:$0xff] %v1348
                  %v1350 = vld [vmem:[%s834 + $0x1010] sm:$0xff]
                  %1351 = vst [vmem:[%s835 + $0x808] sm:$0xff] %v1350
                  %v1352 = vld [vmem:[%s834 + $0x1020] sm:$0xff]
                  %1353 = vst [vmem:[%s835 + $0x810] sm:$0xff] %v1352
                  %v1354 = vld [vmem:[%s834 + $0x1030] sm:$0xff]
                  %1355 = vst [vmem:[%s835 + $0x818] sm:$0xff] %v1354
                  %v1356 = vld [vmem:[%s834 + $0x1040] sm:$0xff]
                  %1357 = vst [vmem:[%s835 + $0x820] sm:$0xff] %v1356
                  %v1358 = vld [vmem:[%s834 + $0x1050] sm:$0xff]
                  %1359 = vst [vmem:[%s835 + $0x828] sm:$0xff] %v1358
                  %v1360 = vld [vmem:[%s834 + $0x1060] sm:$0xff]
                  %1361 = vst [vmem:[%s835 + $0x830] sm:$0xff] %v1360
                  %v1362 = vld [vmem:[%s834 + $0x1070] sm:$0xff]
                  %1363 = vst [vmem:[%s835 + $0x838] sm:$0xff] %v1362
                  %v1364 = vld [vmem:[%s834 + $0x1080] sm:$0xff]
                  %1365 = vst [vmem:[%s835 + $0x840] sm:$0xff] %v1364
                  %v1366 = vld [vmem:[%s834 + $0x1090] sm:$0xff]
                  %1367 = vst [vmem:[%s835 + $0x848] sm:$0xff] %v1366
                  %v1368 = vld [vmem:[%s834 + $0x10a0] sm:$0xff]
                  %1369 = vst [vmem:[%s835 + $0x850] sm:$0xff] %v1368
                  %v1370 = vld [vmem:[%s834 + $0x10b0] sm:$0xff]
                  %1371 = vst [vmem:[%s835 + $0x858] sm:$0xff] %v1370
                  %v1372 = vld [vmem:[%s834 + $0x10c0] sm:$0xff]
                  %1373 = vst [vmem:[%s835 + $0x860] sm:$0xff] %v1372
                  %v1374 = vld [vmem:[%s834 + $0x10d0] sm:$0xff]
                  %1375 = vst [vmem:[%s835 + $0x868] sm:$0xff] %v1374
                  %v1376 = vld [vmem:[%s834 + $0x10e0] sm:$0xff]
                  %1377 = vst [vmem:[%s835 + $0x870] sm:$0xff] %v1376
                  %v1378 = vld [vmem:[%s834 + $0x10f0] sm:$0xff]
                  %1379 = vst [vmem:[%s835 + $0x878] sm:$0xff] %v1378
                  %v1380 = vld [vmem:[%s834 + $0x1100] sm:$0xff]
                  %1381 = vst [vmem:[%s835 + $0x880] sm:$0xff] %v1380
                  %v1382 = vld [vmem:[%s834 + $0x1110] sm:$0xff]
                  %1383 = vst [vmem:[%s835 + $0x888] sm:$0xff] %v1382
                  %v1384 = vld [vmem:[%s834 + $0x1120] sm:$0xff]
                  %1385 = vst [vmem:[%s835 + $0x890] sm:$0xff] %v1384
                  %v1386 = vld [vmem:[%s834 + $0x1130] sm:$0xff]
                  %1387 = vst [vmem:[%s835 + $0x898] sm:$0xff] %v1386
                  %v1388 = vld [vmem:[%s834 + $0x1140] sm:$0xff]
                  %1389 = vst [vmem:[%s835 + $0x8a0] sm:$0xff] %v1388
                  %v1390 = vld [vmem:[%s834 + $0x1150] sm:$0xff]
                  %1391 = vst [vmem:[%s835 + $0x8a8] sm:$0xff] %v1390
                  %v1392 = vld [vmem:[%s834 + $0x1160] sm:$0xff]
                  %1393 = vst [vmem:[%s835 + $0x8b0] sm:$0xff] %v1392
                  %v1394 = vld [vmem:[%s834 + $0x1170] sm:$0xff]
                  %1395 = vst [vmem:[%s835 + $0x8b8] sm:$0xff] %v1394
                  %v1396 = vld [vmem:[%s834 + $0x1180] sm:$0xff]
                  %1397 = vst [vmem:[%s835 + $0x8c0] sm:$0xff] %v1396
                  %v1398 = vld [vmem:[%s834 + $0x1190] sm:$0xff]
                  %1399 = vst [vmem:[%s835 + $0x8c8] sm:$0xff] %v1398
                  %v1400 = vld [vmem:[%s834 + $0x11a0] sm:$0xff]
                  %1401 = vst [vmem:[%s835 + $0x8d0] sm:$0xff] %v1400
                  %v1402 = vld [vmem:[%s834 + $0x11b0] sm:$0xff]
                  %1403 = vst [vmem:[%s835 + $0x8d8] sm:$0xff] %v1402
                  %v1404 = vld [vmem:[%s834 + $0x11c0] sm:$0xff]
                  %1405 = vst [vmem:[%s835 + $0x8e0] sm:$0xff] %v1404
                  %v1406 = vld [vmem:[%s834 + $0x11d0] sm:$0xff]
                  %1407 = vst [vmem:[%s835 + $0x8e8] sm:$0xff] %v1406
                  %v1408 = vld [vmem:[%s834 + $0x11e0] sm:$0xff]
                  %1409 = vst [vmem:[%s835 + $0x8f0] sm:$0xff] %v1408
                  %v1410 = vld [vmem:[%s834 + $0x11f0] sm:$0xff]
                  %1411 = vst [vmem:[%s835 + $0x8f8] sm:$0xff] %v1410
                $region71: #{nature_conv_body.7} parent=65 // loop_footer
                  %s833 = sadd.s32 1, %s829
                $region72: #{nature_conv_body.7} parent=65 // loop_footer_branch
                  %828 = sbr.rel target = $region68
                $region73: #{nature_conv_body.7} parent=65 // loop_exit
                  _
              $region66: #{nature_conv_body.7} parent=50 // pred_fallthru
                _
              // Predicated region
              $region74: #{nature_conv_body.7} parent=50 // pred_check
                _
              $region75: #{nature_conv_body.7} parent=50 // pred_check_branch
                %1413 = sbr.rel target = $region77
              $region76: #{nature_conv_body.7} parent=50 // pred_region
                _
              $region77: #{nature_conv_body.7} parent=50 // pred_fallthru
                _
            $region51: #{nature_conv_body.7} parent=46 // pred_fallthru
              _
            // Predicated region
            $region52: #{nature_conv_body.7} parent=46 // pred_check
              _
            $region53: #{nature_conv_body.7} parent=46 // pred_check_branch
              %239 = sbr.rel target = $region55
            $region54: #{nature_conv_body.7} parent=46 // pred_region
              %s241 = ssub.s32 256, 1
              loop: start=0, step=1, limit=1
              $region56: #{nature_conv_body.7} parent=54 // loop_pre_header
                _
              $region57: #{nature_conv_body.7} parent=54 // loop_header
                %s243 = sphi 0, %s247
                %p244 = scmp.ge.s32.totalorder %s243, 1
                %s248 = sphi %s233, %s233
                %s249 = sphi %s227, %s227
              $region58: #{nature_conv_body.7} parent=54 // loop_header_branch
                %246 = sbr.rel (%p244) target = $region62
              $region59: #{nature_conv_body.7} parent=54 // loop_body
                %v250 = vld [vmem:[%s248] sm:%s241]
                %251 = vst [vmem:[%s249] sm:%s241] %v250
                %v252 = vld [vmem:[%s248 + $0x10] sm:%s241]
                %253 = vst [vmem:[%s249 + $0x8] sm:%s241] %v252
                %v254 = vld [vmem:[%s248 + $0x20] sm:%s241]
                %255 = vst [vmem:[%s249 + $0x10] sm:%s241] %v254
                %v256 = vld [vmem:[%s248 + $0x30] sm:%s241]
                %257 = vst [vmem:[%s249 + $0x18] sm:%s241] %v256
                %v258 = vld [vmem:[%s248 + $0x40] sm:%s241]
                %259 = vst [vmem:[%s249 + $0x20] sm:%s241] %v258
                %v260 = vld [vmem:[%s248 + $0x50] sm:%s241]
                %261 = vst [vmem:[%s249 + $0x28] sm:%s241] %v260
                %v262 = vld [vmem:[%s248 + $0x60] sm:%s241]
                %263 = vst [vmem:[%s249 + $0x30] sm:%s241] %v262
                %v264 = vld [vmem:[%s248 + $0x70] sm:%s241]
                %265 = vst [vmem:[%s249 + $0x38] sm:%s241] %v264
                %v266 = vld [vmem:[%s248 + $0x80] sm:%s241]
                %267 = vst [vmem:[%s249 + $0x40] sm:%s241] %v266
                %v268 = vld [vmem:[%s248 + $0x90] sm:%s241]
                %269 = vst [vmem:[%s249 + $0x48] sm:%s241] %v268
                %v270 = vld [vmem:[%s248 + $0xa0] sm:%s241]
                %271 = vst [vmem:[%s249 + $0x50] sm:%s241] %v270
                %v272 = vld [vmem:[%s248 + $0xb0] sm:%s241]
                %273 = vst [vmem:[%s249 + $0x58] sm:%s241] %v272
                %v274 = vld [vmem:[%s248 + $0xc0] sm:%s241]
                %275 = vst [vmem:[%s249 + $0x60] sm:%s241] %v274
                %v276 = vld [vmem:[%s248 + $0xd0] sm:%s241]
                %277 = vst [vmem:[%s249 + $0x68] sm:%s241] %v276
                %v278 = vld [vmem:[%s248 + $0xe0] sm:%s241]
                %279 = vst [vmem:[%s249 + $0x70] sm:%s241] %v278
                %v280 = vld [vmem:[%s248 + $0xf0] sm:%s241]
                %281 = vst [vmem:[%s249 + $0x78] sm:%s241] %v280
                %v282 = vld [vmem:[%s248 + $0x100] sm:%s241]
                %283 = vst [vmem:[%s249 + $0x80] sm:%s241] %v282
                %v284 = vld [vmem:[%s248 + $0x110] sm:%s241]
                %285 = vst [vmem:[%s249 + $0x88] sm:%s241] %v284
                %v286 = vld [vmem:[%s248 + $0x120] sm:%s241]
                %287 = vst [vmem:[%s249 + $0x90] sm:%s241] %v286
                %v288 = vld [vmem:[%s248 + $0x130] sm:%s241]
                %289 = vst [vmem:[%s249 + $0x98] sm:%s241] %v288
                %v290 = vld [vmem:[%s248 + $0x140] sm:%s241]
                %291 = vst [vmem:[%s249 + $0xa0] sm:%s241] %v290
                %v292 = vld [vmem:[%s248 + $0x150] sm:%s241]
                %293 = vst [vmem:[%s249 + $0xa8] sm:%s241] %v292
                %v294 = vld [vmem:[%s248 + $0x160] sm:%s241]
                %295 = vst [vmem:[%s249 + $0xb0] sm:%s241] %v294
                %v296 = vld [vmem:[%s248 + $0x170] sm:%s241]
                %297 = vst [vmem:[%s249 + $0xb8] sm:%s241] %v296
                %v298 = vld [vmem:[%s248 + $0x180] sm:%s241]
                %299 = vst [vmem:[%s249 + $0xc0] sm:%s241] %v298
                %v300 = vld [vmem:[%s248 + $0x190] sm:%s241]
                %301 = vst [vmem:[%s249 + $0xc8] sm:%s241] %v300
                %v302 = vld [vmem:[%s248 + $0x1a0] sm:%s241]
                %303 = vst [vmem:[%s249 + $0xd0] sm:%s241] %v302
                %v304 = vld [vmem:[%s248 + $0x1b0] sm:%s241]
                %305 = vst [vmem:[%s249 + $0xd8] sm:%s241] %v304
                %v306 = vld [vmem:[%s248 + $0x1c0] sm:%s241]
                %307 = vst [vmem:[%s249 + $0xe0] sm:%s241] %v306
                %v308 = vld [vmem:[%s248 + $0x1d0] sm:%s241]
                %309 = vst [vmem:[%s249 + $0xe8] sm:%s241] %v308
                %v310 = vld [vmem:[%s248 + $0x1e0] sm:%s241]
                %311 = vst [vmem:[%s249 + $0xf0] sm:%s241] %v310
                %v312 = vld [vmem:[%s248 + $0x1f0] sm:%s241]
                %313 = vst [vmem:[%s249 + $0xf8] sm:%s241] %v312
                %v314 = vld [vmem:[%s248 + $0x200] sm:%s241]
                %315 = vst [vmem:[%s249 + $0x100] sm:%s241] %v314
                %v316 = vld [vmem:[%s248 + $0x210] sm:%s241]
                %317 = vst [vmem:[%s249 + $0x108] sm:%s241] %v316
                %v318 = vld [vmem:[%s248 + $0x220] sm:%s241]
                %319 = vst [vmem:[%s249 + $0x110] sm:%s241] %v318
                %v320 = vld [vmem:[%s248 + $0x230] sm:%s241]
                %321 = vst [vmem:[%s249 + $0x118] sm:%s241] %v320
                %v322 = vld [vmem:[%s248 + $0x240] sm:%s241]
                %323 = vst [vmem:[%s249 + $0x120] sm:%s241] %v322
                %v324 = vld [vmem:[%s248 + $0x250] sm:%s241]
                %325 = vst [vmem:[%s249 + $0x128] sm:%s241] %v324
                %v326 = vld [vmem:[%s248 + $0x260] sm:%s241]
                %327 = vst [vmem:[%s249 + $0x130] sm:%s241] %v326
                %v328 = vld [vmem:[%s248 + $0x270] sm:%s241]
                %329 = vst [vmem:[%s249 + $0x138] sm:%s241] %v328
                %v330 = vld [vmem:[%s248 + $0x280] sm:%s241]
                %331 = vst [vmem:[%s249 + $0x140] sm:%s241] %v330
                %v332 = vld [vmem:[%s248 + $0x290] sm:%s241]
                %333 = vst [vmem:[%s249 + $0x148] sm:%s241] %v332
                %v334 = vld [vmem:[%s248 + $0x2a0] sm:%s241]
                %335 = vst [vmem:[%s249 + $0x150] sm:%s241] %v334
                %v336 = vld [vmem:[%s248 + $0x2b0] sm:%s241]
                %337 = vst [vmem:[%s249 + $0x158] sm:%s241] %v336
                %v338 = vld [vmem:[%s248 + $0x2c0] sm:%s241]
                %339 = vst [vmem:[%s249 + $0x160] sm:%s241] %v338
                %v340 = vld [vmem:[%s248 + $0x2d0] sm:%s241]
                %341 = vst [vmem:[%s249 + $0x168] sm:%s241] %v340
                %v342 = vld [vmem:[%s248 + $0x2e0] sm:%s241]
                %343 = vst [vmem:[%s249 + $0x170] sm:%s241] %v342
                %v344 = vld [vmem:[%s248 + $0x2f0] sm:%s241]
                %345 = vst [vmem:[%s249 + $0x178] sm:%s241] %v344
                %v346 = vld [vmem:[%s248 + $0x300] sm:%s241]
                %347 = vst [vmem:[%s249 + $0x180] sm:%s241] %v346
                %v348 = vld [vmem:[%s248 + $0x310] sm:%s241]
                %349 = vst [vmem:[%s249 + $0x188] sm:%s241] %v348
                %v350 = vld [vmem:[%s248 + $0x320] sm:%s241]
                %351 = vst [vmem:[%s249 + $0x190] sm:%s241] %v350
                %v352 = vld [vmem:[%s248 + $0x330] sm:%s241]
                %353 = vst [vmem:[%s249 + $0x198] sm:%s241] %v352
                %v354 = vld [vmem:[%s248 + $0x340] sm:%s241]
                %355 = vst [vmem:[%s249 + $0x1a0] sm:%s241] %v354
                %v356 = vld [vmem:[%s248 + $0x350] sm:%s241]
                %357 = vst [vmem:[%s249 + $0x1a8] sm:%s241] %v356
                %v358 = vld [vmem:[%s248 + $0x360] sm:%s241]
                %359 = vst [vmem:[%s249 + $0x1b0] sm:%s241] %v358
                %v360 = vld [vmem:[%s248 + $0x370] sm:%s241]
                %361 = vst [vmem:[%s249 + $0x1b8] sm:%s241] %v360
                %v362 = vld [vmem:[%s248 + $0x380] sm:%s241]
                %363 = vst [vmem:[%s249 + $0x1c0] sm:%s241] %v362
                %v364 = vld [vmem:[%s248 + $0x390] sm:%s241]
                %365 = vst [vmem:[%s249 + $0x1c8] sm:%s241] %v364
                %v366 = vld [vmem:[%s248 + $0x3a0] sm:%s241]
                %367 = vst [vmem:[%s249 + $0x1d0] sm:%s241] %v366
                %v368 = vld [vmem:[%s248 + $0x3b0] sm:%s241]
                %369 = vst [vmem:[%s249 + $0x1d8] sm:%s241] %v368
                %v370 = vld [vmem:[%s248 + $0x3c0] sm:%s241]
                %371 = vst [vmem:[%s249 + $0x1e0] sm:%s241] %v370
                %v372 = vld [vmem:[%s248 + $0x3d0] sm:%s241]
                %373 = vst [vmem:[%s249 + $0x1e8] sm:%s241] %v372
                %v374 = vld [vmem:[%s248 + $0x3e0] sm:%s241]
                %375 = vst [vmem:[%s249 + $0x1f0] sm:%s241] %v374
                %v376 = vld [vmem:[%s248 + $0x3f0] sm:%s241]
                %377 = vst [vmem:[%s249 + $0x1f8] sm:%s241] %v376
                %v378 = vld [vmem:[%s248 + $0x400] sm:%s241]
                %379 = vst [vmem:[%s249 + $0x200] sm:%s241] %v378
                %v380 = vld [vmem:[%s248 + $0x410] sm:%s241]
                %381 = vst [vmem:[%s249 + $0x208] sm:%s241] %v380
                %v382 = vld [vmem:[%s248 + $0x420] sm:%s241]
                %383 = vst [vmem:[%s249 + $0x210] sm:%s241] %v382
                %v384 = vld [vmem:[%s248 + $0x430] sm:%s241]
                %385 = vst [vmem:[%s249 + $0x218] sm:%s241] %v384
                %v386 = vld [vmem:[%s248 + $0x440] sm:%s241]
                %387 = vst [vmem:[%s249 + $0x220] sm:%s241] %v386
                %v388 = vld [vmem:[%s248 + $0x450] sm:%s241]
                %389 = vst [vmem:[%s249 + $0x228] sm:%s241] %v388
                %v390 = vld [vmem:[%s248 + $0x460] sm:%s241]
                %391 = vst [vmem:[%s249 + $0x230] sm:%s241] %v390
                %v392 = vld [vmem:[%s248 + $0x470] sm:%s241]
                %393 = vst [vmem:[%s249 + $0x238] sm:%s241] %v392
                %v394 = vld [vmem:[%s248 + $0x480] sm:%s241]
                %395 = vst [vmem:[%s249 + $0x240] sm:%s241] %v394
                %v396 = vld [vmem:[%s248 + $0x490] sm:%s241]
                %397 = vst [vmem:[%s249 + $0x248] sm:%s241] %v396
                %v398 = vld [vmem:[%s248 + $0x4a0] sm:%s241]
                %399 = vst [vmem:[%s249 + $0x250] sm:%s241] %v398
                %v400 = vld [vmem:[%s248 + $0x4b0] sm:%s241]
                %401 = vst [vmem:[%s249 + $0x258] sm:%s241] %v400
                %v402 = vld [vmem:[%s248 + $0x4c0] sm:%s241]
                %403 = vst [vmem:[%s249 + $0x260] sm:%s241] %v402
                %v404 = vld [vmem:[%s248 + $0x4d0] sm:%s241]
                %405 = vst [vmem:[%s249 + $0x268] sm:%s241] %v404
                %v406 = vld [vmem:[%s248 + $0x4e0] sm:%s241]
                %407 = vst [vmem:[%s249 + $0x270] sm:%s241] %v406
                %v408 = vld [vmem:[%s248 + $0x4f0] sm:%s241]
                %409 = vst [vmem:[%s249 + $0x278] sm:%s241] %v408
                %v410 = vld [vmem:[%s248 + $0x500] sm:%s241]
                %411 = vst [vmem:[%s249 + $0x280] sm:%s241] %v410
                %v412 = vld [vmem:[%s248 + $0x510] sm:%s241]
                %413 = vst [vmem:[%s249 + $0x288] sm:%s241] %v412
                %v414 = vld [vmem:[%s248 + $0x520] sm:%s241]
                %415 = vst [vmem:[%s249 + $0x290] sm:%s241] %v414
                %v416 = vld [vmem:[%s248 + $0x530] sm:%s241]
                %417 = vst [vmem:[%s249 + $0x298] sm:%s241] %v416
                %v418 = vld [vmem:[%s248 + $0x540] sm:%s241]
                %419 = vst [vmem:[%s249 + $0x2a0] sm:%s241] %v418
                %v420 = vld [vmem:[%s248 + $0x550] sm:%s241]
                %421 = vst [vmem:[%s249 + $0x2a8] sm:%s241] %v420
                %v422 = vld [vmem:[%s248 + $0x560] sm:%s241]
                %423 = vst [vmem:[%s249 + $0x2b0] sm:%s241] %v422
                %v424 = vld [vmem:[%s248 + $0x570] sm:%s241]
                %425 = vst [vmem:[%s249 + $0x2b8] sm:%s241] %v424
                %v426 = vld [vmem:[%s248 + $0x580] sm:%s241]
                %427 = vst [vmem:[%s249 + $0x2c0] sm:%s241] %v426
                %v428 = vld [vmem:[%s248 + $0x590] sm:%s241]
                %429 = vst [vmem:[%s249 + $0x2c8] sm:%s241] %v428
                %v430 = vld [vmem:[%s248 + $0x5a0] sm:%s241]
                %431 = vst [vmem:[%s249 + $0x2d0] sm:%s241] %v430
                %v432 = vld [vmem:[%s248 + $0x5b0] sm:%s241]
                %433 = vst [vmem:[%s249 + $0x2d8] sm:%s241] %v432
                %v434 = vld [vmem:[%s248 + $0x5c0] sm:%s241]
                %435 = vst [vmem:[%s249 + $0x2e0] sm:%s241] %v434
                %v436 = vld [vmem:[%s248 + $0x5d0] sm:%s241]
                %437 = vst [vmem:[%s249 + $0x2e8] sm:%s241] %v436
                %v438 = vld [vmem:[%s248 + $0x5e0] sm:%s241]
                %439 = vst [vmem:[%s249 + $0x2f0] sm:%s241] %v438
                %v440 = vld [vmem:[%s248 + $0x5f0] sm:%s241]
                %441 = vst [vmem:[%s249 + $0x2f8] sm:%s241] %v440
                %v442 = vld [vmem:[%s248 + $0x600] sm:%s241]
                %443 = vst [vmem:[%s249 + $0x300] sm:%s241] %v442
                %v444 = vld [vmem:[%s248 + $0x610] sm:%s241]
                %445 = vst [vmem:[%s249 + $0x308] sm:%s241] %v444
                %v446 = vld [vmem:[%s248 + $0x620] sm:%s241]
                %447 = vst [vmem:[%s249 + $0x310] sm:%s241] %v446
                %v448 = vld [vmem:[%s248 + $0x630] sm:%s241]
                %449 = vst [vmem:[%s249 + $0x318] sm:%s241] %v448
                %v450 = vld [vmem:[%s248 + $0x640] sm:%s241]
                %451 = vst [vmem:[%s249 + $0x320] sm:%s241] %v450
                %v452 = vld [vmem:[%s248 + $0x650] sm:%s241]
                %453 = vst [vmem:[%s249 + $0x328] sm:%s241] %v452
                %v454 = vld [vmem:[%s248 + $0x660] sm:%s241]
                %455 = vst [vmem:[%s249 + $0x330] sm:%s241] %v454
                %v456 = vld [vmem:[%s248 + $0x670] sm:%s241]
                %457 = vst [vmem:[%s249 + $0x338] sm:%s241] %v456
                %v458 = vld [vmem:[%s248 + $0x680] sm:%s241]
                %459 = vst [vmem:[%s249 + $0x340] sm:%s241] %v458
                %v460 = vld [vmem:[%s248 + $0x690] sm:%s241]
                %461 = vst [vmem:[%s249 + $0x348] sm:%s241] %v460
                %v462 = vld [vmem:[%s248 + $0x6a0] sm:%s241]
                %463 = vst [vmem:[%s249 + $0x350] sm:%s241] %v462
                %v464 = vld [vmem:[%s248 + $0x6b0] sm:%s241]
                %465 = vst [vmem:[%s249 + $0x358] sm:%s241] %v464
                %v466 = vld [vmem:[%s248 + $0x6c0] sm:%s241]
                %467 = vst [vmem:[%s249 + $0x360] sm:%s241] %v466
                %v468 = vld [vmem:[%s248 + $0x6d0] sm:%s241]
                %469 = vst [vmem:[%s249 + $0x368] sm:%s241] %v468
                %v470 = vld [vmem:[%s248 + $0x6e0] sm:%s241]
                %471 = vst [vmem:[%s249 + $0x370] sm:%s241] %v470
                %v472 = vld [vmem:[%s248 + $0x6f0] sm:%s241]
                %473 = vst [vmem:[%s249 + $0x378] sm:%s241] %v472
                %v474 = vld [vmem:[%s248 + $0x700] sm:%s241]
                %475 = vst [vmem:[%s249 + $0x380] sm:%s241] %v474
                %v476 = vld [vmem:[%s248 + $0x710] sm:%s241]
                %477 = vst [vmem:[%s249 + $0x388] sm:%s241] %v476
                %v478 = vld [vmem:[%s248 + $0x720] sm:%s241]
                %479 = vst [vmem:[%s249 + $0x390] sm:%s241] %v478
                %v480 = vld [vmem:[%s248 + $0x730] sm:%s241]
                %481 = vst [vmem:[%s249 + $0x398] sm:%s241] %v480
                %v482 = vld [vmem:[%s248 + $0x740] sm:%s241]
                %483 = vst [vmem:[%s249 + $0x3a0] sm:%s241] %v482
                %v484 = vld [vmem:[%s248 + $0x750] sm:%s241]
                %485 = vst [vmem:[%s249 + $0x3a8] sm:%s241] %v484
                %v486 = vld [vmem:[%s248 + $0x760] sm:%s241]
                %487 = vst [vmem:[%s249 + $0x3b0] sm:%s241] %v486
                %v488 = vld [vmem:[%s248 + $0x770] sm:%s241]
                %489 = vst [vmem:[%s249 + $0x3b8] sm:%s241] %v488
                %v490 = vld [vmem:[%s248 + $0x780] sm:%s241]
                %491 = vst [vmem:[%s249 + $0x3c0] sm:%s241] %v490
                %v492 = vld [vmem:[%s248 + $0x790] sm:%s241]
                %493 = vst [vmem:[%s249 + $0x3c8] sm:%s241] %v492
                %v494 = vld [vmem:[%s248 + $0x7a0] sm:%s241]
                %495 = vst [vmem:[%s249 + $0x3d0] sm:%s241] %v494
                %v496 = vld [vmem:[%s248 + $0x7b0] sm:%s241]
                %497 = vst [vmem:[%s249 + $0x3d8] sm:%s241] %v496
                %v498 = vld [vmem:[%s248 + $0x7c0] sm:%s241]
                %499 = vst [vmem:[%s249 + $0x3e0] sm:%s241] %v498
                %v500 = vld [vmem:[%s248 + $0x7d0] sm:%s241]
                %501 = vst [vmem:[%s249 + $0x3e8] sm:%s241] %v500
                %v502 = vld [vmem:[%s248 + $0x7e0] sm:%s241]
                %503 = vst [vmem:[%s249 + $0x3f0] sm:%s241] %v502
                %v504 = vld [vmem:[%s248 + $0x7f0] sm:%s241]
                %505 = vst [vmem:[%s249 + $0x3f8] sm:%s241] %v504
                %v506 = vld [vmem:[%s248 + $0x800] sm:%s241]
                %507 = vst [vmem:[%s249 + $0x400] sm:%s241] %v506
                %v508 = vld [vmem:[%s248 + $0x810] sm:%s241]
                %509 = vst [vmem:[%s249 + $0x408] sm:%s241] %v508
                %v510 = vld [vmem:[%s248 + $0x820] sm:%s241]
                %511 = vst [vmem:[%s249 + $0x410] sm:%s241] %v510
                %v512 = vld [vmem:[%s248 + $0x830] sm:%s241]
                %513 = vst [vmem:[%s249 + $0x418] sm:%s241] %v512
                %v514 = vld [vmem:[%s248 + $0x840] sm:%s241]
                %515 = vst [vmem:[%s249 + $0x420] sm:%s241] %v514
                %v516 = vld [vmem:[%s248 + $0x850] sm:%s241]
                %517 = vst [vmem:[%s249 + $0x428] sm:%s241] %v516
                %v518 = vld [vmem:[%s248 + $0x860] sm:%s241]
                %519 = vst [vmem:[%s249 + $0x430] sm:%s241] %v518
                %v520 = vld [vmem:[%s248 + $0x870] sm:%s241]
                %521 = vst [vmem:[%s249 + $0x438] sm:%s241] %v520
                %v522 = vld [vmem:[%s248 + $0x880] sm:%s241]
                %523 = vst [vmem:[%s249 + $0x440] sm:%s241] %v522
                %v524 = vld [vmem:[%s248 + $0x890] sm:%s241]
                %525 = vst [vmem:[%s249 + $0x448] sm:%s241] %v524
                %v526 = vld [vmem:[%s248 + $0x8a0] sm:%s241]
                %527 = vst [vmem:[%s249 + $0x450] sm:%s241] %v526
                %v528 = vld [vmem:[%s248 + $0x8b0] sm:%s241]
                %529 = vst [vmem:[%s249 + $0x458] sm:%s241] %v528
                %v530 = vld [vmem:[%s248 + $0x8c0] sm:%s241]
                %531 = vst [vmem:[%s249 + $0x460] sm:%s241] %v530
                %v532 = vld [vmem:[%s248 + $0x8d0] sm:%s241]
                %533 = vst [vmem:[%s249 + $0x468] sm:%s241] %v532
                %v534 = vld [vmem:[%s248 + $0x8e0] sm:%s241]
                %535 = vst [vmem:[%s249 + $0x470] sm:%s241] %v534
                %v536 = vld [vmem:[%s248 + $0x8f0] sm:%s241]
                %537 = vst [vmem:[%s249 + $0x478] sm:%s241] %v536
                %v538 = vld [vmem:[%s248 + $0x900] sm:%s241]
                %539 = vst [vmem:[%s249 + $0x480] sm:%s241] %v538
                %v540 = vld [vmem:[%s248 + $0x910] sm:%s241]
                %541 = vst [vmem:[%s249 + $0x488] sm:%s241] %v540
                %v542 = vld [vmem:[%s248 + $0x920] sm:%s241]
                %543 = vst [vmem:[%s249 + $0x490] sm:%s241] %v542
                %v544 = vld [vmem:[%s248 + $0x930] sm:%s241]
                %545 = vst [vmem:[%s249 + $0x498] sm:%s241] %v544
                %v546 = vld [vmem:[%s248 + $0x940] sm:%s241]
                %547 = vst [vmem:[%s249 + $0x4a0] sm:%s241] %v546
                %v548 = vld [vmem:[%s248 + $0x950] sm:%s241]
                %549 = vst [vmem:[%s249 + $0x4a8] sm:%s241] %v548
                %v550 = vld [vmem:[%s248 + $0x960] sm:%s241]
                %551 = vst [vmem:[%s249 + $0x4b0] sm:%s241] %v550
                %v552 = vld [vmem:[%s248 + $0x970] sm:%s241]
                %553 = vst [vmem:[%s249 + $0x4b8] sm:%s241] %v552
                %v554 = vld [vmem:[%s248 + $0x980] sm:%s241]
                %555 = vst [vmem:[%s249 + $0x4c0] sm:%s241] %v554
                %v556 = vld [vmem:[%s248 + $0x990] sm:%s241]
                %557 = vst [vmem:[%s249 + $0x4c8] sm:%s241] %v556
                %v558 = vld [vmem:[%s248 + $0x9a0] sm:%s241]
                %559 = vst [vmem:[%s249 + $0x4d0] sm:%s241] %v558
                %v560 = vld [vmem:[%s248 + $0x9b0] sm:%s241]
                %561 = vst [vmem:[%s249 + $0x4d8] sm:%s241] %v560
                %v562 = vld [vmem:[%s248 + $0x9c0] sm:%s241]
                %563 = vst [vmem:[%s249 + $0x4e0] sm:%s241] %v562
                %v564 = vld [vmem:[%s248 + $0x9d0] sm:%s241]
                %565 = vst [vmem:[%s249 + $0x4e8] sm:%s241] %v564
                %v566 = vld [vmem:[%s248 + $0x9e0] sm:%s241]
                %567 = vst [vmem:[%s249 + $0x4f0] sm:%s241] %v566
                %v568 = vld [vmem:[%s248 + $0x9f0] sm:%s241]
                %569 = vst [vmem:[%s249 + $0x4f8] sm:%s241] %v568
                %v570 = vld [vmem:[%s248 + $0xa00] sm:%s241]
                %571 = vst [vmem:[%s249 + $0x500] sm:%s241] %v570
                %v572 = vld [vmem:[%s248 + $0xa10] sm:%s241]
                %573 = vst [vmem:[%s249 + $0x508] sm:%s241] %v572
                %v574 = vld [vmem:[%s248 + $0xa20] sm:%s241]
                %575 = vst [vmem:[%s249 + $0x510] sm:%s241] %v574
                %v576 = vld [vmem:[%s248 + $0xa30] sm:%s241]
                %577 = vst [vmem:[%s249 + $0x518] sm:%s241] %v576
                %v578 = vld [vmem:[%s248 + $0xa40] sm:%s241]
                %579 = vst [vmem:[%s249 + $0x520] sm:%s241] %v578
                %v580 = vld [vmem:[%s248 + $0xa50] sm:%s241]
                %581 = vst [vmem:[%s249 + $0x528] sm:%s241] %v580
                %v582 = vld [vmem:[%s248 + $0xa60] sm:%s241]
                %583 = vst [vmem:[%s249 + $0x530] sm:%s241] %v582
                %v584 = vld [vmem:[%s248 + $0xa70] sm:%s241]
                %585 = vst [vmem:[%s249 + $0x538] sm:%s241] %v584
                %v586 = vld [vmem:[%s248 + $0xa80] sm:%s241]
                %587 = vst [vmem:[%s249 + $0x540] sm:%s241] %v586
                %v588 = vld [vmem:[%s248 + $0xa90] sm:%s241]
                %589 = vst [vmem:[%s249 + $0x548] sm:%s241] %v588
                %v590 = vld [vmem:[%s248 + $0xaa0] sm:%s241]
                %591 = vst [vmem:[%s249 + $0x550] sm:%s241] %v590
                %v592 = vld [vmem:[%s248 + $0xab0] sm:%s241]
                %593 = vst [vmem:[%s249 + $0x558] sm:%s241] %v592
                %v594 = vld [vmem:[%s248 + $0xac0] sm:%s241]
                %595 = vst [vmem:[%s249 + $0x560] sm:%s241] %v594
                %v596 = vld [vmem:[%s248 + $0xad0] sm:%s241]
                %597 = vst [vmem:[%s249 + $0x568] sm:%s241] %v596
                %v598 = vld [vmem:[%s248 + $0xae0] sm:%s241]
                %599 = vst [vmem:[%s249 + $0x570] sm:%s241] %v598
                %v600 = vld [vmem:[%s248 + $0xaf0] sm:%s241]
                %601 = vst [vmem:[%s249 + $0x578] sm:%s241] %v600
                %v602 = vld [vmem:[%s248 + $0xb00] sm:%s241]
                %603 = vst [vmem:[%s249 + $0x580] sm:%s241] %v602
                %v604 = vld [vmem:[%s248 + $0xb10] sm:%s241]
                %605 = vst [vmem:[%s249 + $0x588] sm:%s241] %v604
                %v606 = vld [vmem:[%s248 + $0xb20] sm:%s241]
                %607 = vst [vmem:[%s249 + $0x590] sm:%s241] %v606
                %v608 = vld [vmem:[%s248 + $0xb30] sm:%s241]
                %609 = vst [vmem:[%s249 + $0x598] sm:%s241] %v608
                %v610 = vld [vmem:[%s248 + $0xb40] sm:%s241]
                %611 = vst [vmem:[%s249 + $0x5a0] sm:%s241] %v610
                %v612 = vld [vmem:[%s248 + $0xb50] sm:%s241]
                %613 = vst [vmem:[%s249 + $0x5a8] sm:%s241] %v612
                %v614 = vld [vmem:[%s248 + $0xb60] sm:%s241]
                %615 = vst [vmem:[%s249 + $0x5b0] sm:%s241] %v614
                %v616 = vld [vmem:[%s248 + $0xb70] sm:%s241]
                %617 = vst [vmem:[%s249 + $0x5b8] sm:%s241] %v616
                %v618 = vld [vmem:[%s248 + $0xb80] sm:%s241]
                %619 = vst [vmem:[%s249 + $0x5c0] sm:%s241] %v618
                %v620 = vld [vmem:[%s248 + $0xb90] sm:%s241]
                %621 = vst [vmem:[%s249 + $0x5c8] sm:%s241] %v620
                %v622 = vld [vmem:[%s248 + $0xba0] sm:%s241]
                %623 = vst [vmem:[%s249 + $0x5d0] sm:%s241] %v622
                %v624 = vld [vmem:[%s248 + $0xbb0] sm:%s241]
                %625 = vst [vmem:[%s249 + $0x5d8] sm:%s241] %v624
                %v626 = vld [vmem:[%s248 + $0xbc0] sm:%s241]
                %627 = vst [vmem:[%s249 + $0x5e0] sm:%s241] %v626
                %v628 = vld [vmem:[%s248 + $0xbd0] sm:%s241]
                %629 = vst [vmem:[%s249 + $0x5e8] sm:%s241] %v628
                %v630 = vld [vmem:[%s248 + $0xbe0] sm:%s241]
                %631 = vst [vmem:[%s249 + $0x5f0] sm:%s241] %v630
                %v632 = vld [vmem:[%s248 + $0xbf0] sm:%s241]
                %633 = vst [vmem:[%s249 + $0x5f8] sm:%s241] %v632
                %v634 = vld [vmem:[%s248 + $0xc00] sm:%s241]
                %635 = vst [vmem:[%s249 + $0x600] sm:%s241] %v634
                %v636 = vld [vmem:[%s248 + $0xc10] sm:%s241]
                %637 = vst [vmem:[%s249 + $0x608] sm:%s241] %v636
                %v638 = vld [vmem:[%s248 + $0xc20] sm:%s241]
                %639 = vst [vmem:[%s249 + $0x610] sm:%s241] %v638
                %v640 = vld [vmem:[%s248 + $0xc30] sm:%s241]
                %641 = vst [vmem:[%s249 + $0x618] sm:%s241] %v640
                %v642 = vld [vmem:[%s248 + $0xc40] sm:%s241]
                %643 = vst [vmem:[%s249 + $0x620] sm:%s241] %v642
                %v644 = vld [vmem:[%s248 + $0xc50] sm:%s241]
                %645 = vst [vmem:[%s249 + $0x628] sm:%s241] %v644
                %v646 = vld [vmem:[%s248 + $0xc60] sm:%s241]
                %647 = vst [vmem:[%s249 + $0x630] sm:%s241] %v646
                %v648 = vld [vmem:[%s248 + $0xc70] sm:%s241]
                %649 = vst [vmem:[%s249 + $0x638] sm:%s241] %v648
                %v650 = vld [vmem:[%s248 + $0xc80] sm:%s241]
                %651 = vst [vmem:[%s249 + $0x640] sm:%s241] %v650
                %v652 = vld [vmem:[%s248 + $0xc90] sm:%s241]
                %653 = vst [vmem:[%s249 + $0x648] sm:%s241] %v652
                %v654 = vld [vmem:[%s248 + $0xca0] sm:%s241]
                %655 = vst [vmem:[%s249 + $0x650] sm:%s241] %v654
                %v656 = vld [vmem:[%s248 + $0xcb0] sm:%s241]
                %657 = vst [vmem:[%s249 + $0x658] sm:%s241] %v656
                %v658 = vld [vmem:[%s248 + $0xcc0] sm:%s241]
                %659 = vst [vmem:[%s249 + $0x660] sm:%s241] %v658
                %v660 = vld [vmem:[%s248 + $0xcd0] sm:%s241]
                %661 = vst [vmem:[%s249 + $0x668] sm:%s241] %v660
                %v662 = vld [vmem:[%s248 + $0xce0] sm:%s241]
                %663 = vst [vmem:[%s249 + $0x670] sm:%s241] %v662
                %v664 = vld [vmem:[%s248 + $0xcf0] sm:%s241]
                %665 = vst [vmem:[%s249 + $0x678] sm:%s241] %v664
                %v666 = vld [vmem:[%s248 + $0xd00] sm:%s241]
                %667 = vst [vmem:[%s249 + $0x680] sm:%s241] %v666
                %v668 = vld [vmem:[%s248 + $0xd10] sm:%s241]
                %669 = vst [vmem:[%s249 + $0x688] sm:%s241] %v668
                %v670 = vld [vmem:[%s248 + $0xd20] sm:%s241]
                %671 = vst [vmem:[%s249 + $0x690] sm:%s241] %v670
                %v672 = vld [vmem:[%s248 + $0xd30] sm:%s241]
                %673 = vst [vmem:[%s249 + $0x698] sm:%s241] %v672
                %v674 = vld [vmem:[%s248 + $0xd40] sm:%s241]
                %675 = vst [vmem:[%s249 + $0x6a0] sm:%s241] %v674
                %v676 = vld [vmem:[%s248 + $0xd50] sm:%s241]
                %677 = vst [vmem:[%s249 + $0x6a8] sm:%s241] %v676
                %v678 = vld [vmem:[%s248 + $0xd60] sm:%s241]
                %679 = vst [vmem:[%s249 + $0x6b0] sm:%s241] %v678
                %v680 = vld [vmem:[%s248 + $0xd70] sm:%s241]
                %681 = vst [vmem:[%s249 + $0x6b8] sm:%s241] %v680
                %v682 = vld [vmem:[%s248 + $0xd80] sm:%s241]
                %683 = vst [vmem:[%s249 + $0x6c0] sm:%s241] %v682
                %v684 = vld [vmem:[%s248 + $0xd90] sm:%s241]
                %685 = vst [vmem:[%s249 + $0x6c8] sm:%s241] %v684
                %v686 = vld [vmem:[%s248 + $0xda0] sm:%s241]
                %687 = vst [vmem:[%s249 + $0x6d0] sm:%s241] %v686
                %v688 = vld [vmem:[%s248 + $0xdb0] sm:%s241]
                %689 = vst [vmem:[%s249 + $0x6d8] sm:%s241] %v688
                %v690 = vld [vmem:[%s248 + $0xdc0] sm:%s241]
                %691 = vst [vmem:[%s249 + $0x6e0] sm:%s241] %v690
                %v692 = vld [vmem:[%s248 + $0xdd0] sm:%s241]
                %693 = vst [vmem:[%s249 + $0x6e8] sm:%s241] %v692
                %v694 = vld [vmem:[%s248 + $0xde0] sm:%s241]
                %695 = vst [vmem:[%s249 + $0x6f0] sm:%s241] %v694
                %v696 = vld [vmem:[%s248 + $0xdf0] sm:%s241]
                %697 = vst [vmem:[%s249 + $0x6f8] sm:%s241] %v696
                %v698 = vld [vmem:[%s248 + $0xe00] sm:%s241]
                %699 = vst [vmem:[%s249 + $0x700] sm:%s241] %v698
                %v700 = vld [vmem:[%s248 + $0xe10] sm:%s241]
                %701 = vst [vmem:[%s249 + $0x708] sm:%s241] %v700
                %v702 = vld [vmem:[%s248 + $0xe20] sm:%s241]
                %703 = vst [vmem:[%s249 + $0x710] sm:%s241] %v702
                %v704 = vld [vmem:[%s248 + $0xe30] sm:%s241]
                %705 = vst [vmem:[%s249 + $0x718] sm:%s241] %v704
                %v706 = vld [vmem:[%s248 + $0xe40] sm:%s241]
                %707 = vst [vmem:[%s249 + $0x720] sm:%s241] %v706
                %v708 = vld [vmem:[%s248 + $0xe50] sm:%s241]
                %709 = vst [vmem:[%s249 + $0x728] sm:%s241] %v708
                %v710 = vld [vmem:[%s248 + $0xe60] sm:%s241]
                %711 = vst [vmem:[%s249 + $0x730] sm:%s241] %v710
                %v712 = vld [vmem:[%s248 + $0xe70] sm:%s241]
                %713 = vst [vmem:[%s249 + $0x738] sm:%s241] %v712
                %v714 = vld [vmem:[%s248 + $0xe80] sm:%s241]
                %715 = vst [vmem:[%s249 + $0x740] sm:%s241] %v714
                %v716 = vld [vmem:[%s248 + $0xe90] sm:%s241]
                %717 = vst [vmem:[%s249 + $0x748] sm:%s241] %v716
                %v718 = vld [vmem:[%s248 + $0xea0] sm:%s241]
                %719 = vst [vmem:[%s249 + $0x750] sm:%s241] %v718
                %v720 = vld [vmem:[%s248 + $0xeb0] sm:%s241]
                %721 = vst [vmem:[%s249 + $0x758] sm:%s241] %v720
                %v722 = vld [vmem:[%s248 + $0xec0] sm:%s241]
                %723 = vst [vmem:[%s249 + $0x760] sm:%s241] %v722
                %v724 = vld [vmem:[%s248 + $0xed0] sm:%s241]
                %725 = vst [vmem:[%s249 + $0x768] sm:%s241] %v724
                %v726 = vld [vmem:[%s248 + $0xee0] sm:%s241]
                %727 = vst [vmem:[%s249 + $0x770] sm:%s241] %v726
                %v728 = vld [vmem:[%s248 + $0xef0] sm:%s241]
                %729 = vst [vmem:[%s249 + $0x778] sm:%s241] %v728
                %v730 = vld [vmem:[%s248 + $0xf00] sm:%s241]
                %731 = vst [vmem:[%s249 + $0x780] sm:%s241] %v730
                %v732 = vld [vmem:[%s248 + $0xf10] sm:%s241]
                %733 = vst [vmem:[%s249 + $0x788] sm:%s241] %v732
                %v734 = vld [vmem:[%s248 + $0xf20] sm:%s241]
                %735 = vst [vmem:[%s249 + $0x790] sm:%s241] %v734
                %v736 = vld [vmem:[%s248 + $0xf30] sm:%s241]
                %737 = vst [vmem:[%s249 + $0x798] sm:%s241] %v736
                %v738 = vld [vmem:[%s248 + $0xf40] sm:%s241]
                %739 = vst [vmem:[%s249 + $0x7a0] sm:%s241] %v738
                %v740 = vld [vmem:[%s248 + $0xf50] sm:%s241]
                %741 = vst [vmem:[%s249 + $0x7a8] sm:%s241] %v740
                %v742 = vld [vmem:[%s248 + $0xf60] sm:%s241]
                %743 = vst [vmem:[%s249 + $0x7b0] sm:%s241] %v742
                %v744 = vld [vmem:[%s248 + $0xf70] sm:%s241]
                %745 = vst [vmem:[%s249 + $0x7b8] sm:%s241] %v744
                %v746 = vld [vmem:[%s248 + $0xf80] sm:%s241]
                %747 = vst [vmem:[%s249 + $0x7c0] sm:%s241] %v746
                %v748 = vld [vmem:[%s248 + $0xf90] sm:%s241]
                %749 = vst [vmem:[%s249 + $0x7c8] sm:%s241] %v748
                %v750 = vld [vmem:[%s248 + $0xfa0] sm:%s241]
                %751 = vst [vmem:[%s249 + $0x7d0] sm:%s241] %v750
                %v752 = vld [vmem:[%s248 + $0xfb0] sm:%s241]
                %753 = vst [vmem:[%s249 + $0x7d8] sm:%s241] %v752
                %v754 = vld [vmem:[%s248 + $0xfc0] sm:%s241]
                %755 = vst [vmem:[%s249 + $0x7e0] sm:%s241] %v754
                %v756 = vld [vmem:[%s248 + $0xfd0] sm:%s241]
                %757 = vst [vmem:[%s249 + $0x7e8] sm:%s241] %v756
                %v758 = vld [vmem:[%s248 + $0xfe0] sm:%s241]
                %759 = vst [vmem:[%s249 + $0x7f0] sm:%s241] %v758
                %v760 = vld [vmem:[%s248 + $0xff0] sm:%s241]
                %761 = vst [vmem:[%s249 + $0x7f8] sm:%s241] %v760
                %v762 = vld [vmem:[%s248 + $0x1000] sm:%s241]
                %763 = vst [vmem:[%s249 + $0x800] sm:%s241] %v762
                %v764 = vld [vmem:[%s248 + $0x1010] sm:%s241]
                %765 = vst [vmem:[%s249 + $0x808] sm:%s241] %v764
                %v766 = vld [vmem:[%s248 + $0x1020] sm:%s241]
                %767 = vst [vmem:[%s249 + $0x810] sm:%s241] %v766
                %v768 = vld [vmem:[%s248 + $0x1030] sm:%s241]
                %769 = vst [vmem:[%s249 + $0x818] sm:%s241] %v768
                %v770 = vld [vmem:[%s248 + $0x1040] sm:%s241]
                %771 = vst [vmem:[%s249 + $0x820] sm:%s241] %v770
                %v772 = vld [vmem:[%s248 + $0x1050] sm:%s241]
                %773 = vst [vmem:[%s249 + $0x828] sm:%s241] %v772
                %v774 = vld [vmem:[%s248 + $0x1060] sm:%s241]
                %775 = vst [vmem:[%s249 + $0x830] sm:%s241] %v774
                %v776 = vld [vmem:[%s248 + $0x1070] sm:%s241]
                %777 = vst [vmem:[%s249 + $0x838] sm:%s241] %v776
                %v778 = vld [vmem:[%s248 + $0x1080] sm:%s241]
                %779 = vst [vmem:[%s249 + $0x840] sm:%s241] %v778
                %v780 = vld [vmem:[%s248 + $0x1090] sm:%s241]
                %781 = vst [vmem:[%s249 + $0x848] sm:%s241] %v780
                %v782 = vld [vmem:[%s248 + $0x10a0] sm:%s241]
                %783 = vst [vmem:[%s249 + $0x850] sm:%s241] %v782
                %v784 = vld [vmem:[%s248 + $0x10b0] sm:%s241]
                %785 = vst [vmem:[%s249 + $0x858] sm:%s241] %v784
                %v786 = vld [vmem:[%s248 + $0x10c0] sm:%s241]
                %787 = vst [vmem:[%s249 + $0x860] sm:%s241] %v786
                %v788 = vld [vmem:[%s248 + $0x10d0] sm:%s241]
                %789 = vst [vmem:[%s249 + $0x868] sm:%s241] %v788
                %v790 = vld [vmem:[%s248 + $0x10e0] sm:%s241]
                %791 = vst [vmem:[%s249 + $0x870] sm:%s241] %v790
                %v792 = vld [vmem:[%s248 + $0x10f0] sm:%s241]
                %793 = vst [vmem:[%s249 + $0x878] sm:%s241] %v792
                %v794 = vld [vmem:[%s248 + $0x1100] sm:%s241]
                %795 = vst [vmem:[%s249 + $0x880] sm:%s241] %v794
                %v796 = vld [vmem:[%s248 + $0x1110] sm:%s241]
                %797 = vst [vmem:[%s249 + $0x888] sm:%s241] %v796
                %v798 = vld [vmem:[%s248 + $0x1120] sm:%s241]
                %799 = vst [vmem:[%s249 + $0x890] sm:%s241] %v798
                %v800 = vld [vmem:[%s248 + $0x1130] sm:%s241]
                %801 = vst [vmem:[%s249 + $0x898] sm:%s241] %v800
                %v802 = vld [vmem:[%s248 + $0x1140] sm:%s241]
                %803 = vst [vmem:[%s249 + $0x8a0] sm:%s241] %v802
                %v804 = vld [vmem:[%s248 + $0x1150] sm:%s241]
                %805 = vst [vmem:[%s249 + $0x8a8] sm:%s241] %v804
                %v806 = vld [vmem:[%s248 + $0x1160] sm:%s241]
                %807 = vst [vmem:[%s249 + $0x8b0] sm:%s241] %v806
                %v808 = vld [vmem:[%s248 + $0x1170] sm:%s241]
                %809 = vst [vmem:[%s249 + $0x8b8] sm:%s241] %v808
                %v810 = vld [vmem:[%s248 + $0x1180] sm:%s241]
                %811 = vst [vmem:[%s249 + $0x8c0] sm:%s241] %v810
                %v812 = vld [vmem:[%s248 + $0x1190] sm:%s241]
                %813 = vst [vmem:[%s249 + $0x8c8] sm:%s241] %v812
                %v814 = vld [vmem:[%s248 + $0x11a0] sm:%s241]
                %815 = vst [vmem:[%s249 + $0x8d0] sm:%s241] %v814
                %v816 = vld [vmem:[%s248 + $0x11b0] sm:%s241]
                %817 = vst [vmem:[%s249 + $0x8d8] sm:%s241] %v816
                %v818 = vld [vmem:[%s248 + $0x11c0] sm:%s241]
                %819 = vst [vmem:[%s249 + $0x8e0] sm:%s241] %v818
                %v820 = vld [vmem:[%s248 + $0x11d0] sm:%s241]
                %821 = vst [vmem:[%s249 + $0x8e8] sm:%s241] %v820
                %v822 = vld [vmem:[%s248 + $0x11e0] sm:%s241]
                %823 = vst [vmem:[%s249 + $0x8f0] sm:%s241] %v822
                %v824 = vld [vmem:[%s248 + $0x11f0] sm:%s241]
                %825 = vst [vmem:[%s249 + $0x8f8] sm:%s241] %v824
              $region60: #{nature_conv_body.7} parent=54 // loop_footer
                %s247 = sadd.s32 1, %s243
              $region61: #{nature_conv_body.7} parent=54 // loop_footer_branch
                %242 = sbr.rel target = $region57
              $region62: #{nature_conv_body.7} parent=54 // loop_exit
                _
            $region55: #{nature_conv_body.7} parent=46 // pred_fallthru
              _
          $region47: #{nature_conv_body.7} parent=42 // pred_fallthru
            _
          %1414 = vnop
        $region43: #{nature_conv_body.7} parent=15 // pred_fallthru
          _
        // Predicated region
        $region78: #{nature_conv_body.7} parent=15 // pred_check
          %p1415 = pneg %p104
        $region79: #{nature_conv_body.7} parent=15 // pred_check_branch
          %1417 = sbr.rel (%p1415) target = $region81
        $region80: #{nature_conv_body.7} parent=15 // pred_region
          %s1418 = smul.u32 2, %s17
          %p1419 = scmp.lt.s32.totalorder %s1418, 3
          %s1420 = scalar_select %p1419, %s1418, 3
          %s1421 = scalar_lea.vmem %s2, %s1420
          %s1422 = smul.u32 2, %s17
        $region81: #{nature_conv_body.7} parent=15 // pred_fallthru
          _
      $region16: #{nature_conv_body.7} parent=5 // pred_fallthru
        _
      %p1423 = scmp.le.s32.totalorder 1, %s9
      %p1424 = scmp.lt.s32.totalorder %s9, 19
      %p1425 = pnand %p1423, %p1424
      %p1426 = pneg %p1425
      // Predicated region
      $region82: #{nature_conv_body.7} parent=5 // pred_check
        _
      $region83: #{nature_conv_body.7} parent=5 // pred_check_branch
        %1428 = sbr.rel (%p1425) target = $region85
      $region84: #{nature_conv_body.7} parent=5 // pred_region
        %s1429 = ssub.s32 %s9, 1
        %s1430 = sand.u32 %s43, 1
        %s1431 = sand.u32 %s43, 1
        %s1432 = smul.addr %s1431, 144
        %s1433 = scalar_lea.vmem [#allocation3], %s1432
        // Predicated region
        $region86: #{nature_conv_body.7} parent=84 // pred_check
          %p1434 = pneg %p56
        $region87: #{nature_conv_body.7} parent=84 // pred_check_branch
          %1436 = sbr.rel (%p1434) target = $region89
        $region88: #{nature_conv_body.7} parent=84 // pred_region
          _
        $region89: #{nature_conv_body.7} parent=84 // pred_fallthru
          _
        %s1437 = sand.u32 %s71, 1
        %s1438 = sand.u32 %s71, 1
        %s1439 = smul.addr %s1438, 2304
        %s1440 = scalar_lea.vmem [#allocation4], %s1439
        // Predicated region
        $region90: #{nature_conv_body.7} parent=84 // pred_check
          %p1441 = pneg %p84
        $region91: #{nature_conv_body.7} parent=84 // pred_check_branch
          %1443 = sbr.rel (%p1441) target = $region93
        $region92: #{nature_conv_body.7} parent=84 // pred_region
          _
        $region93: #{nature_conv_body.7} parent=84 // pred_fallthru
          _
        %s1444 = sand.u32 %s43, 1
        %s1445 = sand.u32 %s43, 1
        %s1446 = smul.addr %s1445, 144
        %s1447 = scalar_lea.vmem [#allocation3], %s1446
        %p1448 = pneg %p56
        %p1449 = pneg %p53
        %s1450 = sand.u32 %s71, 1
        %s1451 = sand.u32 %s71, 1
        %s1452 = smul.addr %s1451, 2304
        %s1453 = scalar_lea.vmem [#allocation4], %s1452
        %p1454 = pneg %p84
        %p1455 = pneg %p81
        %s1456 = smul.u32 2, %s20
        %p1457 = scmp.lt.s32.totalorder %s1456, 3
        %s1458 = scalar_select %p1457, %s1456, 3
        %s1459 = scalar_lea.vmem %s2, %s1458
        %p1460 = pneg %p110
        %p1461 = pneg %p107
        %p1462 = pneg %p138
        %p1463 = pneg %p135
        %s1464 = sand.u32 %s125, 1
        %s1465 = sand.u32 %s125, 1
        %s1466 = smul.addr %s1465, 32
        %s1467 = scalar_lea.vmem [#allocation5], %s1466
        %s1468 = smul.u32 2, %s19
        %s1469 = smul.u32 18, %s21
        %s1470 = smul.u32 288, %s21
        %s1471 = smul.u32 2, %s20
        %s1472 = smul.u32 2, %s20
        %p1473 = scmp.lt.s32.totalorder %s1472, 3
        %s1474 = scalar_select %p1473, %s1472, 3
        %s1475 = scalar_lea.vmem %s2, %s1474
        %s1476 = smul.u32 2, %s20
        %s1477 = smul.u32 2, %s19
        %s1478 = smul.u32 2, %s20
        %p1479 = scmp.eq.s32.totalorder %s21, 0
        // Predicated region
        $region94: #{nature_conv_body.7} parent=84 // pred_check
          %p1480 = pneg %p1479
        $region95: #{nature_conv_body.7} parent=84 // pred_check_branch
          %1482 = sbr.rel (%p1480) target = $region97
        $region96: #{nature_conv_body.7} parent=84 // pred_region
          %1483 = vst [vmem:[#allocation2] sm:$0xff] 0.0
          %1484 = vst [vmem:[#allocation2 + $0x8] sm:$0xff] 0.0
          %1485 = vst [vmem:[#allocation2 + $0x10] sm:$0xff] 0.0
          %1486 = vst [vmem:[#allocation2 + $0x18] sm:$0xff] 0.0
        $region97: #{nature_conv_body.7} parent=84 // pred_fallthru
          _
        %v1487 = vld [vmem:[#allocation2] sm:$0xff]
        %v1488 = vld [vmem:[#allocation2 + $0x8] sm:$0xff]
        %v1489 = vld [vmem:[#allocation2 + $0x10] sm:$0xff]
        %v1490 = vld [vmem:[#allocation2 + $0x18] sm:$0xff]
        %v1491 = vld [vmem:[%s1433] sm:$0xff]
        %v1492 = vld [vmem:[%s1433 + $0x8] sm:$0xff]
        %v1493 = vld [vmem:[%s1433 + $0x10] sm:$0xff]
        %v1494 = vld [vmem:[%s1433 + $0x18] sm:$0xff]
        %v1495 = vld [vmem:[%s1433 + $0x20] sm:$0xff]
        %v1496 = vld [vmem:[%s1433 + $0x28] sm:$0xff]
        %v1497 = vld [vmem:[%s1433 + $0x30] sm:$0xff]
        %v1498 = vld [vmem:[%s1433 + $0x38] sm:$0xff]
        %v1499 = vld [vmem:[%s1433 + $0x40] sm:$0xff]
        %v1500 = vld [vmem:[%s1433 + $0x48] sm:$0xff]
        %v1501 = vld [vmem:[%s1433 + $0x50] sm:$0xff]
        %v1502 = vld [vmem:[%s1433 + $0x58] sm:$0xff]
        %v1503 = vld [vmem:[%s1433 + $0x60] sm:$0xff]
        %v1504 = vld [vmem:[%s1433 + $0x68] sm:$0xff]
        %v1505 = vld [vmem:[%s1433 + $0x70] sm:$0xff]
        %v1506 = vld [vmem:[%s1433 + $0x78] sm:$0xff]
        %v1507 = vld [vmem:[%s1433 + $0x80] sm:$0xff]
        %v1508 = vld [vmem:[%s1433 + $0x88] sm:$0xff]
        %v1509 = vld [vmem:[%s1440] sm:$0xff]
        %v1510 = vld [vmem:[%s1440 + $0x8] sm:$0xff]
        %v1511 = vld [vmem:[%s1440 + $0x10] sm:$0xff]
        %v1512 = vld [vmem:[%s1440 + $0x18] sm:$0xff]
        %v1513 = vld [vmem:[%s1440 + $0x20] sm:$0xff]
        %v1514 = vld [vmem:[%s1440 + $0x28] sm:$0xff]
        %v1515 = vld [vmem:[%s1440 + $0x30] sm:$0xff]
        %v1516 = vld [vmem:[%s1440 + $0x38] sm:$0xff]
        %v1517 = vld [vmem:[%s1440 + $0x40] sm:$0xff]
        %v1518 = vld [vmem:[%s1440 + $0x48] sm:$0xff]
        %v1519 = vld [vmem:[%s1440 + $0x50] sm:$0xff]
        %v1520 = vld [vmem:[%s1440 + $0x58] sm:$0xff]
        %v1521 = vld [vmem:[%s1440 + $0x60] sm:$0xff]
        %v1522 = vld [vmem:[%s1440 + $0x68] sm:$0xff]
        %v1523 = vld [vmem:[%s1440 + $0x70] sm:$0xff]
        %v1524 = vld [vmem:[%s1440 + $0x78] sm:$0xff]
        %v1525 = vld [vmem:[%s1440 + $0x80] sm:$0xff]
        %v1526 = vld [vmem:[%s1440 + $0x88] sm:$0xff]
        %v1527 = vld [vmem:[%s1440 + $0x90] sm:$0xff]
        %v1528 = vld [vmem:[%s1440 + $0x98] sm:$0xff]
        %v1529 = vld [vmem:[%s1440 + $0xa0] sm:$0xff]
        %v1530 = vld [vmem:[%s1440 + $0xa8] sm:$0xff]
        %v1531 = vld [vmem:[%s1440 + $0xb0] sm:$0xff]
        %v1532 = vld [vmem:[%s1440 + $0xb8] sm:$0xff]
        %v1533 = vld [vmem:[%s1440 + $0xc0] sm:$0xff]
        %v1534 = vld [vmem:[%s1440 + $0xc8] sm:$0xff]
        %v1535 = vld [vmem:[%s1440 + $0xd0] sm:$0xff]
        %v1536 = vld [vmem:[%s1440 + $0xd8] sm:$0xff]
        %v1537 = vld [vmem:[%s1440 + $0xe0] sm:$0xff]
        %v1538 = vld [vmem:[%s1440 + $0xe8] sm:$0xff]
        %v1539 = vld [vmem:[%s1440 + $0xf0] sm:$0xff]
        %v1540 = vld [vmem:[%s1440 + $0xf8] sm:$0xff]
        %v1541 = vld [vmem:[%s1440 + $0x100] sm:$0xff]
        %v1542 = vld [vmem:[%s1440 + $0x108] sm:$0xff]
        %v1543 = vld [vmem:[%s1440 + $0x110] sm:$0xff]
        %v1544 = vld [vmem:[%s1440 + $0x118] sm:$0xff]
        %v1545 = vld [vmem:[%s1440 + $0x120] sm:$0xff]
        %v1546 = vld [vmem:[%s1440 + $0x128] sm:$0xff]
        %v1547 = vld [vmem:[%s1440 + $0x130] sm:$0xff]
        %v1548 = vld [vmem:[%s1440 + $0x138] sm:$0xff]
        %v1549 = vld [vmem:[%s1440 + $0x140] sm:$0xff]
        %v1550 = vld [vmem:[%s1440 + $0x148] sm:$0xff]
        %v1551 = vld [vmem:[%s1440 + $0x150] sm:$0xff]
        %v1552 = vld [vmem:[%s1440 + $0x158] sm:$0xff]
        %v1553 = vld [vmem:[%s1440 + $0x160] sm:$0xff]
        %v1554 = vld [vmem:[%s1440 + $0x168] sm:$0xff]
        %v1555 = vld [vmem:[%s1440 + $0x170] sm:$0xff]
        %v1556 = vld [vmem:[%s1440 + $0x178] sm:$0xff]
        %v1557 = vld [vmem:[%s1440 + $0x180] sm:$0xff]
        %v1558 = vld [vmem:[%s1440 + $0x188] sm:$0xff]
        %v1559 = vld [vmem:[%s1440 + $0x190] sm:$0xff]
        %v1560 = vld [vmem:[%s1440 + $0x198] sm:$0xff]
        %v1561 = vld [vmem:[%s1440 + $0x1a0] sm:$0xff]
        %v1562 = vld [vmem:[%s1440 + $0x1a8] sm:$0xff]
        %v1563 = vld [vmem:[%s1440 + $0x1b0] sm:$0xff]
        %v1564 = vld [vmem:[%s1440 + $0x1b8] sm:$0xff]
        %v1565 = vld [vmem:[%s1440 + $0x1c0] sm:$0xff]
        %v1566 = vld [vmem:[%s1440 + $0x1c8] sm:$0xff]
        %v1567 = vld [vmem:[%s1440 + $0x1d0] sm:$0xff]
        %v1568 = vld [vmem:[%s1440 + $0x1d8] sm:$0xff]
        %v1569 = vld [vmem:[%s1440 + $0x1e0] sm:$0xff]
        %v1570 = vld [vmem:[%s1440 + $0x1e8] sm:$0xff]
        %v1571 = vld [vmem:[%s1440 + $0x1f0] sm:$0xff]
        %v1572 = vld [vmem:[%s1440 + $0x1f8] sm:$0xff]
        %v1573 = vld [vmem:[%s1440 + $0x200] sm:$0xff]
        %v1574 = vld [vmem:[%s1440 + $0x208] sm:$0xff]
        %v1575 = vld [vmem:[%s1440 + $0x210] sm:$0xff]
        %v1576 = vld [vmem:[%s1440 + $0x218] sm:$0xff]
        %v1577 = vld [vmem:[%s1440 + $0x220] sm:$0xff]
        %v1578 = vld [vmem:[%s1440 + $0x228] sm:$0xff]
        %v1579 = vld [vmem:[%s1440 + $0x230] sm:$0xff]
        %v1580 = vld [vmem:[%s1440 + $0x238] sm:$0xff]
        %v1581 = vld [vmem:[%s1440 + $0x240] sm:$0xff]
        %v1582 = vld [vmem:[%s1440 + $0x248] sm:$0xff]
        %v1583 = vld [vmem:[%s1440 + $0x250] sm:$0xff]
        %v1584 = vld [vmem:[%s1440 + $0x258] sm:$0xff]
        %v1585 = vld [vmem:[%s1440 + $0x260] sm:$0xff]
        %v1586 = vld [vmem:[%s1440 + $0x268] sm:$0xff]
        %v1587 = vld [vmem:[%s1440 + $0x270] sm:$0xff]
        %v1588 = vld [vmem:[%s1440 + $0x278] sm:$0xff]
        %v1589 = vld [vmem:[%s1440 + $0x280] sm:$0xff]
        %v1590 = vld [vmem:[%s1440 + $0x288] sm:$0xff]
        %v1591 = vld [vmem:[%s1440 + $0x290] sm:$0xff]
        %v1592 = vld [vmem:[%s1440 + $0x298] sm:$0xff]
        %v1593 = vld [vmem:[%s1440 + $0x2a0] sm:$0xff]
        %v1594 = vld [vmem:[%s1440 + $0x2a8] sm:$0xff]
        %v1595 = vld [vmem:[%s1440 + $0x2b0] sm:$0xff]
        %v1596 = vld [vmem:[%s1440 + $0x2b8] sm:$0xff]
        %v1597 = vld [vmem:[%s1440 + $0x2c0] sm:$0xff]
        %v1598 = vld [vmem:[%s1440 + $0x2c8] sm:$0xff]
        %v1599 = vld [vmem:[%s1440 + $0x2d0] sm:$0xff]
        %v1600 = vld [vmem:[%s1440 + $0x2d8] sm:$0xff]
        %v1601 = vld [vmem:[%s1440 + $0x2e0] sm:$0xff]
        %v1602 = vld [vmem:[%s1440 + $0x2e8] sm:$0xff]
        %v1603 = vld [vmem:[%s1440 + $0x2f0] sm:$0xff]
        %v1604 = vld [vmem:[%s1440 + $0x2f8] sm:$0xff]
        %v1605 = vld [vmem:[%s1440 + $0x300] sm:$0xff]
        %v1606 = vld [vmem:[%s1440 + $0x308] sm:$0xff]
        %v1607 = vld [vmem:[%s1440 + $0x310] sm:$0xff]
        %v1608 = vld [vmem:[%s1440 + $0x318] sm:$0xff]
        %v1609 = vld [vmem:[%s1440 + $0x320] sm:$0xff]
        %v1610 = vld [vmem:[%s1440 + $0x328] sm:$0xff]
        %v1611 = vld [vmem:[%s1440 + $0x330] sm:$0xff]
        %v1612 = vld [vmem:[%s1440 + $0x338] sm:$0xff]
        %v1613 = vld [vmem:[%s1440 + $0x340] sm:$0xff]
        %v1614 = vld [vmem:[%s1440 + $0x348] sm:$0xff]
        %v1615 = vld [vmem:[%s1440 + $0x350] sm:$0xff]
        %v1616 = vld [vmem:[%s1440 + $0x358] sm:$0xff]
        %v1617 = vld [vmem:[%s1440 + $0x360] sm:$0xff]
        %v1618 = vld [vmem:[%s1440 + $0x368] sm:$0xff]
        %v1619 = vld [vmem:[%s1440 + $0x370] sm:$0xff]
        %v1620 = vld [vmem:[%s1440 + $0x378] sm:$0xff]
        %v1621 = vld [vmem:[%s1440 + $0x380] sm:$0xff]
        %v1622 = vld [vmem:[%s1440 + $0x388] sm:$0xff]
        %v1623 = vld [vmem:[%s1440 + $0x390] sm:$0xff]
        %v1624 = vld [vmem:[%s1440 + $0x398] sm:$0xff]
        %v1625 = vld [vmem:[%s1440 + $0x3a0] sm:$0xff]
        %v1626 = vld [vmem:[%s1440 + $0x3a8] sm:$0xff]
        %v1627 = vld [vmem:[%s1440 + $0x3b0] sm:$0xff]
        %v1628 = vld [vmem:[%s1440 + $0x3b8] sm:$0xff]
        %v1629 = vld [vmem:[%s1440 + $0x3c0] sm:$0xff]
        %v1630 = vld [vmem:[%s1440 + $0x3c8] sm:$0xff]
        %v1631 = vld [vmem:[%s1440 + $0x3d0] sm:$0xff]
        %v1632 = vld [vmem:[%s1440 + $0x3d8] sm:$0xff]
        %v1633 = vld [vmem:[%s1440 + $0x3e0] sm:$0xff]
        %v1634 = vld [vmem:[%s1440 + $0x3e8] sm:$0xff]
        %v1635 = vld [vmem:[%s1440 + $0x3f0] sm:$0xff]
        %v1636 = vld [vmem:[%s1440 + $0x3f8] sm:$0xff]
        %v1637 = vld [vmem:[%s1440 + $0x400] sm:$0xff]
        %v1638 = vld [vmem:[%s1440 + $0x408] sm:$0xff]
        %v1639 = vld [vmem:[%s1440 + $0x410] sm:$0xff]
        %v1640 = vld [vmem:[%s1440 + $0x418] sm:$0xff]
        %v1641 = vld [vmem:[%s1440 + $0x420] sm:$0xff]
        %v1642 = vld [vmem:[%s1440 + $0x428] sm:$0xff]
        %v1643 = vld [vmem:[%s1440 + $0x430] sm:$0xff]
        %v1644 = vld [vmem:[%s1440 + $0x438] sm:$0xff]
        %v1645 = vld [vmem:[%s1440 + $0x440] sm:$0xff]
        %v1646 = vld [vmem:[%s1440 + $0x448] sm:$0xff]
        %v1647 = vld [vmem:[%s1440 + $0x450] sm:$0xff]
        %v1648 = vld [vmem:[%s1440 + $0x458] sm:$0xff]
        %v1649 = vld [vmem:[%s1440 + $0x460] sm:$0xff]
        %v1650 = vld [vmem:[%s1440 + $0x468] sm:$0xff]
        %v1651 = vld [vmem:[%s1440 + $0x470] sm:$0xff]
        %v1652 = vld [vmem:[%s1440 + $0x478] sm:$0xff]
        %v1653 = vld [vmem:[%s1440 + $0x480] sm:$0xff]
        %v1654 = vld [vmem:[%s1440 + $0x488] sm:$0xff]
        %v1655 = vld [vmem:[%s1440 + $0x490] sm:$0xff]
        %v1656 = vld [vmem:[%s1440 + $0x498] sm:$0xff]
        %v1657 = vld [vmem:[%s1440 + $0x4a0] sm:$0xff]
        %v1658 = vld [vmem:[%s1440 + $0x4a8] sm:$0xff]
        %v1659 = vld [vmem:[%s1440 + $0x4b0] sm:$0xff]
        %v1660 = vld [vmem:[%s1440 + $0x4b8] sm:$0xff]
        %v1661 = vld [vmem:[%s1440 + $0x4c0] sm:$0xff]
        %v1662 = vld [vmem:[%s1440 + $0x4c8] sm:$0xff]
        %v1663 = vld [vmem:[%s1440 + $0x4d0] sm:$0xff]
        %v1664 = vld [vmem:[%s1440 + $0x4d8] sm:$0xff]
        %v1665 = vld [vmem:[%s1440 + $0x4e0] sm:$0xff]
        %v1666 = vld [vmem:[%s1440 + $0x4e8] sm:$0xff]
        %v1667 = vld [vmem:[%s1440 + $0x4f0] sm:$0xff]
        %v1668 = vld [vmem:[%s1440 + $0x4f8] sm:$0xff]
        %v1669 = vld [vmem:[%s1440 + $0x500] sm:$0xff]
        %v1670 = vld [vmem:[%s1440 + $0x508] sm:$0xff]
        %v1671 = vld [vmem:[%s1440 + $0x510] sm:$0xff]
        %v1672 = vld [vmem:[%s1440 + $0x518] sm:$0xff]
        %v1673 = vld [vmem:[%s1440 + $0x520] sm:$0xff]
        %v1674 = vld [vmem:[%s1440 + $0x528] sm:$0xff]
        %v1675 = vld [vmem:[%s1440 + $0x530] sm:$0xff]
        %v1676 = vld [vmem:[%s1440 + $0x538] sm:$0xff]
        %v1677 = vld [vmem:[%s1440 + $0x540] sm:$0xff]
        %v1678 = vld [vmem:[%s1440 + $0x548] sm:$0xff]
        %v1679 = vld [vmem:[%s1440 + $0x550] sm:$0xff]
        %v1680 = vld [vmem:[%s1440 + $0x558] sm:$0xff]
        %v1681 = vld [vmem:[%s1440 + $0x560] sm:$0xff]
        %v1682 = vld [vmem:[%s1440 + $0x568] sm:$0xff]
        %v1683 = vld [vmem:[%s1440 + $0x570] sm:$0xff]
        %v1684 = vld [vmem:[%s1440 + $0x578] sm:$0xff]
        %v1685 = vld [vmem:[%s1440 + $0x580] sm:$0xff]
        %v1686 = vld [vmem:[%s1440 + $0x588] sm:$0xff]
        %v1687 = vld [vmem:[%s1440 + $0x590] sm:$0xff]
        %v1688 = vld [vmem:[%s1440 + $0x598] sm:$0xff]
        %v1689 = vld [vmem:[%s1440 + $0x5a0] sm:$0xff]
        %v1690 = vld [vmem:[%s1440 + $0x5a8] sm:$0xff]
        %v1691 = vld [vmem:[%s1440 + $0x5b0] sm:$0xff]
        %v1692 = vld [vmem:[%s1440 + $0x5b8] sm:$0xff]
        %v1693 = vld [vmem:[%s1440 + $0x5c0] sm:$0xff]
        %v1694 = vld [vmem:[%s1440 + $0x5c8] sm:$0xff]
        %v1695 = vld [vmem:[%s1440 + $0x5d0] sm:$0xff]
        %v1696 = vld [vmem:[%s1440 + $0x5d8] sm:$0xff]
        %v1697 = vld [vmem:[%s1440 + $0x5e0] sm:$0xff]
        %v1698 = vld [vmem:[%s1440 + $0x5e8] sm:$0xff]
        %v1699 = vld [vmem:[%s1440 + $0x5f0] sm:$0xff]
        %v1700 = vld [vmem:[%s1440 + $0x5f8] sm:$0xff]
        %v1701 = vld [vmem:[%s1440 + $0x600] sm:$0xff]
        %v1702 = vld [vmem:[%s1440 + $0x608] sm:$0xff]
        %v1703 = vld [vmem:[%s1440 + $0x610] sm:$0xff]
        %v1704 = vld [vmem:[%s1440 + $0x618] sm:$0xff]
        %v1705 = vld [vmem:[%s1440 + $0x620] sm:$0xff]
        %v1706 = vld [vmem:[%s1440 + $0x628] sm:$0xff]
        %v1707 = vld [vmem:[%s1440 + $0x630] sm:$0xff]
        %v1708 = vld [vmem:[%s1440 + $0x638] sm:$0xff]
        %v1709 = vld [vmem:[%s1440 + $0x640] sm:$0xff]
        %v1710 = vld [vmem:[%s1440 + $0x648] sm:$0xff]
        %v1711 = vld [vmem:[%s1440 + $0x650] sm:$0xff]
        %v1712 = vld [vmem:[%s1440 + $0x658] sm:$0xff]
        %v1713 = vld [vmem:[%s1440 + $0x660] sm:$0xff]
        %v1714 = vld [vmem:[%s1440 + $0x668] sm:$0xff]
        %v1715 = vld [vmem:[%s1440 + $0x670] sm:$0xff]
        %v1716 = vld [vmem:[%s1440 + $0x678] sm:$0xff]
        %v1717 = vld [vmem:[%s1440 + $0x680] sm:$0xff]
        %v1718 = vld [vmem:[%s1440 + $0x688] sm:$0xff]
        %v1719 = vld [vmem:[%s1440 + $0x690] sm:$0xff]
        %v1720 = vld [vmem:[%s1440 + $0x698] sm:$0xff]
        %v1721 = vld [vmem:[%s1440 + $0x6a0] sm:$0xff]
        %v1722 = vld [vmem:[%s1440 + $0x6a8] sm:$0xff]
        %v1723 = vld [vmem:[%s1440 + $0x6b0] sm:$0xff]
        %v1724 = vld [vmem:[%s1440 + $0x6b8] sm:$0xff]
        %v1725 = vld [vmem:[%s1440 + $0x6c0] sm:$0xff]
        %v1726 = vld [vmem:[%s1440 + $0x6c8] sm:$0xff]
        %v1727 = vld [vmem:[%s1440 + $0x6d0] sm:$0xff]
        %v1728 = vld [vmem:[%s1440 + $0x6d8] sm:$0xff]
        %v1729 = vld [vmem:[%s1440 + $0x6e0] sm:$0xff]
        %v1730 = vld [vmem:[%s1440 + $0x6e8] sm:$0xff]
        %v1731 = vld [vmem:[%s1440 + $0x6f0] sm:$0xff]
        %v1732 = vld [vmem:[%s1440 + $0x6f8] sm:$0xff]
        %v1733 = vld [vmem:[%s1440 + $0x700] sm:$0xff]
        %v1734 = vld [vmem:[%s1440 + $0x708] sm:$0xff]
        %v1735 = vld [vmem:[%s1440 + $0x710] sm:$0xff]
        %v1736 = vld [vmem:[%s1440 + $0x718] sm:$0xff]
        %v1737 = vld [vmem:[%s1440 + $0x720] sm:$0xff]
        %v1738 = vld [vmem:[%s1440 + $0x728] sm:$0xff]
        %v1739 = vld [vmem:[%s1440 + $0x730] sm:$0xff]
        %v1740 = vld [vmem:[%s1440 + $0x738] sm:$0xff]
        %v1741 = vld [vmem:[%s1440 + $0x740] sm:$0xff]
        %v1742 = vld [vmem:[%s1440 + $0x748] sm:$0xff]
        %v1743 = vld [vmem:[%s1440 + $0x750] sm:$0xff]
        %v1744 = vld [vmem:[%s1440 + $0x758] sm:$0xff]
        %v1745 = vld [vmem:[%s1440 + $0x760] sm:$0xff]
        %v1746 = vld [vmem:[%s1440 + $0x768] sm:$0xff]
        %v1747 = vld [vmem:[%s1440 + $0x770] sm:$0xff]
        %v1748 = vld [vmem:[%s1440 + $0x778] sm:$0xff]
        %v1749 = vld [vmem:[%s1440 + $0x780] sm:$0xff]
        %v1750 = vld [vmem:[%s1440 + $0x788] sm:$0xff]
        %v1751 = vld [vmem:[%s1440 + $0x790] sm:$0xff]
        %v1752 = vld [vmem:[%s1440 + $0x798] sm:$0xff]
        %v1753 = vld [vmem:[%s1440 + $0x7a0] sm:$0xff]
        %v1754 = vld [vmem:[%s1440 + $0x7a8] sm:$0xff]
        %v1755 = vld [vmem:[%s1440 + $0x7b0] sm:$0xff]
        %v1756 = vld [vmem:[%s1440 + $0x7b8] sm:$0xff]
        %v1757 = vld [vmem:[%s1440 + $0x7c0] sm:$0xff]
        %v1758 = vld [vmem:[%s1440 + $0x7c8] sm:$0xff]
        %v1759 = vld [vmem:[%s1440 + $0x7d0] sm:$0xff]
        %v1760 = vld [vmem:[%s1440 + $0x7d8] sm:$0xff]
        %v1761 = vld [vmem:[%s1440 + $0x7e0] sm:$0xff]
        %v1762 = vld [vmem:[%s1440 + $0x7e8] sm:$0xff]
        %v1763 = vld [vmem:[%s1440 + $0x7f0] sm:$0xff]
        %v1764 = vld [vmem:[%s1440 + $0x7f8] sm:$0xff]
        %v1765 = vld [vmem:[%s1440 + $0x800] sm:$0xff]
        %v1766 = vld [vmem:[%s1440 + $0x808] sm:$0xff]
        %v1767 = vld [vmem:[%s1440 + $0x810] sm:$0xff]
        %v1768 = vld [vmem:[%s1440 + $0x818] sm:$0xff]
        %v1769 = vld [vmem:[%s1440 + $0x820] sm:$0xff]
        %v1770 = vld [vmem:[%s1440 + $0x828] sm:$0xff]
        %v1771 = vld [vmem:[%s1440 + $0x830] sm:$0xff]
        %v1772 = vld [vmem:[%s1440 + $0x838] sm:$0xff]
        %v1773 = vld [vmem:[%s1440 + $0x840] sm:$0xff]
        %v1774 = vld [vmem:[%s1440 + $0x848] sm:$0xff]
        %v1775 = vld [vmem:[%s1440 + $0x850] sm:$0xff]
        %v1776 = vld [vmem:[%s1440 + $0x858] sm:$0xff]
        %v1777 = vld [vmem:[%s1440 + $0x860] sm:$0xff]
        %v1778 = vld [vmem:[%s1440 + $0x868] sm:$0xff]
        %v1779 = vld [vmem:[%s1440 + $0x870] sm:$0xff]
        %v1780 = vld [vmem:[%s1440 + $0x878] sm:$0xff]
        %v1781 = vld [vmem:[%s1440 + $0x880] sm:$0xff]
        %v1782 = vld [vmem:[%s1440 + $0x888] sm:$0xff]
        %v1783 = vld [vmem:[%s1440 + $0x890] sm:$0xff]
        %v1784 = vld [vmem:[%s1440 + $0x898] sm:$0xff]
        %v1785 = vld [vmem:[%s1440 + $0x8a0] sm:$0xff]
        %v1786 = vld [vmem:[%s1440 + $0x8a8] sm:$0xff]
        %v1787 = vld [vmem:[%s1440 + $0x8b0] sm:$0xff]
        %v1788 = vld [vmem:[%s1440 + $0x8b8] sm:$0xff]
        %v1789 = vld [vmem:[%s1440 + $0x8c0] sm:$0xff]
        %v1790 = vld [vmem:[%s1440 + $0x8c8] sm:$0xff]
        %v1791 = vld [vmem:[%s1440 + $0x8d0] sm:$0xff]
        %v1792 = vld [vmem:[%s1440 + $0x8d8] sm:$0xff]
        %v1793 = vld [vmem:[%s1440 + $0x8e0] sm:$0xff]
        %v1794 = vld [vmem:[%s1440 + $0x8e8] sm:$0xff]
        %v1795 = vld [vmem:[%s1440 + $0x8f0] sm:$0xff]
        %v1796 = vld [vmem:[%s1440 + $0x8f8] sm:$0xff]
        %v1815 = vunpack.c.l.b16 %v1491
        %v1816 = vunpack.c.h.b16 %v1491
        %v1817 = vunpack.c.l.b16 %v1492
        %v1818 = vunpack.c.h.b16 %v1492
        %v1819 = vunpack.c.l.b16 %v1493
        %v1820 = vunpack.c.h.b16 %v1493
        %v1821 = vunpack.c.l.b16 %v1494
        %v1822 = vunpack.c.h.b16 %v1494
        %v1823 = vunpack.c.l.b16 %v1495
        %v1824 = vunpack.c.h.b16 %v1495
        %v1825 = vunpack.c.l.b16 %v1496
        %v1826 = vunpack.c.h.b16 %v1496
        %v1827 = vunpack.c.l.b16 %v1497
        %v1828 = vunpack.c.h.b16 %v1497
        %v1829 = vunpack.c.l.b16 %v1498
        %v1830 = vunpack.c.h.b16 %v1498
        %v1831 = vunpack.c.l.b16 %v1499
        %v1832 = vunpack.c.h.b16 %v1499
        %v1833 = vunpack.c.l.b16 %v1500
        %v1834 = vunpack.c.h.b16 %v1500
        %v1835 = vunpack.c.l.b16 %v1501
        %v1836 = vunpack.c.h.b16 %v1501
        %v1837 = vunpack.c.l.b16 %v1502
        %v1838 = vunpack.c.h.b16 %v1502
        %v1839 = vunpack.c.l.b16 %v1503
        %v1840 = vunpack.c.h.b16 %v1503
        %v1841 = vunpack.c.l.b16 %v1504
        %v1842 = vunpack.c.h.b16 %v1504
        %v1843 = vunpack.c.l.b16 %v1505
        %v1844 = vunpack.c.h.b16 %v1505
        %v1845 = vunpack.c.l.b16 %v1506
        %v1846 = vunpack.c.h.b16 %v1506
        %v1847 = vunpack.c.l.b16 %v1507
        %v1848 = vunpack.c.h.b16 %v1507
        %v1849 = vunpack.c.l.b16 %v1508
        %v1850 = vunpack.c.h.b16 %v1508
        %v1851 = vpack.c.b16 %v1833, %v1815
        %v1852 = vpack.c.b16 %v1834, %v1816
        %v1853 = vpack.c.b16 %v1835, %v1817
        %v1854 = vpack.c.b16 %v1836, %v1818
        %v1855 = vpack.c.b16 %v1837, %v1819
        %v1856 = vpack.c.b16 %v1838, %v1820
        %v1857 = vpack.c.b16 %v1839, %v1821
        %v1858 = vpack.c.b16 %v1840, %v1822
        %v1859 = vpack.c.b16 %v1841, %v1823
        %v1860 = vpack.c.b16 %v1842, %v1824
        %v1861 = vpack.c.b16 %v1843, %v1825
        %v1862 = vpack.c.b16 %v1844, %v1826
        %v1863 = vpack.c.b16 %v1845, %v1827
        %v1864 = vpack.c.b16 %v1846, %v1828
        %v1865 = vpack.c.b16 %v1847, %v1829
        %v1866 = vpack.c.b16 %v1848, %v1830
        %v1867 = vpack.c.b16 %v1849, %v1831
        %v1868 = vpack.c.b16 %v1850, %v1832
        %v2175 = vunpack.c.l.b16 %v1509
        %v2176 = vunpack.c.h.b16 %v1509
        %v2177 = vunpack.c.l.b16 %v1510
        %v2178 = vunpack.c.h.b16 %v1510
        %v2179 = vunpack.c.l.b16 %v1511
        %v2180 = vunpack.c.h.b16 %v1511
        %v2181 = vunpack.c.l.b16 %v1512
        %v2182 = vunpack.c.h.b16 %v1512
        %v2183 = vunpack.c.l.b16 %v1513
        %v2184 = vunpack.c.h.b16 %v1513
        %v2185 = vunpack.c.l.b16 %v1514
        %v2186 = vunpack.c.h.b16 %v1514
        %v2187 = vunpack.c.l.b16 %v1515
        %v2188 = vunpack.c.h.b16 %v1515
        %v2189 = vunpack.c.l.b16 %v1516
        %v2190 = vunpack.c.h.b16 %v1516
        %v2191 = vunpack.c.l.b16 %v1517
        %v2192 = vunpack.c.h.b16 %v1517
        %v2193 = vunpack.c.l.b16 %v1518
        %v2194 = vunpack.c.h.b16 %v1518
        %v2195 = vunpack.c.l.b16 %v1519
        %v2196 = vunpack.c.h.b16 %v1519
        %v2197 = vunpack.c.l.b16 %v1520
        %v2198 = vunpack.c.h.b16 %v1520
        %v2199 = vunpack.c.l.b16 %v1521
        %v2200 = vunpack.c.h.b16 %v1521
        %v2201 = vunpack.c.l.b16 %v1522
        %v2202 = vunpack.c.h.b16 %v1522
        %v2203 = vunpack.c.l.b16 %v1523
        %v2204 = vunpack.c.h.b16 %v1523
        %v2205 = vunpack.c.l.b16 %v1524
        %v2206 = vunpack.c.h.b16 %v1524
        %v2207 = vunpack.c.l.b16 %v1525
        %v2208 = vunpack.c.h.b16 %v1525
        %v2209 = vunpack.c.l.b16 %v1526
        %v2210 = vunpack.c.h.b16 %v1526
        %v2211 = vunpack.c.l.b16 %v1527
        %v2212 = vunpack.c.h.b16 %v1527
        %v2213 = vunpack.c.l.b16 %v1528
        %v2214 = vunpack.c.h.b16 %v1528
        %v2215 = vunpack.c.l.b16 %v1529
        %v2216 = vunpack.c.h.b16 %v1529
        %v2217 = vunpack.c.l.b16 %v1530
        %v2218 = vunpack.c.h.b16 %v1530
        %v2219 = vunpack.c.l.b16 %v1531
        %v2220 = vunpack.c.h.b16 %v1531
        %v2221 = vunpack.c.l.b16 %v1532
        %v2222 = vunpack.c.h.b16 %v1532
        %v2223 = vunpack.c.l.b16 %v1533
        %v2224 = vunpack.c.h.b16 %v1533
        %v2225 = vunpack.c.l.b16 %v1534
        %v2226 = vunpack.c.h.b16 %v1534
        %v2227 = vunpack.c.l.b16 %v1535
        %v2228 = vunpack.c.h.b16 %v1535
        %v2229 = vunpack.c.l.b16 %v1536
        %v2230 = vunpack.c.h.b16 %v1536
        %v2231 = vunpack.c.l.b16 %v1537
        %v2232 = vunpack.c.h.b16 %v1537
        %v2233 = vunpack.c.l.b16 %v1538
        %v2234 = vunpack.c.h.b16 %v1538
        %v2235 = vunpack.c.l.b16 %v1539
        %v2236 = vunpack.c.h.b16 %v1539
        %v2237 = vunpack.c.l.b16 %v1540
        %v2238 = vunpack.c.h.b16 %v1540
        %v2239 = vunpack.c.l.b16 %v1541
        %v2240 = vunpack.c.h.b16 %v1541
        %v2241 = vunpack.c.l.b16 %v1542
        %v2242 = vunpack.c.h.b16 %v1542
        %v2243 = vunpack.c.l.b16 %v1543
        %v2244 = vunpack.c.h.b16 %v1543
        %v2245 = vunpack.c.l.b16 %v1544
        %v2246 = vunpack.c.h.b16 %v1544
        %v2247 = vunpack.c.l.b16 %v1545
        %v2248 = vunpack.c.h.b16 %v1545
        %v2249 = vunpack.c.l.b16 %v1546
        %v2250 = vunpack.c.h.b16 %v1546
        %v2251 = vunpack.c.l.b16 %v1547
        %v2252 = vunpack.c.h.b16 %v1547
        %v2253 = vunpack.c.l.b16 %v1548
        %v2254 = vunpack.c.h.b16 %v1548
        %v2255 = vunpack.c.l.b16 %v1549
        %v2256 = vunpack.c.h.b16 %v1549
        %v2257 = vunpack.c.l.b16 %v1550
        %v2258 = vunpack.c.h.b16 %v1550
        %v2259 = vunpack.c.l.b16 %v1551
        %v2260 = vunpack.c.h.b16 %v1551
        %v2261 = vunpack.c.l.b16 %v1552
        %v2262 = vunpack.c.h.b16 %v1552
        %v2263 = vunpack.c.l.b16 %v1553
        %v2264 = vunpack.c.h.b16 %v1553
        %v2265 = vunpack.c.l.b16 %v1554
        %v2266 = vunpack.c.h.b16 %v1554
        %v2267 = vunpack.c.l.b16 %v1555
        %v2268 = vunpack.c.h.b16 %v1555
        %v2269 = vunpack.c.l.b16 %v1556
        %v2270 = vunpack.c.h.b16 %v1556
        %v2271 = vunpack.c.l.b16 %v1557
        %v2272 = vunpack.c.h.b16 %v1557
        %v2273 = vunpack.c.l.b16 %v1558
        %v2274 = vunpack.c.h.b16 %v1558
        %v2275 = vunpack.c.l.b16 %v1559
        %v2276 = vunpack.c.h.b16 %v1559
        %v2277 = vunpack.c.l.b16 %v1560
        %v2278 = vunpack.c.h.b16 %v1560
        %v2279 = vunpack.c.l.b16 %v1561
        %v2280 = vunpack.c.h.b16 %v1561
        %v2281 = vunpack.c.l.b16 %v1562
        %v2282 = vunpack.c.h.b16 %v1562
        %v2283 = vunpack.c.l.b16 %v1563
        %v2284 = vunpack.c.h.b16 %v1563
        %v2285 = vunpack.c.l.b16 %v1564
        %v2286 = vunpack.c.h.b16 %v1564
        %v2287 = vunpack.c.l.b16 %v1565
        %v2288 = vunpack.c.h.b16 %v1565
        %v2289 = vunpack.c.l.b16 %v1566
        %v2290 = vunpack.c.h.b16 %v1566
        %v2291 = vunpack.c.l.b16 %v1567
        %v2292 = vunpack.c.h.b16 %v1567
        %v2293 = vunpack.c.l.b16 %v1568
        %v2294 = vunpack.c.h.b16 %v1568
        %v2295 = vunpack.c.l.b16 %v1569
        %v2296 = vunpack.c.h.b16 %v1569
        %v2297 = vunpack.c.l.b16 %v1570
        %v2298 = vunpack.c.h.b16 %v1570
        %v2299 = vunpack.c.l.b16 %v1571
        %v2300 = vunpack.c.h.b16 %v1571
        %v2301 = vunpack.c.l.b16 %v1572
        %v2302 = vunpack.c.h.b16 %v1572
        %v2303 = vunpack.c.l.b16 %v1573
        %v2304 = vunpack.c.h.b16 %v1573
        %v2305 = vunpack.c.l.b16 %v1574
        %v2306 = vunpack.c.h.b16 %v1574
        %v2307 = vunpack.c.l.b16 %v1575
        %v2308 = vunpack.c.h.b16 %v1575
        %v2309 = vunpack.c.l.b16 %v1576
        %v2310 = vunpack.c.h.b16 %v1576
        %v2311 = vunpack.c.l.b16 %v1577
        %v2312 = vunpack.c.h.b16 %v1577
        %v2313 = vunpack.c.l.b16 %v1578
        %v2314 = vunpack.c.h.b16 %v1578
        %v2315 = vunpack.c.l.b16 %v1579
        %v2316 = vunpack.c.h.b16 %v1579
        %v2317 = vunpack.c.l.b16 %v1580
        %v2318 = vunpack.c.h.b16 %v1580
        %v2319 = vunpack.c.l.b16 %v1581
        %v2320 = vunpack.c.h.b16 %v1581
        %v2321 = vunpack.c.l.b16 %v1582
        %v2322 = vunpack.c.h.b16 %v1582
        %v2323 = vunpack.c.l.b16 %v1583
        %v2324 = vunpack.c.h.b16 %v1583
        %v2325 = vunpack.c.l.b16 %v1584
        %v2326 = vunpack.c.h.b16 %v1584
        %v2327 = vunpack.c.l.b16 %v1585
        %v2328 = vunpack.c.h.b16 %v1585
        %v2329 = vunpack.c.l.b16 %v1586
        %v2330 = vunpack.c.h.b16 %v1586
        %v2331 = vunpack.c.l.b16 %v1587
        %v2332 = vunpack.c.h.b16 %v1587
        %v2333 = vunpack.c.l.b16 %v1588
        %v2334 = vunpack.c.h.b16 %v1588
        %v2335 = vunpack.c.l.b16 %v1589
        %v2336 = vunpack.c.h.b16 %v1589
        %v2337 = vunpack.c.l.b16 %v1590
        %v2338 = vunpack.c.h.b16 %v1590
        %v2339 = vunpack.c.l.b16 %v1591
        %v2340 = vunpack.c.h.b16 %v1591
        %v2341 = vunpack.c.l.b16 %v1592
        %v2342 = vunpack.c.h.b16 %v1592
        %v2343 = vunpack.c.l.b16 %v1593
        %v2344 = vunpack.c.h.b16 %v1593
        %v2345 = vunpack.c.l.b16 %v1594
        %v2346 = vunpack.c.h.b16 %v1594
        %v2347 = vunpack.c.l.b16 %v1595
        %v2348 = vunpack.c.h.b16 %v1595
        %v2349 = vunpack.c.l.b16 %v1596
        %v2350 = vunpack.c.h.b16 %v1596
        %v2351 = vunpack.c.l.b16 %v1597
        %v2352 = vunpack.c.h.b16 %v1597
        %v2353 = vunpack.c.l.b16 %v1598
        %v2354 = vunpack.c.h.b16 %v1598
        %v2355 = vunpack.c.l.b16 %v1599
        %v2356 = vunpack.c.h.b16 %v1599
        %v2357 = vunpack.c.l.b16 %v1600
        %v2358 = vunpack.c.h.b16 %v1600
        %v2359 = vunpack.c.l.b16 %v1601
        %v2360 = vunpack.c.h.b16 %v1601
        %v2361 = vunpack.c.l.b16 %v1602
        %v2362 = vunpack.c.h.b16 %v1602
        %v2363 = vunpack.c.l.b16 %v1603
        %v2364 = vunpack.c.h.b16 %v1603
        %v2365 = vunpack.c.l.b16 %v1604
        %v2366 = vunpack.c.h.b16 %v1604
        %v2367 = vunpack.c.l.b16 %v1605
        %v2368 = vunpack.c.h.b16 %v1605
        %v2369 = vunpack.c.l.b16 %v1606
        %v2370 = vunpack.c.h.b16 %v1606
        %v2371 = vunpack.c.l.b16 %v1607
        %v2372 = vunpack.c.h.b16 %v1607
        %v2373 = vunpack.c.l.b16 %v1608
        %v2374 = vunpack.c.h.b16 %v1608
        %v2375 = vunpack.c.l.b16 %v1609
        %v2376 = vunpack.c.h.b16 %v1609
        %v2377 = vunpack.c.l.b16 %v1610
        %v2378 = vunpack.c.h.b16 %v1610
        %v2379 = vunpack.c.l.b16 %v1611
        %v2380 = vunpack.c.h.b16 %v1611
        %v2381 = vunpack.c.l.b16 %v1612
        %v2382 = vunpack.c.h.b16 %v1612
        %v2383 = vunpack.c.l.b16 %v1613
        %v2384 = vunpack.c.h.b16 %v1613
        %v2385 = vunpack.c.l.b16 %v1614
        %v2386 = vunpack.c.h.b16 %v1614
        %v2387 = vunpack.c.l.b16 %v1615
        %v2388 = vunpack.c.h.b16 %v1615
        %v2389 = vunpack.c.l.b16 %v1616
        %v2390 = vunpack.c.h.b16 %v1616
        %v2391 = vunpack.c.l.b16 %v1617
        %v2392 = vunpack.c.h.b16 %v1617
        %v2393 = vunpack.c.l.b16 %v1618
        %v2394 = vunpack.c.h.b16 %v1618
        %v2395 = vunpack.c.l.b16 %v1619
        %v2396 = vunpack.c.h.b16 %v1619
        %v2397 = vunpack.c.l.b16 %v1620
        %v2398 = vunpack.c.h.b16 %v1620
        %v2399 = vunpack.c.l.b16 %v1621
        %v2400 = vunpack.c.h.b16 %v1621
        %v2401 = vunpack.c.l.b16 %v1622
        %v2402 = vunpack.c.h.b16 %v1622
        %v2403 = vunpack.c.l.b16 %v1623
        %v2404 = vunpack.c.h.b16 %v1623
        %v2405 = vunpack.c.l.b16 %v1624
        %v2406 = vunpack.c.h.b16 %v1624
        %v2407 = vunpack.c.l.b16 %v1625
        %v2408 = vunpack.c.h.b16 %v1625
        %v2409 = vunpack.c.l.b16 %v1626
        %v2410 = vunpack.c.h.b16 %v1626
        %v2411 = vunpack.c.l.b16 %v1627
        %v2412 = vunpack.c.h.b16 %v1627
        %v2413 = vunpack.c.l.b16 %v1628
        %v2414 = vunpack.c.h.b16 %v1628
        %v2415 = vunpack.c.l.b16 %v1629
        %v2416 = vunpack.c.h.b16 %v1629
        %v2417 = vunpack.c.l.b16 %v1630
        %v2418 = vunpack.c.h.b16 %v1630
        %v2419 = vunpack.c.l.b16 %v1631
        %v2420 = vunpack.c.h.b16 %v1631
        %v2421 = vunpack.c.l.b16 %v1632
        %v2422 = vunpack.c.h.b16 %v1632
        %v2423 = vunpack.c.l.b16 %v1633
        %v2424 = vunpack.c.h.b16 %v1633
        %v2425 = vunpack.c.l.b16 %v1634
        %v2426 = vunpack.c.h.b16 %v1634
        %v2427 = vunpack.c.l.b16 %v1635
        %v2428 = vunpack.c.h.b16 %v1635
        %v2429 = vunpack.c.l.b16 %v1636
        %v2430 = vunpack.c.h.b16 %v1636
        %v2431 = vunpack.c.l.b16 %v1637
        %v2432 = vunpack.c.h.b16 %v1637
        %v2433 = vunpack.c.l.b16 %v1638
        %v2434 = vunpack.c.h.b16 %v1638
        %v2435 = vunpack.c.l.b16 %v1639
        %v2436 = vunpack.c.h.b16 %v1639
        %v2437 = vunpack.c.l.b16 %v1640
        %v2438 = vunpack.c.h.b16 %v1640
        %v2439 = vunpack.c.l.b16 %v1641
        %v2440 = vunpack.c.h.b16 %v1641
        %v2441 = vunpack.c.l.b16 %v1642
        %v2442 = vunpack.c.h.b16 %v1642
        %v2443 = vunpack.c.l.b16 %v1643
        %v2444 = vunpack.c.h.b16 %v1643
        %v2445 = vunpack.c.l.b16 %v1644
        %v2446 = vunpack.c.h.b16 %v1644
        %v2447 = vunpack.c.l.b16 %v1645
        %v2448 = vunpack.c.h.b16 %v1645
        %v2449 = vunpack.c.l.b16 %v1646
        %v2450 = vunpack.c.h.b16 %v1646
        %v2451 = vunpack.c.l.b16 %v1647
        %v2452 = vunpack.c.h.b16 %v1647
        %v2453 = vunpack.c.l.b16 %v1648
        %v2454 = vunpack.c.h.b16 %v1648
        %v2455 = vunpack.c.l.b16 %v1649
        %v2456 = vunpack.c.h.b16 %v1649
        %v2457 = vunpack.c.l.b16 %v1650
        %v2458 = vunpack.c.h.b16 %v1650
        %v2459 = vunpack.c.l.b16 %v1651
        %v2460 = vunpack.c.h.b16 %v1651
        %v2461 = vunpack.c.l.b16 %v1652
        %v2462 = vunpack.c.h.b16 %v1652
        %v2463 = vunpack.c.l.b16 %v1653
        %v2464 = vunpack.c.h.b16 %v1653
        %v2465 = vunpack.c.l.b16 %v1654
        %v2466 = vunpack.c.h.b16 %v1654
        %v2467 = vunpack.c.l.b16 %v1655
        %v2468 = vunpack.c.h.b16 %v1655
        %v2469 = vunpack.c.l.b16 %v1656
        %v2470 = vunpack.c.h.b16 %v1656
        %v2471 = vunpack.c.l.b16 %v1657
        %v2472 = vunpack.c.h.b16 %v1657
        %v2473 = vunpack.c.l.b16 %v1658
        %v2474 = vunpack.c.h.b16 %v1658
        %v2475 = vunpack.c.l.b16 %v1659
        %v2476 = vunpack.c.h.b16 %v1659
        %v2477 = vunpack.c.l.b16 %v1660
        %v2478 = vunpack.c.h.b16 %v1660
        %v2479 = vunpack.c.l.b16 %v1661
        %v2480 = vunpack.c.h.b16 %v1661
        %v2481 = vunpack.c.l.b16 %v1662
        %v2482 = vunpack.c.h.b16 %v1662
        %v2483 = vunpack.c.l.b16 %v1663
        %v2484 = vunpack.c.h.b16 %v1663
        %v2485 = vunpack.c.l.b16 %v1664
        %v2486 = vunpack.c.h.b16 %v1664
        %v2487 = vunpack.c.l.b16 %v1665
        %v2488 = vunpack.c.h.b16 %v1665
        %v2489 = vunpack.c.l.b16 %v1666
        %v2490 = vunpack.c.h.b16 %v1666
        %v2491 = vunpack.c.l.b16 %v1667
        %v2492 = vunpack.c.h.b16 %v1667
        %v2493 = vunpack.c.l.b16 %v1668
        %v2494 = vunpack.c.h.b16 %v1668
        %v2495 = vunpack.c.l.b16 %v1669
        %v2496 = vunpack.c.h.b16 %v1669
        %v2497 = vunpack.c.l.b16 %v1670
        %v2498 = vunpack.c.h.b16 %v1670
        %v2499 = vunpack.c.l.b16 %v1671
        %v2500 = vunpack.c.h.b16 %v1671
        %v2501 = vunpack.c.l.b16 %v1672
        %v2502 = vunpack.c.h.b16 %v1672
        %v2503 = vunpack.c.l.b16 %v1673
        %v2504 = vunpack.c.h.b16 %v1673
        %v2505 = vunpack.c.l.b16 %v1674
        %v2506 = vunpack.c.h.b16 %v1674
        %v2507 = vunpack.c.l.b16 %v1675
        %v2508 = vunpack.c.h.b16 %v1675
        %v2509 = vunpack.c.l.b16 %v1676
        %v2510 = vunpack.c.h.b16 %v1676
        %v2511 = vunpack.c.l.b16 %v1677
        %v2512 = vunpack.c.h.b16 %v1677
        %v2513 = vunpack.c.l.b16 %v1678
        %v2514 = vunpack.c.h.b16 %v1678
        %v2515 = vunpack.c.l.b16 %v1679
        %v2516 = vunpack.c.h.b16 %v1679
        %v2517 = vunpack.c.l.b16 %v1680
        %v2518 = vunpack.c.h.b16 %v1680
        %v2519 = vunpack.c.l.b16 %v1681
        %v2520 = vunpack.c.h.b16 %v1681
        %v2521 = vunpack.c.l.b16 %v1682
        %v2522 = vunpack.c.h.b16 %v1682
        %v2523 = vunpack.c.l.b16 %v1683
        %v2524 = vunpack.c.h.b16 %v1683
        %v2525 = vunpack.c.l.b16 %v1684
        %v2526 = vunpack.c.h.b16 %v1684
        %v2527 = vunpack.c.l.b16 %v1685
        %v2528 = vunpack.c.h.b16 %v1685
        %v2529 = vunpack.c.l.b16 %v1686
        %v2530 = vunpack.c.h.b16 %v1686
        %v2531 = vunpack.c.l.b16 %v1687
        %v2532 = vunpack.c.h.b16 %v1687
        %v2533 = vunpack.c.l.b16 %v1688
        %v2534 = vunpack.c.h.b16 %v1688
        %v2535 = vunpack.c.l.b16 %v1689
        %v2536 = vunpack.c.h.b16 %v1689
        %v2537 = vunpack.c.l.b16 %v1690
        %v2538 = vunpack.c.h.b16 %v1690
        %v2539 = vunpack.c.l.b16 %v1691
        %v2540 = vunpack.c.h.b16 %v1691
        %v2541 = vunpack.c.l.b16 %v1692
        %v2542 = vunpack.c.h.b16 %v1692
        %v2543 = vunpack.c.l.b16 %v1693
        %v2544 = vunpack.c.h.b16 %v1693
        %v2545 = vunpack.c.l.b16 %v1694
        %v2546 = vunpack.c.h.b16 %v1694
        %v2547 = vunpack.c.l.b16 %v1695
        %v2548 = vunpack.c.h.b16 %v1695
        %v2549 = vunpack.c.l.b16 %v1696
        %v2550 = vunpack.c.h.b16 %v1696
        %v2551 = vunpack.c.l.b16 %v1697
        %v2552 = vunpack.c.h.b16 %v1697
        %v2553 = vunpack.c.l.b16 %v1698
        %v2554 = vunpack.c.h.b16 %v1698
        %v2555 = vunpack.c.l.b16 %v1699
        %v2556 = vunpack.c.h.b16 %v1699
        %v2557 = vunpack.c.l.b16 %v1700
        %v2558 = vunpack.c.h.b16 %v1700
        %v2559 = vunpack.c.l.b16 %v1701
        %v2560 = vunpack.c.h.b16 %v1701
        %v2561 = vunpack.c.l.b16 %v1702
        %v2562 = vunpack.c.h.b16 %v1702
        %v2563 = vunpack.c.l.b16 %v1703
        %v2564 = vunpack.c.h.b16 %v1703
        %v2565 = vunpack.c.l.b16 %v1704
        %v2566 = vunpack.c.h.b16 %v1704
        %v2567 = vunpack.c.l.b16 %v1705
        %v2568 = vunpack.c.h.b16 %v1705
        %v2569 = vunpack.c.l.b16 %v1706
        %v2570 = vunpack.c.h.b16 %v1706
        %v2571 = vunpack.c.l.b16 %v1707
        %v2572 = vunpack.c.h.b16 %v1707
        %v2573 = vunpack.c.l.b16 %v1708
        %v2574 = vunpack.c.h.b16 %v1708
        %v2575 = vunpack.c.l.b16 %v1709
        %v2576 = vunpack.c.h.b16 %v1709
        %v2577 = vunpack.c.l.b16 %v1710
        %v2578 = vunpack.c.h.b16 %v1710
        %v2579 = vunpack.c.l.b16 %v1711
        %v2580 = vunpack.c.h.b16 %v1711
        %v2581 = vunpack.c.l.b16 %v1712
        %v2582 = vunpack.c.h.b16 %v1712
        %v2583 = vunpack.c.l.b16 %v1713
        %v2584 = vunpack.c.h.b16 %v1713
        %v2585 = vunpack.c.l.b16 %v1714
        %v2586 = vunpack.c.h.b16 %v1714
        %v2587 = vunpack.c.l.b16 %v1715
        %v2588 = vunpack.c.h.b16 %v1715
        %v2589 = vunpack.c.l.b16 %v1716
        %v2590 = vunpack.c.h.b16 %v1716
        %v2591 = vunpack.c.l.b16 %v1717
        %v2592 = vunpack.c.h.b16 %v1717
        %v2593 = vunpack.c.l.b16 %v1718
        %v2594 = vunpack.c.h.b16 %v1718
        %v2595 = vunpack.c.l.b16 %v1719
        %v2596 = vunpack.c.h.b16 %v1719
        %v2597 = vunpack.c.l.b16 %v1720
        %v2598 = vunpack.c.h.b16 %v1720
        %v2599 = vunpack.c.l.b16 %v1721
        %v2600 = vunpack.c.h.b16 %v1721
        %v2601 = vunpack.c.l.b16 %v1722
        %v2602 = vunpack.c.h.b16 %v1722
        %v2603 = vunpack.c.l.b16 %v1723
        %v2604 = vunpack.c.h.b16 %v1723
        %v2605 = vunpack.c.l.b16 %v1724
        %v2606 = vunpack.c.h.b16 %v1724
        %v2607 = vunpack.c.l.b16 %v1725
        %v2608 = vunpack.c.h.b16 %v1725
        %v2609 = vunpack.c.l.b16 %v1726
        %v2610 = vunpack.c.h.b16 %v1726
        %v2611 = vunpack.c.l.b16 %v1727
        %v2612 = vunpack.c.h.b16 %v1727
        %v2613 = vunpack.c.l.b16 %v1728
        %v2614 = vunpack.c.h.b16 %v1728
        %v2615 = vunpack.c.l.b16 %v1729
        %v2616 = vunpack.c.h.b16 %v1729
        %v2617 = vunpack.c.l.b16 %v1730
        %v2618 = vunpack.c.h.b16 %v1730
        %v2619 = vunpack.c.l.b16 %v1731
        %v2620 = vunpack.c.h.b16 %v1731
        %v2621 = vunpack.c.l.b16 %v1732
        %v2622 = vunpack.c.h.b16 %v1732
        %v2623 = vunpack.c.l.b16 %v1733
        %v2624 = vunpack.c.h.b16 %v1733
        %v2625 = vunpack.c.l.b16 %v1734
        %v2626 = vunpack.c.h.b16 %v1734
        %v2627 = vunpack.c.l.b16 %v1735
        %v2628 = vunpack.c.h.b16 %v1735
        %v2629 = vunpack.c.l.b16 %v1736
        %v2630 = vunpack.c.h.b16 %v1736
        %v2631 = vunpack.c.l.b16 %v1737
        %v2632 = vunpack.c.h.b16 %v1737
        %v2633 = vunpack.c.l.b16 %v1738
        %v2634 = vunpack.c.h.b16 %v1738
        %v2635 = vunpack.c.l.b16 %v1739
        %v2636 = vunpack.c.h.b16 %v1739
        %v2637 = vunpack.c.l.b16 %v1740
        %v2638 = vunpack.c.h.b16 %v1740
        %v2639 = vunpack.c.l.b16 %v1741
        %v2640 = vunpack.c.h.b16 %v1741
        %v2641 = vunpack.c.l.b16 %v1742
        %v2642 = vunpack.c.h.b16 %v1742
        %v2643 = vunpack.c.l.b16 %v1743
        %v2644 = vunpack.c.h.b16 %v1743
        %v2645 = vunpack.c.l.b16 %v1744
        %v2646 = vunpack.c.h.b16 %v1744
        %v2647 = vunpack.c.l.b16 %v1745
        %v2648 = vunpack.c.h.b16 %v1745
        %v2649 = vunpack.c.l.b16 %v1746
        %v2650 = vunpack.c.h.b16 %v1746
        %v2651 = vunpack.c.l.b16 %v1747
        %v2652 = vunpack.c.h.b16 %v1747
        %v2653 = vunpack.c.l.b16 %v1748
        %v2654 = vunpack.c.h.b16 %v1748
        %v2655 = vunpack.c.l.b16 %v1749
        %v2656 = vunpack.c.h.b16 %v1749
        %v2657 = vunpack.c.l.b16 %v1750
        %v2658 = vunpack.c.h.b16 %v1750
        %v2659 = vunpack.c.l.b16 %v1751
        %v2660 = vunpack.c.h.b16 %v1751
        %v2661 = vunpack.c.l.b16 %v1752
        %v2662 = vunpack.c.h.b16 %v1752
        %v2663 = vunpack.c.l.b16 %v1753
        %v2664 = vunpack.c.h.b16 %v1753
        %v2665 = vunpack.c.l.b16 %v1754
        %v2666 = vunpack.c.h.b16 %v1754
        %v2667 = vunpack.c.l.b16 %v1755
        %v2668 = vunpack.c.h.b16 %v1755
        %v2669 = vunpack.c.l.b16 %v1756
        %v2670 = vunpack.c.h.b16 %v1756
        %v2671 = vunpack.c.l.b16 %v1757
        %v2672 = vunpack.c.h.b16 %v1757
        %v2673 = vunpack.c.l.b16 %v1758
        %v2674 = vunpack.c.h.b16 %v1758
        %v2675 = vunpack.c.l.b16 %v1759
        %v2676 = vunpack.c.h.b16 %v1759
        %v2677 = vunpack.c.l.b16 %v1760
        %v2678 = vunpack.c.h.b16 %v1760
        %v2679 = vunpack.c.l.b16 %v1761
        %v2680 = vunpack.c.h.b16 %v1761
        %v2681 = vunpack.c.l.b16 %v1762
        %v2682 = vunpack.c.h.b16 %v1762
        %v2683 = vunpack.c.l.b16 %v1763
        %v2684 = vunpack.c.h.b16 %v1763
        %v2685 = vunpack.c.l.b16 %v1764
        %v2686 = vunpack.c.h.b16 %v1764
        %v2687 = vunpack.c.l.b16 %v1765
        %v2688 = vunpack.c.h.b16 %v1765
        %v2689 = vunpack.c.l.b16 %v1766
        %v2690 = vunpack.c.h.b16 %v1766
        %v2691 = vunpack.c.l.b16 %v1767
        %v2692 = vunpack.c.h.b16 %v1767
        %v2693 = vunpack.c.l.b16 %v1768
        %v2694 = vunpack.c.h.b16 %v1768
        %v2695 = vunpack.c.l.b16 %v1769
        %v2696 = vunpack.c.h.b16 %v1769
        %v2697 = vunpack.c.l.b16 %v1770
        %v2698 = vunpack.c.h.b16 %v1770
        %v2699 = vunpack.c.l.b16 %v1771
        %v2700 = vunpack.c.h.b16 %v1771
        %v2701 = vunpack.c.l.b16 %v1772
        %v2702 = vunpack.c.h.b16 %v1772
        %v2703 = vunpack.c.l.b16 %v1773
        %v2704 = vunpack.c.h.b16 %v1773
        %v2705 = vunpack.c.l.b16 %v1774
        %v2706 = vunpack.c.h.b16 %v1774
        %v2707 = vunpack.c.l.b16 %v1775
        %v2708 = vunpack.c.h.b16 %v1775
        %v2709 = vunpack.c.l.b16 %v1776
        %v2710 = vunpack.c.h.b16 %v1776
        %v2711 = vunpack.c.l.b16 %v1777
        %v2712 = vunpack.c.h.b16 %v1777
        %v2713 = vunpack.c.l.b16 %v1778
        %v2714 = vunpack.c.h.b16 %v1778
        %v2715 = vunpack.c.l.b16 %v1779
        %v2716 = vunpack.c.h.b16 %v1779
        %v2717 = vunpack.c.l.b16 %v1780
        %v2718 = vunpack.c.h.b16 %v1780
        %v2719 = vunpack.c.l.b16 %v1781
        %v2720 = vunpack.c.h.b16 %v1781
        %v2721 = vunpack.c.l.b16 %v1782
        %v2722 = vunpack.c.h.b16 %v1782
        %v2723 = vunpack.c.l.b16 %v1783
        %v2724 = vunpack.c.h.b16 %v1783
        %v2725 = vunpack.c.l.b16 %v1784
        %v2726 = vunpack.c.h.b16 %v1784
        %v2727 = vunpack.c.l.b16 %v1785
        %v2728 = vunpack.c.h.b16 %v1785
        %v2729 = vunpack.c.l.b16 %v1786
        %v2730 = vunpack.c.h.b16 %v1786
        %v2731 = vunpack.c.l.b16 %v1787
        %v2732 = vunpack.c.h.b16 %v1787
        %v2733 = vunpack.c.l.b16 %v1788
        %v2734 = vunpack.c.h.b16 %v1788
        %v2735 = vunpack.c.l.b16 %v1789
        %v2736 = vunpack.c.h.b16 %v1789
        %v2737 = vunpack.c.l.b16 %v1790
        %v2738 = vunpack.c.h.b16 %v1790
        %v2739 = vunpack.c.l.b16 %v1791
        %v2740 = vunpack.c.h.b16 %v1791
        %v2741 = vunpack.c.l.b16 %v1792
        %v2742 = vunpack.c.h.b16 %v1792
        %v2743 = vunpack.c.l.b16 %v1793
        %v2744 = vunpack.c.h.b16 %v1793
        %v2745 = vunpack.c.l.b16 %v1794
        %v2746 = vunpack.c.h.b16 %v1794
        %v2747 = vunpack.c.l.b16 %v1795
        %v2748 = vunpack.c.h.b16 %v1795
        %v2749 = vunpack.c.l.b16 %v1796
        %v2750 = vunpack.c.h.b16 %v1796
        %v2751 = vpack.c.b16 %v2177, %v2175
        %v2752 = vpack.c.b16 %v2178, %v2176
        %v2753 = vpack.c.b16 %v2181, %v2179
        %v2754 = vpack.c.b16 %v2182, %v2180
        %v2755 = vpack.c.b16 %v2185, %v2183
        %v2756 = vpack.c.b16 %v2186, %v2184
        %v2757 = vpack.c.b16 %v2189, %v2187
        %v2758 = vpack.c.b16 %v2190, %v2188
        %v2759 = vpack.c.b16 %v2193, %v2191
        %v2760 = vpack.c.b16 %v2194, %v2192
        %v2761 = vpack.c.b16 %v2197, %v2195
        %v2762 = vpack.c.b16 %v2198, %v2196
        %v2763 = vpack.c.b16 %v2201, %v2199
        %v2764 = vpack.c.b16 %v2202, %v2200
        %v2765 = vpack.c.b16 %v2205, %v2203
        %v2766 = vpack.c.b16 %v2206, %v2204
        %v2767 = vpack.c.b16 %v2209, %v2207
        %v2768 = vpack.c.b16 %v2210, %v2208
        %v2769 = vpack.c.b16 %v2213, %v2211
        %v2770 = vpack.c.b16 %v2214, %v2212
        %v2771 = vpack.c.b16 %v2217, %v2215
        %v2772 = vpack.c.b16 %v2218, %v2216
        %v2773 = vpack.c.b16 %v2221, %v2219
        %v2774 = vpack.c.b16 %v2222, %v2220
        %v2775 = vpack.c.b16 %v2225, %v2223
        %v2776 = vpack.c.b16 %v2226, %v2224
        %v2777 = vpack.c.b16 %v2229, %v2227
        %v2778 = vpack.c.b16 %v2230, %v2228
        %v2779 = vpack.c.b16 %v2233, %v2231
        %v2780 = vpack.c.b16 %v2234, %v2232
        %v2781 = vpack.c.b16 %v2237, %v2235
        %v2782 = vpack.c.b16 %v2238, %v2236
        %v2783 = vpack.c.b16 %v2241, %v2239
        %v2784 = vpack.c.b16 %v2242, %v2240
        %v2785 = vpack.c.b16 %v2245, %v2243
        %v2786 = vpack.c.b16 %v2246, %v2244
        %v2787 = vpack.c.b16 %v2249, %v2247
        %v2788 = vpack.c.b16 %v2250, %v2248
        %v2789 = vpack.c.b16 %v2253, %v2251
        %v2790 = vpack.c.b16 %v2254, %v2252
        %v2791 = vpack.c.b16 %v2257, %v2255
        %v2792 = vpack.c.b16 %v2258, %v2256
        %v2793 = vpack.c.b16 %v2261, %v2259
        %v2794 = vpack.c.b16 %v2262, %v2260
        %v2795 = vpack.c.b16 %v2265, %v2263
        %v2796 = vpack.c.b16 %v2266, %v2264
        %v2797 = vpack.c.b16 %v2269, %v2267
        %v2798 = vpack.c.b16 %v2270, %v2268
        %v2799 = vpack.c.b16 %v2273, %v2271
        %v2800 = vpack.c.b16 %v2274, %v2272
        %v2801 = vpack.c.b16 %v2277, %v2275
        %v2802 = vpack.c.b16 %v2278, %v2276
        %v2803 = vpack.c.b16 %v2281, %v2279
        %v2804 = vpack.c.b16 %v2282, %v2280
        %v2805 = vpack.c.b16 %v2285, %v2283
        %v2806 = vpack.c.b16 %v2286, %v2284
        %v2807 = vpack.c.b16 %v2289, %v2287
        %v2808 = vpack.c.b16 %v2290, %v2288
        %v2809 = vpack.c.b16 %v2293, %v2291
        %v2810 = vpack.c.b16 %v2294, %v2292
        %v2811 = vpack.c.b16 %v2297, %v2295
        %v2812 = vpack.c.b16 %v2298, %v2296
        %v2813 = vpack.c.b16 %v2301, %v2299
        %v2814 = vpack.c.b16 %v2302, %v2300
        %v2815 = vpack.c.b16 %v2305, %v2303
        %v2816 = vpack.c.b16 %v2306, %v2304
        %v2817 = vpack.c.b16 %v2309, %v2307
        %v2818 = vpack.c.b16 %v2310, %v2308
        %v2819 = vpack.c.b16 %v2313, %v2311
        %v2820 = vpack.c.b16 %v2314, %v2312
        %v2821 = vpack.c.b16 %v2317, %v2315
        %v2822 = vpack.c.b16 %v2318, %v2316
        %v2823 = vpack.c.b16 %v2321, %v2319
        %v2824 = vpack.c.b16 %v2322, %v2320
        %v2825 = vpack.c.b16 %v2325, %v2323
        %v2826 = vpack.c.b16 %v2326, %v2324
        %v2827 = vpack.c.b16 %v2329, %v2327
        %v2828 = vpack.c.b16 %v2330, %v2328
        %v2829 = vpack.c.b16 %v2333, %v2331
        %v2830 = vpack.c.b16 %v2334, %v2332
        %v2831 = vpack.c.b16 %v2337, %v2335
        %v2832 = vpack.c.b16 %v2338, %v2336
        %v2833 = vpack.c.b16 %v2341, %v2339
        %v2834 = vpack.c.b16 %v2342, %v2340
        %v2835 = vpack.c.b16 %v2345, %v2343
        %v2836 = vpack.c.b16 %v2346, %v2344
        %v2837 = vpack.c.b16 %v2349, %v2347
        %v2838 = vpack.c.b16 %v2350, %v2348
        %v2839 = vpack.c.b16 %v2353, %v2351
        %v2840 = vpack.c.b16 %v2354, %v2352
        %v2841 = vpack.c.b16 %v2357, %v2355
        %v2842 = vpack.c.b16 %v2358, %v2356
        %v2843 = vpack.c.b16 %v2361, %v2359
        %v2844 = vpack.c.b16 %v2362, %v2360
        %v2845 = vpack.c.b16 %v2365, %v2363
        %v2846 = vpack.c.b16 %v2366, %v2364
        %v2847 = vpack.c.b16 %v2369, %v2367
        %v2848 = vpack.c.b16 %v2370, %v2368
        %v2849 = vpack.c.b16 %v2373, %v2371
        %v2850 = vpack.c.b16 %v2374, %v2372
        %v2851 = vpack.c.b16 %v2377, %v2375
        %v2852 = vpack.c.b16 %v2378, %v2376
        %v2853 = vpack.c.b16 %v2381, %v2379
        %v2854 = vpack.c.b16 %v2382, %v2380
        %v2855 = vpack.c.b16 %v2385, %v2383
        %v2856 = vpack.c.b16 %v2386, %v2384
        %v2857 = vpack.c.b16 %v2389, %v2387
        %v2858 = vpack.c.b16 %v2390, %v2388
        %v2859 = vpack.c.b16 %v2393, %v2391
        %v2860 = vpack.c.b16 %v2394, %v2392
        %v2861 = vpack.c.b16 %v2397, %v2395
        %v2862 = vpack.c.b16 %v2398, %v2396
        %v2863 = vpack.c.b16 %v2401, %v2399
        %v2864 = vpack.c.b16 %v2402, %v2400
        %v2865 = vpack.c.b16 %v2405, %v2403
        %v2866 = vpack.c.b16 %v2406, %v2404
        %v2867 = vpack.c.b16 %v2409, %v2407
        %v2868 = vpack.c.b16 %v2410, %v2408
        %v2869 = vpack.c.b16 %v2413, %v2411
        %v2870 = vpack.c.b16 %v2414, %v2412
        %v2871 = vpack.c.b16 %v2417, %v2415
        %v2872 = vpack.c.b16 %v2418, %v2416
        %v2873 = vpack.c.b16 %v2421, %v2419
        %v2874 = vpack.c.b16 %v2422, %v2420
        %v2875 = vpack.c.b16 %v2425, %v2423
        %v2876 = vpack.c.b16 %v2426, %v2424
        %v2877 = vpack.c.b16 %v2429, %v2427
        %v2878 = vpack.c.b16 %v2430, %v2428
        %v2879 = vpack.c.b16 %v2433, %v2431
        %v2880 = vpack.c.b16 %v2434, %v2432
        %v2881 = vpack.c.b16 %v2437, %v2435
        %v2882 = vpack.c.b16 %v2438, %v2436
        %v2883 = vpack.c.b16 %v2441, %v2439
        %v2884 = vpack.c.b16 %v2442, %v2440
        %v2885 = vpack.c.b16 %v2445, %v2443
        %v2886 = vpack.c.b16 %v2446, %v2444
        %v2887 = vpack.c.b16 %v2449, %v2447
        %v2888 = vpack.c.b16 %v2450, %v2448
        %v2889 = vpack.c.b16 %v2453, %v2451
        %v2890 = vpack.c.b16 %v2454, %v2452
        %v2891 = vpack.c.b16 %v2457, %v2455
        %v2892 = vpack.c.b16 %v2458, %v2456
        %v2893 = vpack.c.b16 %v2461, %v2459
        %v2894 = vpack.c.b16 %v2462, %v2460
        %v2895 = vpack.c.b16 %v2465, %v2463
        %v2896 = vpack.c.b16 %v2466, %v2464
        %v2897 = vpack.c.b16 %v2469, %v2467
        %v2898 = vpack.c.b16 %v2470, %v2468
        %v2899 = vpack.c.b16 %v2473, %v2471
        %v2900 = vpack.c.b16 %v2474, %v2472
        %v2901 = vpack.c.b16 %v2477, %v2475
        %v2902 = vpack.c.b16 %v2478, %v2476
        %v2903 = vpack.c.b16 %v2481, %v2479
        %v2904 = vpack.c.b16 %v2482, %v2480
        %v2905 = vpack.c.b16 %v2485, %v2483
        %v2906 = vpack.c.b16 %v2486, %v2484
        %v2907 = vpack.c.b16 %v2489, %v2487
        %v2908 = vpack.c.b16 %v2490, %v2488
        %v2909 = vpack.c.b16 %v2493, %v2491
        %v2910 = vpack.c.b16 %v2494, %v2492
        %v2911 = vpack.c.b16 %v2497, %v2495
        %v2912 = vpack.c.b16 %v2498, %v2496
        %v2913 = vpack.c.b16 %v2501, %v2499
        %v2914 = vpack.c.b16 %v2502, %v2500
        %v2915 = vpack.c.b16 %v2505, %v2503
        %v2916 = vpack.c.b16 %v2506, %v2504
        %v2917 = vpack.c.b16 %v2509, %v2507
        %v2918 = vpack.c.b16 %v2510, %v2508
        %v2919 = vpack.c.b16 %v2513, %v2511
        %v2920 = vpack.c.b16 %v2514, %v2512
        %v2921 = vpack.c.b16 %v2517, %v2515
        %v2922 = vpack.c.b16 %v2518, %v2516
        %v2923 = vpack.c.b16 %v2521, %v2519
        %v2924 = vpack.c.b16 %v2522, %v2520
        %v2925 = vpack.c.b16 %v2525, %v2523
        %v2926 = vpack.c.b16 %v2526, %v2524
        %v2927 = vpack.c.b16 %v2529, %v2527
        %v2928 = vpack.c.b16 %v2530, %v2528
        %v2929 = vpack.c.b16 %v2533, %v2531
        %v2930 = vpack.c.b16 %v2534, %v2532
        %v2931 = vpack.c.b16 %v2537, %v2535
        %v2932 = vpack.c.b16 %v2538, %v2536
        %v2933 = vpack.c.b16 %v2541, %v2539
        %v2934 = vpack.c.b16 %v2542, %v2540
        %v2935 = vpack.c.b16 %v2545, %v2543
        %v2936 = vpack.c.b16 %v2546, %v2544
        %v2937 = vpack.c.b16 %v2549, %v2547
        %v2938 = vpack.c.b16 %v2550, %v2548
        %v2939 = vpack.c.b16 %v2553, %v2551
        %v2940 = vpack.c.b16 %v2554, %v2552
        %v2941 = vpack.c.b16 %v2557, %v2555
        %v2942 = vpack.c.b16 %v2558, %v2556
        %v2943 = vpack.c.b16 %v2561, %v2559
        %v2944 = vpack.c.b16 %v2562, %v2560
        %v2945 = vpack.c.b16 %v2565, %v2563
        %v2946 = vpack.c.b16 %v2566, %v2564
        %v2947 = vpack.c.b16 %v2569, %v2567
        %v2948 = vpack.c.b16 %v2570, %v2568
        %v2949 = vpack.c.b16 %v2573, %v2571
        %v2950 = vpack.c.b16 %v2574, %v2572
        %v2951 = vpack.c.b16 %v2577, %v2575
        %v2952 = vpack.c.b16 %v2578, %v2576
        %v2953 = vpack.c.b16 %v2581, %v2579
        %v2954 = vpack.c.b16 %v2582, %v2580
        %v2955 = vpack.c.b16 %v2585, %v2583
        %v2956 = vpack.c.b16 %v2586, %v2584
        %v2957 = vpack.c.b16 %v2589, %v2587
        %v2958 = vpack.c.b16 %v2590, %v2588
        %v2959 = vpack.c.b16 %v2593, %v2591
        %v2960 = vpack.c.b16 %v2594, %v2592
        %v2961 = vpack.c.b16 %v2597, %v2595
        %v2962 = vpack.c.b16 %v2598, %v2596
        %v2963 = vpack.c.b16 %v2601, %v2599
        %v2964 = vpack.c.b16 %v2602, %v2600
        %v2965 = vpack.c.b16 %v2605, %v2603
        %v2966 = vpack.c.b16 %v2606, %v2604
        %v2967 = vpack.c.b16 %v2609, %v2607
        %v2968 = vpack.c.b16 %v2610, %v2608
        %v2969 = vpack.c.b16 %v2613, %v2611
        %v2970 = vpack.c.b16 %v2614, %v2612
        %v2971 = vpack.c.b16 %v2617, %v2615
        %v2972 = vpack.c.b16 %v2618, %v2616
        %v2973 = vpack.c.b16 %v2621, %v2619
        %v2974 = vpack.c.b16 %v2622, %v2620
        %v2975 = vpack.c.b16 %v2625, %v2623
        %v2976 = vpack.c.b16 %v2626, %v2624
        %v2977 = vpack.c.b16 %v2629, %v2627
        %v2978 = vpack.c.b16 %v2630, %v2628
        %v2979 = vpack.c.b16 %v2633, %v2631
        %v2980 = vpack.c.b16 %v2634, %v2632
        %v2981 = vpack.c.b16 %v2637, %v2635
        %v2982 = vpack.c.b16 %v2638, %v2636
        %v2983 = vpack.c.b16 %v2641, %v2639
        %v2984 = vpack.c.b16 %v2642, %v2640
        %v2985 = vpack.c.b16 %v2645, %v2643
        %v2986 = vpack.c.b16 %v2646, %v2644
        %v2987 = vpack.c.b16 %v2649, %v2647
        %v2988 = vpack.c.b16 %v2650, %v2648
        %v2989 = vpack.c.b16 %v2653, %v2651
        %v2990 = vpack.c.b16 %v2654, %v2652
        %v2991 = vpack.c.b16 %v2657, %v2655
        %v2992 = vpack.c.b16 %v2658, %v2656
        %v2993 = vpack.c.b16 %v2661, %v2659
        %v2994 = vpack.c.b16 %v2662, %v2660
        %v2995 = vpack.c.b16 %v2665, %v2663
        %v2996 = vpack.c.b16 %v2666, %v2664
        %v2997 = vpack.c.b16 %v2669, %v2667
        %v2998 = vpack.c.b16 %v2670, %v2668
        %v2999 = vpack.c.b16 %v2673, %v2671
        %v3000 = vpack.c.b16 %v2674, %v2672
        %v3001 = vpack.c.b16 %v2677, %v2675
        %v3002 = vpack.c.b16 %v2678, %v2676
        %v3003 = vpack.c.b16 %v2681, %v2679
        %v3004 = vpack.c.b16 %v2682, %v2680
        %v3005 = vpack.c.b16 %v2685, %v2683
        %v3006 = vpack.c.b16 %v2686, %v2684
        %v3007 = vpack.c.b16 %v2689, %v2687
        %v3008 = vpack.c.b16 %v2690, %v2688
        %v3009 = vpack.c.b16 %v2693, %v2691
        %v3010 = vpack.c.b16 %v2694, %v2692
        %v3011 = vpack.c.b16 %v2697, %v2695
        %v3012 = vpack.c.b16 %v2698, %v2696
        %v3013 = vpack.c.b16 %v2701, %v2699
        %v3014 = vpack.c.b16 %v2702, %v2700
        %v3015 = vpack.c.b16 %v2705, %v2703
        %v3016 = vpack.c.b16 %v2706, %v2704
        %v3017 = vpack.c.b16 %v2709, %v2707
        %v3018 = vpack.c.b16 %v2710, %v2708
        %v3019 = vpack.c.b16 %v2713, %v2711
        %v3020 = vpack.c.b16 %v2714, %v2712
        %v3021 = vpack.c.b16 %v2717, %v2715
        %v3022 = vpack.c.b16 %v2718, %v2716
        %v3023 = vpack.c.b16 %v2721, %v2719
        %v3024 = vpack.c.b16 %v2722, %v2720
        %v3025 = vpack.c.b16 %v2725, %v2723
        %v3026 = vpack.c.b16 %v2726, %v2724
        %v3027 = vpack.c.b16 %v2729, %v2727
        %v3028 = vpack.c.b16 %v2730, %v2728
        %v3029 = vpack.c.b16 %v2733, %v2731
        %v3030 = vpack.c.b16 %v2734, %v2732
        %v3031 = vpack.c.b16 %v2737, %v2735
        %v3032 = vpack.c.b16 %v2738, %v2736
        %v3033 = vpack.c.b16 %v2741, %v2739
        %v3034 = vpack.c.b16 %v2742, %v2740
        %v3035 = vpack.c.b16 %v2745, %v2743
        %v3036 = vpack.c.b16 %v2746, %v2744
        %v3037 = vpack.c.b16 %v2749, %v2747
        %v3038 = vpack.c.b16 %v2750, %v2748
        %3327 = vmatprep.subr.bf16.mxu0 %v2766
        %3328 = vmatpush1.bf16.msra.mxu0 %v2765
        %3329 = vmatprep.subr.bf16.mxu0 %v2764
        %3330 = vmatpush1.bf16.msra.mxu0 %v2763
        %3331 = vmatprep.subr.bf16.mxu0 %v2762
        %3332 = vmatpush1.bf16.msra.mxu0 %v2761
        %3333 = vmatprep.subr.bf16.mxu0 %v2760
        %3334 = vmatpush1.bf16.msra.mxu0 %v2759
        %3335 = vmatprep.subr.bf16.mxu0 %v2758
        %3336 = vmatpush1.bf16.msra.mxu0 %v2757
        %3337 = vmatprep.subr.bf16.mxu0 %v2756
        %3338 = vmatpush1.bf16.msra.mxu0 %v2755
        %3339 = vmatprep.subr.bf16.mxu0 %v2754
        %3340 = vmatpush1.bf16.msra.mxu0 %v2753
        %3341 = vmatprep.subr.bf16.mxu0 %v2752
        %3342 = vmatpush1.bf16.msra.mxu0 %v2751
        %3343 = vmatprep.subr.bf16.mxu0 %v2782
        %3344 = vmatpush2.bf16.msra.mxu0 %v2781
        %3345 = vmatprep.subr.bf16.mxu0 %v2780
        %3346 = vmatpush2.bf16.msra.mxu0 %v2779
        %3347 = vmatprep.subr.bf16.mxu0 %v2778
        %3348 = vmatpush2.bf16.msra.mxu0 %v2777
        %3349 = vmatprep.subr.bf16.mxu0 %v2776
        %3350 = vmatpush2.bf16.msra.mxu0 %v2775
        %3351 = vmatprep.subr.bf16.mxu0 %v2774
        %3352 = vmatpush2.bf16.msra.mxu0 %v2773
        %3353 = vmatprep.subr.bf16.mxu0 %v2772
        %3354 = vmatpush2.bf16.msra.mxu0 %v2771
        %3355 = vmatprep.subr.bf16.mxu0 %v2770
        %3356 = vmatpush2.bf16.msra.mxu0 %v2769
        %3357 = vmatprep.subr.bf16.mxu0 %v2768
        %3358 = vmatpush2.bf16.msra.mxu0 %v2767
        %3359 = vmatprep.mubr.bf16.mxu0 %v1852
        %3360 = vmatmul.mubr.bf16.gmra.mxu0 %v1851
        %v3361 = vpop.f32.mrf.mxu0
        %v3362 = vadd.f32 0.0, %v3361
        %v3363 = vpop.f32.mrf.mxu0
        %v3364 = vadd.f32 0.0, %v3363
        %v3365 = vpop.f32.mrf.mxu0
        %v3366 = vadd.f32 0.0, %v3365
        %v3367 = vpop.f32.mrf.mxu0
        %v3368 = vadd.f32 0.0, %v3367
        %3369 = vdwg.mxu0
        %3370 = vmatprep.subr.bf16.mxu0 %v2798
        %3371 = vmatpush1.bf16.msra.mxu0 %v2797
        %3372 = vmatprep.subr.bf16.mxu0 %v2796
        %3373 = vmatpush1.bf16.msra.mxu0 %v2795
        %3374 = vmatprep.subr.bf16.mxu0 %v2794
        %3375 = vmatpush1.bf16.msra.mxu0 %v2793
        %3376 = vmatprep.subr.bf16.mxu0 %v2792
        %3377 = vmatpush1.bf16.msra.mxu0 %v2791
        %3378 = vmatprep.subr.bf16.mxu0 %v2790
        %3379 = vmatpush1.bf16.msra.mxu0 %v2789
        %3380 = vmatprep.subr.bf16.mxu0 %v2788
        %3381 = vmatpush1.bf16.msra.mxu0 %v2787
        %3382 = vmatprep.subr.bf16.mxu0 %v2786
        %3383 = vmatpush1.bf16.msra.mxu0 %v2785
        %3384 = vmatprep.subr.bf16.mxu0 %v2784
        %3385 = vmatpush1.bf16.msra.mxu0 %v2783
        %3386 = vmatprep.subr.bf16.mxu0 %v2814
        %3387 = vmatpush2.bf16.msra.mxu0 %v2813
        %3388 = vmatprep.subr.bf16.mxu0 %v2812
        %3389 = vmatpush2.bf16.msra.mxu0 %v2811
        %3390 = vmatprep.subr.bf16.mxu0 %v2810
        %3391 = vmatpush2.bf16.msra.mxu0 %v2809
        %3392 = vmatprep.subr.bf16.mxu0 %v2808
        %3393 = vmatpush2.bf16.msra.mxu0 %v2807
        %3394 = vmatprep.subr.bf16.mxu0 %v2806
        %3395 = vmatpush2.bf16.msra.mxu0 %v2805
        %3396 = vmatprep.subr.bf16.mxu0 %v2804
        %3397 = vmatpush2.bf16.msra.mxu0 %v2803
        %3398 = vmatprep.subr.bf16.mxu0 %v2802
        %3399 = vmatpush2.bf16.msra.mxu0 %v2801
        %3400 = vmatprep.subr.bf16.mxu0 %v2800
        %3401 = vmatpush2.bf16.msra.mxu0 %v2799
        %3402 = vmatprep.mubr.bf16.mxu0 %v1854
        %3403 = vmatmul.mubr.bf16.gmra.mxu0 %v1853
        %v3404 = vpop.f32.mrf.mxu0
        %v3405 = vadd.f32 %v3362, %v3404
        %v3406 = vpop.f32.mrf.mxu0
        %v3407 = vadd.f32 %v3364, %v3406
        %v3408 = vpop.f32.mrf.mxu0
        %v3409 = vadd.f32 %v3366, %v3408
        %v3410 = vpop.f32.mrf.mxu0
        %v3411 = vadd.f32 %v3368, %v3410
        %3412 = vdwg.mxu0
        %3413 = vmatprep.subr.bf16.mxu0 %v2830
        %3414 = vmatpush1.bf16.msra.mxu0 %v2829
        %3415 = vmatprep.subr.bf16.mxu0 %v2828
        %3416 = vmatpush1.bf16.msra.mxu0 %v2827
        %3417 = vmatprep.subr.bf16.mxu0 %v2826
        %3418 = vmatpush1.bf16.msra.mxu0 %v2825
        %3419 = vmatprep.subr.bf16.mxu0 %v2824
        %3420 = vmatpush1.bf16.msra.mxu0 %v2823
        %3421 = vmatprep.subr.bf16.mxu0 %v2822
        %3422 = vmatpush1.bf16.msra.mxu0 %v2821
        %3423 = vmatprep.subr.bf16.mxu0 %v2820
        %3424 = vmatpush1.bf16.msra.mxu0 %v2819
        %3425 = vmatprep.subr.bf16.mxu0 %v2818
        %3426 = vmatpush1.bf16.msra.mxu0 %v2817
        %3427 = vmatprep.subr.bf16.mxu0 %v2816
        %3428 = vmatpush1.bf16.msra.mxu0 %v2815
        %3429 = vmatprep.subr.bf16.mxu0 %v2846
        %3430 = vmatpush2.bf16.msra.mxu0 %v2845
        %3431 = vmatprep.subr.bf16.mxu0 %v2844
        %3432 = vmatpush2.bf16.msra.mxu0 %v2843
        %3433 = vmatprep.subr.bf16.mxu0 %v2842
        %3434 = vmatpush2.bf16.msra.mxu0 %v2841
        %3435 = vmatprep.subr.bf16.mxu0 %v2840
        %3436 = vmatpush2.bf16.msra.mxu0 %v2839
        %3437 = vmatprep.subr.bf16.mxu0 %v2838
        %3438 = vmatpush2.bf16.msra.mxu0 %v2837
        %3439 = vmatprep.subr.bf16.mxu0 %v2836
        %3440 = vmatpush2.bf16.msra.mxu0 %v2835
        %3441 = vmatprep.subr.bf16.mxu0 %v2834
        %3442 = vmatpush2.bf16.msra.mxu0 %v2833
        %3443 = vmatprep.subr.bf16.mxu0 %v2832
        %3444 = vmatpush2.bf16.msra.mxu0 %v2831
        %3445 = vmatprep.mubr.bf16.mxu0 %v1856
        %3446 = vmatmul.mubr.bf16.gmra.mxu0 %v1855
        %v3447 = vpop.f32.mrf.mxu0
        %v3448 = vadd.f32 %v3405, %v3447
        %v3449 = vpop.f32.mrf.mxu0
        %v3450 = vadd.f32 %v3407, %v3449
        %v3451 = vpop.f32.mrf.mxu0
        %v3452 = vadd.f32 %v3409, %v3451
        %v3453 = vpop.f32.mrf.mxu0
        %v3454 = vadd.f32 %v3411, %v3453
        %3455 = vdwg.mxu0
        %3456 = vmatprep.subr.bf16.mxu0 %v2862
        %3457 = vmatpush1.bf16.msra.mxu0 %v2861
        %3458 = vmatprep.subr.bf16.mxu0 %v2860
        %3459 = vmatpush1.bf16.msra.mxu0 %v2859
        %3460 = vmatprep.subr.bf16.mxu0 %v2858
        %3461 = vmatpush1.bf16.msra.mxu0 %v2857
        %3462 = vmatprep.subr.bf16.mxu0 %v2856
        %3463 = vmatpush1.bf16.msra.mxu0 %v2855
        %3464 = vmatprep.subr.bf16.mxu0 %v2854
        %3465 = vmatpush1.bf16.msra.mxu0 %v2853
        %3466 = vmatprep.subr.bf16.mxu0 %v2852
        %3467 = vmatpush1.bf16.msra.mxu0 %v2851
        %3468 = vmatprep.subr.bf16.mxu0 %v2850
        %3469 = vmatpush1.bf16.msra.mxu0 %v2849
        %3470 = vmatprep.subr.bf16.mxu0 %v2848
        %3471 = vmatpush1.bf16.msra.mxu0 %v2847
        %3472 = vmatprep.subr.bf16.mxu0 %v2878
        %3473 = vmatpush2.bf16.msra.mxu0 %v2877
        %3474 = vmatprep.subr.bf16.mxu0 %v2876
        %3475 = vmatpush2.bf16.msra.mxu0 %v2875
        %3476 = vmatprep.subr.bf16.mxu0 %v2874
        %3477 = vmatpush2.bf16.msra.mxu0 %v2873
        %3478 = vmatprep.subr.bf16.mxu0 %v2872
        %3479 = vmatpush2.bf16.msra.mxu0 %v2871
        %3480 = vmatprep.subr.bf16.mxu0 %v2870
        %3481 = vmatpush2.bf16.msra.mxu0 %v2869
        %3482 = vmatprep.subr.bf16.mxu0 %v2868
        %3483 = vmatpush2.bf16.msra.mxu0 %v2867
        %3484 = vmatprep.subr.bf16.mxu0 %v2866
        %3485 = vmatpush2.bf16.msra.mxu0 %v2865
        %3486 = vmatprep.subr.bf16.mxu0 %v2864
        %3487 = vmatpush2.bf16.msra.mxu0 %v2863
        %3488 = vmatprep.mubr.bf16.mxu0 %v1858
        %3489 = vmatmul.mubr.bf16.gmra.mxu0 %v1857
        %v3490 = vpop.f32.mrf.mxu0
        %v3491 = vadd.f32 %v3448, %v3490
        %v3492 = vpop.f32.mrf.mxu0
        %v3493 = vadd.f32 %v3450, %v3492
        %v3494 = vpop.f32.mrf.mxu0
        %v3495 = vadd.f32 %v3452, %v3494
        %v3496 = vpop.f32.mrf.mxu0
        %v3497 = vadd.f32 %v3454, %v3496
        %3498 = vdwg.mxu0
        %3499 = vmatprep.subr.bf16.mxu0 %v2894
        %3500 = vmatpush1.bf16.msra.mxu0 %v2893
        %3501 = vmatprep.subr.bf16.mxu0 %v2892
        %3502 = vmatpush1.bf16.msra.mxu0 %v2891
        %3503 = vmatprep.subr.bf16.mxu0 %v2890
        %3504 = vmatpush1.bf16.msra.mxu0 %v2889
        %3505 = vmatprep.subr.bf16.mxu0 %v2888
        %3506 = vmatpush1.bf16.msra.mxu0 %v2887
        %3507 = vmatprep.subr.bf16.mxu0 %v2886
        %3508 = vmatpush1.bf16.msra.mxu0 %v2885
        %3509 = vmatprep.subr.bf16.mxu0 %v2884
        %3510 = vmatpush1.bf16.msra.mxu0 %v2883
        %3511 = vmatprep.subr.bf16.mxu0 %v2882
        %3512 = vmatpush1.bf16.msra.mxu0 %v2881
        %3513 = vmatprep.subr.bf16.mxu0 %v2880
        %3514 = vmatpush1.bf16.msra.mxu0 %v2879
        %3515 = vmatprep.subr.bf16.mxu0 %v2910
        %3516 = vmatpush2.bf16.msra.mxu0 %v2909
        %3517 = vmatprep.subr.bf16.mxu0 %v2908
        %3518 = vmatpush2.bf16.msra.mxu0 %v2907
        %3519 = vmatprep.subr.bf16.mxu0 %v2906
        %3520 = vmatpush2.bf16.msra.mxu0 %v2905
        %3521 = vmatprep.subr.bf16.mxu0 %v2904
        %3522 = vmatpush2.bf16.msra.mxu0 %v2903
        %3523 = vmatprep.subr.bf16.mxu0 %v2902
        %3524 = vmatpush2.bf16.msra.mxu0 %v2901
        %3525 = vmatprep.subr.bf16.mxu0 %v2900
        %3526 = vmatpush2.bf16.msra.mxu0 %v2899
        %3527 = vmatprep.subr.bf16.mxu0 %v2898
        %3528 = vmatpush2.bf16.msra.mxu0 %v2897
        %3529 = vmatprep.subr.bf16.mxu0 %v2896
        %3530 = vmatpush2.bf16.msra.mxu0 %v2895
        %3531 = vmatprep.mubr.bf16.mxu0 %v1860
        %3532 = vmatmul.mubr.bf16.gmra.mxu0 %v1859
        %v3533 = vpop.f32.mrf.mxu0
        %v3534 = vadd.f32 %v3491, %v3533
        %v3535 = vpop.f32.mrf.mxu0
        %v3536 = vadd.f32 %v3493, %v3535
        %v3537 = vpop.f32.mrf.mxu0
        %v3538 = vadd.f32 %v3495, %v3537
        %v3539 = vpop.f32.mrf.mxu0
        %v3540 = vadd.f32 %v3497, %v3539
        %3541 = vdwg.mxu0
        %3542 = vmatprep.subr.bf16.mxu0 %v2926
        %3543 = vmatpush1.bf16.msra.mxu0 %v2925
        %3544 = vmatprep.subr.bf16.mxu0 %v2924
        %3545 = vmatpush1.bf16.msra.mxu0 %v2923
        %3546 = vmatprep.subr.bf16.mxu0 %v2922
        %3547 = vmatpush1.bf16.msra.mxu0 %v2921
        %3548 = vmatprep.subr.bf16.mxu0 %v2920
        %3549 = vmatpush1.bf16.msra.mxu0 %v2919
        %3550 = vmatprep.subr.bf16.mxu0 %v2918
        %3551 = vmatpush1.bf16.msra.mxu0 %v2917
        %3552 = vmatprep.subr.bf16.mxu0 %v2916
        %3553 = vmatpush1.bf16.msra.mxu0 %v2915
        %3554 = vmatprep.subr.bf16.mxu0 %v2914
        %3555 = vmatpush1.bf16.msra.mxu0 %v2913
        %3556 = vmatprep.subr.bf16.mxu0 %v2912
        %3557 = vmatpush1.bf16.msra.mxu0 %v2911
        %3558 = vmatprep.subr.bf16.mxu0 %v2942
        %3559 = vmatpush2.bf16.msra.mxu0 %v2941
        %3560 = vmatprep.subr.bf16.mxu0 %v2940
        %3561 = vmatpush2.bf16.msra.mxu0 %v2939
        %3562 = vmatprep.subr.bf16.mxu0 %v2938
        %3563 = vmatpush2.bf16.msra.mxu0 %v2937
        %3564 = vmatprep.subr.bf16.mxu0 %v2936
        %3565 = vmatpush2.bf16.msra.mxu0 %v2935
        %3566 = vmatprep.subr.bf16.mxu0 %v2934
        %3567 = vmatpush2.bf16.msra.mxu0 %v2933
        %3568 = vmatprep.subr.bf16.mxu0 %v2932
        %3569 = vmatpush2.bf16.msra.mxu0 %v2931
        %3570 = vmatprep.subr.bf16.mxu0 %v2930
        %3571 = vmatpush2.bf16.msra.mxu0 %v2929
        %3572 = vmatprep.subr.bf16.mxu0 %v2928
        %3573 = vmatpush2.bf16.msra.mxu0 %v2927
        %3574 = vmatprep.mubr.bf16.mxu0 %v1862
        %3575 = vmatmul.mubr.bf16.gmra.mxu0 %v1861
        %v3576 = vpop.f32.mrf.mxu0
        %v3577 = vadd.f32 %v3534, %v3576
        %v3578 = vpop.f32.mrf.mxu0
        %v3579 = vadd.f32 %v3536, %v3578
        %v3580 = vpop.f32.mrf.mxu0
        %v3581 = vadd.f32 %v3538, %v3580
        %v3582 = vpop.f32.mrf.mxu0
        %v3583 = vadd.f32 %v3540, %v3582
        %3584 = vdwg.mxu0
        %3585 = vmatprep.subr.bf16.mxu0 %v2958
        %3586 = vmatpush1.bf16.msra.mxu0 %v2957
        %3587 = vmatprep.subr.bf16.mxu0 %v2956
        %3588 = vmatpush1.bf16.msra.mxu0 %v2955
        %3589 = vmatprep.subr.bf16.mxu0 %v2954
        %3590 = vmatpush1.bf16.msra.mxu0 %v2953
        %3591 = vmatprep.subr.bf16.mxu0 %v2952
        %3592 = vmatpush1.bf16.msra.mxu0 %v2951
        %3593 = vmatprep.subr.bf16.mxu0 %v2950
        %3594 = vmatpush1.bf16.msra.mxu0 %v2949
        %3595 = vmatprep.subr.bf16.mxu0 %v2948
        %3596 = vmatpush1.bf16.msra.mxu0 %v2947
        %3597 = vmatprep.subr.bf16.mxu0 %v2946
        %3598 = vmatpush1.bf16.msra.mxu0 %v2945
        %3599 = vmatprep.subr.bf16.mxu0 %v2944
        %3600 = vmatpush1.bf16.msra.mxu0 %v2943
        %3601 = vmatprep.subr.bf16.mxu0 %v2974
        %3602 = vmatpush2.bf16.msra.mxu0 %v2973
        %3603 = vmatprep.subr.bf16.mxu0 %v2972
        %3604 = vmatpush2.bf16.msra.mxu0 %v2971
        %3605 = vmatprep.subr.bf16.mxu0 %v2970
        %3606 = vmatpush2.bf16.msra.mxu0 %v2969
        %3607 = vmatprep.subr.bf16.mxu0 %v2968
        %3608 = vmatpush2.bf16.msra.mxu0 %v2967
        %3609 = vmatprep.subr.bf16.mxu0 %v2966
        %3610 = vmatpush2.bf16.msra.mxu0 %v2965
        %3611 = vmatprep.subr.bf16.mxu0 %v2964
        %3612 = vmatpush2.bf16.msra.mxu0 %v2963
        %3613 = vmatprep.subr.bf16.mxu0 %v2962
        %3614 = vmatpush2.bf16.msra.mxu0 %v2961
        %3615 = vmatprep.subr.bf16.mxu0 %v2960
        %3616 = vmatpush2.bf16.msra.mxu0 %v2959
        %3617 = vmatprep.mubr.bf16.mxu0 %v1864
        %3618 = vmatmul.mubr.bf16.gmra.mxu0 %v1863
        %v3619 = vpop.f32.mrf.mxu0
        %v3620 = vadd.f32 %v3577, %v3619
        %v3621 = vpop.f32.mrf.mxu0
        %v3622 = vadd.f32 %v3579, %v3621
        %v3623 = vpop.f32.mrf.mxu0
        %v3624 = vadd.f32 %v3581, %v3623
        %v3625 = vpop.f32.mrf.mxu0
        %v3626 = vadd.f32 %v3583, %v3625
        %3627 = vdwg.mxu0
        %3628 = vmatprep.subr.bf16.mxu0 %v2990
        %3629 = vmatpush1.bf16.msra.mxu0 %v2989
        %3630 = vmatprep.subr.bf16.mxu0 %v2988
        %3631 = vmatpush1.bf16.msra.mxu0 %v2987
        %3632 = vmatprep.subr.bf16.mxu0 %v2986
        %3633 = vmatpush1.bf16.msra.mxu0 %v2985
        %3634 = vmatprep.subr.bf16.mxu0 %v2984
        %3635 = vmatpush1.bf16.msra.mxu0 %v2983
        %3636 = vmatprep.subr.bf16.mxu0 %v2982
        %3637 = vmatpush1.bf16.msra.mxu0 %v2981
        %3638 = vmatprep.subr.bf16.mxu0 %v2980
        %3639 = vmatpush1.bf16.msra.mxu0 %v2979
        %3640 = vmatprep.subr.bf16.mxu0 %v2978
        %3641 = vmatpush1.bf16.msra.mxu0 %v2977
        %3642 = vmatprep.subr.bf16.mxu0 %v2976
        %3643 = vmatpush1.bf16.msra.mxu0 %v2975
        %3644 = vmatprep.subr.bf16.mxu0 %v3006
        %3645 = vmatpush2.bf16.msra.mxu0 %v3005
        %3646 = vmatprep.subr.bf16.mxu0 %v3004
        %3647 = vmatpush2.bf16.msra.mxu0 %v3003
        %3648 = vmatprep.subr.bf16.mxu0 %v3002
        %3649 = vmatpush2.bf16.msra.mxu0 %v3001
        %3650 = vmatprep.subr.bf16.mxu0 %v3000
        %3651 = vmatpush2.bf16.msra.mxu0 %v2999
        %3652 = vmatprep.subr.bf16.mxu0 %v2998
        %3653 = vmatpush2.bf16.msra.mxu0 %v2997
        %3654 = vmatprep.subr.bf16.mxu0 %v2996
        %3655 = vmatpush2.bf16.msra.mxu0 %v2995
        %3656 = vmatprep.subr.bf16.mxu0 %v2994
        %3657 = vmatpush2.bf16.msra.mxu0 %v2993
        %3658 = vmatprep.subr.bf16.mxu0 %v2992
        %3659 = vmatpush2.bf16.msra.mxu0 %v2991
        %3660 = vmatprep.mubr.bf16.mxu0 %v1866
        %3661 = vmatmul.mubr.bf16.gmra.mxu0 %v1865
        %v3662 = vpop.f32.mrf.mxu0
        %v3663 = vadd.f32 %v3620, %v3662
        %v3664 = vpop.f32.mrf.mxu0
        %v3665 = vadd.f32 %v3622, %v3664
        %v3666 = vpop.f32.mrf.mxu0
        %v3667 = vadd.f32 %v3624, %v3666
        %v3668 = vpop.f32.mrf.mxu0
        %v3669 = vadd.f32 %v3626, %v3668
        %3670 = vdwg.mxu0
        %3671 = vmatprep.subr.bf16.mxu0 %v3022
        %3672 = vmatpush1.bf16.msra.mxu0 %v3021
        %3673 = vmatprep.subr.bf16.mxu0 %v3020
        %3674 = vmatpush1.bf16.msra.mxu0 %v3019
        %3675 = vmatprep.subr.bf16.mxu0 %v3018
        %3676 = vmatpush1.bf16.msra.mxu0 %v3017
        %3677 = vmatprep.subr.bf16.mxu0 %v3016
        %3678 = vmatpush1.bf16.msra.mxu0 %v3015
        %3679 = vmatprep.subr.bf16.mxu0 %v3014
        %3680 = vmatpush1.bf16.msra.mxu0 %v3013
        %3681 = vmatprep.subr.bf16.mxu0 %v3012
        %3682 = vmatpush1.bf16.msra.mxu0 %v3011
        %3683 = vmatprep.subr.bf16.mxu0 %v3010
        %3684 = vmatpush1.bf16.msra.mxu0 %v3009
        %3685 = vmatprep.subr.bf16.mxu0 %v3008
        %3686 = vmatpush1.bf16.msra.mxu0 %v3007
        %3687 = vmatprep.subr.bf16.mxu0 %v3038
        %3688 = vmatpush2.bf16.msra.mxu0 %v3037
        %3689 = vmatprep.subr.bf16.mxu0 %v3036
        %3690 = vmatpush2.bf16.msra.mxu0 %v3035
        %3691 = vmatprep.subr.bf16.mxu0 %v3034
        %3692 = vmatpush2.bf16.msra.mxu0 %v3033
        %3693 = vmatprep.subr.bf16.mxu0 %v3032
        %3694 = vmatpush2.bf16.msra.mxu0 %v3031
        %3695 = vmatprep.subr.bf16.mxu0 %v3030
        %3696 = vmatpush2.bf16.msra.mxu0 %v3029
        %3697 = vmatprep.subr.bf16.mxu0 %v3028
        %3698 = vmatpush2.bf16.msra.mxu0 %v3027
        %3699 = vmatprep.subr.bf16.mxu0 %v3026
        %3700 = vmatpush2.bf16.msra.mxu0 %v3025
        %3701 = vmatprep.subr.bf16.mxu0 %v3024
        %3702 = vmatpush2.bf16.msra.mxu0 %v3023
        %3703 = vmatprep.mubr.bf16.mxu0 %v1868
        %3704 = vmatmul.mubr.bf16.gmra.mxu0 %v1867
        %v3705 = vpop.f32.mrf.mxu0
        %v3706 = vadd.f32 %v3663, %v3705
        %v3707 = vpop.f32.mrf.mxu0
        %v3708 = vadd.f32 %v3665, %v3707
        %v3709 = vpop.f32.mrf.mxu0
        %v3710 = vadd.f32 %v3667, %v3709
        %v3711 = vpop.f32.mrf.mxu0
        %v3712 = vadd.f32 %v3669, %v3711
        %3713 = vdwg.mxu0
        %v3714 = vadd.f32 %v1487, %v3706
        %v3715 = vadd.f32 %v1488, %v3708
        %v3716 = vadd.f32 %v1489, %v3710
        %v3717 = vadd.f32 %v1490, %v3712
        %3718 = vst [vmem:[#allocation2] sm:$0xff] %v3714
        %3719 = vst [vmem:[#allocation2 + $0x8] sm:$0xff] %v3715
        %3720 = vst [vmem:[#allocation2 + $0x10] sm:$0xff] %v3716
        %3721 = vst [vmem:[#allocation2 + $0x18] sm:$0xff] %v3717
        %p3722 = scmp.eq.s32.totalorder %s21, 8
        // Predicated region
        $region98: #{nature_conv_body.7} parent=84 // pred_check
          %p3723 = pneg %p3722
        $region99: #{nature_conv_body.7} parent=84 // pred_check_branch
          %3725 = sbr.rel (%p3723) target = $region101
        $region100: #{nature_conv_body.7} parent=84 // pred_region
          %v3726 = vld [vmem:[#allocation2] sm:$0xff]
          %v3727 = vld [vmem:[#allocation2 + $0x8] sm:$0xff]
          %v3728 = vld [vmem:[#allocation2 + $0x10] sm:$0xff]
          %v3729 = vld [vmem:[#allocation2 + $0x18] sm:$0xff]
          %v3730 = vld [vmem:[%s1475] sm:$0x3]
          %v3732 = vlaneseq
          %v3733 = vshrl.u32 %v3732, 7
          %v3734 = vsub.s32 0, %v3733
          %v3735 = vrot.slane %v3730, %v3734
          %v3736 = vlaneseq
          %v3737 = vshrl.u32 %v3736, 7
          %v3738 = vsub.s32 1, %v3737
          %v3739 = vrot.slane %v3730, %v3738
          %v3742 = vadd.f32 %v3726, %v3735
          %v3743 = vadd.f32 %v3727, %v3739
          %v3744 = vadd.f32 %v3728, %v3735
          %v3745 = vadd.f32 %v3729, %v3739
          %v3746 = vmax.f32 %v3742, 0.0
          %v3747 = vmax.f32 %v3743, 0.0
          %v3748 = vmax.f32 %v3744, 0.0
          %v3749 = vmax.f32 %v3745, 0.0
          %3750 = vst [vmem:[%s1467] sm:$0xff] %v3746
          %3751 = vst [vmem:[%s1467 + $0x8] sm:$0xff] %v3747
          %3752 = vst [vmem:[%s1467 + $0x10] sm:$0xff] %v3748
          %3753 = vst [vmem:[%s1467 + $0x18] sm:$0xff] %v3749
        $region101: #{nature_conv_body.7} parent=84 // pred_fallthru
          _
        %s3754 = sand.u32 %s125, 1
        %s3755 = sand.u32 %s125, 1
        %s3756 = smul.addr %s3755, 32
        %s3757 = scalar_lea.vmem [#allocation5], %s3756
        // Predicated region
        $region102: #{nature_conv_body.7} parent=84 // pred_check
          %p3758 = pneg %p135
        $region103: #{nature_conv_body.7} parent=84 // pred_check_branch
          %3760 = sbr.rel (%p3758) target = $region105
        $region104: #{nature_conv_body.7} parent=84 // pred_region
          %s3761 = smul.u32 2, %s19
          %s3762 = smul.u32 2, %s20
          %s3763 = smul.addr %s3761, 4
          %s3764 = sadd.s32 %s3762, %s3763
          %s3765 = smul.addr %s3764, 8
          %s3766 = scalar_lea.vmem %s3, %s3765
          // Predicated region
          $region106: #{nature_conv_body.7} parent=104 // pred_check
            _
          $region107: #{nature_conv_body.7} parent=104 // pred_check_branch
            %3768 = sbr.rel (0) target = $region109
          $region108: #{nature_conv_body.7} parent=104 // pred_region
            // Predicated region
            $region110: #{nature_conv_body.7} parent=108 // pred_check
              _
            $region111: #{nature_conv_body.7} parent=108 // pred_check_branch
              %3770 = sbr.rel (0) target = $region113
            $region112: #{nature_conv_body.7} parent=108 // pred_region
              loop: start=0, step=1, limit=1
              $region114: #{nature_conv_body.7} parent=112 // loop_pre_header
                _
              $region115: #{nature_conv_body.7} parent=112 // loop_header
                %s3772 = sphi 0, %s3776
                %p3773 = scmp.ge.s32.totalorder %s3772, 1
                %s3777 = sphi %s3757, %s3757
                %s3778 = sphi %s3766, %s3766
              $region116: #{nature_conv_body.7} parent=112 // loop_header_branch
                %3775 = sbr.rel (%p3773) target = $region120
              $region117: #{nature_conv_body.7} parent=112 // loop_body
                %v3779 = vld [vmem:[%s3777] sm:$0xff]
                %3780 = vst [vmem:[%s3778] sm:$0xff] %v3779
                %v3781 = vld [vmem:[%s3777 + $0x8] sm:$0xff]
                %3782 = vst [vmem:[%s3778 + $0x8] sm:$0xff] %v3781
                %v3783 = vld [vmem:[%s3777 + $0x10] sm:$0xff]
                %3784 = vst [vmem:[%s3778 + $0x20] sm:$0xff] %v3783
                %v3785 = vld [vmem:[%s3777 + $0x18] sm:$0xff]
                %3786 = vst [vmem:[%s3778 + $0x28] sm:$0xff] %v3785
              $region118: #{nature_conv_body.7} parent=112 // loop_footer
                %s3776 = sadd.s32 1, %s3772
              $region119: #{nature_conv_body.7} parent=112 // loop_footer_branch
                %3771 = sbr.rel target = $region115
              $region120: #{nature_conv_body.7} parent=112 // loop_exit
                _
            $region113: #{nature_conv_body.7} parent=108 // pred_fallthru
              _
            // Predicated region
            $region121: #{nature_conv_body.7} parent=108 // pred_check
              _
            $region122: #{nature_conv_body.7} parent=108 // pred_check_branch
              %3788 = sbr.rel target = $region124
            $region123: #{nature_conv_body.7} parent=108 // pred_region
              _
            $region124: #{nature_conv_body.7} parent=108 // pred_fallthru
              _
          $region109: #{nature_conv_body.7} parent=104 // pred_fallthru
            _
          %3789 = vnop
        $region105: #{nature_conv_body.7} parent=84 // pred_fallthru
          _
      $region85: #{nature_conv_body.7} parent=5 // pred_fallthru
        _
      %p3790 = scmp.le.s32.totalorder 2, %s9
      // Predicated region
      $region125: #{nature_conv_body.7} parent=5 // pred_check
        %p3791 = pneg %p3790
      $region126: #{nature_conv_body.7} parent=5 // pred_check_branch
        %3793 = sbr.rel (%p3791) target = $region128
      $region127: #{nature_conv_body.7} parent=5 // pred_region
        %s3794 = ssub.s32 %s9, 2
        // Predicated region
        $region129: #{nature_conv_body.7} parent=127 // pred_check
          %p3795 = pneg %p141
        $region130: #{nature_conv_body.7} parent=127 // pred_check_branch
          %3797 = sbr.rel (%p3795) target = $region132
        $region131: #{nature_conv_body.7} parent=127 // pred_region
          %s3798 = sand.u32 %s126, 1
          %s3799 = sand.u32 %s126, 1
          %s3800 = smul.addr %s3799, 32
          %s3801 = scalar_lea.vmem [#allocation5], %s3800
        $region132: #{nature_conv_body.7} parent=127 // pred_fallthru
          _
      $region128: #{nature_conv_body.7} parent=5 // pred_fallthru
        _
    $region6: #{nature_conv_body.7} parent=1 // loop_footer
      %s13 = sadd.s32 1, %s9
    $region7: #{nature_conv_body.7} parent=1 // loop_footer_branch
      %8 = sbr.rel target = $region3
    $region8: #{nature_conv_body.7} parent=1 // loop_exit
      _

</llo_original>
